<compile_context>
chip_gen: v5e
topology: v5e:2x2
jax: 0.10.0
libtpu: 0.0.40
codegen_flags: <defaults>
</compile_context>

<pallas_src>
import jax
import jax.numpy as jnp
import numpy as np
from jax.experimental import pallas as pl
from jax.experimental.pallas import tpu as pltpu

MAX_OBJECTS = 15   # self.max_objects_in_frame
BB_IN_DIM = 6      # self.bb_in_dim (overridden to 6 in OPNetLstmMlp)
BB_OUT_DIM = 4     # self.bb_out_dim


def _opnet_kernel(scene_ref, w_ih_ref, w_hh_ref, w_pred_ref, r_exp_ref,
                  w_hid_ref, w_out_ref, y_ref, pred_ref, gx_ref, lstm_ref):
    n_frames, in_dim, bb = scene_ref.shape      # (F, 90, Bb) feature-major
    h1 = w_hh_ref.shape[1]                      # LSTM hidden size
    h3 = 3 * h1
    unroll = min(8, n_frames)

    # Small weights: load once (a few vregs each; compiler may respill).
    w_ih = w_ih_ref[...]        # (4H1, 90), gate rows ordered [i, f, o, g]
    w_hh = w_hh_ref[...]        # (4H1, H1)
    w_pred = w_pred_ref[...]    # (n_pred, H1)
    r_exp = r_exp_ref[...]      # (90, n_pred) object -> flat-scene expansion
    w_hid = w_hid_ref[...]      # (H2, 90) row-tiled hidden_layer weight
    w_out = w_out_ref[...]      # (4, H2)

    # ---- hoisted input projection: W_ih @ x_t for every frame ---------------
    # Independent per frame, so it stays off the recurrence critical path.
    def proj(t, carry):
        gx_ref[t] = jnp.dot(w_ih, scene_ref[t],
                            preferred_element_type=jnp.float32)     # (4H1, Bb)
        return carry

    jax.lax.fori_loop(0, n_frames, proj, 0, unroll=unroll)

    # ---- LSTM recurrence (num_layers=1, bias=False); gate rows [i, f, o, g] -
    def step(t, carry):
        h, c = carry                                                 # (H1, Bb)
        gates = gx_ref[t] + jnp.dot(w_hh, h,
                                    preferred_element_type=jnp.float32)
        sig = jax.nn.sigmoid(gates[:h3])        # i, f, o in one EUP sweep
        i = sig[:h1]
        f = sig[h1:2 * h1]
        o = sig[2 * h1:h3]
        g = jnp.tanh(gates[h3:])
        c_new = f * c + i * g
        h_new = o * jnp.tanh(c_new)
        lstm_ref[t] = h_new
        return (h_new, c_new)

    zeros = jnp.zeros((h1, bb), jnp.float32)
    jax.lax.fori_loop(0, n_frames, step, (zeros, zeros), unroll=unroll)

    # ---- per-frame tail: prediction head + softmax + weighted-box MLP -------
    def tail(t, carry):
        h_t = lstm_ref[t]                                            # (H1, Bb)
        pred = jnp.dot(w_pred, h_t,
                       preferred_element_type=jnp.float32)           # (n_pred, Bb)
        pred_ref[t] = pred                                           # lane-dense
        pmax = jnp.max(pred, axis=0, keepdims=True)
        e = jnp.exp(pred - pmax)
        probs = e * pl.reciprocal(jnp.sum(e, axis=0, keepdims=True),
                                  approx=True)
        # probs_exp[o*T + t', b] = probs[o, b]; combined with the row-tiled
        # w_hid this reproduces einsum('bfot,bfo->bft') + hidden_layer.
        probs_exp = jnp.dot(r_exp, probs,
                            preferred_element_type=jnp.float32)      # (90, Bb)
        weighted = probs_exp * scene_ref[t]                          # (90, Bb)
        hidden = jnp.maximum(
            jnp.dot(w_hid, weighted, preferred_element_type=jnp.float32), 0.0)
        y_ref[t] = jnp.dot(w_out, hidden,
                           preferred_element_type=jnp.float32)       # (4, Bb)
        return carry

    jax.lax.fori_loop(0, n_frames, tail, 0, unroll=unroll)


def _round_up(x, m):
    return (x + m - 1) // m * m


def _reorder_gates_ifog(w):
    """PyTorch LSTM weights stack gates [i, f, g, o]; reorder rows to [i, f, o, g]."""
    i, f, g, o = jnp.split(w, 4, axis=0)
    return jnp.concatenate([i, f, o, g], axis=0)


def opnet_lstm_mlp(boxes, params, *, max_batch_block=256,
                   vmem_budget_bytes=24 * 1024 * 1024):
    """boxes: (B, F, 15, 6) float32.  Returns (y_boxes, object_to_track_pred)."""
    B, F, O, T = boxes.shape
    in_dim = O * T
    H1 = params["w_hh"].shape[1]
    H2 = params["w_hid"].shape[0]
    n_pred = params["w_pred"].shape[0]
    if n_pred != O:
        raise ValueError(
            "einsum 'bfot,bfo->bft' requires object_to_track_pred_dim == num_objects")

    # ---- weight prep (wrapper side, free at runtime) -------------------------
    w_ih = _reorder_gates_ifog(params["w_ih"]).astype(jnp.float32)     # (4H1, 90)
    w_hh = _reorder_gates_ifog(params["w_hh"]).astype(jnp.float32)     # (4H1, H1)
    w_pred = params["w_pred"].astype(jnp.float32)                      # (n_pred, H1)
    r_exp = jnp.repeat(jnp.eye(n_pred, dtype=jnp.float32), T, axis=0)  # (90, n_pred)
    w_hid_tiled = jnp.tile(params["w_hid"].astype(jnp.float32), (1, O))  # (H2, 90)
    w_out = params["w_out"].astype(jnp.float32)                        # (4, H2)

    # ---- feature-major input layout: (F, in_dim, B) --------------------------
    scene = jnp.transpose(boxes.reshape(B, F, in_dim).astype(jnp.float32),
                          (1, 2, 0))

    # ---- batch block selection (bytes per batch row, incl. double-buffering) -
    per_row = 4 * F * (2 * in_dim                 # scene block (double-buffered)
                       + 4 * H1 + H1              # gx + lstm scratch
                       + 2 * (BB_OUT_DIM + n_pred))  # outputs (double-buffered)
    per_row += 4 * 8 * (4 * H1 + 2 * in_dim + n_pred + H2)  # loop transients
    cap = vmem_budget_bytes // max(per_row, 1)
    b128 = _round_up(B, 128)
    Bb = min(max_batch_block, cap, b128)
    Bb = max(128, Bb // 128 * 128)                # lane-dense: multiple of 128
    # v7x megacore: keep >= 2 grid steps when there is enough batch to split.
    if b128 // Bb < 2 and b128 >= 256:
        Bb = max(128, (b128 // 2) // 128 * 128)
    B_pad = _round_up(B, Bb)
    if B_pad != B:
        scene = jnp.pad(scene, ((0, 0), (0, 0), (0, B_pad - B)))

    y_all, pred_all = pl.pallas_call(
        _opnet_kernel,
        out_shape=(
            jax.ShapeDtypeStruct((F, BB_OUT_DIM, B_pad), jnp.float32),
            jax.ShapeDtypeStruct((F, n_pred, B_pad), jnp.float32),
        ),
        grid_spec=pltpu.PrefetchScalarGridSpec(
            num_scalar_prefetch=0,
            grid=(B_pad // Bb,),
            in_specs=[
                pl.BlockSpec((F, in_dim, Bb), lambda b: (0, 0, b)),
                pl.BlockSpec(w_ih.shape, lambda b: (0, 0)),
                pl.BlockSpec(w_hh.shape, lambda b: (0, 0)),
                pl.BlockSpec(w_pred.shape, lambda b: (0, 0)),
                pl.BlockSpec(r_exp.shape, lambda b: (0, 0)),
                pl.BlockSpec(w_hid_tiled.shape, lambda b: (0, 0)),
                pl.BlockSpec(w_out.shape, lambda b: (0, 0)),
            ],
            out_specs=[
                pl.BlockSpec((F, BB_OUT_DIM, Bb), lambda b: (0, 0, b)),
                pl.BlockSpec((F, n_pred, Bb), lambda b: (0, 0, b)),
            ],
            scratch_shapes=[
                pltpu.VMEM((F, 4 * H1, Bb), jnp.float32),   # hoisted W_ih @ x
                pltpu.VMEM((F, H1, Bb), jnp.float32),       # LSTM hidden states
            ],
        ),
        compiler_params=pltpu.CompilerParams(
            dimension_semantics=("parallel",),
            vmem_limit_bytes=32 * 1024 * 1024),
    )(scene, w_ih, w_hh, w_pred, r_exp, w_hid_tiled, w_out)

    y_boxes = jnp.transpose(y_all[:, :, :B], (2, 0, 1))       # (B, F, 4)
    obj_pred = jnp.transpose(pred_all[:, :, :B], (2, 1, 0))   # (B, n_pred, F)
    return y_boxes, obj_pred


# ------------------------- pure NumPy reference ------------------------------
def _reference_np(boxes, params):
    def sigmoid(x):
        return 1.0 / (1.0 + np.exp(-x))

    boxes = np.asarray(boxes, np.float64)
    w_ih = np.asarray(params["w_ih"], np.float64)
    w_hh = np.asarray(params["w_hh"], np.float64)
    w_pred = np.asarray(params["w_pred"], np.float64)
    w_hid = np.asarray(params["w_hid"], np.float64)
    w_out = np.asarray(params["w_out"], np.float64)

    B, F, O, T = boxes.shape
    H1 = w_hh.shape[1]
    scene = boxes.reshape(B, F, O * T)
    hs = np.zeros((B, F, H1))
    for b in range(B):
        h = np.zeros(H1)
        c = np.zeros(H1)
        for t in range(F):
            gates = w_ih @ scene[b, t] + w_hh @ h
            i = sigmoid(gates[0:H1])
            f = sigmoid(gates[H1:2 * H1])
            g = np.tanh(gates[2 * H1:3 * H1])
            o = sigmoid(gates[3 * H1:4 * H1])
            c = f * c + i * g
            h = o * np.tanh(c)
            hs[b, t] = h
    pred = hs @ w_pred.T
    e = np.exp(pred - pred.max(-1, keepdims=True))
    probs = e / e.sum(-1, keepdims=True)
    frames_boxes = np.einsum("bfot,bfo->bft", boxes, probs)
    hidden = np.maximum(frames_boxes @ w_hid.T, 0.0)
    y = hidden @ w_out.T
    return y, pred.transpose(0, 2, 1)


if __name__ == "__main__":
    # config: object_to_track_pred_dim must equal num_objects (15) for the
    # einsum 'bfot,bfo->bft' in the original forward to be well-defined.
    config = {
        "object_to_track_pred_dim": 15,
        "object_to_track_hidden_dim": 32,
        "videos_hidden_dim": 32,
    }
    B, F, O, T = 2, 8, MAX_OBJECTS, BB_IN_DIM
    H1 = config["object_to_track_hidden_dim"]
    H2 = config["videos_hidden_dim"]
    n_pred = config["object_to_track_pred_dim"]
    in_dim = O * T  # 90

    key = jax.random.PRNGKey(0)
    k_box, k_ih, k_hh, k_pred, k_hid, k_out = jax.random.split(key, 6)

    boxes = jax.random.normal(k_box, (B, F, O, T), dtype=jnp.float32)
    params = {
        # PyTorch shapes: weight_ih_l0 (4H1, in), weight_hh_l0 (4H1, H1),
        # object_to_track_prediction (n_pred, H1), hidden_layer (H2, 6),
        # prediction_layer (4, H2) -- all bias-free.
        "w_ih": 0.1 * jax.random.normal(k_ih, (4 * H1, in_dim), jnp.float32),
        "w_hh": 0.1 * jax.random.normal(k_hh, (4 * H1, H1), jnp.float32),
        "w_pred": 0.1 * jax.random.normal(k_pred, (n_pred, H1), jnp.float32),
        "w_hid": 0.1 * jax.random.normal(k_hid, (H2, BB_IN_DIM), jnp.float32),
        "w_out": 0.1 * jax.random.normal(k_out, (BB_OUT_DIM, H2), jnp.float32),
    }

    fn = jax.jit(opnet_lstm_mlp)
    y_boxes, obj_pred = jax.block_until_ready(fn(boxes, params))

    y_ref, pred_ref = _reference_np(boxes, params)
    np.testing.assert_allclose(np.asarray(y_boxes), y_ref, rtol=2e-3, atol=2e-3)
    np.testing.assert_allclose(np.asarray(obj_pred), pred_ref, rtol=2e-3, atol=2e-3)

    print("KERNEL_OK")
</pallas_src>

<mosaic_0001>
module attributes {stable_mosaic.version = 11 : i64} {
  func.func @_opnet_kernel(%arg0: i32, %arg1: memref<8x90x128xf32, #tpu.memory_space<vmem>>, %arg2: memref<128x90xf32, #tpu.memory_space<vmem>>, %arg3: memref<128x32xf32, #tpu.memory_space<vmem>>, %arg4: memref<15x32xf32, #tpu.memory_space<vmem>>, %arg5: memref<90x15xf32, #tpu.memory_space<vmem>>, %arg6: memref<32x90xf32, #tpu.memory_space<vmem>>, %arg7: memref<4x32xf32, #tpu.memory_space<vmem>>, %arg8: memref<8x4x128xf32, #tpu.memory_space<vmem>>, %arg9: memref<8x15x128xf32, #tpu.memory_space<vmem>>, %arg10: memref<8x128x128xf32, #tpu.memory_space<vmem>>, %arg11: memref<8x32x128xf32, #tpu.memory_space<vmem>>) attributes {dimension_semantics = [#tpu.dimension_semantics<parallel>], iteration_bounds = array<i64: 1>, scalar_prefetch = 0 : i64, scratch_operands = 2 : i64, tpu.core_type = #tpu.core_type<tc>, window_params = [{transform_indices = @transform_0, window_bounds = array<i64: 8, 90, 128>}, {pipeline_mode = #tpu.pipeline_mode<synchronous>, transform_indices = @transform_1, window_bounds = array<i64: 128, 90>}, {pipeline_mode = #tpu.pipeline_mode<synchronous>, transform_indices = @transform_2, window_bounds = array<i64: 128, 32>}, {pipeline_mode = #tpu.pipeline_mode<synchronous>, transform_indices = @transform_3, window_bounds = array<i64: 15, 32>}, {pipeline_mode = #tpu.pipeline_mode<synchronous>, transform_indices = @transform_4, window_bounds = array<i64: 90, 15>}, {pipeline_mode = #tpu.pipeline_mode<synchronous>, transform_indices = @transform_5, window_bounds = array<i64: 32, 90>}, {pipeline_mode = #tpu.pipeline_mode<synchronous>, transform_indices = @transform_6, window_bounds = array<i64: 4, 32>}, {transform_indices = @transform_7, window_bounds = array<i64: 8, 4, 128>}, {transform_indices = @transform_8, window_bounds = array<i64: 8, 15, 128>}]} {
    %c0 = arith.constant 0 : index
    %c0_0 = arith.constant 0 : index
    %0 = vector.load %arg2[%c0, %c0_0] : memref<128x90xf32, #tpu.memory_space<vmem>>, vector<128x90xf32>
    %c0_1 = arith.constant 0 : index
    %c0_2 = arith.constant 0 : index
    %1 = vector.load %arg3[%c0_1, %c0_2] : memref<128x32xf32, #tpu.memory_space<vmem>>, vector<128x32xf32>
    %c0_3 = arith.constant 0 : index
    %c0_4 = arith.constant 0 : index
    %2 = vector.load %arg4[%c0_3, %c0_4] : memref<15x32xf32, #tpu.memory_space<vmem>>, vector<15x32xf32>
    %c0_5 = arith.constant 0 : index
    %c0_6 = arith.constant 0 : index
    %3 = vector.load %arg5[%c0_5, %c0_6] : memref<90x15xf32, #tpu.memory_space<vmem>>, vector<90x15xf32>
    %c0_7 = arith.constant 0 : index
    %c0_8 = arith.constant 0 : index
    %4 = vector.load %arg6[%c0_7, %c0_8] : memref<32x90xf32, #tpu.memory_space<vmem>>, vector<32x90xf32>
    %c0_9 = arith.constant 0 : index
    %c0_10 = arith.constant 0 : index
    %5 = vector.load %arg7[%c0_9, %c0_10] : memref<4x32xf32, #tpu.memory_space<vmem>>, vector<4x32xf32>
    %c0_i32 = arith.constant 0 : i32
    %6 = arith.index_cast %c0_i32 : i32 to index
    %c0_11 = arith.constant 0 : index
    %c0_12 = arith.constant 0 : index
    %7 = vector.load %arg1[%6, %c0_11, %c0_12] : memref<8x90x128xf32, #tpu.memory_space<vmem>>, vector<1x90x128xf32>
    %8 = vector.shape_cast %7 : vector<1x90x128xf32> to vector<90x128xf32>
    %cst = arith.constant dense<0.000000e+00> : vector<128x128xf32>
    %9 = tpu.matmul %0, %8, %cst {dimension_numbers = #tpu.dot_dimension_numbers<[1], [0], [0], [1], [0, 0, 1, 1], [], []>} : vector<128x90xf32>, vector<90x128xf32>, vector<128x128xf32> -> vector<128x128xf32>
    %10 = arith.index_cast %c0_i32 : i32 to index
    %c0_13 = arith.constant 0 : index
    %c0_14 = arith.constant 0 : index
    %11 = vector.load %arg10[%10, %c0_13, %c0_14] : memref<8x128x128xf32, #tpu.memory_space<vmem>>, vector<1x128x128xf32>
    %12 = vector.shape_cast %11 : vector<1x128x128xf32> to vector<128x128xf32>
    %13 = vector.shape_cast %9 : vector<128x128xf32> to vector<1x128x128xf32>
    tpu.vector_store %arg10[%10, %c0_13, %c0_14], %13 {strides = array<i32>} : memref<8x128x128xf32, #tpu.memory_space<vmem>>, vector<1x128x128xf32>,
    %c1_i32 = arith.constant 1 : i32
    %14 = arith.index_cast %c1_i32 : i32 to index
    %c0_15 = arith.constant 0 : index
    %c0_16 = arith.constant 0 : index
    %15 = vector.load %arg1[%14, %c0_15, %c0_16] : memref<8x90x128xf32, #tpu.memory_space<vmem>>, vector<1x90x128xf32>
    %16 = vector.shape_cast %15 : vector<1x90x128xf32> to vector<90x128xf32>
    %cst_17 = arith.constant dense<0.000000e+00> : vector<128x128xf32>
    %17 = tpu.matmul %0, %16, %cst_17 {dimension_numbers = #tpu.dot_dimension_numbers<[1], [0], [0], [1], [0, 0, 1, 1], [], []>} : vector<128x90xf32>, vector<90x128xf32>, vector<128x128xf32> -> vector<128x128xf32>
    %18 = arith.index_cast %c1_i32 : i32 to index
    %c0_18 = arith.constant 0 : index
    %c0_19 = arith.constant 0 : index
    %19 = vector.load %arg10[%18, %c0_18, %c0_19] : memref<8x128x128xf32, #tpu.memory_space<vmem>>, vector<1x128x128xf32>
    %20 = vector.shape_cast %19 : vector<1x128x128xf32> to vector<128x128xf32>
    %21 = vector.shape_cast %17 : vector<128x128xf32> to vector<1x128x128xf32>
    tpu.vector_store %arg10[%18, %c0_18, %c0_19], %21 {strides = array<i32>} : memref<8x128x128xf32, #tpu.memory_space<vmem>>, vector<1x128x128xf32>,
    %c2_i32 = arith.constant 2 : i32
    %22 = arith.index_cast %c2_i32 : i32 to index
    %c0_20 = arith.constant 0 : index
    %c0_21 = arith.constant 0 : index
    %23 = vector.load %arg1[%22, %c0_20, %c0_21] : memref<8x90x128xf32, #tpu.memory_space<vmem>>, vector<1x90x128xf32>
    %24 = vector.shape_cast %23 : vector<1x90x128xf32> to vector<90x128xf32>
    %cst_22 = arith.constant dense<0.000000e+00> : vector<128x128xf32>
    %25 = tpu.matmul %0, %24, %cst_22 {dimension_numbers = #tpu.dot_dimension_numbers<[1], [0], [0], [1], [0, 0, 1, 1], [], []>} : vector<128x90xf32>, vector<90x128xf32>, vector<128x128xf32> -> vector<128x128xf32>
    %26 = arith.index_cast %c2_i32 : i32 to index
    %c0_23 = arith.constant 0 : index
    %c0_24 = arith.constant 0 : index
    %27 = vector.load %arg10[%26, %c0_23, %c0_24] : memref<8x128x128xf32, #tpu.memory_space<vmem>>, vector<1x128x128xf32>
    %28 = vector.shape_cast %27 : vector<1x128x128xf32> to vector<128x128xf32>
    %29 = vector.shape_cast %25 : vector<128x128xf32> to vector<1x128x128xf32>
    tpu.vector_store %arg10[%26, %c0_23, %c0_24], %29 {strides = array<i32>} : memref<8x128x128xf32, #tpu.memory_space<vmem>>, vector<1x128x128xf32>,
    %c3_i32 = arith.constant 3 : i32
    %30 = arith.index_cast %c3_i32 : i32 to index
    %c0_25 = arith.constant 0 : index
    %c0_26 = arith.constant 0 : index
    %31 = vector.load %arg1[%30, %c0_25, %c0_26] : memref<8x90x128xf32, #tpu.memory_space<vmem>>, vector<1x90x128xf32>
    %32 = vector.shape_cast %31 : vector<1x90x128xf32> to vector<90x128xf32>
    %cst_27 = arith.constant dense<0.000000e+00> : vector<128x128xf32>
    %33 = tpu.matmul %0, %32, %cst_27 {dimension_numbers = #tpu.dot_dimension_numbers<[1], [0], [0], [1], [0, 0, 1, 1], [], []>} : vector<128x90xf32>, vector<90x128xf32>, vector<128x128xf32> -> vector<128x128xf32>
    %34 = arith.index_cast %c3_i32 : i32 to index
    %c0_28 = arith.constant 0 : index
    %c0_29 = arith.constant 0 : index
    %35 = vector.load %arg10[%34, %c0_28, %c0_29] : memref<8x128x128xf32, #tpu.memory_space<vmem>>, vector<1x128x128xf32>
    %36 = vector.shape_cast %35 : vector<1x128x128xf32> to vector<128x128xf32>
    %37 = vector.shape_cast %33 : vector<128x128xf32> to vector<1x128x128xf32>
    tpu.vector_store %arg10[%34, %c0_28, %c0_29], %37 {strides = array<i32>} : memref<8x128x128xf32, #tpu.memory_space<vmem>>, vector<1x128x128xf32>,
    %c4_i32 = arith.constant 4 : i32
    %38 = arith.index_cast %c4_i32 : i32 to index
    %c0_30 = arith.constant 0 : index
    %c0_31 = arith.constant 0 : index
    %39 = vector.load %arg1[%38, %c0_30, %c0_31] : memref<8x90x128xf32, #tpu.memory_space<vmem>>, vector<1x90x128xf32>
    %40 = vector.shape_cast %39 : vector<1x90x128xf32> to vector<90x128xf32>
    %cst_32 = arith.constant dense<0.000000e+00> : vector<128x128xf32>
    %41 = tpu.matmul %0, %40, %cst_32 {dimension_numbers = #tpu.dot_dimension_numbers<[1], [0], [0], [1], [0, 0, 1, 1], [], []>} : vector<128x90xf32>, vector<90x128xf32>, vector<128x128xf32> -> vector<128x128xf32>
    %42 = arith.index_cast %c4_i32 : i32 to index
    %c0_33 = arith.constant 0 : index
    %c0_34 = arith.constant 0 : index
    %43 = vector.load %arg10[%42, %c0_33, %c0_34] : memref<8x128x128xf32, #tpu.memory_space<vmem>>, vector<1x128x128xf32>
    %44 = vector.shape_cast %43 : vector<1x128x128xf32> to vector<128x128xf32>
    %45 = vector.shape_cast %41 : vector<128x128xf32> to vector<1x128x128xf32>
    tpu.vector_store %arg10[%42, %c0_33, %c0_34], %45 {strides = array<i32>} : memref<8x128x128xf32, #tpu.memory_space<vmem>>, vector<1x128x128xf32>,
    %c5_i32 = arith.constant 5 : i32
    %46 = arith.index_cast %c5_i32 : i32 to index
    %c0_35 = arith.constant 0 : index
    %c0_36 = arith.constant 0 : index
    %47 = vector.load %arg1[%46, %c0_35, %c0_36] : memref<8x90x128xf32, #tpu.memory_space<vmem>>, vector<1x90x128xf32>
    %48 = vector.shape_cast %47 : vector<1x90x128xf32> to vector<90x128xf32>
    %cst_37 = arith.constant dense<0.000000e+00> : vector<128x128xf32>
    %49 = tpu.matmul %0, %48, %cst_37 {dimension_numbers = #tpu.dot_dimension_numbers<[1], [0], [0], [1], [0, 0, 1, 1], [], []>} : vector<128x90xf32>, vector<90x128xf32>, vector<128x128xf32> -> vector<128x128xf32>
    %50 = arith.index_cast %c5_i32 : i32 to index
    %c0_38 = arith.constant 0 : index
    %c0_39 = arith.constant 0 : index
    %51 = vector.load %arg10[%50, %c0_38, %c0_39] : memref<8x128x128xf32, #tpu.memory_space<vmem>>, vector<1x128x128xf32>
    %52 = vector.shape_cast %51 : vector<1x128x128xf32> to vector<128x128xf32>
    %53 = vector.shape_cast %49 : vector<128x128xf32> to vector<1x128x128xf32>
    tpu.vector_store %arg10[%50, %c0_38, %c0_39], %53 {strides = array<i32>} : memref<8x128x128xf32, #tpu.memory_space<vmem>>, vector<1x128x128xf32>,
    %c6_i32 = arith.constant 6 : i32
    %54 = arith.index_cast %c6_i32 : i32 to index
    %c0_40 = arith.constant 0 : index
    %c0_41 = arith.constant 0 : index
    %55 = vector.load %arg1[%54, %c0_40, %c0_41] : memref<8x90x128xf32, #tpu.memory_space<vmem>>, vector<1x90x128xf32>
    %56 = vector.shape_cast %55 : vector<1x90x128xf32> to vector<90x128xf32>
    %cst_42 = arith.constant dense<0.000000e+00> : vector<128x128xf32>
    %57 = tpu.matmul %0, %56, %cst_42 {dimension_numbers = #tpu.dot_dimension_numbers<[1], [0], [0], [1], [0, 0, 1, 1], [], []>} : vector<128x90xf32>, vector<90x128xf32>, vector<128x128xf32> -> vector<128x128xf32>
    %58 = arith.index_cast %c6_i32 : i32 to index
    %c0_43 = arith.constant 0 : index
    %c0_44 = arith.constant 0 : index
    %59 = vector.load %arg10[%58, %c0_43, %c0_44] : memref<8x128x128xf32, #tpu.memory_space<vmem>>, vector<1x128x128xf32>
    %60 = vector.shape_cast %59 : vector<1x128x128xf32> to vector<128x128xf32>
    %61 = vector.shape_cast %57 : vector<128x128xf32> to vector<1x128x128xf32>
    tpu.vector_store %arg10[%58, %c0_43, %c0_44], %61 {strides = array<i32>} : memref<8x128x128xf32, #tpu.memory_space<vmem>>, vector<1x128x128xf32>,
    %c7_i32 = arith.constant 7 : i32
    %62 = arith.index_cast %c7_i32 : i32 to index
    %c0_45 = arith.constant 0 : index
    %c0_46 = arith.constant 0 : index
    %63 = vector.load %arg1[%62, %c0_45, %c0_46] : memref<8x90x128xf32, #tpu.memory_space<vmem>>, vector<1x90x128xf32>
    %64 = vector.shape_cast %63 : vector<1x90x128xf32> to vector<90x128xf32>
    %cst_47 = arith.constant dense<0.000000e+00> : vector<128x128xf32>
    %65 = tpu.matmul %0, %64, %cst_47 {dimension_numbers = #tpu.dot_dimension_numbers<[1], [0], [0], [1], [0, 0, 1, 1], [], []>} : vector<128x90xf32>, vector<90x128xf32>, vector<128x128xf32> -> vector<128x128xf32>
    %66 = arith.index_cast %c7_i32 : i32 to index
    %c0_48 = arith.constant 0 : index
    %c0_49 = arith.constant 0 : index
    %67 = vector.load %arg10[%66, %c0_48, %c0_49] : memref<8x128x128xf32, #tpu.memory_space<vmem>>, vector<1x128x128xf32>
    %68 = vector.shape_cast %67 : vector<1x128x128xf32> to vector<128x128xf32>
    %69 = vector.shape_cast %65 : vector<128x128xf32> to vector<1x128x128xf32>
    tpu.vector_store %arg10[%66, %c0_48, %c0_49], %69 {strides = array<i32>} : memref<8x128x128xf32, #tpu.memory_space<vmem>>, vector<1x128x128xf32>,
    %c8_i32 = arith.constant 8 : i32
    %cst_50 = arith.constant 0.000000e+00 : f32
    %70 = vector.broadcast %cst_50 : f32 to vector<32x128xf32>
    %c0_i32_51 = arith.constant 0 : i32
    %71 = arith.index_cast %c0_i32_51 : i32 to index
    %c0_52 = arith.constant 0 : index
    %c0_53 = arith.constant 0 : index
    %72 = vector.load %arg10[%71, %c0_52, %c0_53] : memref<8x128x128xf32, #tpu.memory_space<vmem>>, vector<1x128x128xf32>
    %73 = vector.shape_cast %72 : vector<1x128x128xf32> to vector<128x128xf32>
    %cst_54 = arith.constant dense<0.000000e+00> : vector<128x128xf32>
    %74 = tpu.matmul %1, %70, %cst_54 {dimension_numbers = #tpu.dot_dimension_numbers<[1], [0], [0], [1], [0, 0, 1, 1], [], []>} : vector<128x32xf32>, vector<32x128xf32>, vector<128x128xf32> -> vector<128x128xf32>
    %75 = arith.addf %73, %74 : vector<128x128xf32>
    %76 = vector.extract_strided_slice %75 {offsets = [0, 0], sizes = [96, 128], strides = [1, 1]} : vector<128x128xf32> to vector<96x128xf32>
    %77 = arith.negf %76 : vector<96x128xf32>
    %78 = math.exp %77 : vector<96x128xf32>
    %cst_55 = arith.constant 1.000000e+00 : f32
    %79 = vector.broadcast %cst_55 : f32 to vector<96x128xf32>
    %80 = arith.addf %79, %78 : vector<96x128xf32>
    %81 = arith.divf %79, %80 : vector<96x128xf32>
    %82 = vector.extract_strided_slice %81 {offsets = [0, 0], sizes = [32, 128], strides = [1, 1]} : vector<96x128xf32> to vector<32x128xf32>
    %83 = vector.extract_strided_slice %81 {offsets = [32, 0], sizes = [32, 128], strides = [1, 1]} : vector<96x128xf32> to vector<32x128xf32>
    %84 = vector.extract_strided_slice %81 {offsets = [64, 0], sizes = [32, 128], strides = [1, 1]} : vector<96x128xf32> to vector<32x128xf32>
    %85 = vector.extract_strided_slice %75 {offsets = [96, 0], sizes = [32, 128], strides = [1, 1]} : vector<128x128xf32> to vector<32x128xf32>
    %86 = math.tanh %85 : vector<32x128xf32>
    %87 = arith.mulf %83, %70 : vector<32x128xf32>
    %88 = arith.mulf %82, %86 : vector<32x128xf32>
    %89 = arith.addf %87, %88 : vector<32x128xf32>
    %90 = math.tanh %89 : vector<32x128xf32>
    %91 = arith.mulf %84, %90 : vector<32x128xf32>
    %92 = arith.index_cast %c0_i32_51 : i32 to index
    %c0_56 = arith.constant 0 : index
    %c0_57 = arith.constant 0 : index
    %93 = vector.load %arg11[%92, %c0_56, %c0_57] : memref<8x32x128xf32, #tpu.memory_space<vmem>>, vector<1x32x128xf32>
    %94 = vector.shape_cast %93 : vector<1x32x128xf32> to vector<32x128xf32>
    %95 = vector.shape_cast %91 : vector<32x128xf32> to vector<1x32x128xf32>
    tpu.vector_store %arg11[%92, %c0_56, %c0_57], %95 {strides = array<i32>} : memref<8x32x128xf32, #tpu.memory_space<vmem>>, vector<1x32x128xf32>,
    %c1_i32_58 = arith.constant 1 : i32
    %96 = arith.index_cast %c1_i32_58 : i32 to index
    %c0_59 = arith.constant 0 : index
    %c0_60 = arith.constant 0 : index
    %97 = vector.load %arg10[%96, %c0_59, %c0_60] : memref<8x128x128xf32, #tpu.memory_space<vmem>>, vector<1x128x128xf32>
    %98 = vector.shape_cast %97 : vector<1x128x128xf32> to vector<128x128xf32>
    %cst_61 = arith.constant dense<0.000000e+00> : vector<128x128xf32>
    %99 = tpu.matmul %1, %91, %cst_61 {dimension_numbers = #tpu.dot_dimension_numbers<[1], [0], [0], [1], [0, 0, 1, 1], [], []>} : vector<128x32xf32>, vector<32x128xf32>, vector<128x128xf32> -> vector<128x128xf32>
    %100 = arith.addf %98, %99 : vector<128x128xf32>
    %101 = vector.extract_strided_slice %100 {offsets = [0, 0], sizes = [96, 128], strides = [1, 1]} : vector<128x128xf32> to vector<96x128xf32>
    %102 = arith.negf %101 : vector<96x128xf32>
    %103 = math.exp %102 : vector<96x128xf32>
    %cst_62 = arith.constant 1.000000e+00 : f32
    %104 = vector.broadcast %cst_62 : f32 to vector<96x128xf32>
    %105 = arith.addf %104, %103 : vector<96x128xf32>
    %106 = arith.divf %104, %105 : vector<96x128xf32>
    %107 = vector.extract_strided_slice %106 {offsets = [0, 0], sizes = [32, 128], strides = [1, 1]} : vector<96x128xf32> to vector<32x128xf32>
    %108 = vector.extract_strided_slice %106 {offsets = [32, 0], sizes = [32, 128], strides = [1, 1]} : vector<96x128xf32> to vector<32x128xf32>
    %109 = vector.extract_strided_slice %106 {offsets = [64, 0], sizes = [32, 128], strides = [1, 1]} : vector<96x128xf32> to vector<32x128xf32>
    %110 = vector.extract_strided_slice %100 {offsets = [96, 0], sizes = [32, 128], strides = [1, 1]} : vector<128x128xf32> to vector<32x128xf32>
    %111 = math.tanh %110 : vector<32x128xf32>
    %112 = arith.mulf %108, %89 : vector<32x128xf32>
    %113 = arith.mulf %107, %111 : vector<32x128xf32>
    %114 = arith.addf %112, %113 : vector<32x128xf32>
    %115 = math.tanh %114 : vector<32x128xf32>
    %116 = arith.mulf %109, %115 : vector<32x128xf32>
    %117 = arith.index_cast %c1_i32_58 : i32 to index
    %c0_63 = arith.constant 0 : index
    %c0_64 = arith.constant 0 : index
    %118 = vector.load %arg11[%117, %c0_63, %c0_64] : memref<8x32x128xf32, #tpu.memory_space<vmem>>, vector<1x32x128xf32>
    %119 = vector.shape_cast %118 : vector<1x32x128xf32> to vector<32x128xf32>
    %120 = vector.shape_cast %116 : vector<32x128xf32> to vector<1x32x128xf32>
    tpu.vector_store %arg11[%117, %c0_63, %c0_64], %120 {strides = array<i32>} : memref<8x32x128xf32, #tpu.memory_space<vmem>>, vector<1x32x128xf32>,
    %c2_i32_65 = arith.constant 2 : i32
    %121 = arith.index_cast %c2_i32_65 : i32 to index
    %c0_66 = arith.constant 0 : index
    %c0_67 = arith.constant 0 : index
    %122 = vector.load %arg10[%121, %c0_66, %c0_67] : memref<8x128x128xf32, #tpu.memory_space<vmem>>, vector<1x128x128xf32>
    %123 = vector.shape_cast %122 : vector<1x128x128xf32> to vector<128x128xf32>
    %cst_68 = arith.constant dense<0.000000e+00> : vector<128x128xf32>
    %124 = tpu.matmul %1, %116, %cst_68 {dimension_numbers = #tpu.dot_dimension_numbers<[1], [0], [0], [1], [0, 0, 1, 1], [], []>} : vector<128x32xf32>, vector<32x128xf32>, vector<128x128xf32> -> vector<128x128xf32>
    %125 = arith.addf %123, %124 : vector<128x128xf32>
    %126 = vector.extract_strided_slice %125 {offsets = [0, 0], sizes = [96, 128], strides = [1, 1]} : vector<128x128xf32> to vector<96x128xf32>
    %127 = arith.negf %126 : vector<96x128xf32>
    %128 = math.exp %127 : vector<96x128xf32>
    %cst_69 = arith.constant 1.000000e+00 : f32
    %129 = vector.broadcast %cst_69 : f32 to vector<96x128xf32>
    %130 = arith.addf %129, %128 : vector<96x128xf32>
    %131 = arith.divf %129, %130 : vector<96x128xf32>
    %132 = vector.extract_strided_slice %131 {offsets = [0, 0], sizes = [32, 128], strides = [1, 1]} : vector<96x128xf32> to vector<32x128xf32>
    %133 = vector.extract_strided_slice %131 {offsets = [32, 0], sizes = [32, 128], strides = [1, 1]} : vector<96x128xf32> to vector<32x128xf32>
    %134 = vector.extract_strided_slice %131 {offsets = [64, 0], sizes = [32, 128], strides = [1, 1]} : vector<96x128xf32> to vector<32x128xf32>
    %135 = vector.extract_strided_slice %125 {offsets = [96, 0], sizes = [32, 128], strides = [1, 1]} : vector<128x128xf32> to vector<32x128xf32>
    %136 = math.tanh %135 : vector<32x128xf32>
    %137 = arith.mulf %133, %114 : vector<32x128xf32>
    %138 = arith.mulf %132, %136 : vector<32x128xf32>
    %139 = arith.addf %137, %138 : vector<32x128xf32>
    %140 = math.tanh %139 : vector<32x128xf32>
    %141 = arith.mulf %134, %140 : vector<32x128xf32>
    %142 = arith.index_cast %c2_i32_65 : i32 to index
    %c0_70 = arith.constant 0 : index
    %c0_71 = arith.constant 0 : index
    %143 = vector.load %arg11[%142, %c0_70, %c0_71] : memref<8x32x128xf32, #tpu.memory_space<vmem>>, vector<1x32x128xf32>
    %144 = vector.shape_cast %143 : vector<1x32x128xf32> to vector<32x128xf32>
    %145 = vector.shape_cast %141 : vector<32x128xf32> to vector<1x32x128xf32>
    tpu.vector_store %arg11[%142, %c0_70, %c0_71], %145 {strides = array<i32>} : memref<8x32x128xf32, #tpu.memory_space<vmem>>, vector<1x32x128xf32>,
    %c3_i32_72 = arith.constant 3 : i32
    %146 = arith.index_cast %c3_i32_72 : i32 to index
    %c0_73 = arith.constant 0 : index
    %c0_74 = arith.constant 0 : index
    %147 = vector.load %arg10[%146, %c0_73, %c0_74] : memref<8x128x128xf32, #tpu.memory_space<vmem>>, vector<1x128x128xf32>
    %148 = vector.shape_cast %147 : vector<1x128x128xf32> to vector<128x128xf32>
    %cst_75 = arith.constant dense<0.000000e+00> : vector<128x128xf32>
    %149 = tpu.matmul %1, %141, %cst_75 {dimension_numbers = #tpu.dot_dimension_numbers<[1], [0], [0], [1], [0, 0, 1, 1], [], []>} : vector<128x32xf32>, vector<32x128xf32>, vector<128x128xf32> -> vector<128x128xf32>
    %150 = arith.addf %148, %149 : vector<128x128xf32>
    %151 = vector.extract_strided_slice %150 {offsets = [0, 0], sizes = [96, 128], strides = [1, 1]} : vector<128x128xf32> to vector<96x128xf32>
    %152 = arith.negf %151 : vector<96x128xf32>
    %153 = math.exp %152 : vector<96x128xf32>
    %cst_76 = arith.constant 1.000000e+00 : f32
    %154 = vector.broadcast %cst_76 : f32 to vector<96x128xf32>
    %155 = arith.addf %154, %153 : vector<96x128xf32>
    %156 = arith.divf %154, %155 : vector<96x128xf32>
    %157 = vector.extract_strided_slice %156 {offsets = [0, 0], sizes = [32, 128], strides = [1, 1]} : vector<96x128xf32> to vector<32x128xf32>
    %158 = vector.extract_strided_slice %156 {offsets = [32, 0], sizes = [32, 128], strides = [1, 1]} : vector<96x128xf32> to vector<32x128xf32>
    %159 = vector.extract_strided_slice %156 {offsets = [64, 0], sizes = [32, 128], strides = [1, 1]} : vector<96x128xf32> to vector<32x128xf32>
    %160 = vector.extract_strided_slice %150 {offsets = [96, 0], sizes = [32, 128], strides = [1, 1]} : vector<128x128xf32> to vector<32x128xf32>
    %161 = math.tanh %160 : vector<32x128xf32>
    %162 = arith.mulf %158, %139 : vector<32x128xf32>
    %163 = arith.mulf %157, %161 : vector<32x128xf32>
    %164 = arith.addf %162, %163 : vector<32x128xf32>
    %165 = math.tanh %164 : vector<32x128xf32>
    %166 = arith.mulf %159, %165 : vector<32x128xf32>
    %167 = arith.index_cast %c3_i32_72 : i32 to index
    %c0_77 = arith.constant 0 : index
    %c0_78 = arith.constant 0 : index
    %168 = vector.load %arg11[%167, %c0_77, %c0_78] : memref<8x32x128xf32, #tpu.memory_space<vmem>>, vector<1x32x128xf32>
    %169 = vector.shape_cast %168 : vector<1x32x128xf32> to vector<32x128xf32>
    %170 = vector.shape_cast %166 : vector<32x128xf32> to vector<1x32x128xf32>
    tpu.vector_store %arg11[%167, %c0_77, %c0_78], %170 {strides = array<i32>} : memref<8x32x128xf32, #tpu.memory_space<vmem>>, vector<1x32x128xf32>,
    %c4_i32_79 = arith.constant 4 : i32
    %171 = arith.index_cast %c4_i32_79 : i32 to index
    %c0_80 = arith.constant 0 : index
    %c0_81 = arith.constant 0 : index
    %172 = vector.load %arg10[%171, %c0_80, %c0_81] : memref<8x128x128xf32, #tpu.memory_space<vmem>>, vector<1x128x128xf32>
    %173 = vector.shape_cast %172 : vector<1x128x128xf32> to vector<128x128xf32>
    %cst_82 = arith.constant dense<0.000000e+00> : vector<128x128xf32>
    %174 = tpu.matmul %1, %166, %cst_82 {dimension_numbers = #tpu.dot_dimension_numbers<[1], [0], [0], [1], [0, 0, 1, 1], [], []>} : vector<128x32xf32>, vector<32x128xf32>, vector<128x128xf32> -> vector<128x128xf32>
    %175 = arith.addf %173, %174 : vector<128x128xf32>
    %176 = vector.extract_strided_slice %175 {offsets = [0, 0], sizes = [96, 128], strides = [1, 1]} : vector<128x128xf32> to vector<96x128xf32>
    %177 = arith.negf %176 : vector<96x128xf32>
    %178 = math.exp %177 : vector<96x128xf32>
    %cst_83 = arith.constant 1.000000e+00 : f32
    %179 = vector.broadcast %cst_83 : f32 to vector<96x128xf32>
    %180 = arith.addf %179, %178 : vector<96x128xf32>
    %181 = arith.divf %179, %180 : vector<96x128xf32>
    %182 = vector.extract_strided_slice %181 {offsets = [0, 0], sizes = [32, 128], strides = [1, 1]} : vector<96x128xf32> to vector<32x128xf32>
    %183 = vector.extract_strided_slice %181 {offsets = [32, 0], sizes = [32, 128], strides = [1, 1]} : vector<96x128xf32> to vector<32x128xf32>
    %184 = vector.extract_strided_slice %181 {offsets = [64, 0], sizes = [32, 128], strides = [1, 1]} : vector<96x128xf32> to vector<32x128xf32>
    %185 = vector.extract_strided_slice %175 {offsets = [96, 0], sizes = [32, 128], strides = [1, 1]} : vector<128x128xf32> to vector<32x128xf32>
    %186 = math.tanh %185 : vector<32x128xf32>
    %187 = arith.mulf %183, %164 : vector<32x128xf32>
    %188 = arith.mulf %182, %186 : vector<32x128xf32>
    %189 = arith.addf %187, %188 : vector<32x128xf32>
    %190 = math.tanh %189 : vector<32x128xf32>
    %191 = arith.mulf %184, %190 : vector<32x128xf32>
    %192 = arith.index_cast %c4_i32_79 : i32 to index
    %c0_84 = arith.constant 0 : index
    %c0_85 = arith.constant 0 : index
    %193 = vector.load %arg11[%192, %c0_84, %c0_85] : memref<8x32x128xf32, #tpu.memory_space<vmem>>, vector<1x32x128xf32>
    %194 = vector.shape_cast %193 : vector<1x32x128xf32> to vector<32x128xf32>
    %195 = vector.shape_cast %191 : vector<32x128xf32> to vector<1x32x128xf32>
    tpu.vector_store %arg11[%192, %c0_84, %c0_85], %195 {strides = array<i32>} : memref<8x32x128xf32, #tpu.memory_space<vmem>>, vector<1x32x128xf32>,
    %c5_i32_86 = arith.constant 5 : i32
    %196 = arith.index_cast %c5_i32_86 : i32 to index
    %c0_87 = arith.constant 0 : index
    %c0_88 = arith.constant 0 : index
    %197 = vector.load %arg10[%196, %c0_87, %c0_88] : memref<8x128x128xf32, #tpu.memory_space<vmem>>, vector<1x128x128xf32>
    %198 = vector.shape_cast %197 : vector<1x128x128xf32> to vector<128x128xf32>
    %cst_89 = arith.constant dense<0.000000e+00> : vector<128x128xf32>
    %199 = tpu.matmul %1, %191, %cst_89 {dimension_numbers = #tpu.dot_dimension_numbers<[1], [0], [0], [1], [0, 0, 1, 1], [], []>} : vector<128x32xf32>, vector<32x128xf32>, vector<128x128xf32> -> vector<128x128xf32>
    %200 = arith.addf %198, %199 : vector<128x128xf32>
    %201 = vector.extract_strided_slice %200 {offsets = [0, 0], sizes = [96, 128], strides = [1, 1]} : vector<128x128xf32> to vector<96x128xf32>
    %202 = arith.negf %201 : vector<96x128xf32>
    %203 = math.exp %202 : vector<96x128xf32>
    %cst_90 = arith.constant 1.000000e+00 : f32
    %204 = vector.broadcast %cst_90 : f32 to vector<96x128xf32>
    %205 = arith.addf %204, %203 : vector<96x128xf32>
    %206 = arith.divf %204, %205 : vector<96x128xf32>
    %207 = vector.extract_strided_slice %206 {offsets = [0, 0], sizes = [32, 128], strides = [1, 1]} : vector<96x128xf32> to vector<32x128xf32>
    %208 = vector.extract_strided_slice %206 {offsets = [32, 0], sizes = [32, 128], strides = [1, 1]} : vector<96x128xf32> to vector<32x128xf32>
    %209 = vector.extract_strided_slice %206 {offsets = [64, 0], sizes = [32, 128], strides = [1, 1]} : vector<96x128xf32> to vector<32x128xf32>
    %210 = vector.extract_strided_slice %200 {offsets = [96, 0], sizes = [32, 128], strides = [1, 1]} : vector<128x128xf32> to vector<32x128xf32>
    %211 = math.tanh %210 : vector<32x128xf32>
    %212 = arith.mulf %208, %189 : vector<32x128xf32>
    %213 = arith.mulf %207, %211 : vector<32x128xf32>
    %214 = arith.addf %212, %213 : vector<32x128xf32>
    %215 = math.tanh %214 : vector<32x128xf32>
    %216 = arith.mulf %209, %215 : vector<32x128xf32>
    %217 = arith.index_cast %c5_i32_86 : i32 to index
    %c0_91 = arith.constant 0 : index
    %c0_92 = arith.constant 0 : index
    %218 = vector.load %arg11[%217, %c0_91, %c0_92] : memref<8x32x128xf32, #tpu.memory_space<vmem>>, vector<1x32x128xf32>
    %219 = vector.shape_cast %218 : vector<1x32x128xf32> to vector<32x128xf32>
    %220 = vector.shape_cast %216 : vector<32x128xf32> to vector<1x32x128xf32>
    tpu.vector_store %arg11[%217, %c0_91, %c0_92], %220 {strides = array<i32>} : memref<8x32x128xf32, #tpu.memory_space<vmem>>, vector<1x32x128xf32>,
    %c6_i32_93 = arith.constant 6 : i32
    %221 = arith.index_cast %c6_i32_93 : i32 to index
    %c0_94 = arith.constant 0 : index
    %c0_95 = arith.constant 0 : index
    %222 = vector.load %arg10[%221, %c0_94, %c0_95] : memref<8x128x128xf32, #tpu.memory_space<vmem>>, vector<1x128x128xf32>
    %223 = vector.shape_cast %222 : vector<1x128x128xf32> to vector<128x128xf32>
    %cst_96 = arith.constant dense<0.000000e+00> : vector<128x128xf32>
    %224 = tpu.matmul %1, %216, %cst_96 {dimension_numbers = #tpu.dot_dimension_numbers<[1], [0], [0], [1], [0, 0, 1, 1], [], []>} : vector<128x32xf32>, vector<32x128xf32>, vector<128x128xf32> -> vector<128x128xf32>
    %225 = arith.addf %223, %224 : vector<128x128xf32>
    %226 = vector.extract_strided_slice %225 {offsets = [0, 0], sizes = [96, 128], strides = [1, 1]} : vector<128x128xf32> to vector<96x128xf32>
    %227 = arith.negf %226 : vector<96x128xf32>
    %228 = math.exp %227 : vector<96x128xf32>
    %cst_97 = arith.constant 1.000000e+00 : f32
    %229 = vector.broadcast %cst_97 : f32 to vector<96x128xf32>
    %230 = arith.addf %229, %228 : vector<96x128xf32>
    %231 = arith.divf %229, %230 : vector<96x128xf32>
    %232 = vector.extract_strided_slice %231 {offsets = [0, 0], sizes = [32, 128], strides = [1, 1]} : vector<96x128xf32> to vector<32x128xf32>
    %233 = vector.extract_strided_slice %231 {offsets = [32, 0], sizes = [32, 128], strides = [1, 1]} : vector<96x128xf32> to vector<32x128xf32>
    %234 = vector.extract_strided_slice %231 {offsets = [64, 0], sizes = [32, 128], strides = [1, 1]} : vector<96x128xf32> to vector<32x128xf32>
    %235 = vector.extract_strided_slice %225 {offsets = [96, 0], sizes = [32, 128], strides = [1, 1]} : vector<128x128xf32> to vector<32x128xf32>
    %236 = math.tanh %235 : vector<32x128xf32>
    %237 = arith.mulf %233, %214 : vector<32x128xf32>
    %238 = arith.mulf %232, %236 : vector<32x128xf32>
    %239 = arith.addf %237, %238 : vector<32x128xf32>
    %240 = math.tanh %239 : vector<32x128xf32>
    %241 = arith.mulf %234, %240 : vector<32x128xf32>
    %242 = arith.index_cast %c6_i32_93 : i32 to index
    %c0_98 = arith.constant 0 : index
    %c0_99 = arith.constant 0 : index
    %243 = vector.load %arg11[%242, %c0_98, %c0_99] : memref<8x32x128xf32, #tpu.memory_space<vmem>>, vector<1x32x128xf32>
    %244 = vector.shape_cast %243 : vector<1x32x128xf32> to vector<32x128xf32>
    %245 = vector.shape_cast %241 : vector<32x128xf32> to vector<1x32x128xf32>
    tpu.vector_store %arg11[%242, %c0_98, %c0_99], %245 {strides = array<i32>} : memref<8x32x128xf32, #tpu.memory_space<vmem>>, vector<1x32x128xf32>,
    %c7_i32_100 = arith.constant 7 : i32
    %246 = arith.index_cast %c7_i32_100 : i32 to index
    %c0_101 = arith.constant 0 : index
    %c0_102 = arith.constant 0 : index
    %247 = vector.load %arg10[%246, %c0_101, %c0_102] : memref<8x128x128xf32, #tpu.memory_space<vmem>>, vector<1x128x128xf32>
    %248 = vector.shape_cast %247 : vector<1x128x128xf32> to vector<128x128xf32>
    %cst_103 = arith.constant dense<0.000000e+00> : vector<128x128xf32>
    %249 = tpu.matmul %1, %241, %cst_103 {dimension_numbers = #tpu.dot_dimension_numbers<[1], [0], [0], [1], [0, 0, 1, 1], [], []>} : vector<128x32xf32>, vector<32x128xf32>, vector<128x128xf32> -> vector<128x128xf32>
    %250 = arith.addf %248, %249 : vector<128x128xf32>
    %251 = vector.extract_strided_slice %250 {offsets = [0, 0], sizes = [96, 128], strides = [1, 1]} : vector<128x128xf32> to vector<96x128xf32>
    %252 = arith.negf %251 : vector<96x128xf32>
    %253 = math.exp %252 : vector<96x128xf32>
    %cst_104 = arith.constant 1.000000e+00 : f32
    %254 = vector.broadcast %cst_104 : f32 to vector<96x128xf32>
    %255 = arith.addf %254, %253 : vector<96x128xf32>
    %256 = arith.divf %254, %255 : vector<96x128xf32>
    %257 = vector.extract_strided_slice %256 {offsets = [0, 0], sizes = [32, 128], strides = [1, 1]} : vector<96x128xf32> to vector<32x128xf32>
    %258 = vector.extract_strided_slice %256 {offsets = [32, 0], sizes = [32, 128], strides = [1, 1]} : vector<96x128xf32> to vector<32x128xf32>
    %259 = vector.extract_strided_slice %256 {offsets = [64, 0], sizes = [32, 128], strides = [1, 1]} : vector<96x128xf32> to vector<32x128xf32>
    %260 = vector.extract_strided_slice %250 {offsets = [96, 0], sizes = [32, 128], strides = [1, 1]} : vector<128x128xf32> to vector<32x128xf32>
    %261 = math.tanh %260 : vector<32x128xf32>
    %262 = arith.mulf %258, %239 : vector<32x128xf32>
    %263 = arith.mulf %257, %261 : vector<32x128xf32>
    %264 = arith.addf %262, %263 : vector<32x128xf32>
    %265 = math.tanh %264 : vector<32x128xf32>
    %266 = arith.mulf %259, %265 : vector<32x128xf32>
    %267 = arith.index_cast %c7_i32_100 : i32 to index
    %c0_105 = arith.constant 0 : index
    %c0_106 = arith.constant 0 : index
    %268 = vector.load %arg11[%267, %c0_105, %c0_106] : memref<8x32x128xf32, #tpu.memory_space<vmem>>, vector<1x32x128xf32>
    %269 = vector.shape_cast %268 : vector<1x32x128xf32> to vector<32x128xf32>
    %270 = vector.shape_cast %266 : vector<32x128xf32> to vector<1x32x128xf32>
    tpu.vector_store %arg11[%267, %c0_105, %c0_106], %270 {strides = array<i32>} : memref<8x32x128xf32, #tpu.memory_space<vmem>>, vector<1x32x128xf32>,
    %c8_i32_107 = arith.constant 8 : i32
    %c0_i32_108 = arith.constant 0 : i32
    %271 = arith.index_cast %c0_i32_108 : i32 to index
    %c0_109 = arith.constant 0 : index
    %c0_110 = arith.constant 0 : index
    %272 = vector.load %arg11[%271, %c0_109, %c0_110] : memref<8x32x128xf32, #tpu.memory_space<vmem>>, vector<1x32x128xf32>
    %273 = vector.shape_cast %272 : vector<1x32x128xf32> to vector<32x128xf32>
    %cst_111 = arith.constant dense<0.000000e+00> : vector<15x128xf32>
    %274 = tpu.matmul %2, %273, %cst_111 {dimension_numbers = #tpu.dot_dimension_numbers<[1], [0], [0], [1], [0, 0, 1, 1], [], []>} : vector<15x32xf32>, vector<32x128xf32>, vector<15x128xf32> -> vector<15x128xf32>
    %275 = arith.index_cast %c0_i32_108 : i32 to index
    %c0_112 = arith.constant 0 : index
    %c0_113 = arith.constant 0 : index
    %276 = vector.load %arg9[%275, %c0_112, %c0_113] : memref<8x15x128xf32, #tpu.memory_space<vmem>>, vector<1x15x128xf32>
    %277 = vector.shape_cast %276 : vector<1x15x128xf32> to vector<15x128xf32>
    %278 = vector.shape_cast %274 : vector<15x128xf32> to vector<1x15x128xf32>
    tpu.vector_store %arg9[%275, %c0_112, %c0_113], %278 {strides = array<i32>} : memref<8x15x128xf32, #tpu.memory_space<vmem>>, vector<1x15x128xf32>,
    %cst_114 = arith.constant dense<0xFF800000> : vector<128xf32>
    %279 = vector.multi_reduction <maximumf>, %274, %cst_114 [0] : vector<15x128xf32> to vector<128xf32>
    %280 = vector.shape_cast %279 : vector<128xf32> to vector<1x128xf32>
    %281 = vector.broadcast %280 : vector<1x128xf32> to vector<15x128xf32>
    %282 = arith.subf %274, %281 : vector<15x128xf32>
    %283 = math.exp %282 : vector<15x128xf32>
    %cst_115 = arith.constant dense<0.000000e+00> : vector<128xf32>
    %284 = vector.multi_reduction <add>, %283, %cst_115 [0] : vector<15x128xf32> to vector<128xf32>
    %285 = vector.shape_cast %284 : vector<128xf32> to vector<1x128xf32>
    %286 = tpu.reciprocal %285 {approx = true} : vector<1x128xf32> -> vector<1x128xf32>
    %287 = vector.broadcast %286 : vector<1x128xf32> to vector<15x128xf32>
    %288 = arith.mulf %283, %287 : vector<15x128xf32>
    %cst_116 = arith.constant dense<0.000000e+00> : vector<90x128xf32>
    %289 = tpu.matmul %3, %288, %cst_116 {dimension_numbers = #tpu.dot_dimension_numbers<[1], [0], [0], [1], [0, 0, 1, 1], [], []>} : vector<90x15xf32>, vector<15x128xf32>, vector<90x128xf32> -> vector<90x128xf32>
    %290 = arith.index_cast %c0_i32_108 : i32 to index
    %c0_117 = arith.constant 0 : index
    %c0_118 = arith.constant 0 : index
    %291 = vector.load %arg1[%290, %c0_117, %c0_118] : memref<8x90x128xf32, #tpu.memory_space<vmem>>, vector<1x90x128xf32>
    %292 = vector.shape_cast %291 : vector<1x90x128xf32> to vector<90x128xf32>
    %293 = arith.mulf %289, %292 : vector<90x128xf32>
    %cst_119 = arith.constant dense<0.000000e+00> : vector<32x128xf32>
    %294 = tpu.matmul %4, %293, %cst_119 {dimension_numbers = #tpu.dot_dimension_numbers<[1], [0], [0], [1], [0, 0, 1, 1], [], []>} : vector<32x90xf32>, vector<90x128xf32>, vector<32x128xf32> -> vector<32x128xf32>
    %cst_120 = arith.constant 0.000000e+00 : f32
    %295 = vector.broadcast %cst_120 : f32 to vector<32x128xf32>
    %296 = arith.maximumf %294, %295 : vector<32x128xf32>
    %cst_121 = arith.constant dense<0.000000e+00> : vector<4x128xf32>
    %297 = tpu.matmul %5, %296, %cst_121 {dimension_numbers = #tpu.dot_dimension_numbers<[1], [0], [0], [1], [0, 0, 1, 1], [], []>} : vector<4x32xf32>, vector<32x128xf32>, vector<4x128xf32> -> vector<4x128xf32>
    %298 = arith.index_cast %c0_i32_108 : i32 to index
    %c0_122 = arith.constant 0 : index
    %c0_123 = arith.constant 0 : index
    %299 = vector.load %arg8[%298, %c0_122, %c0_123] : memref<8x4x128xf32, #tpu.memory_space<vmem>>, vector<1x4x128xf32>
    %300 = vector.shape_cast %299 : vector<1x4x128xf32> to vector<4x128xf32>
    %301 = vector.shape_cast %297 : vector<4x128xf32> to vector<1x4x128xf32>
    tpu.vector_store %arg8[%298, %c0_122, %c0_123], %301 {strides = array<i32>} : memref<8x4x128xf32, #tpu.memory_space<vmem>>, vector<1x4x128xf32>,
    %c1_i32_124 = arith.constant 1 : i32
    %302 = arith.index_cast %c1_i32_124 : i32 to index
    %c0_125 = arith.constant 0 : index
    %c0_126 = arith.constant 0 : index
    %303 = vector.load %arg11[%302, %c0_125, %c0_126] : memref<8x32x128xf32, #tpu.memory_space<vmem>>, vector<1x32x128xf32>
    %304 = vector.shape_cast %303 : vector<1x32x128xf32> to vector<32x128xf32>
    %cst_127 = arith.constant dense<0.000000e+00> : vector<15x128xf32>
    %305 = tpu.matmul %2, %304, %cst_127 {dimension_numbers = #tpu.dot_dimension_numbers<[1], [0], [0], [1], [0, 0, 1, 1], [], []>} : vector<15x32xf32>, vector<32x128xf32>, vector<15x128xf32> -> vector<15x128xf32>
    %306 = arith.index_cast %c1_i32_124 : i32 to index
    %c0_128 = arith.constant 0 : index
    %c0_129 = arith.constant 0 : index
    %307 = vector.load %arg9[%306, %c0_128, %c0_129] : memref<8x15x128xf32, #tpu.memory_space<vmem>>, vector<1x15x128xf32>
    %308 = vector.shape_cast %307 : vector<1x15x128xf32> to vector<15x128xf32>
    %309 = vector.shape_cast %305 : vector<15x128xf32> to vector<1x15x128xf32>
    tpu.vector_store %arg9[%306, %c0_128, %c0_129], %309 {strides = array<i32>} : memref<8x15x128xf32, #tpu.memory_space<vmem>>, vector<1x15x128xf32>,
    %cst_130 = arith.constant dense<0xFF800000> : vector<128xf32>
    %310 = vector.multi_reduction <maximumf>, %305, %cst_130 [0] : vector<15x128xf32> to vector<128xf32>
    %311 = vector.shape_cast %310 : vector<128xf32> to vector<1x128xf32>
    %312 = vector.broadcast %311 : vector<1x128xf32> to vector<15x128xf32>
    %313 = arith.subf %305, %312 : vector<15x128xf32>
    %314 = math.exp %313 : vector<15x128xf32>
    %cst_131 = arith.constant dense<0.000000e+00> : vector<128xf32>
    %315 = vector.multi_reduction <add>, %314, %cst_131 [0] : vector<15x128xf32> to vector<128xf32>
    %316 = vector.shape_cast %315 : vector<128xf32> to vector<1x128xf32>
    %317 = tpu.reciprocal %316 {approx = true} : vector<1x128xf32> -> vector<1x128xf32>
    %318 = vector.broadcast %317 : vector<1x128xf32> to vector<15x128xf32>
    %319 = arith.mulf %314, %318 : vector<15x128xf32>
    %cst_132 = arith.constant dense<0.000000e+00> : vector<90x128xf32>
    %320 = tpu.matmul %3, %319, %cst_132 {dimension_numbers = #tpu.dot_dimension_numbers<[1], [0], [0], [1], [0, 0, 1, 1], [], []>} : vector<90x15xf32>, vector<15x128xf32>, vector<90x128xf32> -> vector<90x128xf32>
    %321 = arith.index_cast %c1_i32_124 : i32 to index
    %c0_133 = arith.constant 0 : index
    %c0_134 = arith.constant 0 : index
    %322 = vector.load %arg1[%321, %c0_133, %c0_134] : memref<8x90x128xf32, #tpu.memory_space<vmem>>, vector<1x90x128xf32>
    %323 = vector.shape_cast %322 : vector<1x90x128xf32> to vector<90x128xf32>
    %324 = arith.mulf %320, %323 : vector<90x128xf32>
    %cst_135 = arith.constant dense<0.000000e+00> : vector<32x128xf32>
    %325 = tpu.matmul %4, %324, %cst_135 {dimension_numbers = #tpu.dot_dimension_numbers<[1], [0], [0], [1], [0, 0, 1, 1], [], []>} : vector<32x90xf32>, vector<90x128xf32>, vector<32x128xf32> -> vector<32x128xf32>
    %cst_136 = arith.constant 0.000000e+00 : f32
    %326 = vector.broadcast %cst_136 : f32 to vector<32x128xf32>
    %327 = arith.maximumf %325, %326 : vector<32x128xf32>
    %cst_137 = arith.constant dense<0.000000e+00> : vector<4x128xf32>
    %328 = tpu.matmul %5, %327, %cst_137 {dimension_numbers = #tpu.dot_dimension_numbers<[1], [0], [0], [1], [0, 0, 1, 1], [], []>} : vector<4x32xf32>, vector<32x128xf32>, vector<4x128xf32> -> vector<4x128xf32>
    %329 = arith.index_cast %c1_i32_124 : i32 to index
    %c0_138 = arith.constant 0 : index
    %c0_139 = arith.constant 0 : index
    %330 = vector.load %arg8[%329, %c0_138, %c0_139] : memref<8x4x128xf32, #tpu.memory_space<vmem>>, vector<1x4x128xf32>
    %331 = vector.shape_cast %330 : vector<1x4x128xf32> to vector<4x128xf32>
    %332 = vector.shape_cast %328 : vector<4x128xf32> to vector<1x4x128xf32>
    tpu.vector_store %arg8[%329, %c0_138, %c0_139], %332 {strides = array<i32>} : memref<8x4x128xf32, #tpu.memory_space<vmem>>, vector<1x4x128xf32>,
    %c2_i32_140 = arith.constant 2 : i32
    %333 = arith.index_cast %c2_i32_140 : i32 to index
    %c0_141 = arith.constant 0 : index
    %c0_142 = arith.constant 0 : index
    %334 = vector.load %arg11[%333, %c0_141, %c0_142] : memref<8x32x128xf32, #tpu.memory_space<vmem>>, vector<1x32x128xf32>
    %335 = vector.shape_cast %334 : vector<1x32x128xf32> to vector<32x128xf32>
    %cst_143 = arith.constant dense<0.000000e+00> : vector<15x128xf32>
    %336 = tpu.matmul %2, %335, %cst_143 {dimension_numbers = #tpu.dot_dimension_numbers<[1], [0], [0], [1], [0, 0, 1, 1], [], []>} : vector<15x32xf32>, vector<32x128xf32>, vector<15x128xf32> -> vector<15x128xf32>
    %337 = arith.index_cast %c2_i32_140 : i32 to index
    %c0_144 = arith.constant 0 : index
    %c0_145 = arith.constant 0 : index
    %338 = vector.load %arg9[%337, %c0_144, %c0_145] : memref<8x15x128xf32, #tpu.memory_space<vmem>>, vector<1x15x128xf32>
    %339 = vector.shape_cast %338 : vector<1x15x128xf32> to vector<15x128xf32>
    %340 = vector.shape_cast %336 : vector<15x128xf32> to vector<1x15x128xf32>
    tpu.vector_store %arg9[%337, %c0_144, %c0_145], %340 {strides = array<i32>} : memref<8x15x128xf32, #tpu.memory_space<vmem>>, vector<1x15x128xf32>,
    %cst_146 = arith.constant dense<0xFF800000> : vector<128xf32>
    %341 = vector.multi_reduction <maximumf>, %336, %cst_146 [0] : vector<15x128xf32> to vector<128xf32>
    %342 = vector.shape_cast %341 : vector<128xf32> to vector<1x128xf32>
    %343 = vector.broadcast %342 : vector<1x128xf32> to vector<15x128xf32>
    %344 = arith.subf %336, %343 : vector<15x128xf32>
    %345 = math.exp %344 : vector<15x128xf32>
    %cst_147 = arith.constant dense<0.000000e+00> : vector<128xf32>
    %346 = vector.multi_reduction <add>, %345, %cst_147 [0] : vector<15x128xf32> to vector<128xf32>
    %347 = vector.shape_cast %346 : vector<128xf32> to vector<1x128xf32>
    %348 = tpu.reciprocal %347 {approx = true} : vector<1x128xf32> -> vector<1x128xf32>
    %349 = vector.broadcast %348 : vector<1x128xf32> to vector<15x128xf32>
    %350 = arith.mulf %345, %349 : vector<15x128xf32>
    %cst_148 = arith.constant dense<0.000000e+00> : vector<90x128xf32>
    %351 = tpu.matmul %3, %350, %cst_148 {dimension_numbers = #tpu.dot_dimension_numbers<[1], [0], [0], [1], [0, 0, 1, 1], [], []>} : vector<90x15xf32>, vector<15x128xf32>, vector<90x128xf32> -> vector<90x128xf32>
    %352 = arith.index_cast %c2_i32_140 : i32 to index
    %c0_149 = arith.constant 0 : index
    %c0_150 = arith.constant 0 : index
    %353 = vector.load %arg1[%352, %c0_149, %c0_150] : memref<8x90x128xf32, #tpu.memory_space<vmem>>, vector<1x90x128xf32>
    %354 = vector.shape_cast %353 : vector<1x90x128xf32> to vector<90x128xf32>
    %355 = arith.mulf %351, %354 : vector<90x128xf32>
    %cst_151 = arith.constant dense<0.000000e+00> : vector<32x128xf32>
    %356 = tpu.matmul %4, %355, %cst_151 {dimension_numbers = #tpu.dot_dimension_numbers<[1], [0], [0], [1], [0, 0, 1, 1], [], []>} : vector<32x90xf32>, vector<90x128xf32>, vector<32x128xf32> -> vector<32x128xf32>
    %cst_152 = arith.constant 0.000000e+00 : f32
    %357 = vector.broadcast %cst_152 : f32 to vector<32x128xf32>
    %358 = arith.maximumf %356, %357 : vector<32x128xf32>
    %cst_153 = arith.constant dense<0.000000e+00> : vector<4x128xf32>
    %359 = tpu.matmul %5, %358, %cst_153 {dimension_numbers = #tpu.dot_dimension_numbers<[1], [0], [0], [1], [0, 0, 1, 1], [], []>} : vector<4x32xf32>, vector<32x128xf32>, vector<4x128xf32> -> vector<4x128xf32>
    %360 = arith.index_cast %c2_i32_140 : i32 to index
    %c0_154 = arith.constant 0 : index
    %c0_155 = arith.constant 0 : index
    %361 = vector.load %arg8[%360, %c0_154, %c0_155] : memref<8x4x128xf32, #tpu.memory_space<vmem>>, vector<1x4x128xf32>
    %362 = vector.shape_cast %361 : vector<1x4x128xf32> to vector<4x128xf32>
    %363 = vector.shape_cast %359 : vector<4x128xf32> to vector<1x4x128xf32>
    tpu.vector_store %arg8[%360, %c0_154, %c0_155], %363 {strides = array<i32>} : memref<8x4x128xf32, #tpu.memory_space<vmem>>, vector<1x4x128xf32>,
    %c3_i32_156 = arith.constant 3 : i32
    %364 = arith.index_cast %c3_i32_156 : i32 to index
    %c0_157 = arith.constant 0 : index
    %c0_158 = arith.constant 0 : index
    %365 = vector.load %arg11[%364, %c0_157, %c0_158] : memref<8x32x128xf32, #tpu.memory_space<vmem>>, vector<1x32x128xf32>
    %366 = vector.shape_cast %365 : vector<1x32x128xf32> to vector<32x128xf32>
    %cst_159 = arith.constant dense<0.000000e+00> : vector<15x128xf32>
    %367 = tpu.matmul %2, %366, %cst_159 {dimension_numbers = #tpu.dot_dimension_numbers<[1], [0], [0], [1], [0, 0, 1, 1], [], []>} : vector<15x32xf32>, vector<32x128xf32>, vector<15x128xf32> -> vector<15x128xf32>
    %368 = arith.index_cast %c3_i32_156 : i32 to index
    %c0_160 = arith.constant 0 : index
    %c0_161 = arith.constant 0 : index
    %369 = vector.load %arg9[%368, %c0_160, %c0_161] : memref<8x15x128xf32, #tpu.memory_space<vmem>>, vector<1x15x128xf32>
    %370 = vector.shape_cast %369 : vector<1x15x128xf32> to vector<15x128xf32>
    %371 = vector.shape_cast %367 : vector<15x128xf32> to vector<1x15x128xf32>
    tpu.vector_store %arg9[%368, %c0_160, %c0_161], %371 {strides = array<i32>} : memref<8x15x128xf32, #tpu.memory_space<vmem>>, vector<1x15x128xf32>,
    %cst_162 = arith.constant dense<0xFF800000> : vector<128xf32>
    %372 = vector.multi_reduction <maximumf>, %367, %cst_162 [0] : vector<15x128xf32> to vector<128xf32>
    %373 = vector.shape_cast %372 : vector<128xf32> to vector<1x128xf32>
    %374 = vector.broadcast %373 : vector<1x128xf32> to vector<15x128xf32>
    %375 = arith.subf %367, %374 : vector<15x128xf32>
    %376 = math.exp %375 : vector<15x128xf32>
    %cst_163 = arith.constant dense<0.000000e+00> : vector<128xf32>
    %377 = vector.multi_reduction <add>, %376, %cst_163 [0] : vector<15x128xf32> to vector<128xf32>
    %378 = vector.shape_cast %377 : vector<128xf32> to vector<1x128xf32>
    %379 = tpu.reciprocal %378 {approx = true} : vector<1x128xf32> -> vector<1x128xf32>
    %380 = vector.broadcast %379 : vector<1x128xf32> to vector<15x128xf32>
    %381 = arith.mulf %376, %380 : vector<15x128xf32>
    %cst_164 = arith.constant dense<0.000000e+00> : vector<90x128xf32>
    %382 = tpu.matmul %3, %381, %cst_164 {dimension_numbers = #tpu.dot_dimension_numbers<[1], [0], [0], [1], [0, 0, 1, 1], [], []>} : vector<90x15xf32>, vector<15x128xf32>, vector<90x128xf32> -> vector<90x128xf32>
    %383 = arith.index_cast %c3_i32_156 : i32 to index
    %c0_165 = arith.constant 0 : index
    %c0_166 = arith.constant 0 : index
    %384 = vector.load %arg1[%383, %c0_165, %c0_166] : memref<8x90x128xf32, #tpu.memory_space<vmem>>, vector<1x90x128xf32>
    %385 = vector.shape_cast %384 : vector<1x90x128xf32> to vector<90x128xf32>
    %386 = arith.mulf %382, %385 : vector<90x128xf32>
    %cst_167 = arith.constant dense<0.000000e+00> : vector<32x128xf32>
    %387 = tpu.matmul %4, %386, %cst_167 {dimension_numbers = #tpu.dot_dimension_numbers<[1], [0], [0], [1], [0, 0, 1, 1], [], []>} : vector<32x90xf32>, vector<90x128xf32>, vector<32x128xf32> -> vector<32x128xf32>
    %cst_168 = arith.constant 0.000000e+00 : f32
    %388 = vector.broadcast %cst_168 : f32 to vector<32x128xf32>
    %389 = arith.maximumf %387, %388 : vector<32x128xf32>
    %cst_169 = arith.constant dense<0.000000e+00> : vector<4x128xf32>
    %390 = tpu.matmul %5, %389, %cst_169 {dimension_numbers = #tpu.dot_dimension_numbers<[1], [0], [0], [1], [0, 0, 1, 1], [], []>} : vector<4x32xf32>, vector<32x128xf32>, vector<4x128xf32> -> vector<4x128xf32>
    %391 = arith.index_cast %c3_i32_156 : i32 to index
    %c0_170 = arith.constant 0 : index
    %c0_171 = arith.constant 0 : index
    %392 = vector.load %arg8[%391, %c0_170, %c0_171] : memref<8x4x128xf32, #tpu.memory_space<vmem>>, vector<1x4x128xf32>
    %393 = vector.shape_cast %392 : vector<1x4x128xf32> to vector<4x128xf32>
    %394 = vector.shape_cast %390 : vector<4x128xf32> to vector<1x4x128xf32>
    tpu.vector_store %arg8[%391, %c0_170, %c0_171], %394 {strides = array<i32>} : memref<8x4x128xf32, #tpu.memory_space<vmem>>, vector<1x4x128xf32>,
    %c4_i32_172 = arith.constant 4 : i32
    %395 = arith.index_cast %c4_i32_172 : i32 to index
    %c0_173 = arith.constant 0 : index
    %c0_174 = arith.constant 0 : index
    %396 = vector.load %arg11[%395, %c0_173, %c0_174] : memref<8x32x128xf32, #tpu.memory_space<vmem>>, vector<1x32x128xf32>
    %397 = vector.shape_cast %396 : vector<1x32x128xf32> to vector<32x128xf32>
    %cst_175 = arith.constant dense<0.000000e+00> : vector<15x128xf32>
    %398 = tpu.matmul %2, %397, %cst_175 {dimension_numbers = #tpu.dot_dimension_numbers<[1], [0], [0], [1], [0, 0, 1, 1], [], []>} : vector<15x32xf32>, vector<32x128xf32>, vector<15x128xf32> -> vector<15x128xf32>
    %399 = arith.index_cast %c4_i32_172 : i32 to index
    %c0_176 = arith.constant 0 : index
    %c0_177 = arith.constant 0 : index
    %400 = vector.load %arg9[%399, %c0_176, %c0_177] : memref<8x15x128xf32, #tpu.memory_space<vmem>>, vector<1x15x128xf32>
    %401 = vector.shape_cast %400 : vector<1x15x128xf32> to vector<15x128xf32>
    %402 = vector.shape_cast %398 : vector<15x128xf32> to vector<1x15x128xf32>
    tpu.vector_store %arg9[%399, %c0_176, %c0_177], %402 {strides = array<i32>} : memref<8x15x128xf32, #tpu.memory_space<vmem>>, vector<1x15x128xf32>,
    %cst_178 = arith.constant dense<0xFF800000> : vector<128xf32>
    %403 = vector.multi_reduction <maximumf>, %398, %cst_178 [0] : vector<15x128xf32> to vector<128xf32>
    %404 = vector.shape_cast %403 : vector<128xf32> to vector<1x128xf32>
    %405 = vector.broadcast %404 : vector<1x128xf32> to vector<15x128xf32>
    %406 = arith.subf %398, %405 : vector<15x128xf32>
    %407 = math.exp %406 : vector<15x128xf32>
    %cst_179 = arith.constant dense<0.000000e+00> : vector<128xf32>
    %408 = vector.multi_reduction <add>, %407, %cst_179 [0] : vector<15x128xf32> to vector<128xf32>
    %409 = vector.shape_cast %408 : vector<128xf32> to vector<1x128xf32>
    %410 = tpu.reciprocal %409 {approx = true} : vector<1x128xf32> -> vector<1x128xf32>
    %411 = vector.broadcast %410 : vector<1x128xf32> to vector<15x128xf32>
    %412 = arith.mulf %407, %411 : vector<15x128xf32>
    %cst_180 = arith.constant dense<0.000000e+00> : vector<90x128xf32>
    %413 = tpu.matmul %3, %412, %cst_180 {dimension_numbers = #tpu.dot_dimension_numbers<[1], [0], [0], [1], [0, 0, 1, 1], [], []>} : vector<90x15xf32>, vector<15x128xf32>, vector<90x128xf32> -> vector<90x128xf32>
    %414 = arith.index_cast %c4_i32_172 : i32 to index
    %c0_181 = arith.constant 0 : index
    %c0_182 = arith.constant 0 : index
    %415 = vector.load %arg1[%414, %c0_181, %c0_182] : memref<8x90x128xf32, #tpu.memory_space<vmem>>, vector<1x90x128xf32>
    %416 = vector.shape_cast %415 : vector<1x90x128xf32> to vector<90x128xf32>
    %417 = arith.mulf %413, %416 : vector<90x128xf32>
    %cst_183 = arith.constant dense<0.000000e+00> : vector<32x128xf32>
    %418 = tpu.matmul %4, %417, %cst_183 {dimension_numbers = #tpu.dot_dimension_numbers<[1], [0], [0], [1], [0, 0, 1, 1], [], []>} : vector<32x90xf32>, vector<90x128xf32>, vector<32x128xf32> -> vector<32x128xf32>
    %cst_184 = arith.constant 0.000000e+00 : f32
    %419 = vector.broadcast %cst_184 : f32 to vector<32x128xf32>
    %420 = arith.maximumf %418, %419 : vector<32x128xf32>
    %cst_185 = arith.constant dense<0.000000e+00> : vector<4x128xf32>
    %421 = tpu.matmul %5, %420, %cst_185 {dimension_numbers = #tpu.dot_dimension_numbers<[1], [0], [0], [1], [0, 0, 1, 1], [], []>} : vector<4x32xf32>, vector<32x128xf32>, vector<4x128xf32> -> vector<4x128xf32>
    %422 = arith.index_cast %c4_i32_172 : i32 to index
    %c0_186 = arith.constant 0 : index
    %c0_187 = arith.constant 0 : index
    %423 = vector.load %arg8[%422, %c0_186, %c0_187] : memref<8x4x128xf32, #tpu.memory_space<vmem>>, vector<1x4x128xf32>
    %424 = vector.shape_cast %423 : vector<1x4x128xf32> to vector<4x128xf32>
    %425 = vector.shape_cast %421 : vector<4x128xf32> to vector<1x4x128xf32>
    tpu.vector_store %arg8[%422, %c0_186, %c0_187], %425 {strides = array<i32>} : memref<8x4x128xf32, #tpu.memory_space<vmem>>, vector<1x4x128xf32>,
    %c5_i32_188 = arith.constant 5 : i32
    %426 = arith.index_cast %c5_i32_188 : i32 to index
    %c0_189 = arith.constant 0 : index
    %c0_190 = arith.constant 0 : index
    %427 = vector.load %arg11[%426, %c0_189, %c0_190] : memref<8x32x128xf32, #tpu.memory_space<vmem>>, vector<1x32x128xf32>
    %428 = vector.shape_cast %427 : vector<1x32x128xf32> to vector<32x128xf32>
    %cst_191 = arith.constant dense<0.000000e+00> : vector<15x128xf32>
    %429 = tpu.matmul %2, %428, %cst_191 {dimension_numbers = #tpu.dot_dimension_numbers<[1], [0], [0], [1], [0, 0, 1, 1], [], []>} : vector<15x32xf32>, vector<32x128xf32>, vector<15x128xf32> -> vector<15x128xf32>
    %430 = arith.index_cast %c5_i32_188 : i32 to index
    %c0_192 = arith.constant 0 : index
    %c0_193 = arith.constant 0 : index
    %431 = vector.load %arg9[%430, %c0_192, %c0_193] : memref<8x15x128xf32, #tpu.memory_space<vmem>>, vector<1x15x128xf32>
    %432 = vector.shape_cast %431 : vector<1x15x128xf32> to vector<15x128xf32>
    %433 = vector.shape_cast %429 : vector<15x128xf32> to vector<1x15x128xf32>
    tpu.vector_store %arg9[%430, %c0_192, %c0_193], %433 {strides = array<i32>} : memref<8x15x128xf32, #tpu.memory_space<vmem>>, vector<1x15x128xf32>,
    %cst_194 = arith.constant dense<0xFF800000> : vector<128xf32>
    %434 = vector.multi_reduction <maximumf>, %429, %cst_194 [0] : vector<15x128xf32> to vector<128xf32>
    %435 = vector.shape_cast %434 : vector<128xf32> to vector<1x128xf32>
    %436 = vector.broadcast %435 : vector<1x128xf32> to vector<15x128xf32>
    %437 = arith.subf %429, %436 : vector<15x128xf32>
    %438 = math.exp %437 : vector<15x128xf32>
    %cst_195 = arith.constant dense<0.000000e+00> : vector<128xf32>
    %439 = vector.multi_reduction <add>, %438, %cst_195 [0] : vector<15x128xf32> to vector<128xf32>
    %440 = vector.shape_cast %439 : vector<128xf32> to vector<1x128xf32>
    %441 = tpu.reciprocal %440 {approx = true} : vector<1x128xf32> -> vector<1x128xf32>
    %442 = vector.broadcast %441 : vector<1x128xf32> to vector<15x128xf32>
    %443 = arith.mulf %438, %442 : vector<15x128xf32>
    %cst_196 = arith.constant dense<0.000000e+00> : vector<90x128xf32>
    %444 = tpu.matmul %3, %443, %cst_196 {dimension_numbers = #tpu.dot_dimension_numbers<[1], [0], [0], [1], [0, 0, 1, 1], [], []>} : vector<90x15xf32>, vector<15x128xf32>, vector<90x128xf32> -> vector<90x128xf32>
    %445 = arith.index_cast %c5_i32_188 : i32 to index
    %c0_197 = arith.constant 0 : index
    %c0_198 = arith.constant 0 : index
    %446 = vector.load %arg1[%445, %c0_197, %c0_198] : memref<8x90x128xf32, #tpu.memory_space<vmem>>, vector<1x90x128xf32>
    %447 = vector.shape_cast %446 : vector<1x90x128xf32> to vector<90x128xf32>
    %448 = arith.mulf %444, %447 : vector<90x128xf32>
    %cst_199 = arith.constant dense<0.000000e+00> : vector<32x128xf32>
    %449 = tpu.matmul %4, %448, %cst_199 {dimension_numbers = #tpu.dot_dimension_numbers<[1], [0], [0], [1], [0, 0, 1, 1], [], []>} : vector<32x90xf32>, vector<90x128xf32>, vector<32x128xf32> -> vector<32x128xf32>
    %cst_200 = arith.constant 0.000000e+00 : f32
    %450 = vector.broadcast %cst_200 : f32 to vector<32x128xf32>
    %451 = arith.maximumf %449, %450 : vector<32x128xf32>
    %cst_201 = arith.constant dense<0.000000e+00> : vector<4x128xf32>
    %452 = tpu.matmul %5, %451, %cst_201 {dimension_numbers = #tpu.dot_dimension_numbers<[1], [0], [0], [1], [0, 0, 1, 1], [], []>} : vector<4x32xf32>, vector<32x128xf32>, vector<4x128xf32> -> vector<4x128xf32>
    %453 = arith.index_cast %c5_i32_188 : i32 to index
    %c0_202 = arith.constant 0 : index
    %c0_203 = arith.constant 0 : index
    %454 = vector.load %arg8[%453, %c0_202, %c0_203] : memref<8x4x128xf32, #tpu.memory_space<vmem>>, vector<1x4x128xf32>
    %455 = vector.shape_cast %454 : vector<1x4x128xf32> to vector<4x128xf32>
    %456 = vector.shape_cast %452 : vector<4x128xf32> to vector<1x4x128xf32>
    tpu.vector_store %arg8[%453, %c0_202, %c0_203], %456 {strides = array<i32>} : memref<8x4x128xf32, #tpu.memory_space<vmem>>, vector<1x4x128xf32>,
    %c6_i32_204 = arith.constant 6 : i32
    %457 = arith.index_cast %c6_i32_204 : i32 to index
    %c0_205 = arith.constant 0 : index
    %c0_206 = arith.constant 0 : index
    %458 = vector.load %arg11[%457, %c0_205, %c0_206] : memref<8x32x128xf32, #tpu.memory_space<vmem>>, vector<1x32x128xf32>
    %459 = vector.shape_cast %458 : vector<1x32x128xf32> to vector<32x128xf32>
    %cst_207 = arith.constant dense<0.000000e+00> : vector<15x128xf32>
    %460 = tpu.matmul %2, %459, %cst_207 {dimension_numbers = #tpu.dot_dimension_numbers<[1], [0], [0], [1], [0, 0, 1, 1], [], []>} : vector<15x32xf32>, vector<32x128xf32>, vector<15x128xf32> -> vector<15x128xf32>
    %461 = arith.index_cast %c6_i32_204 : i32 to index
    %c0_208 = arith.constant 0 : index
    %c0_209 = arith.constant 0 : index
    %462 = vector.load %arg9[%461, %c0_208, %c0_209] : memref<8x15x128xf32, #tpu.memory_space<vmem>>, vector<1x15x128xf32>
    %463 = vector.shape_cast %462 : vector<1x15x128xf32> to vector<15x128xf32>
    %464 = vector.shape_cast %460 : vector<15x128xf32> to vector<1x15x128xf32>
    tpu.vector_store %arg9[%461, %c0_208, %c0_209], %464 {strides = array<i32>} : memref<8x15x128xf32, #tpu.memory_space<vmem>>, vector<1x15x128xf32>,
    %cst_210 = arith.constant dense<0xFF800000> : vector<128xf32>
    %465 = vector.multi_reduction <maximumf>, %460, %cst_210 [0] : vector<15x128xf32> to vector<128xf32>
    %466 = vector.shape_cast %465 : vector<128xf32> to vector<1x128xf32>
    %467 = vector.broadcast %466 : vector<1x128xf32> to vector<15x128xf32>
    %468 = arith.subf %460, %467 : vector<15x128xf32>
    %469 = math.exp %468 : vector<15x128xf32>
    %cst_211 = arith.constant dense<0.000000e+00> : vector<128xf32>
    %470 = vector.multi_reduction <add>, %469, %cst_211 [0] : vector<15x128xf32> to vector<128xf32>
    %471 = vector.shape_cast %470 : vector<128xf32> to vector<1x128xf32>
    %472 = tpu.reciprocal %471 {approx = true} : vector<1x128xf32> -> vector<1x128xf32>
    %473 = vector.broadcast %472 : vector<1x128xf32> to vector<15x128xf32>
    %474 = arith.mulf %469, %473 : vector<15x128xf32>
    %cst_212 = arith.constant dense<0.000000e+00> : vector<90x128xf32>
    %475 = tpu.matmul %3, %474, %cst_212 {dimension_numbers = #tpu.dot_dimension_numbers<[1], [0], [0], [1], [0, 0, 1, 1], [], []>} : vector<90x15xf32>, vector<15x128xf32>, vector<90x128xf32> -> vector<90x128xf32>
    %476 = arith.index_cast %c6_i32_204 : i32 to index
    %c0_213 = arith.constant 0 : index
    %c0_214 = arith.constant 0 : index
    %477 = vector.load %arg1[%476, %c0_213, %c0_214] : memref<8x90x128xf32, #tpu.memory_space<vmem>>, vector<1x90x128xf32>
    %478 = vector.shape_cast %477 : vector<1x90x128xf32> to vector<90x128xf32>
    %479 = arith.mulf %475, %478 : vector<90x128xf32>
    %cst_215 = arith.constant dense<0.000000e+00> : vector<32x128xf32>
    %480 = tpu.matmul %4, %479, %cst_215 {dimension_numbers = #tpu.dot_dimension_numbers<[1], [0], [0], [1], [0, 0, 1, 1], [], []>} : vector<32x90xf32>, vector<90x128xf32>, vector<32x128xf32> -> vector<32x128xf32>
    %cst_216 = arith.constant 0.000000e+00 : f32
    %481 = vector.broadcast %cst_216 : f32 to vector<32x128xf32>
    %482 = arith.maximumf %480, %481 : vector<32x128xf32>
    %cst_217 = arith.constant dense<0.000000e+00> : vector<4x128xf32>
    %483 = tpu.matmul %5, %482, %cst_217 {dimension_numbers = #tpu.dot_dimension_numbers<[1], [0], [0], [1], [0, 0, 1, 1], [], []>} : vector<4x32xf32>, vector<32x128xf32>, vector<4x128xf32> -> vector<4x128xf32>
    %484 = arith.index_cast %c6_i32_204 : i32 to index
    %c0_218 = arith.constant 0 : index
    %c0_219 = arith.constant 0 : index
    %485 = vector.load %arg8[%484, %c0_218, %c0_219] : memref<8x4x128xf32, #tpu.memory_space<vmem>>, vector<1x4x128xf32>
    %486 = vector.shape_cast %485 : vector<1x4x128xf32> to vector<4x128xf32>
    %487 = vector.shape_cast %483 : vector<4x128xf32> to vector<1x4x128xf32>
    tpu.vector_store %arg8[%484, %c0_218, %c0_219], %487 {strides = array<i32>} : memref<8x4x128xf32, #tpu.memory_space<vmem>>, vector<1x4x128xf32>,
    %c7_i32_220 = arith.constant 7 : i32
    %488 = arith.index_cast %c7_i32_220 : i32 to index
    %c0_221 = arith.constant 0 : index
    %c0_222 = arith.constant 0 : index
    %489 = vector.load %arg11[%488, %c0_221, %c0_222] : memref<8x32x128xf32, #tpu.memory_space<vmem>>, vector<1x32x128xf32>
    %490 = vector.shape_cast %489 : vector<1x32x128xf32> to vector<32x128xf32>
    %cst_223 = arith.constant dense<0.000000e+00> : vector<15x128xf32>
    %491 = tpu.matmul %2, %490, %cst_223 {dimension_numbers = #tpu.dot_dimension_numbers<[1], [0], [0], [1], [0, 0, 1, 1], [], []>} : vector<15x32xf32>, vector<32x128xf32>, vector<15x128xf32> -> vector<15x128xf32>
    %492 = arith.index_cast %c7_i32_220 : i32 to index
    %c0_224 = arith.constant 0 : index
    %c0_225 = arith.constant 0 : index
    %493 = vector.load %arg9[%492, %c0_224, %c0_225] : memref<8x15x128xf32, #tpu.memory_space<vmem>>, vector<1x15x128xf32>
    %494 = vector.shape_cast %493 : vector<1x15x128xf32> to vector<15x128xf32>
    %495 = vector.shape_cast %491 : vector<15x128xf32> to vector<1x15x128xf32>
    tpu.vector_store %arg9[%492, %c0_224, %c0_225], %495 {strides = array<i32>} : memref<8x15x128xf32, #tpu.memory_space<vmem>>, vector<1x15x128xf32>,
    %cst_226 = arith.constant dense<0xFF800000> : vector<128xf32>
    %496 = vector.multi_reduction <maximumf>, %491, %cst_226 [0] : vector<15x128xf32> to vector<128xf32>
    %497 = vector.shape_cast %496 : vector<128xf32> to vector<1x128xf32>
    %498 = vector.broadcast %497 : vector<1x128xf32> to vector<15x128xf32>
    %499 = arith.subf %491, %498 : vector<15x128xf32>
    %500 = math.exp %499 : vector<15x128xf32>
    %cst_227 = arith.constant dense<0.000000e+00> : vector<128xf32>
    %501 = vector.multi_reduction <add>, %500, %cst_227 [0] : vector<15x128xf32> to vector<128xf32>
    %502 = vector.shape_cast %501 : vector<128xf32> to vector<1x128xf32>
    %503 = tpu.reciprocal %502 {approx = true} : vector<1x128xf32> -> vector<1x128xf32>
    %504 = vector.broadcast %503 : vector<1x128xf32> to vector<15x128xf32>
    %505 = arith.mulf %500, %504 : vector<15x128xf32>
    %cst_228 = arith.constant dense<0.000000e+00> : vector<90x128xf32>
    %506 = tpu.matmul %3, %505, %cst_228 {dimension_numbers = #tpu.dot_dimension_numbers<[1], [0], [0], [1], [0, 0, 1, 1], [], []>} : vector<90x15xf32>, vector<15x128xf32>, vector<90x128xf32> -> vector<90x128xf32>
    %507 = arith.index_cast %c7_i32_220 : i32 to index
    %c0_229 = arith.constant 0 : index
    %c0_230 = arith.constant 0 : index
    %508 = vector.load %arg1[%507, %c0_229, %c0_230] : memref<8x90x128xf32, #tpu.memory_space<vmem>>, vector<1x90x128xf32>
    %509 = vector.shape_cast %508 : vector<1x90x128xf32> to vector<90x128xf32>
    %510 = arith.mulf %506, %509 : vector<90x128xf32>
    %cst_231 = arith.constant dense<0.000000e+00> : vector<32x128xf32>
    %511 = tpu.matmul %4, %510, %cst_231 {dimension_numbers = #tpu.dot_dimension_numbers<[1], [0], [0], [1], [0, 0, 1, 1], [], []>} : vector<32x90xf32>, vector<90x128xf32>, vector<32x128xf32> -> vector<32x128xf32>
    %cst_232 = arith.constant 0.000000e+00 : f32
    %512 = vector.broadcast %cst_232 : f32 to vector<32x128xf32>
    %513 = arith.maximumf %511, %512 : vector<32x128xf32>
    %cst_233 = arith.constant dense<0.000000e+00> : vector<4x128xf32>
    %514 = tpu.matmul %5, %513, %cst_233 {dimension_numbers = #tpu.dot_dimension_numbers<[1], [0], [0], [1], [0, 0, 1, 1], [], []>} : vector<4x32xf32>, vector<32x128xf32>, vector<4x128xf32> -> vector<4x128xf32>
    %515 = arith.index_cast %c7_i32_220 : i32 to index
    %c0_234 = arith.constant 0 : index
    %c0_235 = arith.constant 0 : index
    %516 = vector.load %arg8[%515, %c0_234, %c0_235] : memref<8x4x128xf32, #tpu.memory_space<vmem>>, vector<1x4x128xf32>
    %517 = vector.shape_cast %516 : vector<1x4x128xf32> to vector<4x128xf32>
    %518 = vector.shape_cast %514 : vector<4x128xf32> to vector<1x4x128xf32>
    tpu.vector_store %arg8[%515, %c0_234, %c0_235], %518 {strides = array<i32>} : memref<8x4x128xf32, #tpu.memory_space<vmem>>, vector<1x4x128xf32>,
    %c8_i32_236 = arith.constant 8 : i32
    return
  }
  func.func @transform_0(%arg0: i32) -> (i32, i32, i32) {
    %c0_i32 = arith.constant 0 : i32
    %c0_i32_0 = arith.constant 0 : i32
    %c0_i32_1 = arith.constant 0 : i32
    return %c0_i32, %c0_i32_0, %arg0 : i32, i32, i32
  }
  func.func @transform_1(%arg0: i32) -> (i32, i32) {
    %c0_i32 = arith.constant 0 : i32
    %c0_i32_0 = arith.constant 0 : i32
    %c0_i32_1 = arith.constant 0 : i32
    return %c0_i32, %c0_i32_0 : i32, i32
  }
  func.func @transform_2(%arg0: i32) -> (i32, i32) {
    %c0_i32 = arith.constant 0 : i32
    %c0_i32_0 = arith.constant 0 : i32
    %c0_i32_1 = arith.constant 0 : i32
    return %c0_i32, %c0_i32_0 : i32, i32
  }
  func.func @transform_3(%arg0: i32) -> (i32, i32) {
    %c0_i32 = arith.constant 0 : i32
    %c0_i32_0 = arith.constant 0 : i32
    %c0_i32_1 = arith.constant 0 : i32
    return %c0_i32, %c0_i32_0 : i32, i32
  }
  func.func @transform_4(%arg0: i32) -> (i32, i32) {
    %c0_i32 = arith.constant 0 : i32
    %c0_i32_0 = arith.constant 0 : i32
    %c0_i32_1 = arith.constant 0 : i32
    return %c0_i32, %c0_i32_0 : i32, i32
  }
  func.func @transform_5(%arg0: i32) -> (i32, i32) {
    %c0_i32 = arith.constant 0 : i32
    %c0_i32_0 = arith.constant 0 : i32
    %c0_i32_1 = arith.constant 0 : i32
    return %c0_i32, %c0_i32_0 : i32, i32
  }
  func.func @transform_6(%arg0: i32) -> (i32, i32) {
    %c0_i32 = arith.constant 0 : i32
    %c0_i32_0 = arith.constant 0 : i32
    %c0_i32_1 = arith.constant 0 : i32
    return %c0_i32, %c0_i32_0 : i32, i32
  }
  func.func @transform_7(%arg0: i32) -> (i32, i32, i32) {
    %c0_i32 = arith.constant 0 : i32
    %c0_i32_0 = arith.constant 0 : i32
    %c0_i32_1 = arith.constant 0 : i32
    return %c0_i32, %c0_i32_0, %arg0 : i32, i32, i32
  }
  func.func @transform_8(%arg0: i32) -> (i32, i32, i32) {
    %c0_i32 = arith.constant 0 : i32
    %c0_i32_0 = arith.constant 0 : i32
    %c0_i32_1 = arith.constant 0 : i32
    return %c0_i32, %c0_i32_0, %arg0 : i32, i32, i32
  }
}

</mosaic_0001>

<llo_original>
// kernel: tile.9
$region0: #{tile.9}
  %s0 = inlined_call_operand.vmem [shape: f32[32,15,6], index: 0, kind: input, shape index: {}]
  %s1 = inlined_call_operand.vmem [shape: f32[32,90], index: 1, kind: output, shape index: {}]
  %v2 = vld [vmem:[%s0] sm:$0x3f]
  %vm3 = vcmask 261120
  %4 = vst.msk [vmem:[%s1] sm:$0x3f] %vm3, %v2
  %s5 = scalar_lea.vmem %s0, 8
  %v6 = vld [vmem:[%s5] sm:$0x3f]
  %vm7 = vcmask 261120
  %s8 = scalar_lea.vmem %s1, 6
  %9 = vst.msk [vmem:[%s8] sm:$0x3f] %vm7, %v6
  %s10 = scalar_lea.vmem %s0, 16
  %v11 = vld [vmem:[%s10] sm:$0x3f]
  %vm12 = vcmask 261120
  %s13 = scalar_lea.vmem %s1, 12
  %14 = vst.msk [vmem:[%s13] sm:$0x3f] %vm12, %v11
  %s15 = scalar_lea.vmem %s0, 24
  %v16 = vld [vmem:[%s15] sm:$0x3f]
  %vm17 = vcmask 261120
  %s18 = scalar_lea.vmem %s1, 18
  %19 = vst.msk [vmem:[%s18] sm:$0x3f] %vm17, %v16
  %s20 = scalar_lea.vmem %s0, 32
  %v21 = vld [vmem:[%s20] sm:$0x3f]
  %vm22 = vcmask 261120
  %s23 = scalar_lea.vmem %s1, 24
  %24 = vst.msk [vmem:[%s23] sm:$0x3f] %vm22, %v21
  %s25 = scalar_lea.vmem %s0, 40
  %v26 = vld [vmem:[%s25] sm:$0x3f]
  %vm27 = vcmask 261120
  %s28 = scalar_lea.vmem %s1, 30
  %29 = vst.msk [vmem:[%s28] sm:$0x3f] %vm27, %v26
  %s30 = scalar_lea.vmem %s0, 48
  %v31 = vld [vmem:[%s30] sm:$0x3f]
  %vm32 = vcmask 261120
  %s33 = scalar_lea.vmem %s1, 36
  %34 = vst.msk [vmem:[%s33] sm:$0x3f] %vm32, %v31
  %s35 = scalar_lea.vmem %s0, 56
  %v36 = vld [vmem:[%s35] sm:$0x3f]
  %vm37 = vcmask 261120
  %s38 = scalar_lea.vmem %s1, 42
  %39 = vst.msk [vmem:[%s38] sm:$0x3f] %vm37, %v36
  %s40 = scalar_lea.vmem %s0, 64
  %v41 = vld [vmem:[%s40] sm:$0x3f]
  %vm42 = vcmask 261120
  %s43 = scalar_lea.vmem %s1, 48
  %44 = vst.msk [vmem:[%s43] sm:$0x3f] %vm42, %v41
  %s45 = scalar_lea.vmem %s0, 72
  %v46 = vld [vmem:[%s45] sm:$0x3f]
  %vm47 = vcmask 261120
  %s48 = scalar_lea.vmem %s1, 54
  %49 = vst.msk [vmem:[%s48] sm:$0x3f] %vm47, %v46
  %s50 = scalar_lea.vmem %s0, 80
  %v51 = vld [vmem:[%s50] sm:$0x3f]
  %vm52 = vcmask 261120
  %s53 = scalar_lea.vmem %s1, 60
  %54 = vst.msk [vmem:[%s53] sm:$0x3f] %vm52, %v51
  %s55 = scalar_lea.vmem %s0, 88
  %v56 = vld [vmem:[%s55] sm:$0x3f]
  %vm57 = vcmask 261120
  %s58 = scalar_lea.vmem %s1, 66
  %59 = vst.msk [vmem:[%s58] sm:$0x3f] %vm57, %v56
  %s60 = scalar_lea.vmem %s0, 96
  %v61 = vld [vmem:[%s60] sm:$0x3f]
  %vm62 = vcmask 261120
  %s63 = scalar_lea.vmem %s1, 72
  %64 = vst.msk [vmem:[%s63] sm:$0x3f] %vm62, %v61
  %s65 = scalar_lea.vmem %s0, 104
  %v66 = vld [vmem:[%s65] sm:$0x3f]
  %vm67 = vcmask 261120
  %s68 = scalar_lea.vmem %s1, 78
  %69 = vst.msk [vmem:[%s68] sm:$0x3f] %vm67, %v66
  %s70 = scalar_lea.vmem %s0, 112
  %v71 = vld [vmem:[%s70] sm:$0x3f]
  %vm72 = vcmask 261120
  %s73 = scalar_lea.vmem %s1, 84
  %74 = vst.msk [vmem:[%s73] sm:$0x3f] %vm72, %v71

// kernel: opnet_lstm_mlp.1
$region0: #{opnet_lstm_mlp.1}
  #allocation0 [shape = 'u32[]', space=smem, size = 0x4, offset = 0x4, fixed_abs, tag = 'smem constant byte address 0x4 - core index']
  #allocation1 [shape = 'u32[72,128]{1,0:T(1,128)}', space=vmem, size = 0x9000, scoped, tag = 'internal scratch']
  #allocation2 [shape = 'f32[8,128,128]{2,1,0:T(8,128)}', space=vmem, size = 0x80000, scoped, tag = 'scratch operand']
  #allocation3 [shape = 'f32[8,32,128]{2,1,0:T(8,128)}', space=vmem, size = 0x20000, scoped, tag = 'scratch operand']
  %s0 = inlined_call_operand.vmem [shape: f32[8,90,128], index: 0, kind: input, shape index: {}]
  %s1 = inlined_call_operand.vmem [shape: f32[128,90], index: 1, kind: input, shape index: {}]
  %s2 = inlined_call_operand.vmem [shape: f32[128,32], index: 2, kind: input, shape index: {}]
  %s3 = inlined_call_operand.vmem [shape: f32[15,32], index: 3, kind: input, shape index: {}]
  %s4 = inlined_call_operand.vmem [shape: f32[90,15], index: 4, kind: input, shape index: {}]
  %s5 = inlined_call_operand.vmem [shape: f32[32,90], index: 5, kind: input, shape index: {}]
  %s6 = inlined_call_operand.vmem [shape: f32[4,32], index: 6, kind: input, shape index: {}]
  %s7 = inlined_call_operand.vmem [shape: f32[8,4,128], index: 7, kind: output, shape index: {0}]
  %s8 = inlined_call_operand.vmem [shape: f32[8,15,128], index: 8, kind: output, shape index: {1}]
  %9 = xla_tuple %s7, %s8
  %s10 = sld [smem:[#allocation0]]
  $region46: #{opnet_lstm_mlp.1} parent=0
    _
  %s12 = ssub.s32 1, %s10
  %s13 = scalar_select 0, %s12, %s10
  // Predicated region
  $region2: #{opnet_lstm_mlp.1} parent=0 // pred_check
    _
  $region3: #{opnet_lstm_mlp.1} parent=0 // pred_check_branch
    %15 = sbr.rel (0) target = $region5
  $region4: #{opnet_lstm_mlp.1} parent=0 // pred_region
    _
  $region5: #{opnet_lstm_mlp.1} parent=0 // pred_fallthru
    _
  // Predicated region
  $region6: #{opnet_lstm_mlp.1} parent=0 // pred_check
    _
  $region7: #{opnet_lstm_mlp.1} parent=0 // pred_check_branch
    %17 = sbr.rel (0) target = $region9
  $region8: #{opnet_lstm_mlp.1} parent=0 // pred_region
    _
  $region9: #{opnet_lstm_mlp.1} parent=0 // pred_fallthru
    _
  // Predicated region
  $region10: #{opnet_lstm_mlp.1} parent=0 // pred_check
    _
  $region11: #{opnet_lstm_mlp.1} parent=0 // pred_check_branch
    %19 = sbr.rel (0) target = $region13
  $region12: #{opnet_lstm_mlp.1} parent=0 // pred_region
    _
  $region13: #{opnet_lstm_mlp.1} parent=0 // pred_fallthru
    _
  // Predicated region
  $region14: #{opnet_lstm_mlp.1} parent=0 // pred_check
    _
  $region15: #{opnet_lstm_mlp.1} parent=0 // pred_check_branch
    %21 = sbr.rel (0) target = $region17
  $region16: #{opnet_lstm_mlp.1} parent=0 // pred_region
    _
  $region17: #{opnet_lstm_mlp.1} parent=0 // pred_fallthru
    _
  // Predicated region
  $region18: #{opnet_lstm_mlp.1} parent=0 // pred_check
    _
  $region19: #{opnet_lstm_mlp.1} parent=0 // pred_check_branch
    %23 = sbr.rel (0) target = $region21
  $region20: #{opnet_lstm_mlp.1} parent=0 // pred_region
    _
  $region21: #{opnet_lstm_mlp.1} parent=0 // pred_fallthru
    _
  // Predicated region
  $region22: #{opnet_lstm_mlp.1} parent=0 // pred_check
    _
  $region23: #{opnet_lstm_mlp.1} parent=0 // pred_check_branch
    %25 = sbr.rel (0) target = $region25
  $region24: #{opnet_lstm_mlp.1} parent=0 // pred_region
    _
  $region25: #{opnet_lstm_mlp.1} parent=0 // pred_fallthru
    _
  // Predicated region
  $region26: #{opnet_lstm_mlp.1} parent=0 // pred_check
    _
  $region27: #{opnet_lstm_mlp.1} parent=0 // pred_check_branch
    %27 = sbr.rel (0) target = $region29
  $region28: #{opnet_lstm_mlp.1} parent=0 // pred_region
    _
  $region29: #{opnet_lstm_mlp.1} parent=0 // pred_fallthru
    _
  %v28 = vld [vmem:[%s1] sm:$0xff]
  %v29 = vld [vmem:[%s1 + $0x8] sm:$0xff]
  %v30 = vld [vmem:[%s1 + $0x10] sm:$0xff]
  %v31 = vld [vmem:[%s1 + $0x18] sm:$0xff]
  %v32 = vld [vmem:[%s1 + $0x20] sm:$0xff]
  %v33 = vld [vmem:[%s1 + $0x28] sm:$0xff]
  %v34 = vld [vmem:[%s1 + $0x30] sm:$0xff]
  %v35 = vld [vmem:[%s1 + $0x38] sm:$0xff]
  %v36 = vld [vmem:[%s1 + $0x40] sm:$0xff]
  %v37 = vld [vmem:[%s1 + $0x48] sm:$0xff]
  %v38 = vld [vmem:[%s1 + $0x50] sm:$0xff]
  %v39 = vld [vmem:[%s1 + $0x58] sm:$0xff]
  %v40 = vld [vmem:[%s1 + $0x60] sm:$0xff]
  %v41 = vld [vmem:[%s1 + $0x68] sm:$0xff]
  %v42 = vld [vmem:[%s1 + $0x70] sm:$0xff]
  %v43 = vld [vmem:[%s1 + $0x78] sm:$0xff]
  %v44 = vld [vmem:[%s2] sm:$0xff]
  %v45 = vld [vmem:[%s2 + $0x8] sm:$0xff]
  %v46 = vld [vmem:[%s2 + $0x10] sm:$0xff]
  %v47 = vld [vmem:[%s2 + $0x18] sm:$0xff]
  %v48 = vld [vmem:[%s2 + $0x20] sm:$0xff]
  %v49 = vld [vmem:[%s2 + $0x28] sm:$0xff]
  %v50 = vld [vmem:[%s2 + $0x30] sm:$0xff]
  %v51 = vld [vmem:[%s2 + $0x38] sm:$0xff]
  %v52 = vld [vmem:[%s2 + $0x40] sm:$0xff]
  %v53 = vld [vmem:[%s2 + $0x48] sm:$0xff]
  %v54 = vld [vmem:[%s2 + $0x50] sm:$0xff]
  %v55 = vld [vmem:[%s2 + $0x58] sm:$0xff]
  %v56 = vld [vmem:[%s2 + $0x60] sm:$0xff]
  %v57 = vld [vmem:[%s2 + $0x68] sm:$0xff]
  %v58 = vld [vmem:[%s2 + $0x70] sm:$0xff]
  %v59 = vld [vmem:[%s2 + $0x78] sm:$0xff]
  %v60 = vld [vmem:[%s3] sm:$0xff]
  %v61 = vld [vmem:[%s3 + $0x8] sm:$0x7f]
  %v62 = vld [vmem:[%s4] sm:$0xff]
  %v63 = vld [vmem:[%s4 + $0x8] sm:$0xff]
  %v64 = vld [vmem:[%s4 + $0x10] sm:$0xff]
  %v65 = vld [vmem:[%s4 + $0x18] sm:$0xff]
  %v66 = vld [vmem:[%s4 + $0x20] sm:$0xff]
  %v67 = vld [vmem:[%s4 + $0x28] sm:$0xff]
  %v68 = vld [vmem:[%s4 + $0x30] sm:$0xff]
  %v69 = vld [vmem:[%s4 + $0x38] sm:$0xff]
  %v70 = vld [vmem:[%s4 + $0x40] sm:$0xff]
  %v71 = vld [vmem:[%s4 + $0x48] sm:$0xff]
  %v72 = vld [vmem:[%s4 + $0x50] sm:$0xff]
  %v73 = vld [vmem:[%s4 + $0x58] sm:$0x3]
  %v74 = vld [vmem:[%s5] sm:$0xff]
  %v75 = vld [vmem:[%s5 + $0x8] sm:$0xff]
  %v76 = vld [vmem:[%s5 + $0x10] sm:$0xff]
  %v77 = vld [vmem:[%s5 + $0x18] sm:$0xff]
  %v78 = vld [vmem:[%s6] sm:$0xf]
  %v79 = vld [vmem:[%s0] sm:$0xff]
  %v80 = vld [vmem:[%s0 + $0x8] sm:$0xff]
  %v81 = vld [vmem:[%s0 + $0x10] sm:$0xff]
  %v82 = vld [vmem:[%s0 + $0x18] sm:$0xff]
  %v83 = vld [vmem:[%s0 + $0x20] sm:$0xff]
  %v84 = vld [vmem:[%s0 + $0x28] sm:$0xff]
  %v85 = vld [vmem:[%s0 + $0x30] sm:$0xff]
  %v86 = vld [vmem:[%s0 + $0x38] sm:$0xff]
  %v87 = vld [vmem:[%s0 + $0x40] sm:$0xff]
  %v88 = vld [vmem:[%s0 + $0x48] sm:$0xff]
  %v89 = vld [vmem:[%s0 + $0x50] sm:$0xff]
  %v90 = vld [vmem:[%s0 + $0x58] sm:$0x3]
  %vm91 = vcmask 736256
  %v93 = vsel %vm91, %v28, 0
  %v96 = vsel %vm91, %v29, 0
  %v99 = vsel %vm91, %v30, 0
  %v102 = vsel %vm91, %v31, 0
  %v105 = vsel %vm91, %v32, 0
  %v108 = vsel %vm91, %v33, 0
  %v111 = vsel %vm91, %v34, 0
  %v114 = vsel %vm91, %v35, 0
  %v117 = vsel %vm91, %v36, 0
  %v120 = vsel %vm91, %v37, 0
  %v123 = vsel %vm91, %v38, 0
  %v126 = vsel %vm91, %v39, 0
  %v129 = vsel %vm91, %v40, 0
  %v132 = vsel %vm91, %v41, 0
  %v135 = vsel %vm91, %v42, 0
  %v138 = vsel %vm91, %v43, 0
  %vm140 = vcmask 1041408
  %v142 = vsel %vm140, %v90, 0
  %144 = vmatpush.msra.mxu0 0.0
  %145 = vmatpush.msra.mxu0 0.0
  %146 = vmatpush.msra.mxu0 0.0
  %147 = vmatpush.msra.mxu0 0.0
  %148 = vmatpush.msra.mxu0 %v142
  %149 = vmatpush.msra.mxu0 %v89
  %150 = vmatpush.msra.mxu0 %v88
  %151 = vmatpush.msra.mxu0 %v87
  %152 = vmatpush.msra.mxu0 %v86
  %153 = vmatpush.msra.mxu0 %v85
  %154 = vmatpush.msra.mxu0 %v84
  %155 = vmatpush.msra.mxu0 %v83
  %156 = vmatpush.msra.mxu0 %v82
  %157 = vmatpush.msra.mxu0 %v81
  %158 = vmatpush.msra.mxu0 %v80
  %159 = vmatpush.msra.mxu0 %v79
  %160 = vmatmul.f32.gmra.mxu0 %v93
  %v161 = vpop.f32.mrf.mxu0
  %v162 = vadd.f32 0.0, %v161
  %163 = vmatmul.f32.gmra.mxu0 %v96
  %v164 = vpop.f32.mrf.mxu0
  %v165 = vadd.f32 0.0, %v164
  %166 = vmatmul.f32.gmra.mxu0 %v99
  %v167 = vpop.f32.mrf.mxu0
  %v168 = vadd.f32 0.0, %v167
  %169 = vmatmul.f32.gmra.mxu0 %v102
  %v170 = vpop.f32.mrf.mxu0
  %v171 = vadd.f32 0.0, %v170
  %172 = vmatmul.f32.gmra.mxu0 %v105
  %v173 = vpop.f32.mrf.mxu0
  %v174 = vadd.f32 0.0, %v173
  %175 = vmatmul.f32.gmra.mxu0 %v108
  %v176 = vpop.f32.mrf.mxu0
  %v177 = vadd.f32 0.0, %v176
  %178 = vmatmul.f32.gmra.mxu0 %v111
  %v179 = vpop.f32.mrf.mxu0
  %v180 = vadd.f32 0.0, %v179
  %181 = vmatmul.f32.gmra.mxu0 %v114
  %v182 = vpop.f32.mrf.mxu0
  %v183 = vadd.f32 0.0, %v182
  %184 = vmatmul.f32.gmra.mxu0 %v117
  %v185 = vpop.f32.mrf.mxu0
  %v186 = vadd.f32 0.0, %v185
  %187 = vmatmul.f32.gmra.mxu0 %v120
  %v188 = vpop.f32.mrf.mxu0
  %v189 = vadd.f32 0.0, %v188
  %190 = vmatmul.f32.gmra.mxu0 %v123
  %v191 = vpop.f32.mrf.mxu0
  %v192 = vadd.f32 0.0, %v191
  %193 = vmatmul.f32.gmra.mxu0 %v126
  %v194 = vpop.f32.mrf.mxu0
  %v195 = vadd.f32 0.0, %v194
  %196 = vmatmul.f32.gmra.mxu0 %v129
  %v197 = vpop.f32.mrf.mxu0
  %v198 = vadd.f32 0.0, %v197
  %199 = vmatmul.f32.gmra.mxu0 %v132
  %v200 = vpop.f32.mrf.mxu0
  %v201 = vadd.f32 0.0, %v200
  %202 = vmatmul.f32.gmra.mxu0 %v135
  %v203 = vpop.f32.mrf.mxu0
  %v204 = vadd.f32 0.0, %v203
  %205 = vmatmul.f32.gmra.mxu0 %v138
  %v206 = vpop.f32.mrf.mxu0
  %v207 = vadd.f32 0.0, %v206
  %208 = vdwg.mxu0
  %209 = vst [vmem:[#allocation2] sm:$0xff] %v162
  %210 = vst [vmem:[#allocation2 + $0x8] sm:$0xff] %v165
  %211 = vst [vmem:[#allocation2 + $0x10] sm:$0xff] %v168
  %212 = vst [vmem:[#allocation2 + $0x18] sm:$0xff] %v171
  %213 = vst [vmem:[#allocation2 + $0x20] sm:$0xff] %v174
  %214 = vst [vmem:[#allocation2 + $0x28] sm:$0xff] %v177
  %215 = vst [vmem:[#allocation2 + $0x30] sm:$0xff] %v180
  %216 = vst [vmem:[#allocation2 + $0x38] sm:$0xff] %v183
  %217 = vst [vmem:[#allocation2 + $0x40] sm:$0xff] %v186
  %218 = vst [vmem:[#allocation2 + $0x48] sm:$0xff] %v189
  %219 = vst [vmem:[#allocation2 + $0x50] sm:$0xff] %v192
  %220 = vst [vmem:[#allocation2 + $0x58] sm:$0xff] %v195
  %221 = vst [vmem:[#allocation2 + $0x60] sm:$0xff] %v198
  %222 = vst [vmem:[#allocation2 + $0x68] sm:$0xff] %v201
  %223 = vst [vmem:[#allocation2 + $0x70] sm:$0xff] %v204
  %224 = vst [vmem:[#allocation2 + $0x78] sm:$0xff] %v207
  %s225 = scalar_lea.vmem %s0, 96
  %v226 = vld [vmem:[%s225] sm:$0xff]
  %v227 = vld [vmem:[%s225 + $0x8] sm:$0xff]
  %v228 = vld [vmem:[%s225 + $0x10] sm:$0xff]
  %v229 = vld [vmem:[%s225 + $0x18] sm:$0xff]
  %v230 = vld [vmem:[%s225 + $0x20] sm:$0xff]
  %v231 = vld [vmem:[%s225 + $0x28] sm:$0xff]
  %v232 = vld [vmem:[%s225 + $0x30] sm:$0xff]
  %v233 = vld [vmem:[%s225 + $0x38] sm:$0xff]
  %v234 = vld [vmem:[%s225 + $0x40] sm:$0xff]
  %v235 = vld [vmem:[%s225 + $0x48] sm:$0xff]
  %v236 = vld [vmem:[%s225 + $0x50] sm:$0xff]
  %v237 = vld [vmem:[%s225 + $0x58] sm:$0x3]
  %v239 = vsel %vm140, %v237, 0
  %241 = vmatpush.msra.mxu0 0.0
  %242 = vmatpush.msra.mxu0 0.0
  %243 = vmatpush.msra.mxu0 0.0
  %244 = vmatpush.msra.mxu0 0.0
  %245 = vmatpush.msra.mxu0 %v239
  %246 = vmatpush.msra.mxu0 %v236
  %247 = vmatpush.msra.mxu0 %v235
  %248 = vmatpush.msra.mxu0 %v234
  %249 = vmatpush.msra.mxu0 %v233
  %250 = vmatpush.msra.mxu0 %v232
  %251 = vmatpush.msra.mxu0 %v231
  %252 = vmatpush.msra.mxu0 %v230
  %253 = vmatpush.msra.mxu0 %v229
  %254 = vmatpush.msra.mxu0 %v228
  %255 = vmatpush.msra.mxu0 %v227
  %256 = vmatpush.msra.mxu0 %v226
  %257 = vmatmul.f32.gmra.mxu0 %v93
  %v258 = vpop.f32.mrf.mxu0
  %v259 = vadd.f32 0.0, %v258
  %260 = vmatmul.f32.gmra.mxu0 %v96
  %v261 = vpop.f32.mrf.mxu0
  %v262 = vadd.f32 0.0, %v261
  %263 = vmatmul.f32.gmra.mxu0 %v99
  %v264 = vpop.f32.mrf.mxu0
  %v265 = vadd.f32 0.0, %v264
  %266 = vmatmul.f32.gmra.mxu0 %v102
  %v267 = vpop.f32.mrf.mxu0
  %v268 = vadd.f32 0.0, %v267
  %269 = vmatmul.f32.gmra.mxu0 %v105
  %v270 = vpop.f32.mrf.mxu0
  %v271 = vadd.f32 0.0, %v270
  %272 = vmatmul.f32.gmra.mxu0 %v108
  %v273 = vpop.f32.mrf.mxu0
  %v274 = vadd.f32 0.0, %v273
  %275 = vmatmul.f32.gmra.mxu0 %v111
  %v276 = vpop.f32.mrf.mxu0
  %v277 = vadd.f32 0.0, %v276
  %278 = vmatmul.f32.gmra.mxu0 %v114
  %v279 = vpop.f32.mrf.mxu0
  %v280 = vadd.f32 0.0, %v279
  %281 = vmatmul.f32.gmra.mxu0 %v117
  %v282 = vpop.f32.mrf.mxu0
  %v283 = vadd.f32 0.0, %v282
  %284 = vmatmul.f32.gmra.mxu0 %v120
  %v285 = vpop.f32.mrf.mxu0
  %v286 = vadd.f32 0.0, %v285
  %287 = vmatmul.f32.gmra.mxu0 %v123
  %v288 = vpop.f32.mrf.mxu0
  %v289 = vadd.f32 0.0, %v288
  %290 = vmatmul.f32.gmra.mxu0 %v126
  %v291 = vpop.f32.mrf.mxu0
  %v292 = vadd.f32 0.0, %v291
  %293 = vmatmul.f32.gmra.mxu0 %v129
  %v294 = vpop.f32.mrf.mxu0
  %v295 = vadd.f32 0.0, %v294
  %296 = vmatmul.f32.gmra.mxu0 %v132
  %v297 = vpop.f32.mrf.mxu0
  %v298 = vadd.f32 0.0, %v297
  %299 = vmatmul.f32.gmra.mxu0 %v135
  %v300 = vpop.f32.mrf.mxu0
  %v301 = vadd.f32 0.0, %v300
  %302 = vmatmul.f32.gmra.mxu0 %v138
  %v303 = vpop.f32.mrf.mxu0
  %v304 = vadd.f32 0.0, %v303
  %305 = vdwg.mxu0
  %s306 = scalar_lea.vmem [#allocation2], 128
  %307 = vst [vmem:[%s306] sm:$0xff] %v259
  %308 = vst [vmem:[%s306 + $0x8] sm:$0xff] %v262
  %309 = vst [vmem:[%s306 + $0x10] sm:$0xff] %v265
  %310 = vst [vmem:[%s306 + $0x18] sm:$0xff] %v268
  %311 = vst [vmem:[%s306 + $0x20] sm:$0xff] %v271
  %312 = vst [vmem:[%s306 + $0x28] sm:$0xff] %v274
  %313 = vst [vmem:[%s306 + $0x30] sm:$0xff] %v277
  %314 = vst [vmem:[%s306 + $0x38] sm:$0xff] %v280
  %315 = vst [vmem:[%s306 + $0x40] sm:$0xff] %v283
  %316 = vst [vmem:[%s306 + $0x48] sm:$0xff] %v286
  %317 = vst [vmem:[%s306 + $0x50] sm:$0xff] %v289
  %318 = vst [vmem:[%s306 + $0x58] sm:$0xff] %v292
  %319 = vst [vmem:[%s306 + $0x60] sm:$0xff] %v295
  %320 = vst [vmem:[%s306 + $0x68] sm:$0xff] %v298
  %321 = vst [vmem:[%s306 + $0x70] sm:$0xff] %v301
  %322 = vst [vmem:[%s306 + $0x78] sm:$0xff] %v304
  %s323 = scalar_lea.vmem %s0, 192
  %v324 = vld [vmem:[%s323] sm:$0xff]
  %v325 = vld [vmem:[%s323 + $0x8] sm:$0xff]
  %v326 = vld [vmem:[%s323 + $0x10] sm:$0xff]
  %v327 = vld [vmem:[%s323 + $0x18] sm:$0xff]
  %v328 = vld [vmem:[%s323 + $0x20] sm:$0xff]
  %v329 = vld [vmem:[%s323 + $0x28] sm:$0xff]
  %v330 = vld [vmem:[%s323 + $0x30] sm:$0xff]
  %v331 = vld [vmem:[%s323 + $0x38] sm:$0xff]
  %v332 = vld [vmem:[%s323 + $0x40] sm:$0xff]
  %v333 = vld [vmem:[%s323 + $0x48] sm:$0xff]
  %v334 = vld [vmem:[%s323 + $0x50] sm:$0xff]
  %v335 = vld [vmem:[%s323 + $0x58] sm:$0x3]
  %v337 = vsel %vm140, %v335, 0
  %339 = vmatpush.msra.mxu0 0.0
  %340 = vmatpush.msra.mxu0 0.0
  %341 = vmatpush.msra.mxu0 0.0
  %342 = vmatpush.msra.mxu0 0.0
  %343 = vmatpush.msra.mxu0 %v337
  %344 = vmatpush.msra.mxu0 %v334
  %345 = vmatpush.msra.mxu0 %v333
  %346 = vmatpush.msra.mxu0 %v332
  %347 = vmatpush.msra.mxu0 %v331
  %348 = vmatpush.msra.mxu0 %v330
  %349 = vmatpush.msra.mxu0 %v329
  %350 = vmatpush.msra.mxu0 %v328
  %351 = vmatpush.msra.mxu0 %v327
  %352 = vmatpush.msra.mxu0 %v326
  %353 = vmatpush.msra.mxu0 %v325
  %354 = vmatpush.msra.mxu0 %v324
  %355 = vmatmul.f32.gmra.mxu0 %v93
  %v356 = vpop.f32.mrf.mxu0
  %v357 = vadd.f32 0.0, %v356
  %358 = vmatmul.f32.gmra.mxu0 %v96
  %v359 = vpop.f32.mrf.mxu0
  %v360 = vadd.f32 0.0, %v359
  %361 = vmatmul.f32.gmra.mxu0 %v99
  %v362 = vpop.f32.mrf.mxu0
  %v363 = vadd.f32 0.0, %v362
  %364 = vmatmul.f32.gmra.mxu0 %v102
  %v365 = vpop.f32.mrf.mxu0
  %v366 = vadd.f32 0.0, %v365
  %367 = vmatmul.f32.gmra.mxu0 %v105
  %v368 = vpop.f32.mrf.mxu0
  %v369 = vadd.f32 0.0, %v368
  %370 = vmatmul.f32.gmra.mxu0 %v108
  %v371 = vpop.f32.mrf.mxu0
  %v372 = vadd.f32 0.0, %v371
  %373 = vmatmul.f32.gmra.mxu0 %v111
  %v374 = vpop.f32.mrf.mxu0
  %v375 = vadd.f32 0.0, %v374
  %376 = vmatmul.f32.gmra.mxu0 %v114
  %v377 = vpop.f32.mrf.mxu0
  %v378 = vadd.f32 0.0, %v377
  %379 = vmatmul.f32.gmra.mxu0 %v117
  %v380 = vpop.f32.mrf.mxu0
  %v381 = vadd.f32 0.0, %v380
  %382 = vmatmul.f32.gmra.mxu0 %v120
  %v383 = vpop.f32.mrf.mxu0
  %v384 = vadd.f32 0.0, %v383
  %385 = vmatmul.f32.gmra.mxu0 %v123
  %v386 = vpop.f32.mrf.mxu0
  %v387 = vadd.f32 0.0, %v386
  %388 = vmatmul.f32.gmra.mxu0 %v126
  %v389 = vpop.f32.mrf.mxu0
  %v390 = vadd.f32 0.0, %v389
  %391 = vmatmul.f32.gmra.mxu0 %v129
  %v392 = vpop.f32.mrf.mxu0
  %v393 = vadd.f32 0.0, %v392
  %394 = vmatmul.f32.gmra.mxu0 %v132
  %v395 = vpop.f32.mrf.mxu0
  %v396 = vadd.f32 0.0, %v395
  %397 = vmatmul.f32.gmra.mxu0 %v135
  %v398 = vpop.f32.mrf.mxu0
  %v399 = vadd.f32 0.0, %v398
  %400 = vmatmul.f32.gmra.mxu0 %v138
  %v401 = vpop.f32.mrf.mxu0
  %v402 = vadd.f32 0.0, %v401
  %403 = vdwg.mxu0
  %s404 = scalar_lea.vmem [#allocation2], 256
  %405 = vst [vmem:[%s404] sm:$0xff] %v357
  %406 = vst [vmem:[%s404 + $0x8] sm:$0xff] %v360
  %407 = vst [vmem:[%s404 + $0x10] sm:$0xff] %v363
  %408 = vst [vmem:[%s404 + $0x18] sm:$0xff] %v366
  %409 = vst [vmem:[%s404 + $0x20] sm:$0xff] %v369
  %410 = vst [vmem:[%s404 + $0x28] sm:$0xff] %v372
  %411 = vst [vmem:[%s404 + $0x30] sm:$0xff] %v375
  %412 = vst [vmem:[%s404 + $0x38] sm:$0xff] %v378
  %413 = vst [vmem:[%s404 + $0x40] sm:$0xff] %v381
  %414 = vst [vmem:[%s404 + $0x48] sm:$0xff] %v384
  %415 = vst [vmem:[%s404 + $0x50] sm:$0xff] %v387
  %416 = vst [vmem:[%s404 + $0x58] sm:$0xff] %v390
  %417 = vst [vmem:[%s404 + $0x60] sm:$0xff] %v393
  %418 = vst [vmem:[%s404 + $0x68] sm:$0xff] %v396
  %419 = vst [vmem:[%s404 + $0x70] sm:$0xff] %v399
  %420 = vst [vmem:[%s404 + $0x78] sm:$0xff] %v402
  %s421 = scalar_lea.vmem %s0, 288
  %v422 = vld [vmem:[%s421] sm:$0xff]
  %v423 = vld [vmem:[%s421 + $0x8] sm:$0xff]
  %v424 = vld [vmem:[%s421 + $0x10] sm:$0xff]
  %v425 = vld [vmem:[%s421 + $0x18] sm:$0xff]
  %v426 = vld [vmem:[%s421 + $0x20] sm:$0xff]
  %v427 = vld [vmem:[%s421 + $0x28] sm:$0xff]
  %v428 = vld [vmem:[%s421 + $0x30] sm:$0xff]
  %v429 = vld [vmem:[%s421 + $0x38] sm:$0xff]
  %v430 = vld [vmem:[%s421 + $0x40] sm:$0xff]
  %v431 = vld [vmem:[%s421 + $0x48] sm:$0xff]
  %v432 = vld [vmem:[%s421 + $0x50] sm:$0xff]
  %v433 = vld [vmem:[%s421 + $0x58] sm:$0x3]
  %v435 = vsel %vm140, %v433, 0
  %437 = vmatpush.msra.mxu0 0.0
  %438 = vmatpush.msra.mxu0 0.0
  %439 = vmatpush.msra.mxu0 0.0
  %440 = vmatpush.msra.mxu0 0.0
  %441 = vmatpush.msra.mxu0 %v435
  %442 = vmatpush.msra.mxu0 %v432
  %443 = vmatpush.msra.mxu0 %v431
  %444 = vmatpush.msra.mxu0 %v430
  %445 = vmatpush.msra.mxu0 %v429
  %446 = vmatpush.msra.mxu0 %v428
  %447 = vmatpush.msra.mxu0 %v427
  %448 = vmatpush.msra.mxu0 %v426
  %449 = vmatpush.msra.mxu0 %v425
  %450 = vmatpush.msra.mxu0 %v424
  %451 = vmatpush.msra.mxu0 %v423
  %452 = vmatpush.msra.mxu0 %v422
  %453 = vmatmul.f32.gmra.mxu0 %v93
  %v454 = vpop.f32.mrf.mxu0
  %v455 = vadd.f32 0.0, %v454
  %456 = vmatmul.f32.gmra.mxu0 %v96
  %v457 = vpop.f32.mrf.mxu0
  %v458 = vadd.f32 0.0, %v457
  %459 = vmatmul.f32.gmra.mxu0 %v99
  %v460 = vpop.f32.mrf.mxu0
  %v461 = vadd.f32 0.0, %v460
  %462 = vmatmul.f32.gmra.mxu0 %v102
  %v463 = vpop.f32.mrf.mxu0
  %v464 = vadd.f32 0.0, %v463
  %465 = vmatmul.f32.gmra.mxu0 %v105
  %v466 = vpop.f32.mrf.mxu0
  %v467 = vadd.f32 0.0, %v466
  %468 = vmatmul.f32.gmra.mxu0 %v108
  %v469 = vpop.f32.mrf.mxu0
  %v470 = vadd.f32 0.0, %v469
  %471 = vmatmul.f32.gmra.mxu0 %v111
  %v472 = vpop.f32.mrf.mxu0
  %v473 = vadd.f32 0.0, %v472
  %474 = vmatmul.f32.gmra.mxu0 %v114
  %v475 = vpop.f32.mrf.mxu0
  %v476 = vadd.f32 0.0, %v475
  %477 = vmatmul.f32.gmra.mxu0 %v117
  %v478 = vpop.f32.mrf.mxu0
  %v479 = vadd.f32 0.0, %v478
  %480 = vmatmul.f32.gmra.mxu0 %v120
  %v481 = vpop.f32.mrf.mxu0
  %v482 = vadd.f32 0.0, %v481
  %483 = vmatmul.f32.gmra.mxu0 %v123
  %v484 = vpop.f32.mrf.mxu0
  %v485 = vadd.f32 0.0, %v484
  %486 = vmatmul.f32.gmra.mxu0 %v126
  %v487 = vpop.f32.mrf.mxu0
  %v488 = vadd.f32 0.0, %v487
  %489 = vmatmul.f32.gmra.mxu0 %v129
  %v490 = vpop.f32.mrf.mxu0
  %v491 = vadd.f32 0.0, %v490
  %492 = vmatmul.f32.gmra.mxu0 %v132
  %v493 = vpop.f32.mrf.mxu0
  %v494 = vadd.f32 0.0, %v493
  %495 = vmatmul.f32.gmra.mxu0 %v135
  %v496 = vpop.f32.mrf.mxu0
  %v497 = vadd.f32 0.0, %v496
  %498 = vmatmul.f32.gmra.mxu0 %v138
  %v499 = vpop.f32.mrf.mxu0
  %v500 = vadd.f32 0.0, %v499
  %501 = vdwg.mxu0
  %s502 = scalar_lea.vmem [#allocation2], 384
  %503 = vst [vmem:[%s502] sm:$0xff] %v455
  %504 = vst [vmem:[%s502 + $0x8] sm:$0xff] %v458
  %505 = vst [vmem:[%s502 + $0x10] sm:$0xff] %v461
  %506 = vst [vmem:[%s502 + $0x18] sm:$0xff] %v464
  %507 = vst [vmem:[%s502 + $0x20] sm:$0xff] %v467
  %508 = vst [vmem:[%s502 + $0x28] sm:$0xff] %v470
  %509 = vst [vmem:[%s502 + $0x30] sm:$0xff] %v473
  %510 = vst [vmem:[%s502 + $0x38] sm:$0xff] %v476
  %511 = vst [vmem:[%s502 + $0x40] sm:$0xff] %v479
  %512 = vst [vmem:[%s502 + $0x48] sm:$0xff] %v482
  %513 = vst [vmem:[%s502 + $0x50] sm:$0xff] %v485
  %514 = vst [vmem:[%s502 + $0x58] sm:$0xff] %v488
  %515 = vst [vmem:[%s502 + $0x60] sm:$0xff] %v491
  %516 = vst [vmem:[%s502 + $0x68] sm:$0xff] %v494
  %517 = vst [vmem:[%s502 + $0x70] sm:$0xff] %v497
  %518 = vst [vmem:[%s502 + $0x78] sm:$0xff] %v500
  %s519 = scalar_lea.vmem %s0, 384
  %v520 = vld [vmem:[%s519] sm:$0xff]
  %v521 = vld [vmem:[%s519 + $0x8] sm:$0xff]
  %v522 = vld [vmem:[%s519 + $0x10] sm:$0xff]
  %v523 = vld [vmem:[%s519 + $0x18] sm:$0xff]
  %v524 = vld [vmem:[%s519 + $0x20] sm:$0xff]
  %v525 = vld [vmem:[%s519 + $0x28] sm:$0xff]
  %v526 = vld [vmem:[%s519 + $0x30] sm:$0xff]
  %v527 = vld [vmem:[%s519 + $0x38] sm:$0xff]
  %v528 = vld [vmem:[%s519 + $0x40] sm:$0xff]
  %v529 = vld [vmem:[%s519 + $0x48] sm:$0xff]
  %v530 = vld [vmem:[%s519 + $0x50] sm:$0xff]
  %v531 = vld [vmem:[%s519 + $0x58] sm:$0x3]
  %v533 = vsel %vm140, %v531, 0
  %535 = vmatpush.msra.mxu0 0.0
  %536 = vmatpush.msra.mxu0 0.0
  %537 = vmatpush.msra.mxu0 0.0
  %538 = vmatpush.msra.mxu0 0.0
  %539 = vmatpush.msra.mxu0 %v533
  %540 = vmatpush.msra.mxu0 %v530
  %541 = vmatpush.msra.mxu0 %v529
  %542 = vmatpush.msra.mxu0 %v528
  %543 = vmatpush.msra.mxu0 %v527
  %544 = vmatpush.msra.mxu0 %v526
  %545 = vmatpush.msra.mxu0 %v525
  %546 = vmatpush.msra.mxu0 %v524
  %547 = vmatpush.msra.mxu0 %v523
  %548 = vmatpush.msra.mxu0 %v522
  %549 = vmatpush.msra.mxu0 %v521
  %550 = vmatpush.msra.mxu0 %v520
  %551 = vmatmul.f32.gmra.mxu0 %v93
  %v552 = vpop.f32.mrf.mxu0
  %v553 = vadd.f32 0.0, %v552
  %554 = vmatmul.f32.gmra.mxu0 %v96
  %v555 = vpop.f32.mrf.mxu0
  %v556 = vadd.f32 0.0, %v555
  %557 = vmatmul.f32.gmra.mxu0 %v99
  %v558 = vpop.f32.mrf.mxu0
  %v559 = vadd.f32 0.0, %v558
  %560 = vmatmul.f32.gmra.mxu0 %v102
  %v561 = vpop.f32.mrf.mxu0
  %v562 = vadd.f32 0.0, %v561
  %563 = vmatmul.f32.gmra.mxu0 %v105
  %v564 = vpop.f32.mrf.mxu0
  %v565 = vadd.f32 0.0, %v564
  %566 = vmatmul.f32.gmra.mxu0 %v108
  %v567 = vpop.f32.mrf.mxu0
  %v568 = vadd.f32 0.0, %v567
  %569 = vmatmul.f32.gmra.mxu0 %v111
  %v570 = vpop.f32.mrf.mxu0
  %v571 = vadd.f32 0.0, %v570
  %572 = vmatmul.f32.gmra.mxu0 %v114
  %v573 = vpop.f32.mrf.mxu0
  %v574 = vadd.f32 0.0, %v573
  %575 = vmatmul.f32.gmra.mxu0 %v117
  %v576 = vpop.f32.mrf.mxu0
  %v577 = vadd.f32 0.0, %v576
  %578 = vmatmul.f32.gmra.mxu0 %v120
  %v579 = vpop.f32.mrf.mxu0
  %v580 = vadd.f32 0.0, %v579
  %581 = vmatmul.f32.gmra.mxu0 %v123
  %v582 = vpop.f32.mrf.mxu0
  %v583 = vadd.f32 0.0, %v582
  %584 = vmatmul.f32.gmra.mxu0 %v126
  %v585 = vpop.f32.mrf.mxu0
  %v586 = vadd.f32 0.0, %v585
  %587 = vmatmul.f32.gmra.mxu0 %v129
  %v588 = vpop.f32.mrf.mxu0
  %v589 = vadd.f32 0.0, %v588
  %590 = vmatmul.f32.gmra.mxu0 %v132
  %v591 = vpop.f32.mrf.mxu0
  %v592 = vadd.f32 0.0, %v591
  %593 = vmatmul.f32.gmra.mxu0 %v135
  %v594 = vpop.f32.mrf.mxu0
  %v595 = vadd.f32 0.0, %v594
  %596 = vmatmul.f32.gmra.mxu0 %v138
  %v597 = vpop.f32.mrf.mxu0
  %v598 = vadd.f32 0.0, %v597
  %599 = vdwg.mxu0
  %s600 = scalar_lea.vmem [#allocation2], 512
  %601 = vst [vmem:[%s600] sm:$0xff] %v553
  %602 = vst [vmem:[%s600 + $0x8] sm:$0xff] %v556
  %603 = vst [vmem:[%s600 + $0x10] sm:$0xff] %v559
  %604 = vst [vmem:[%s600 + $0x18] sm:$0xff] %v562
  %605 = vst [vmem:[%s600 + $0x20] sm:$0xff] %v565
  %606 = vst [vmem:[%s600 + $0x28] sm:$0xff] %v568
  %607 = vst [vmem:[%s600 + $0x30] sm:$0xff] %v571
  %608 = vst [vmem:[%s600 + $0x38] sm:$0xff] %v574
  %609 = vst [vmem:[%s600 + $0x40] sm:$0xff] %v577
  %610 = vst [vmem:[%s600 + $0x48] sm:$0xff] %v580
  %611 = vst [vmem:[%s600 + $0x50] sm:$0xff] %v583
  %612 = vst [vmem:[%s600 + $0x58] sm:$0xff] %v586
  %613 = vst [vmem:[%s600 + $0x60] sm:$0xff] %v589
  %614 = vst [vmem:[%s600 + $0x68] sm:$0xff] %v592
  %615 = vst [vmem:[%s600 + $0x70] sm:$0xff] %v595
  %616 = vst [vmem:[%s600 + $0x78] sm:$0xff] %v598
  %s617 = scalar_lea.vmem %s0, 480
  %v618 = vld [vmem:[%s617] sm:$0xff]
  %v619 = vld [vmem:[%s617 + $0x8] sm:$0xff]
  %v620 = vld [vmem:[%s617 + $0x10] sm:$0xff]
  %v621 = vld [vmem:[%s617 + $0x18] sm:$0xff]
  %v622 = vld [vmem:[%s617 + $0x20] sm:$0xff]
  %v623 = vld [vmem:[%s617 + $0x28] sm:$0xff]
  %v624 = vld [vmem:[%s617 + $0x30] sm:$0xff]
  %v625 = vld [vmem:[%s617 + $0x38] sm:$0xff]
  %v626 = vld [vmem:[%s617 + $0x40] sm:$0xff]
  %v627 = vld [vmem:[%s617 + $0x48] sm:$0xff]
  %v628 = vld [vmem:[%s617 + $0x50] sm:$0xff]
  %v629 = vld [vmem:[%s617 + $0x58] sm:$0x3]
  %v631 = vsel %vm140, %v629, 0
  %633 = vmatpush.msra.mxu0 0.0
  %634 = vmatpush.msra.mxu0 0.0
  %635 = vmatpush.msra.mxu0 0.0
  %636 = vmatpush.msra.mxu0 0.0
  %637 = vmatpush.msra.mxu0 %v631
  %638 = vmatpush.msra.mxu0 %v628
  %639 = vmatpush.msra.mxu0 %v627
  %640 = vmatpush.msra.mxu0 %v626
  %641 = vmatpush.msra.mxu0 %v625
  %642 = vmatpush.msra.mxu0 %v624
  %643 = vmatpush.msra.mxu0 %v623
  %644 = vmatpush.msra.mxu0 %v622
  %645 = vmatpush.msra.mxu0 %v621
  %646 = vmatpush.msra.mxu0 %v620
  %647 = vmatpush.msra.mxu0 %v619
  %648 = vmatpush.msra.mxu0 %v618
  %649 = vmatmul.f32.gmra.mxu0 %v93
  %v650 = vpop.f32.mrf.mxu0
  %v651 = vadd.f32 0.0, %v650
  %652 = vmatmul.f32.gmra.mxu0 %v96
  %v653 = vpop.f32.mrf.mxu0
  %v654 = vadd.f32 0.0, %v653
  %655 = vmatmul.f32.gmra.mxu0 %v99
  %v656 = vpop.f32.mrf.mxu0
  %v657 = vadd.f32 0.0, %v656
  %658 = vmatmul.f32.gmra.mxu0 %v102
  %v659 = vpop.f32.mrf.mxu0
  %v660 = vadd.f32 0.0, %v659
  %661 = vmatmul.f32.gmra.mxu0 %v105
  %v662 = vpop.f32.mrf.mxu0
  %v663 = vadd.f32 0.0, %v662
  %664 = vmatmul.f32.gmra.mxu0 %v108
  %v665 = vpop.f32.mrf.mxu0
  %v666 = vadd.f32 0.0, %v665
  %667 = vmatmul.f32.gmra.mxu0 %v111
  %v668 = vpop.f32.mrf.mxu0
  %v669 = vadd.f32 0.0, %v668
  %670 = vmatmul.f32.gmra.mxu0 %v114
  %v671 = vpop.f32.mrf.mxu0
  %v672 = vadd.f32 0.0, %v671
  %673 = vmatmul.f32.gmra.mxu0 %v117
  %v674 = vpop.f32.mrf.mxu0
  %v675 = vadd.f32 0.0, %v674
  %676 = vmatmul.f32.gmra.mxu0 %v120
  %v677 = vpop.f32.mrf.mxu0
  %v678 = vadd.f32 0.0, %v677
  %679 = vmatmul.f32.gmra.mxu0 %v123
  %v680 = vpop.f32.mrf.mxu0
  %v681 = vadd.f32 0.0, %v680
  %682 = vmatmul.f32.gmra.mxu0 %v126
  %v683 = vpop.f32.mrf.mxu0
  %v684 = vadd.f32 0.0, %v683
  %685 = vmatmul.f32.gmra.mxu0 %v129
  %v686 = vpop.f32.mrf.mxu0
  %v687 = vadd.f32 0.0, %v686
  %688 = vmatmul.f32.gmra.mxu0 %v132
  %v689 = vpop.f32.mrf.mxu0
  %v690 = vadd.f32 0.0, %v689
  %691 = vmatmul.f32.gmra.mxu0 %v135
  %v692 = vpop.f32.mrf.mxu0
  %v693 = vadd.f32 0.0, %v692
  %694 = vmatmul.f32.gmra.mxu0 %v138
  %v695 = vpop.f32.mrf.mxu0
  %v696 = vadd.f32 0.0, %v695
  %697 = vdwg.mxu0
  %s698 = scalar_lea.vmem [#allocation2], 640
  %699 = vst [vmem:[%s698] sm:$0xff] %v651
  %700 = vst [vmem:[%s698 + $0x8] sm:$0xff] %v654
  %701 = vst [vmem:[%s698 + $0x10] sm:$0xff] %v657
  %702 = vst [vmem:[%s698 + $0x18] sm:$0xff] %v660
  %703 = vst [vmem:[%s698 + $0x20] sm:$0xff] %v663
  %704 = vst [vmem:[%s698 + $0x28] sm:$0xff] %v666
  %705 = vst [vmem:[%s698 + $0x30] sm:$0xff] %v669
  %706 = vst [vmem:[%s698 + $0x38] sm:$0xff] %v672
  %707 = vst [vmem:[%s698 + $0x40] sm:$0xff] %v675
  %708 = vst [vmem:[%s698 + $0x48] sm:$0xff] %v678
  %709 = vst [vmem:[%s698 + $0x50] sm:$0xff] %v681
  %710 = vst [vmem:[%s698 + $0x58] sm:$0xff] %v684
  %711 = vst [vmem:[%s698 + $0x60] sm:$0xff] %v687
  %712 = vst [vmem:[%s698 + $0x68] sm:$0xff] %v690
  %713 = vst [vmem:[%s698 + $0x70] sm:$0xff] %v693
  %714 = vst [vmem:[%s698 + $0x78] sm:$0xff] %v696
  %s715 = scalar_lea.vmem %s0, 576
  %v716 = vld [vmem:[%s715] sm:$0xff]
  %v717 = vld [vmem:[%s715 + $0x8] sm:$0xff]
  %v718 = vld [vmem:[%s715 + $0x10] sm:$0xff]
  %v719 = vld [vmem:[%s715 + $0x18] sm:$0xff]
  %v720 = vld [vmem:[%s715 + $0x20] sm:$0xff]
  %v721 = vld [vmem:[%s715 + $0x28] sm:$0xff]
  %v722 = vld [vmem:[%s715 + $0x30] sm:$0xff]
  %v723 = vld [vmem:[%s715 + $0x38] sm:$0xff]
  %v724 = vld [vmem:[%s715 + $0x40] sm:$0xff]
  %v725 = vld [vmem:[%s715 + $0x48] sm:$0xff]
  %v726 = vld [vmem:[%s715 + $0x50] sm:$0xff]
  %v727 = vld [vmem:[%s715 + $0x58] sm:$0x3]
  %v729 = vsel %vm140, %v727, 0
  %731 = vmatpush.msra.mxu0 0.0
  %732 = vmatpush.msra.mxu0 0.0
  %733 = vmatpush.msra.mxu0 0.0
  %734 = vmatpush.msra.mxu0 0.0
  %735 = vmatpush.msra.mxu0 %v729
  %736 = vmatpush.msra.mxu0 %v726
  %737 = vmatpush.msra.mxu0 %v725
  %738 = vmatpush.msra.mxu0 %v724
  %739 = vmatpush.msra.mxu0 %v723
  %740 = vmatpush.msra.mxu0 %v722
  %741 = vmatpush.msra.mxu0 %v721
  %742 = vmatpush.msra.mxu0 %v720
  %743 = vmatpush.msra.mxu0 %v719
  %744 = vmatpush.msra.mxu0 %v718
  %745 = vmatpush.msra.mxu0 %v717
  %746 = vmatpush.msra.mxu0 %v716
  %747 = vmatmul.f32.gmra.mxu0 %v93
  %v748 = vpop.f32.mrf.mxu0
  %v749 = vadd.f32 0.0, %v748
  %750 = vmatmul.f32.gmra.mxu0 %v96
  %v751 = vpop.f32.mrf.mxu0
  %v752 = vadd.f32 0.0, %v751
  %753 = vmatmul.f32.gmra.mxu0 %v99
  %v754 = vpop.f32.mrf.mxu0
  %v755 = vadd.f32 0.0, %v754
  %756 = vmatmul.f32.gmra.mxu0 %v102
  %v757 = vpop.f32.mrf.mxu0
  %v758 = vadd.f32 0.0, %v757
  %759 = vmatmul.f32.gmra.mxu0 %v105
  %v760 = vpop.f32.mrf.mxu0
  %v761 = vadd.f32 0.0, %v760
  %762 = vmatmul.f32.gmra.mxu0 %v108
  %v763 = vpop.f32.mrf.mxu0
  %v764 = vadd.f32 0.0, %v763
  %765 = vmatmul.f32.gmra.mxu0 %v111
  %v766 = vpop.f32.mrf.mxu0
  %v767 = vadd.f32 0.0, %v766
  %768 = vmatmul.f32.gmra.mxu0 %v114
  %v769 = vpop.f32.mrf.mxu0
  %v770 = vadd.f32 0.0, %v769
  %771 = vmatmul.f32.gmra.mxu0 %v117
  %v772 = vpop.f32.mrf.mxu0
  %v773 = vadd.f32 0.0, %v772
  %774 = vmatmul.f32.gmra.mxu0 %v120
  %v775 = vpop.f32.mrf.mxu0
  %v776 = vadd.f32 0.0, %v775
  %777 = vmatmul.f32.gmra.mxu0 %v123
  %v778 = vpop.f32.mrf.mxu0
  %v779 = vadd.f32 0.0, %v778
  %780 = vmatmul.f32.gmra.mxu0 %v126
  %v781 = vpop.f32.mrf.mxu0
  %v782 = vadd.f32 0.0, %v781
  %783 = vmatmul.f32.gmra.mxu0 %v129
  %v784 = vpop.f32.mrf.mxu0
  %v785 = vadd.f32 0.0, %v784
  %786 = vmatmul.f32.gmra.mxu0 %v132
  %v787 = vpop.f32.mrf.mxu0
  %v788 = vadd.f32 0.0, %v787
  %789 = vmatmul.f32.gmra.mxu0 %v135
  %v790 = vpop.f32.mrf.mxu0
  %v791 = vadd.f32 0.0, %v790
  %792 = vmatmul.f32.gmra.mxu0 %v138
  %v793 = vpop.f32.mrf.mxu0
  %v794 = vadd.f32 0.0, %v793
  %795 = vdwg.mxu0
  %s796 = scalar_lea.vmem [#allocation2], 768
  %797 = vst [vmem:[%s796] sm:$0xff] %v749
  %798 = vst [vmem:[%s796 + $0x8] sm:$0xff] %v752
  %799 = vst [vmem:[%s796 + $0x10] sm:$0xff] %v755
  %800 = vst [vmem:[%s796 + $0x18] sm:$0xff] %v758
  %801 = vst [vmem:[%s796 + $0x20] sm:$0xff] %v761
  %802 = vst [vmem:[%s796 + $0x28] sm:$0xff] %v764
  %803 = vst [vmem:[%s796 + $0x30] sm:$0xff] %v767
  %804 = vst [vmem:[%s796 + $0x38] sm:$0xff] %v770
  %805 = vst [vmem:[%s796 + $0x40] sm:$0xff] %v773
  %806 = vst [vmem:[%s796 + $0x48] sm:$0xff] %v776
  %807 = vst [vmem:[%s796 + $0x50] sm:$0xff] %v779
  %808 = vst [vmem:[%s796 + $0x58] sm:$0xff] %v782
  %809 = vst [vmem:[%s796 + $0x60] sm:$0xff] %v785
  %810 = vst [vmem:[%s796 + $0x68] sm:$0xff] %v788
  %811 = vst [vmem:[%s796 + $0x70] sm:$0xff] %v791
  %812 = vst [vmem:[%s796 + $0x78] sm:$0xff] %v794
  %s813 = scalar_lea.vmem %s0, 672
  %v814 = vld [vmem:[%s813] sm:$0xff]
  %v815 = vld [vmem:[%s813 + $0x8] sm:$0xff]
  %v816 = vld [vmem:[%s813 + $0x10] sm:$0xff]
  %v817 = vld [vmem:[%s813 + $0x18] sm:$0xff]
  %v818 = vld [vmem:[%s813 + $0x20] sm:$0xff]
  %v819 = vld [vmem:[%s813 + $0x28] sm:$0xff]
  %v820 = vld [vmem:[%s813 + $0x30] sm:$0xff]
  %v821 = vld [vmem:[%s813 + $0x38] sm:$0xff]
  %v822 = vld [vmem:[%s813 + $0x40] sm:$0xff]
  %v823 = vld [vmem:[%s813 + $0x48] sm:$0xff]
  %v824 = vld [vmem:[%s813 + $0x50] sm:$0xff]
  %v825 = vld [vmem:[%s813 + $0x58] sm:$0x3]
  %v827 = vsel %vm140, %v825, 0
  %829 = vmatpush.msra.mxu0 0.0
  %830 = vmatpush.msra.mxu0 0.0
  %831 = vmatpush.msra.mxu0 0.0
  %832 = vmatpush.msra.mxu0 0.0
  %833 = vmatpush.msra.mxu0 %v827
  %834 = vmatpush.msra.mxu0 %v824
  %835 = vmatpush.msra.mxu0 %v823
  %836 = vmatpush.msra.mxu0 %v822
  %837 = vmatpush.msra.mxu0 %v821
  %838 = vmatpush.msra.mxu0 %v820
  %839 = vmatpush.msra.mxu0 %v819
  %840 = vmatpush.msra.mxu0 %v818
  %841 = vmatpush.msra.mxu0 %v817
  %842 = vmatpush.msra.mxu0 %v816
  %843 = vmatpush.msra.mxu0 %v815
  %844 = vmatpush.msra.mxu0 %v814
  %845 = vmatmul.f32.gmra.mxu0 %v93
  %v846 = vpop.f32.mrf.mxu0
  %v847 = vadd.f32 0.0, %v846
  %848 = vmatmul.f32.gmra.mxu0 %v96
  %v849 = vpop.f32.mrf.mxu0
  %v850 = vadd.f32 0.0, %v849
  %851 = vmatmul.f32.gmra.mxu0 %v99
  %v852 = vpop.f32.mrf.mxu0
  %v853 = vadd.f32 0.0, %v852
  %854 = vmatmul.f32.gmra.mxu0 %v102
  %v855 = vpop.f32.mrf.mxu0
  %v856 = vadd.f32 0.0, %v855
  %857 = vmatmul.f32.gmra.mxu0 %v105
  %v858 = vpop.f32.mrf.mxu0
  %v859 = vadd.f32 0.0, %v858
  %860 = vmatmul.f32.gmra.mxu0 %v108
  %v861 = vpop.f32.mrf.mxu0
  %v862 = vadd.f32 0.0, %v861
  %863 = vmatmul.f32.gmra.mxu0 %v111
  %v864 = vpop.f32.mrf.mxu0
  %v865 = vadd.f32 0.0, %v864
  %866 = vmatmul.f32.gmra.mxu0 %v114
  %v867 = vpop.f32.mrf.mxu0
  %v868 = vadd.f32 0.0, %v867
  %869 = vmatmul.f32.gmra.mxu0 %v117
  %v870 = vpop.f32.mrf.mxu0
  %v871 = vadd.f32 0.0, %v870
  %872 = vmatmul.f32.gmra.mxu0 %v120
  %v873 = vpop.f32.mrf.mxu0
  %v874 = vadd.f32 0.0, %v873
  %875 = vmatmul.f32.gmra.mxu0 %v123
  %v876 = vpop.f32.mrf.mxu0
  %v877 = vadd.f32 0.0, %v876
  %878 = vmatmul.f32.gmra.mxu0 %v126
  %v879 = vpop.f32.mrf.mxu0
  %v880 = vadd.f32 0.0, %v879
  %881 = vmatmul.f32.gmra.mxu0 %v129
  %v882 = vpop.f32.mrf.mxu0
  %v883 = vadd.f32 0.0, %v882
  %884 = vmatmul.f32.gmra.mxu0 %v132
  %v885 = vpop.f32.mrf.mxu0
  %v886 = vadd.f32 0.0, %v885
  %887 = vmatmul.f32.gmra.mxu0 %v135
  %v888 = vpop.f32.mrf.mxu0
  %v889 = vadd.f32 0.0, %v888
  %890 = vmatmul.f32.gmra.mxu0 %v138
  %v891 = vpop.f32.mrf.mxu0
  %v892 = vadd.f32 0.0, %v891
  %893 = vdwg.mxu0
  %s894 = scalar_lea.vmem [#allocation2], 896
  %895 = vst [vmem:[%s894] sm:$0xff] %v847
  %896 = vst [vmem:[%s894 + $0x8] sm:$0xff] %v850
  %897 = vst [vmem:[%s894 + $0x10] sm:$0xff] %v853
  %898 = vst [vmem:[%s894 + $0x18] sm:$0xff] %v856
  %899 = vst [vmem:[%s894 + $0x20] sm:$0xff] %v859
  %900 = vst [vmem:[%s894 + $0x28] sm:$0xff] %v862
  %901 = vst [vmem:[%s894 + $0x30] sm:$0xff] %v865
  %902 = vst [vmem:[%s894 + $0x38] sm:$0xff] %v868
  %903 = vst [vmem:[%s894 + $0x40] sm:$0xff] %v871
  %904 = vst [vmem:[%s894 + $0x48] sm:$0xff] %v874
  %905 = vst [vmem:[%s894 + $0x50] sm:$0xff] %v877
  %906 = vst [vmem:[%s894 + $0x58] sm:$0xff] %v880
  %907 = vst [vmem:[%s894 + $0x60] sm:$0xff] %v883
  %908 = vst [vmem:[%s894 + $0x68] sm:$0xff] %v886
  %909 = vst [vmem:[%s894 + $0x70] sm:$0xff] %v889
  %910 = vst [vmem:[%s894 + $0x78] sm:$0xff] %v892
  %v911 = vld [vmem:[#allocation2] sm:$0xff]
  %v912 = vld [vmem:[#allocation2 + $0x8] sm:$0xff]
  %v913 = vld [vmem:[#allocation2 + $0x10] sm:$0xff]
  %v914 = vld [vmem:[#allocation2 + $0x18] sm:$0xff]
  %v915 = vld [vmem:[#allocation2 + $0x20] sm:$0xff]
  %v916 = vld [vmem:[#allocation2 + $0x28] sm:$0xff]
  %v917 = vld [vmem:[#allocation2 + $0x30] sm:$0xff]
  %v918 = vld [vmem:[#allocation2 + $0x38] sm:$0xff]
  %v919 = vld [vmem:[#allocation2 + $0x40] sm:$0xff]
  %v920 = vld [vmem:[#allocation2 + $0x48] sm:$0xff]
  %v921 = vld [vmem:[#allocation2 + $0x50] sm:$0xff]
  %v922 = vld [vmem:[#allocation2 + $0x58] sm:$0xff]
  %v923 = vld [vmem:[#allocation2 + $0x60] sm:$0xff]
  %v924 = vld [vmem:[#allocation2 + $0x68] sm:$0xff]
  %v925 = vld [vmem:[#allocation2 + $0x70] sm:$0xff]
  %v926 = vld [vmem:[#allocation2 + $0x78] sm:$0xff]
  %vm927 = vcmask 261120
  %v929 = vsel %vm927, %v44, 0
  %v932 = vsel %vm927, %v45, 0
  %v935 = vsel %vm927, %v46, 0
  %v938 = vsel %vm927, %v47, 0
  %v941 = vsel %vm927, %v48, 0
  %v944 = vsel %vm927, %v49, 0
  %v947 = vsel %vm927, %v50, 0
  %v950 = vsel %vm927, %v51, 0
  %v953 = vsel %vm927, %v52, 0
  %v956 = vsel %vm927, %v53, 0
  %v959 = vsel %vm927, %v54, 0
  %v962 = vsel %vm927, %v55, 0
  %v965 = vsel %vm927, %v56, 0
  %v968 = vsel %vm927, %v57, 0
  %v971 = vsel %vm927, %v58, 0
  %v974 = vsel %vm927, %v59, 0
  %976 = vmatpush.msra.mxu0 0.0
  %977 = vmatpush.msra.mxu0 0.0
  %978 = vmatpush.msra.mxu0 0.0
  %979 = vmatpush.msra.mxu0 0.0
  %980 = vmatpush.msra.mxu0 0.0
  %981 = vmatpush.msra.mxu0 0.0
  %982 = vmatpush.msra.mxu0 0.0
  %983 = vmatpush.msra.mxu0 0.0
  %984 = vmatpush.msra.mxu0 0.0
  %985 = vmatpush.msra.mxu0 0.0
  %986 = vmatpush.msra.mxu0 0.0
  %987 = vmatpush.msra.mxu0 0.0
  %988 = vmatpush.msra.mxu0 0.0
  %989 = vmatpush.msra.mxu0 0.0
  %990 = vmatpush.msra.mxu0 0.0
  %991 = vmatpush.msra.mxu0 0.0
  %992 = vmatmul.f32.gmra.mxu0 %v929
  %v993 = vpop.f32.mrf.mxu0
  %v994 = vadd.f32 0.0, %v993
  %995 = vmatmul.f32.gmra.mxu0 %v932
  %v996 = vpop.f32.mrf.mxu0
  %v997 = vadd.f32 0.0, %v996
  %998 = vmatmul.f32.gmra.mxu0 %v935
  %v999 = vpop.f32.mrf.mxu0
  %v1000 = vadd.f32 0.0, %v999
  %1001 = vmatmul.f32.gmra.mxu0 %v938
  %v1002 = vpop.f32.mrf.mxu0
  %v1003 = vadd.f32 0.0, %v1002
  %1004 = vmatmul.f32.gmra.mxu0 %v941
  %v1005 = vpop.f32.mrf.mxu0
  %v1006 = vadd.f32 0.0, %v1005
  %1007 = vmatmul.f32.gmra.mxu0 %v944
  %v1008 = vpop.f32.mrf.mxu0
  %v1009 = vadd.f32 0.0, %v1008
  %1010 = vmatmul.f32.gmra.mxu0 %v947
  %v1011 = vpop.f32.mrf.mxu0
  %v1012 = vadd.f32 0.0, %v1011
  %1013 = vmatmul.f32.gmra.mxu0 %v950
  %v1014 = vpop.f32.mrf.mxu0
  %v1015 = vadd.f32 0.0, %v1014
  %1016 = vmatmul.f32.gmra.mxu0 %v953
  %v1017 = vpop.f32.mrf.mxu0
  %v1018 = vadd.f32 0.0, %v1017
  %1019 = vmatmul.f32.gmra.mxu0 %v956
  %v1020 = vpop.f32.mrf.mxu0
  %v1021 = vadd.f32 0.0, %v1020
  %1022 = vmatmul.f32.gmra.mxu0 %v959
  %v1023 = vpop.f32.mrf.mxu0
  %v1024 = vadd.f32 0.0, %v1023
  %1025 = vmatmul.f32.gmra.mxu0 %v962
  %v1026 = vpop.f32.mrf.mxu0
  %v1027 = vadd.f32 0.0, %v1026
  %1028 = vmatmul.f32.gmra.mxu0 %v965
  %v1029 = vpop.f32.mrf.mxu0
  %v1030 = vadd.f32 0.0, %v1029
  %1031 = vmatmul.f32.gmra.mxu0 %v968
  %v1032 = vpop.f32.mrf.mxu0
  %v1033 = vadd.f32 0.0, %v1032
  %1034 = vmatmul.f32.gmra.mxu0 %v971
  %v1035 = vpop.f32.mrf.mxu0
  %v1036 = vadd.f32 0.0, %v1035
  %1037 = vmatmul.f32.gmra.mxu0 %v974
  %v1038 = vpop.f32.mrf.mxu0
  %v1039 = vadd.f32 0.0, %v1038
  %1040 = vdwg.mxu0
  %v1041 = vadd.f32 %v911, %v994
  %v1042 = vadd.f32 %v912, %v997
  %v1043 = vadd.f32 %v913, %v1000
  %v1044 = vadd.f32 %v914, %v1003
  %v1045 = vadd.f32 %v915, %v1006
  %v1046 = vadd.f32 %v916, %v1009
  %v1047 = vadd.f32 %v917, %v1012
  %v1048 = vadd.f32 %v918, %v1015
  %v1049 = vadd.f32 %v919, %v1018
  %v1050 = vadd.f32 %v920, %v1021
  %v1051 = vadd.f32 %v921, %v1024
  %v1052 = vadd.f32 %v922, %v1027
  %v1053 = vadd.f32 %v923, %v1030
  %v1054 = vadd.f32 %v924, %v1033
  %v1055 = vadd.f32 %v925, %v1036
  %v1056 = vadd.f32 %v926, %v1039
  %v1057 = vxor.u32 %v1041, 2147483648
  %v1058 = vxor.u32 %v1042, 2147483648
  %v1059 = vxor.u32 %v1043, 2147483648
  %v1060 = vxor.u32 %v1044, 2147483648
  %v1061 = vxor.u32 %v1045, 2147483648
  %v1062 = vxor.u32 %v1046, 2147483648
  %v1063 = vxor.u32 %v1047, 2147483648
  %v1064 = vxor.u32 %v1048, 2147483648
  %v1065 = vxor.u32 %v1049, 2147483648
  %v1066 = vxor.u32 %v1050, 2147483648
  %v1067 = vxor.u32 %v1051, 2147483648
  %v1068 = vxor.u32 %v1052, 2147483648
  %v1069 = vmul.f32 %v1057, 1.442695
  %v1070 = vpow.pop %v1069
  %v1071 = vmul.f32 %v1058, 1.442695
  %v1072 = vpow.pop %v1071
  %v1073 = vmul.f32 %v1059, 1.442695
  %v1074 = vpow.pop %v1073
  %v1075 = vmul.f32 %v1060, 1.442695
  %v1076 = vpow.pop %v1075
  %v1077 = vmul.f32 %v1061, 1.442695
  %v1078 = vpow.pop %v1077
  %v1079 = vmul.f32 %v1062, 1.442695
  %v1080 = vpow.pop %v1079
  %v1081 = vmul.f32 %v1063, 1.442695
  %v1082 = vpow.pop %v1081
  %v1083 = vmul.f32 %v1064, 1.442695
  %v1084 = vpow.pop %v1083
  %v1085 = vmul.f32 %v1065, 1.442695
  %v1086 = vpow.pop %v1085
  %v1087 = vmul.f32 %v1066, 1.442695
  %v1088 = vpow.pop %v1087
  %v1089 = vmul.f32 %v1067, 1.442695
  %v1090 = vpow.pop %v1089
  %v1091 = vmul.f32 %v1068, 1.442695
  %v1092 = vpow.pop %v1091
  %v1093 = vadd.f32 %v1070, 1.0
  %v1094 = vadd.f32 %v1072, 1.0
  %v1095 = vadd.f32 %v1074, 1.0
  %v1096 = vadd.f32 %v1076, 1.0
  %v1097 = vadd.f32 %v1078, 1.0
  %v1098 = vadd.f32 %v1080, 1.0
  %v1099 = vadd.f32 %v1082, 1.0
  %v1100 = vadd.f32 %v1084, 1.0
  %v1101 = vadd.f32 %v1086, 1.0
  %v1102 = vadd.f32 %v1088, 1.0
  %v1103 = vadd.f32 %v1090, 1.0
  %v1104 = vadd.f32 %v1092, 1.0
  %v1105 = vrcp.pop %v1093
  %v1106 = vmul.f32 %v1093, %v1105
  %v1107 = vsub.f32 1.0, %v1106
  %v1108 = vmul.f32 %v1105, %v1107
  %v1109 = vadd.f32 %v1105, %v1108
  %vm1110 = vweird.f32 %v1093
  %vm1111 = vweird.f32 %v1105
  %vm1112 = vmor %vm1110, %vm1111
  %v1113 = vsel %vm1112, %v1105, %v1109
  %v1114 = vand.u32 2147483647, %v1093
  %vm1115 = vcmp.eq.f32.partialorder %v1114, 8.507059e+37
  %v1116 = vand.u32 %v1093, 2147483648
  %v1117 = vor.u32 1.1754944e-38, %v1116
  %v1118 = vsel %vm1115, %v1117, %v1113
  %v1119 = vmul.f32 1.0, %v1118
  %v1120 = vrcp.pop %v1094
  %v1121 = vmul.f32 %v1094, %v1120
  %v1122 = vsub.f32 1.0, %v1121
  %v1123 = vmul.f32 %v1120, %v1122
  %v1124 = vadd.f32 %v1120, %v1123
  %vm1125 = vweird.f32 %v1094
  %vm1126 = vweird.f32 %v1120
  %vm1127 = vmor %vm1125, %vm1126
  %v1128 = vsel %vm1127, %v1120, %v1124
  %v1129 = vand.u32 2147483647, %v1094
  %vm1130 = vcmp.eq.f32.partialorder %v1129, 8.507059e+37
  %v1131 = vand.u32 %v1094, 2147483648
  %v1132 = vor.u32 1.1754944e-38, %v1131
  %v1133 = vsel %vm1130, %v1132, %v1128
  %v1134 = vmul.f32 1.0, %v1133
  %v1135 = vrcp.pop %v1095
  %v1136 = vmul.f32 %v1095, %v1135
  %v1137 = vsub.f32 1.0, %v1136
  %v1138 = vmul.f32 %v1135, %v1137
  %v1139 = vadd.f32 %v1135, %v1138
  %vm1140 = vweird.f32 %v1095
  %vm1141 = vweird.f32 %v1135
  %vm1142 = vmor %vm1140, %vm1141
  %v1143 = vsel %vm1142, %v1135, %v1139
  %v1144 = vand.u32 2147483647, %v1095
  %vm1145 = vcmp.eq.f32.partialorder %v1144, 8.507059e+37
  %v1146 = vand.u32 %v1095, 2147483648
  %v1147 = vor.u32 1.1754944e-38, %v1146
  %v1148 = vsel %vm1145, %v1147, %v1143
  %v1149 = vmul.f32 1.0, %v1148
  %v1150 = vrcp.pop %v1096
  %v1151 = vmul.f32 %v1096, %v1150
  %v1152 = vsub.f32 1.0, %v1151
  %v1153 = vmul.f32 %v1150, %v1152
  %v1154 = vadd.f32 %v1150, %v1153
  %vm1155 = vweird.f32 %v1096
  %vm1156 = vweird.f32 %v1150
  %vm1157 = vmor %vm1155, %vm1156
  %v1158 = vsel %vm1157, %v1150, %v1154
  %v1159 = vand.u32 2147483647, %v1096
  %vm1160 = vcmp.eq.f32.partialorder %v1159, 8.507059e+37
  %v1161 = vand.u32 %v1096, 2147483648
  %v1162 = vor.u32 1.1754944e-38, %v1161
  %v1163 = vsel %vm1160, %v1162, %v1158
  %v1164 = vmul.f32 1.0, %v1163
  %v1165 = vrcp.pop %v1097
  %v1166 = vmul.f32 %v1097, %v1165
  %v1167 = vsub.f32 1.0, %v1166
  %v1168 = vmul.f32 %v1165, %v1167
  %v1169 = vadd.f32 %v1165, %v1168
  %vm1170 = vweird.f32 %v1097
  %vm1171 = vweird.f32 %v1165
  %vm1172 = vmor %vm1170, %vm1171
  %v1173 = vsel %vm1172, %v1165, %v1169
  %v1174 = vand.u32 2147483647, %v1097
  %vm1175 = vcmp.eq.f32.partialorder %v1174, 8.507059e+37
  %v1176 = vand.u32 %v1097, 2147483648
  %v1177 = vor.u32 1.1754944e-38, %v1176
  %v1178 = vsel %vm1175, %v1177, %v1173
  %v1179 = vmul.f32 1.0, %v1178
  %v1180 = vrcp.pop %v1098
  %v1181 = vmul.f32 %v1098, %v1180
  %v1182 = vsub.f32 1.0, %v1181
  %v1183 = vmul.f32 %v1180, %v1182
  %v1184 = vadd.f32 %v1180, %v1183
  %vm1185 = vweird.f32 %v1098
  %vm1186 = vweird.f32 %v1180
  %vm1187 = vmor %vm1185, %vm1186
  %v1188 = vsel %vm1187, %v1180, %v1184
  %v1189 = vand.u32 2147483647, %v1098
  %vm1190 = vcmp.eq.f32.partialorder %v1189, 8.507059e+37
  %v1191 = vand.u32 %v1098, 2147483648
  %v1192 = vor.u32 1.1754944e-38, %v1191
  %v1193 = vsel %vm1190, %v1192, %v1188
  %v1194 = vmul.f32 1.0, %v1193
  %v1195 = vrcp.pop %v1099
  %v1196 = vmul.f32 %v1099, %v1195
  %v1197 = vsub.f32 1.0, %v1196
  %v1198 = vmul.f32 %v1195, %v1197
  %v1199 = vadd.f32 %v1195, %v1198
  %vm1200 = vweird.f32 %v1099
  %vm1201 = vweird.f32 %v1195
  %vm1202 = vmor %vm1200, %vm1201
  %v1203 = vsel %vm1202, %v1195, %v1199
  %v1204 = vand.u32 2147483647, %v1099
  %vm1205 = vcmp.eq.f32.partialorder %v1204, 8.507059e+37
  %v1206 = vand.u32 %v1099, 2147483648
  %v1207 = vor.u32 1.1754944e-38, %v1206
  %v1208 = vsel %vm1205, %v1207, %v1203
  %v1209 = vmul.f32 1.0, %v1208
  %v1210 = vrcp.pop %v1100
  %v1211 = vmul.f32 %v1100, %v1210
  %v1212 = vsub.f32 1.0, %v1211
  %v1213 = vmul.f32 %v1210, %v1212
  %v1214 = vadd.f32 %v1210, %v1213
  %vm1215 = vweird.f32 %v1100
  %vm1216 = vweird.f32 %v1210
  %vm1217 = vmor %vm1215, %vm1216
  %v1218 = vsel %vm1217, %v1210, %v1214
  %v1219 = vand.u32 2147483647, %v1100
  %vm1220 = vcmp.eq.f32.partialorder %v1219, 8.507059e+37
  %v1221 = vand.u32 %v1100, 2147483648
  %v1222 = vor.u32 1.1754944e-38, %v1221
  %v1223 = vsel %vm1220, %v1222, %v1218
  %v1224 = vmul.f32 1.0, %v1223
  %v1225 = vrcp.pop %v1101
  %v1226 = vmul.f32 %v1101, %v1225
  %v1227 = vsub.f32 1.0, %v1226
  %v1228 = vmul.f32 %v1225, %v1227
  %v1229 = vadd.f32 %v1225, %v1228
  %vm1230 = vweird.f32 %v1101
  %vm1231 = vweird.f32 %v1225
  %vm1232 = vmor %vm1230, %vm1231
  %v1233 = vsel %vm1232, %v1225, %v1229
  %v1234 = vand.u32 2147483647, %v1101
  %vm1235 = vcmp.eq.f32.partialorder %v1234, 8.507059e+37
  %v1236 = vand.u32 %v1101, 2147483648
  %v1237 = vor.u32 1.1754944e-38, %v1236
  %v1238 = vsel %vm1235, %v1237, %v1233
  %v1239 = vmul.f32 1.0, %v1238
  %v1240 = vrcp.pop %v1102
  %v1241 = vmul.f32 %v1102, %v1240
  %v1242 = vsub.f32 1.0, %v1241
  %v1243 = vmul.f32 %v1240, %v1242
  %v1244 = vadd.f32 %v1240, %v1243
  %vm1245 = vweird.f32 %v1102
  %vm1246 = vweird.f32 %v1240
  %vm1247 = vmor %vm1245, %vm1246
  %v1248 = vsel %vm1247, %v1240, %v1244
  %v1249 = vand.u32 2147483647, %v1102
  %vm1250 = vcmp.eq.f32.partialorder %v1249, 8.507059e+37
  %v1251 = vand.u32 %v1102, 2147483648
  %v1252 = vor.u32 1.1754944e-38, %v1251
  %v1253 = vsel %vm1250, %v1252, %v1248
  %v1254 = vmul.f32 1.0, %v1253
  %v1255 = vrcp.pop %v1103
  %v1256 = vmul.f32 %v1103, %v1255
  %v1257 = vsub.f32 1.0, %v1256
  %v1258 = vmul.f32 %v1255, %v1257
  %v1259 = vadd.f32 %v1255, %v1258
  %vm1260 = vweird.f32 %v1103
  %vm1261 = vweird.f32 %v1255
  %vm1262 = vmor %vm1260, %vm1261
  %v1263 = vsel %vm1262, %v1255, %v1259
  %v1264 = vand.u32 2147483647, %v1103
  %vm1265 = vcmp.eq.f32.partialorder %v1264, 8.507059e+37
  %v1266 = vand.u32 %v1103, 2147483648
  %v1267 = vor.u32 1.1754944e-38, %v1266
  %v1268 = vsel %vm1265, %v1267, %v1263
  %v1269 = vmul.f32 1.0, %v1268
  %v1270 = vrcp.pop %v1104
  %v1271 = vmul.f32 %v1104, %v1270
  %v1272 = vsub.f32 1.0, %v1271
  %v1273 = vmul.f32 %v1270, %v1272
  %v1274 = vadd.f32 %v1270, %v1273
  %vm1275 = vweird.f32 %v1104
  %vm1276 = vweird.f32 %v1270
  %vm1277 = vmor %vm1275, %vm1276
  %v1278 = vsel %vm1277, %v1270, %v1274
  %v1279 = vand.u32 2147483647, %v1104
  %vm1280 = vcmp.eq.f32.partialorder %v1279, 8.507059e+37
  %v1281 = vand.u32 %v1104, 2147483648
  %v1282 = vor.u32 1.1754944e-38, %v1281
  %v1283 = vsel %vm1280, %v1282, %v1278
  %v1284 = vmul.f32 1.0, %v1283
  %v1285 = vtanh.pop %v1053
  %v1286 = vtanh.pop %v1054
  %v1287 = vtanh.pop %v1055
  %v1288 = vtanh.pop %v1056
  %v1289 = vmul.f32 %v1179, 0.0
  %v1290 = vmul.f32 %v1194, 0.0
  %v1291 = vmul.f32 %v1209, 0.0
  %v1292 = vmul.f32 %v1224, 0.0
  %v1293 = vmul.f32 %v1119, %v1285
  %v1294 = vmul.f32 %v1134, %v1286
  %v1295 = vmul.f32 %v1149, %v1287
  %v1296 = vmul.f32 %v1164, %v1288
  %v1297 = vadd.f32 %v1289, %v1293
  %v1298 = vadd.f32 %v1290, %v1294
  %v1299 = vadd.f32 %v1291, %v1295
  %v1300 = vadd.f32 %v1292, %v1296
  %v1301 = vtanh.pop %v1297
  %v1302 = vtanh.pop %v1298
  %v1303 = vtanh.pop %v1299
  %v1304 = vtanh.pop %v1300
  %v1305 = vmul.f32 %v1239, %v1301
  %v1306 = vmul.f32 %v1254, %v1302
  %v1307 = vmul.f32 %v1269, %v1303
  %v1308 = vmul.f32 %v1284, %v1304
  %1309 = vst [vmem:[#allocation3] sm:$0xff] %v1305
  %1310 = vst [vmem:[#allocation3 + $0x8] sm:$0xff] %v1306
  %1311 = vst [vmem:[#allocation3 + $0x10] sm:$0xff] %v1307
  %1312 = vst [vmem:[#allocation3 + $0x18] sm:$0xff] %v1308
  %v1313 = vld [vmem:[%s306] sm:$0xff]
  %v1314 = vld [vmem:[%s306 + $0x8] sm:$0xff]
  %v1315 = vld [vmem:[%s306 + $0x10] sm:$0xff]
  %v1316 = vld [vmem:[%s306 + $0x18] sm:$0xff]
  %v1317 = vld [vmem:[%s306 + $0x20] sm:$0xff]
  %v1318 = vld [vmem:[%s306 + $0x28] sm:$0xff]
  %v1319 = vld [vmem:[%s306 + $0x30] sm:$0xff]
  %v1320 = vld [vmem:[%s306 + $0x38] sm:$0xff]
  %v1321 = vld [vmem:[%s306 + $0x40] sm:$0xff]
  %v1322 = vld [vmem:[%s306 + $0x48] sm:$0xff]
  %v1323 = vld [vmem:[%s306 + $0x50] sm:$0xff]
  %v1324 = vld [vmem:[%s306 + $0x58] sm:$0xff]
  %v1325 = vld [vmem:[%s306 + $0x60] sm:$0xff]
  %v1326 = vld [vmem:[%s306 + $0x68] sm:$0xff]
  %v1327 = vld [vmem:[%s306 + $0x70] sm:$0xff]
  %v1328 = vld [vmem:[%s306 + $0x78] sm:$0xff]
  %1329 = vmatpush.msra.mxu0 0.0
  %1330 = vmatpush.msra.mxu0 0.0
  %1331 = vmatpush.msra.mxu0 0.0
  %1332 = vmatpush.msra.mxu0 0.0
  %1333 = vmatpush.msra.mxu0 0.0
  %1334 = vmatpush.msra.mxu0 0.0
  %1335 = vmatpush.msra.mxu0 0.0
  %1336 = vmatpush.msra.mxu0 0.0
  %1337 = vmatpush.msra.mxu0 0.0
  %1338 = vmatpush.msra.mxu0 0.0
  %1339 = vmatpush.msra.mxu0 0.0
  %1340 = vmatpush.msra.mxu0 0.0
  %1341 = vmatpush.msra.mxu0 %v1308
  %1342 = vmatpush.msra.mxu0 %v1307
  %1343 = vmatpush.msra.mxu0 %v1306
  %1344 = vmatpush.msra.mxu0 %v1305
  %1345 = vmatmul.f32.gmra.mxu0 %v929
  %v1346 = vpop.f32.mrf.mxu0
  %v1347 = vadd.f32 0.0, %v1346
  %1348 = vmatmul.f32.gmra.mxu0 %v932
  %v1349 = vpop.f32.mrf.mxu0
  %v1350 = vadd.f32 0.0, %v1349
  %1351 = vmatmul.f32.gmra.mxu0 %v935
  %v1352 = vpop.f32.mrf.mxu0
  %v1353 = vadd.f32 0.0, %v1352
  %1354 = vmatmul.f32.gmra.mxu0 %v938
  %v1355 = vpop.f32.mrf.mxu0
  %v1356 = vadd.f32 0.0, %v1355
  %1357 = vmatmul.f32.gmra.mxu0 %v941
  %v1358 = vpop.f32.mrf.mxu0
  %v1359 = vadd.f32 0.0, %v1358
  %1360 = vmatmul.f32.gmra.mxu0 %v944
  %v1361 = vpop.f32.mrf.mxu0
  %v1362 = vadd.f32 0.0, %v1361
  %1363 = vmatmul.f32.gmra.mxu0 %v947
  %v1364 = vpop.f32.mrf.mxu0
  %v1365 = vadd.f32 0.0, %v1364
  %1366 = vmatmul.f32.gmra.mxu0 %v950
  %v1367 = vpop.f32.mrf.mxu0
  %v1368 = vadd.f32 0.0, %v1367
  %1369 = vmatmul.f32.gmra.mxu0 %v953
  %v1370 = vpop.f32.mrf.mxu0
  %v1371 = vadd.f32 0.0, %v1370
  %1372 = vmatmul.f32.gmra.mxu0 %v956
  %v1373 = vpop.f32.mrf.mxu0
  %v1374 = vadd.f32 0.0, %v1373
  %1375 = vmatmul.f32.gmra.mxu0 %v959
  %v1376 = vpop.f32.mrf.mxu0
  %v1377 = vadd.f32 0.0, %v1376
  %1378 = vmatmul.f32.gmra.mxu0 %v962
  %v1379 = vpop.f32.mrf.mxu0
  %v1380 = vadd.f32 0.0, %v1379
  %1381 = vmatmul.f32.gmra.mxu0 %v965
  %v1382 = vpop.f32.mrf.mxu0
  %v1383 = vadd.f32 0.0, %v1382
  %1384 = vmatmul.f32.gmra.mxu0 %v968
  %v1385 = vpop.f32.mrf.mxu0
  %v1386 = vadd.f32 0.0, %v1385
  %1387 = vmatmul.f32.gmra.mxu0 %v971
  %v1388 = vpop.f32.mrf.mxu0
  %v1389 = vadd.f32 0.0, %v1388
  %1390 = vmatmul.f32.gmra.mxu0 %v974
  %v1391 = vpop.f32.mrf.mxu0
  %v1392 = vadd.f32 0.0, %v1391
  %1393 = vdwg.mxu0
  %v1394 = vadd.f32 %v1313, %v1347
  %v1395 = vadd.f32 %v1314, %v1350
  %v1396 = vadd.f32 %v1315, %v1353
  %v1397 = vadd.f32 %v1316, %v1356
  %v1398 = vadd.f32 %v1317, %v1359
  %v1399 = vadd.f32 %v1318, %v1362
  %v1400 = vadd.f32 %v1319, %v1365
  %v1401 = vadd.f32 %v1320, %v1368
  %v1402 = vadd.f32 %v1321, %v1371
  %v1403 = vadd.f32 %v1322, %v1374
  %v1404 = vadd.f32 %v1323, %v1377
  %v1405 = vadd.f32 %v1324, %v1380
  %v1406 = vadd.f32 %v1325, %v1383
  %v1407 = vadd.f32 %v1326, %v1386
  %v1408 = vadd.f32 %v1327, %v1389
  %v1409 = vadd.f32 %v1328, %v1392
  %v1410 = vxor.u32 %v1394, 2147483648
  %v1411 = vxor.u32 %v1395, 2147483648
  %v1412 = vxor.u32 %v1396, 2147483648
  %v1413 = vxor.u32 %v1397, 2147483648
  %v1414 = vxor.u32 %v1398, 2147483648
  %v1415 = vxor.u32 %v1399, 2147483648
  %v1416 = vxor.u32 %v1400, 2147483648
  %v1417 = vxor.u32 %v1401, 2147483648
  %v1418 = vxor.u32 %v1402, 2147483648
  %v1419 = vxor.u32 %v1403, 2147483648
  %v1420 = vxor.u32 %v1404, 2147483648
  %v1421 = vxor.u32 %v1405, 2147483648
  %v1422 = vmul.f32 %v1410, 1.442695
  %v1423 = vpow.pop %v1422
  %v1424 = vmul.f32 %v1411, 1.442695
  %v1425 = vpow.pop %v1424
  %v1426 = vmul.f32 %v1412, 1.442695
  %v1427 = vpow.pop %v1426
  %v1428 = vmul.f32 %v1413, 1.442695
  %v1429 = vpow.pop %v1428
  %v1430 = vmul.f32 %v1414, 1.442695
  %v1431 = vpow.pop %v1430
  %v1432 = vmul.f32 %v1415, 1.442695
  %v1433 = vpow.pop %v1432
  %v1434 = vmul.f32 %v1416, 1.442695
  %v1435 = vpow.pop %v1434
  %v1436 = vmul.f32 %v1417, 1.442695
  %v1437 = vpow.pop %v1436
  %v1438 = vmul.f32 %v1418, 1.442695
  %v1439 = vpow.pop %v1438
  %v1440 = vmul.f32 %v1419, 1.442695
  %v1441 = vpow.pop %v1440
  %v1442 = vmul.f32 %v1420, 1.442695
  %v1443 = vpow.pop %v1442
  %v1444 = vmul.f32 %v1421, 1.442695
  %v1445 = vpow.pop %v1444
  %v1446 = vadd.f32 %v1423, 1.0
  %v1447 = vadd.f32 %v1425, 1.0
  %v1448 = vadd.f32 %v1427, 1.0
  %v1449 = vadd.f32 %v1429, 1.0
  %v1450 = vadd.f32 %v1431, 1.0
  %v1451 = vadd.f32 %v1433, 1.0
  %v1452 = vadd.f32 %v1435, 1.0
  %v1453 = vadd.f32 %v1437, 1.0
  %v1454 = vadd.f32 %v1439, 1.0
  %v1455 = vadd.f32 %v1441, 1.0
  %v1456 = vadd.f32 %v1443, 1.0
  %v1457 = vadd.f32 %v1445, 1.0
  %v1458 = vrcp.pop %v1446
  %v1459 = vmul.f32 %v1446, %v1458
  %v1460 = vsub.f32 1.0, %v1459
  %v1461 = vmul.f32 %v1458, %v1460
  %v1462 = vadd.f32 %v1458, %v1461
  %vm1463 = vweird.f32 %v1446
  %vm1464 = vweird.f32 %v1458
  %vm1465 = vmor %vm1463, %vm1464
  %v1466 = vsel %vm1465, %v1458, %v1462
  %v1467 = vand.u32 2147483647, %v1446
  %vm1468 = vcmp.eq.f32.partialorder %v1467, 8.507059e+37
  %v1469 = vand.u32 %v1446, 2147483648
  %v1470 = vor.u32 1.1754944e-38, %v1469
  %v1471 = vsel %vm1468, %v1470, %v1466
  %v1472 = vmul.f32 1.0, %v1471
  %v1473 = vrcp.pop %v1447
  %v1474 = vmul.f32 %v1447, %v1473
  %v1475 = vsub.f32 1.0, %v1474
  %v1476 = vmul.f32 %v1473, %v1475
  %v1477 = vadd.f32 %v1473, %v1476
  %vm1478 = vweird.f32 %v1447
  %vm1479 = vweird.f32 %v1473
  %vm1480 = vmor %vm1478, %vm1479
  %v1481 = vsel %vm1480, %v1473, %v1477
  %v1482 = vand.u32 2147483647, %v1447
  %vm1483 = vcmp.eq.f32.partialorder %v1482, 8.507059e+37
  %v1484 = vand.u32 %v1447, 2147483648
  %v1485 = vor.u32 1.1754944e-38, %v1484
  %v1486 = vsel %vm1483, %v1485, %v1481
  %v1487 = vmul.f32 1.0, %v1486
  %v1488 = vrcp.pop %v1448
  %v1489 = vmul.f32 %v1448, %v1488
  %v1490 = vsub.f32 1.0, %v1489
  %v1491 = vmul.f32 %v1488, %v1490
  %v1492 = vadd.f32 %v1488, %v1491
  %vm1493 = vweird.f32 %v1448
  %vm1494 = vweird.f32 %v1488
  %vm1495 = vmor %vm1493, %vm1494
  %v1496 = vsel %vm1495, %v1488, %v1492
  %v1497 = vand.u32 2147483647, %v1448
  %vm1498 = vcmp.eq.f32.partialorder %v1497, 8.507059e+37
  %v1499 = vand.u32 %v1448, 2147483648
  %v1500 = vor.u32 1.1754944e-38, %v1499
  %v1501 = vsel %vm1498, %v1500, %v1496
  %v1502 = vmul.f32 1.0, %v1501
  %v1503 = vrcp.pop %v1449
  %v1504 = vmul.f32 %v1449, %v1503
  %v1505 = vsub.f32 1.0, %v1504
  %v1506 = vmul.f32 %v1503, %v1505
  %v1507 = vadd.f32 %v1503, %v1506
  %vm1508 = vweird.f32 %v1449
  %vm1509 = vweird.f32 %v1503
  %vm1510 = vmor %vm1508, %vm1509
  %v1511 = vsel %vm1510, %v1503, %v1507
  %v1512 = vand.u32 2147483647, %v1449
  %vm1513 = vcmp.eq.f32.partialorder %v1512, 8.507059e+37
  %v1514 = vand.u32 %v1449, 2147483648
  %v1515 = vor.u32 1.1754944e-38, %v1514
  %v1516 = vsel %vm1513, %v1515, %v1511
  %v1517 = vmul.f32 1.0, %v1516
  %v1518 = vrcp.pop %v1450
  %v1519 = vmul.f32 %v1450, %v1518
  %v1520 = vsub.f32 1.0, %v1519
  %v1521 = vmul.f32 %v1518, %v1520
  %v1522 = vadd.f32 %v1518, %v1521
  %vm1523 = vweird.f32 %v1450
  %vm1524 = vweird.f32 %v1518
  %vm1525 = vmor %vm1523, %vm1524
  %v1526 = vsel %vm1525, %v1518, %v1522
  %v1527 = vand.u32 2147483647, %v1450
  %vm1528 = vcmp.eq.f32.partialorder %v1527, 8.507059e+37
  %v1529 = vand.u32 %v1450, 2147483648
  %v1530 = vor.u32 1.1754944e-38, %v1529
  %v1531 = vsel %vm1528, %v1530, %v1526
  %v1532 = vmul.f32 1.0, %v1531
  %v1533 = vrcp.pop %v1451
  %v1534 = vmul.f32 %v1451, %v1533
  %v1535 = vsub.f32 1.0, %v1534
  %v1536 = vmul.f32 %v1533, %v1535
  %v1537 = vadd.f32 %v1533, %v1536
  %vm1538 = vweird.f32 %v1451
  %vm1539 = vweird.f32 %v1533
  %vm1540 = vmor %vm1538, %vm1539
  %v1541 = vsel %vm1540, %v1533, %v1537
  %v1542 = vand.u32 2147483647, %v1451
  %vm1543 = vcmp.eq.f32.partialorder %v1542, 8.507059e+37
  %v1544 = vand.u32 %v1451, 2147483648
  %v1545 = vor.u32 1.1754944e-38, %v1544
  %v1546 = vsel %vm1543, %v1545, %v1541
  %v1547 = vmul.f32 1.0, %v1546
  %v1548 = vrcp.pop %v1452
  %v1549 = vmul.f32 %v1452, %v1548
  %v1550 = vsub.f32 1.0, %v1549
  %v1551 = vmul.f32 %v1548, %v1550
  %v1552 = vadd.f32 %v1548, %v1551
  %vm1553 = vweird.f32 %v1452
  %vm1554 = vweird.f32 %v1548
  %vm1555 = vmor %vm1553, %vm1554
  %v1556 = vsel %vm1555, %v1548, %v1552
  %v1557 = vand.u32 2147483647, %v1452
  %vm1558 = vcmp.eq.f32.partialorder %v1557, 8.507059e+37
  %v1559 = vand.u32 %v1452, 2147483648
  %v1560 = vor.u32 1.1754944e-38, %v1559
  %v1561 = vsel %vm1558, %v1560, %v1556
  %v1562 = vmul.f32 1.0, %v1561
  %v1563 = vrcp.pop %v1453
  %v1564 = vmul.f32 %v1453, %v1563
  %v1565 = vsub.f32 1.0, %v1564
  %v1566 = vmul.f32 %v1563, %v1565
  %v1567 = vadd.f32 %v1563, %v1566
  %vm1568 = vweird.f32 %v1453
  %vm1569 = vweird.f32 %v1563
  %vm1570 = vmor %vm1568, %vm1569
  %v1571 = vsel %vm1570, %v1563, %v1567
  %v1572 = vand.u32 2147483647, %v1453
  %vm1573 = vcmp.eq.f32.partialorder %v1572, 8.507059e+37
  %v1574 = vand.u32 %v1453, 2147483648
  %v1575 = vor.u32 1.1754944e-38, %v1574
  %v1576 = vsel %vm1573, %v1575, %v1571
  %v1577 = vmul.f32 1.0, %v1576
  %v1578 = vrcp.pop %v1454
  %v1579 = vmul.f32 %v1454, %v1578
  %v1580 = vsub.f32 1.0, %v1579
  %v1581 = vmul.f32 %v1578, %v1580
  %v1582 = vadd.f32 %v1578, %v1581
  %vm1583 = vweird.f32 %v1454
  %vm1584 = vweird.f32 %v1578
  %vm1585 = vmor %vm1583, %vm1584
  %v1586 = vsel %vm1585, %v1578, %v1582
  %v1587 = vand.u32 2147483647, %v1454
  %vm1588 = vcmp.eq.f32.partialorder %v1587, 8.507059e+37
  %v1589 = vand.u32 %v1454, 2147483648
  %v1590 = vor.u32 1.1754944e-38, %v1589
  %v1591 = vsel %vm1588, %v1590, %v1586
  %v1592 = vmul.f32 1.0, %v1591
  %v1593 = vrcp.pop %v1455
  %v1594 = vmul.f32 %v1455, %v1593
  %v1595 = vsub.f32 1.0, %v1594
  %v1596 = vmul.f32 %v1593, %v1595
  %v1597 = vadd.f32 %v1593, %v1596
  %vm1598 = vweird.f32 %v1455
  %vm1599 = vweird.f32 %v1593
  %vm1600 = vmor %vm1598, %vm1599
  %v1601 = vsel %vm1600, %v1593, %v1597
  %v1602 = vand.u32 2147483647, %v1455
  %vm1603 = vcmp.eq.f32.partialorder %v1602, 8.507059e+37
  %v1604 = vand.u32 %v1455, 2147483648
  %v1605 = vor.u32 1.1754944e-38, %v1604
  %v1606 = vsel %vm1603, %v1605, %v1601
  %v1607 = vmul.f32 1.0, %v1606
  %v1608 = vrcp.pop %v1456
  %v1609 = vmul.f32 %v1456, %v1608
  %v1610 = vsub.f32 1.0, %v1609
  %v1611 = vmul.f32 %v1608, %v1610
  %v1612 = vadd.f32 %v1608, %v1611
  %vm1613 = vweird.f32 %v1456
  %vm1614 = vweird.f32 %v1608
  %vm1615 = vmor %vm1613, %vm1614
  %v1616 = vsel %vm1615, %v1608, %v1612
  %v1617 = vand.u32 2147483647, %v1456
  %vm1618 = vcmp.eq.f32.partialorder %v1617, 8.507059e+37
  %v1619 = vand.u32 %v1456, 2147483648
  %v1620 = vor.u32 1.1754944e-38, %v1619
  %v1621 = vsel %vm1618, %v1620, %v1616
  %v1622 = vmul.f32 1.0, %v1621
  %v1623 = vrcp.pop %v1457
  %v1624 = vmul.f32 %v1457, %v1623
  %v1625 = vsub.f32 1.0, %v1624
  %v1626 = vmul.f32 %v1623, %v1625
  %v1627 = vadd.f32 %v1623, %v1626
  %vm1628 = vweird.f32 %v1457
  %vm1629 = vweird.f32 %v1623
  %vm1630 = vmor %vm1628, %vm1629
  %v1631 = vsel %vm1630, %v1623, %v1627
  %v1632 = vand.u32 2147483647, %v1457
  %vm1633 = vcmp.eq.f32.partialorder %v1632, 8.507059e+37
  %v1634 = vand.u32 %v1457, 2147483648
  %v1635 = vor.u32 1.1754944e-38, %v1634
  %v1636 = vsel %vm1633, %v1635, %v1631
  %v1637 = vmul.f32 1.0, %v1636
  %v1638 = vtanh.pop %v1406
  %v1639 = vtanh.pop %v1407
  %v1640 = vtanh.pop %v1408
  %v1641 = vtanh.pop %v1409
  %v1642 = vmul.f32 %v1532, %v1297
  %v1643 = vmul.f32 %v1547, %v1298
  %v1644 = vmul.f32 %v1562, %v1299
  %v1645 = vmul.f32 %v1577, %v1300
  %v1646 = vmul.f32 %v1472, %v1638
  %v1647 = vmul.f32 %v1487, %v1639
  %v1648 = vmul.f32 %v1502, %v1640
  %v1649 = vmul.f32 %v1517, %v1641
  %v1650 = vadd.f32 %v1642, %v1646
  %v1651 = vadd.f32 %v1643, %v1647
  %v1652 = vadd.f32 %v1644, %v1648
  %v1653 = vadd.f32 %v1645, %v1649
  %v1654 = vtanh.pop %v1650
  %v1655 = vtanh.pop %v1651
  %v1656 = vtanh.pop %v1652
  %v1657 = vtanh.pop %v1653
  %v1658 = vmul.f32 %v1592, %v1654
  %v1659 = vmul.f32 %v1607, %v1655
  %v1660 = vmul.f32 %v1622, %v1656
  %v1661 = vmul.f32 %v1637, %v1657
  %s1662 = scalar_lea.vmem [#allocation3], 32
  %1663 = vst [vmem:[%s1662] sm:$0xff] %v1658
  %1664 = vst [vmem:[%s1662 + $0x8] sm:$0xff] %v1659
  %1665 = vst [vmem:[%s1662 + $0x10] sm:$0xff] %v1660
  %1666 = vst [vmem:[%s1662 + $0x18] sm:$0xff] %v1661
  %v1667 = vld [vmem:[%s404] sm:$0xff]
  %v1668 = vld [vmem:[%s404 + $0x8] sm:$0xff]
  %v1669 = vld [vmem:[%s404 + $0x10] sm:$0xff]
  %v1670 = vld [vmem:[%s404 + $0x18] sm:$0xff]
  %v1671 = vld [vmem:[%s404 + $0x20] sm:$0xff]
  %v1672 = vld [vmem:[%s404 + $0x28] sm:$0xff]
  %v1673 = vld [vmem:[%s404 + $0x30] sm:$0xff]
  %v1674 = vld [vmem:[%s404 + $0x38] sm:$0xff]
  %v1675 = vld [vmem:[%s404 + $0x40] sm:$0xff]
  %v1676 = vld [vmem:[%s404 + $0x48] sm:$0xff]
  %v1677 = vld [vmem:[%s404 + $0x50] sm:$0xff]
  %v1678 = vld [vmem:[%s404 + $0x58] sm:$0xff]
  %v1679 = vld [vmem:[%s404 + $0x60] sm:$0xff]
  %v1680 = vld [vmem:[%s404 + $0x68] sm:$0xff]
  %v1681 = vld [vmem:[%s404 + $0x70] sm:$0xff]
  %v1682 = vld [vmem:[%s404 + $0x78] sm:$0xff]
  %1683 = vmatpush.msra.mxu0 0.0
  %1684 = vmatpush.msra.mxu0 0.0
  %1685 = vmatpush.msra.mxu0 0.0
  %1686 = vmatpush.msra.mxu0 0.0
  %1687 = vmatpush.msra.mxu0 0.0
  %1688 = vmatpush.msra.mxu0 0.0
  %1689 = vmatpush.msra.mxu0 0.0
  %1690 = vmatpush.msra.mxu0 0.0
  %1691 = vmatpush.msra.mxu0 0.0
  %1692 = vmatpush.msra.mxu0 0.0
  %1693 = vmatpush.msra.mxu0 0.0
  %1694 = vmatpush.msra.mxu0 0.0
  %1695 = vmatpush.msra.mxu0 %v1661
  %1696 = vmatpush.msra.mxu0 %v1660
  %1697 = vmatpush.msra.mxu0 %v1659
  %1698 = vmatpush.msra.mxu0 %v1658
  %1699 = vmatmul.f32.gmra.mxu0 %v929
  %v1700 = vpop.f32.mrf.mxu0
  %v1701 = vadd.f32 0.0, %v1700
  %1702 = vmatmul.f32.gmra.mxu0 %v932
  %v1703 = vpop.f32.mrf.mxu0
  %v1704 = vadd.f32 0.0, %v1703
  %1705 = vmatmul.f32.gmra.mxu0 %v935
  %v1706 = vpop.f32.mrf.mxu0
  %v1707 = vadd.f32 0.0, %v1706
  %1708 = vmatmul.f32.gmra.mxu0 %v938
  %v1709 = vpop.f32.mrf.mxu0
  %v1710 = vadd.f32 0.0, %v1709
  %1711 = vmatmul.f32.gmra.mxu0 %v941
  %v1712 = vpop.f32.mrf.mxu0
  %v1713 = vadd.f32 0.0, %v1712
  %1714 = vmatmul.f32.gmra.mxu0 %v944
  %v1715 = vpop.f32.mrf.mxu0
  %v1716 = vadd.f32 0.0, %v1715
  %1717 = vmatmul.f32.gmra.mxu0 %v947
  %v1718 = vpop.f32.mrf.mxu0
  %v1719 = vadd.f32 0.0, %v1718
  %1720 = vmatmul.f32.gmra.mxu0 %v950
  %v1721 = vpop.f32.mrf.mxu0
  %v1722 = vadd.f32 0.0, %v1721
  %1723 = vmatmul.f32.gmra.mxu0 %v953
  %v1724 = vpop.f32.mrf.mxu0
  %v1725 = vadd.f32 0.0, %v1724
  %1726 = vmatmul.f32.gmra.mxu0 %v956
  %v1727 = vpop.f32.mrf.mxu0
  %v1728 = vadd.f32 0.0, %v1727
  %1729 = vmatmul.f32.gmra.mxu0 %v959
  %v1730 = vpop.f32.mrf.mxu0
  %v1731 = vadd.f32 0.0, %v1730
  %1732 = vmatmul.f32.gmra.mxu0 %v962
  %v1733 = vpop.f32.mrf.mxu0
  %v1734 = vadd.f32 0.0, %v1733
  %1735 = vmatmul.f32.gmra.mxu0 %v965
  %v1736 = vpop.f32.mrf.mxu0
  %v1737 = vadd.f32 0.0, %v1736
  %1738 = vmatmul.f32.gmra.mxu0 %v968
  %v1739 = vpop.f32.mrf.mxu0
  %v1740 = vadd.f32 0.0, %v1739
  %1741 = vmatmul.f32.gmra.mxu0 %v971
  %v1742 = vpop.f32.mrf.mxu0
  %v1743 = vadd.f32 0.0, %v1742
  %1744 = vmatmul.f32.gmra.mxu0 %v974
  %v1745 = vpop.f32.mrf.mxu0
  %v1746 = vadd.f32 0.0, %v1745
  %1747 = vdwg.mxu0
  %v1748 = vadd.f32 %v1667, %v1701
  %v1749 = vadd.f32 %v1668, %v1704
  %v1750 = vadd.f32 %v1669, %v1707
  %v1751 = vadd.f32 %v1670, %v1710
  %v1752 = vadd.f32 %v1671, %v1713
  %v1753 = vadd.f32 %v1672, %v1716
  %v1754 = vadd.f32 %v1673, %v1719
  %v1755 = vadd.f32 %v1674, %v1722
  %v1756 = vadd.f32 %v1675, %v1725
  %v1757 = vadd.f32 %v1676, %v1728
  %v1758 = vadd.f32 %v1677, %v1731
  %v1759 = vadd.f32 %v1678, %v1734
  %v1760 = vadd.f32 %v1679, %v1737
  %v1761 = vadd.f32 %v1680, %v1740
  %v1762 = vadd.f32 %v1681, %v1743
  %v1763 = vadd.f32 %v1682, %v1746
  %v1764 = vxor.u32 %v1748, 2147483648
  %v1765 = vxor.u32 %v1749, 2147483648
  %v1766 = vxor.u32 %v1750, 2147483648
  %v1767 = vxor.u32 %v1751, 2147483648
  %v1768 = vxor.u32 %v1752, 2147483648
  %v1769 = vxor.u32 %v1753, 2147483648
  %v1770 = vxor.u32 %v1754, 2147483648
  %v1771 = vxor.u32 %v1755, 2147483648
  %v1772 = vxor.u32 %v1756, 2147483648
  %v1773 = vxor.u32 %v1757, 2147483648
  %v1774 = vxor.u32 %v1758, 2147483648
  %v1775 = vxor.u32 %v1759, 2147483648
  %v1776 = vmul.f32 %v1764, 1.442695
  %v1777 = vpow.pop %v1776
  %v1778 = vmul.f32 %v1765, 1.442695
  %v1779 = vpow.pop %v1778
  %v1780 = vmul.f32 %v1766, 1.442695
  %v1781 = vpow.pop %v1780
  %v1782 = vmul.f32 %v1767, 1.442695
  %v1783 = vpow.pop %v1782
  %v1784 = vmul.f32 %v1768, 1.442695
  %v1785 = vpow.pop %v1784
  %v1786 = vmul.f32 %v1769, 1.442695
  %v1787 = vpow.pop %v1786
  %v1788 = vmul.f32 %v1770, 1.442695
  %v1789 = vpow.pop %v1788
  %v1790 = vmul.f32 %v1771, 1.442695
  %v1791 = vpow.pop %v1790
  %v1792 = vmul.f32 %v1772, 1.442695
  %v1793 = vpow.pop %v1792
  %v1794 = vmul.f32 %v1773, 1.442695
  %v1795 = vpow.pop %v1794
  %v1796 = vmul.f32 %v1774, 1.442695
  %v1797 = vpow.pop %v1796
  %v1798 = vmul.f32 %v1775, 1.442695
  %v1799 = vpow.pop %v1798
  %v1800 = vadd.f32 %v1777, 1.0
  %v1801 = vadd.f32 %v1779, 1.0
  %v1802 = vadd.f32 %v1781, 1.0
  %v1803 = vadd.f32 %v1783, 1.0
  %v1804 = vadd.f32 %v1785, 1.0
  %v1805 = vadd.f32 %v1787, 1.0
  %v1806 = vadd.f32 %v1789, 1.0
  %v1807 = vadd.f32 %v1791, 1.0
  %v1808 = vadd.f32 %v1793, 1.0
  %v1809 = vadd.f32 %v1795, 1.0
  %v1810 = vadd.f32 %v1797, 1.0
  %v1811 = vadd.f32 %v1799, 1.0
  %v1812 = vrcp.pop %v1800
  %v1813 = vmul.f32 %v1800, %v1812
  %v1814 = vsub.f32 1.0, %v1813
  %v1815 = vmul.f32 %v1812, %v1814
  %v1816 = vadd.f32 %v1812, %v1815
  %vm1817 = vweird.f32 %v1800
  %vm1818 = vweird.f32 %v1812
  %vm1819 = vmor %vm1817, %vm1818
  %v1820 = vsel %vm1819, %v1812, %v1816
  %v1821 = vand.u32 2147483647, %v1800
  %vm1822 = vcmp.eq.f32.partialorder %v1821, 8.507059e+37
  %v1823 = vand.u32 %v1800, 2147483648
  %v1824 = vor.u32 1.1754944e-38, %v1823
  %v1825 = vsel %vm1822, %v1824, %v1820
  %v1826 = vmul.f32 1.0, %v1825
  %v1827 = vrcp.pop %v1801
  %v1828 = vmul.f32 %v1801, %v1827
  %v1829 = vsub.f32 1.0, %v1828
  %v1830 = vmul.f32 %v1827, %v1829
  %v1831 = vadd.f32 %v1827, %v1830
  %vm1832 = vweird.f32 %v1801
  %vm1833 = vweird.f32 %v1827
  %vm1834 = vmor %vm1832, %vm1833
  %v1835 = vsel %vm1834, %v1827, %v1831
  %v1836 = vand.u32 2147483647, %v1801
  %vm1837 = vcmp.eq.f32.partialorder %v1836, 8.507059e+37
  %v1838 = vand.u32 %v1801, 2147483648
  %v1839 = vor.u32 1.1754944e-38, %v1838
  %v1840 = vsel %vm1837, %v1839, %v1835
  %v1841 = vmul.f32 1.0, %v1840
  %v1842 = vrcp.pop %v1802
  %v1843 = vmul.f32 %v1802, %v1842
  %v1844 = vsub.f32 1.0, %v1843
  %v1845 = vmul.f32 %v1842, %v1844
  %v1846 = vadd.f32 %v1842, %v1845
  %vm1847 = vweird.f32 %v1802
  %vm1848 = vweird.f32 %v1842
  %vm1849 = vmor %vm1847, %vm1848
  %v1850 = vsel %vm1849, %v1842, %v1846
  %v1851 = vand.u32 2147483647, %v1802
  %vm1852 = vcmp.eq.f32.partialorder %v1851, 8.507059e+37
  %v1853 = vand.u32 %v1802, 2147483648
  %v1854 = vor.u32 1.1754944e-38, %v1853
  %v1855 = vsel %vm1852, %v1854, %v1850
  %v1856 = vmul.f32 1.0, %v1855
  %v1857 = vrcp.pop %v1803
  %v1858 = vmul.f32 %v1803, %v1857
  %v1859 = vsub.f32 1.0, %v1858
  %v1860 = vmul.f32 %v1857, %v1859
  %v1861 = vadd.f32 %v1857, %v1860
  %vm1862 = vweird.f32 %v1803
  %vm1863 = vweird.f32 %v1857
  %vm1864 = vmor %vm1862, %vm1863
  %v1865 = vsel %vm1864, %v1857, %v1861
  %v1866 = vand.u32 2147483647, %v1803
  %vm1867 = vcmp.eq.f32.partialorder %v1866, 8.507059e+37
  %v1868 = vand.u32 %v1803, 2147483648
  %v1869 = vor.u32 1.1754944e-38, %v1868
  %v1870 = vsel %vm1867, %v1869, %v1865
  %v1871 = vmul.f32 1.0, %v1870
  %v1872 = vrcp.pop %v1804
  %v1873 = vmul.f32 %v1804, %v1872
  %v1874 = vsub.f32 1.0, %v1873
  %v1875 = vmul.f32 %v1872, %v1874
  %v1876 = vadd.f32 %v1872, %v1875
  %vm1877 = vweird.f32 %v1804
  %vm1878 = vweird.f32 %v1872
  %vm1879 = vmor %vm1877, %vm1878
  %v1880 = vsel %vm1879, %v1872, %v1876
  %v1881 = vand.u32 2147483647, %v1804
  %vm1882 = vcmp.eq.f32.partialorder %v1881, 8.507059e+37
  %v1883 = vand.u32 %v1804, 2147483648
  %v1884 = vor.u32 1.1754944e-38, %v1883
  %v1885 = vsel %vm1882, %v1884, %v1880
  %v1886 = vmul.f32 1.0, %v1885
  %v1887 = vrcp.pop %v1805
  %v1888 = vmul.f32 %v1805, %v1887
  %v1889 = vsub.f32 1.0, %v1888
  %v1890 = vmul.f32 %v1887, %v1889
  %v1891 = vadd.f32 %v1887, %v1890
  %vm1892 = vweird.f32 %v1805
  %vm1893 = vweird.f32 %v1887
  %vm1894 = vmor %vm1892, %vm1893
  %v1895 = vsel %vm1894, %v1887, %v1891
  %v1896 = vand.u32 2147483647, %v1805
  %vm1897 = vcmp.eq.f32.partialorder %v1896, 8.507059e+37
  %v1898 = vand.u32 %v1805, 2147483648
  %v1899 = vor.u32 1.1754944e-38, %v1898
  %v1900 = vsel %vm1897, %v1899, %v1895
  %v1901 = vmul.f32 1.0, %v1900
  %v1902 = vrcp.pop %v1806
  %v1903 = vmul.f32 %v1806, %v1902
  %v1904 = vsub.f32 1.0, %v1903
  %v1905 = vmul.f32 %v1902, %v1904
  %v1906 = vadd.f32 %v1902, %v1905
  %vm1907 = vweird.f32 %v1806
  %vm1908 = vweird.f32 %v1902
  %vm1909 = vmor %vm1907, %vm1908
  %v1910 = vsel %vm1909, %v1902, %v1906
  %v1911 = vand.u32 2147483647, %v1806
  %vm1912 = vcmp.eq.f32.partialorder %v1911, 8.507059e+37
  %v1913 = vand.u32 %v1806, 2147483648
  %v1914 = vor.u32 1.1754944e-38, %v1913
  %v1915 = vsel %vm1912, %v1914, %v1910
  %v1916 = vmul.f32 1.0, %v1915
  %v1917 = vrcp.pop %v1807
  %v1918 = vmul.f32 %v1807, %v1917
  %v1919 = vsub.f32 1.0, %v1918
  %v1920 = vmul.f32 %v1917, %v1919
  %v1921 = vadd.f32 %v1917, %v1920
  %vm1922 = vweird.f32 %v1807
  %vm1923 = vweird.f32 %v1917
  %vm1924 = vmor %vm1922, %vm1923
  %v1925 = vsel %vm1924, %v1917, %v1921
  %v1926 = vand.u32 2147483647, %v1807
  %vm1927 = vcmp.eq.f32.partialorder %v1926, 8.507059e+37
  %v1928 = vand.u32 %v1807, 2147483648
  %v1929 = vor.u32 1.1754944e-38, %v1928
  %v1930 = vsel %vm1927, %v1929, %v1925
  %v1931 = vmul.f32 1.0, %v1930
  %v1932 = vrcp.pop %v1808
  %v1933 = vmul.f32 %v1808, %v1932
  %v1934 = vsub.f32 1.0, %v1933
  %v1935 = vmul.f32 %v1932, %v1934
  %v1936 = vadd.f32 %v1932, %v1935
  %vm1937 = vweird.f32 %v1808
  %vm1938 = vweird.f32 %v1932
  %vm1939 = vmor %vm1937, %vm1938
  %v1940 = vsel %vm1939, %v1932, %v1936
  %v1941 = vand.u32 2147483647, %v1808
  %vm1942 = vcmp.eq.f32.partialorder %v1941, 8.507059e+37
  %v1943 = vand.u32 %v1808, 2147483648
  %v1944 = vor.u32 1.1754944e-38, %v1943
  %v1945 = vsel %vm1942, %v1944, %v1940
  %v1946 = vmul.f32 1.0, %v1945
  %v1947 = vrcp.pop %v1809
  %v1948 = vmul.f32 %v1809, %v1947
  %v1949 = vsub.f32 1.0, %v1948
  %v1950 = vmul.f32 %v1947, %v1949
  %v1951 = vadd.f32 %v1947, %v1950
  %vm1952 = vweird.f32 %v1809
  %vm1953 = vweird.f32 %v1947
  %vm1954 = vmor %vm1952, %vm1953
  %v1955 = vsel %vm1954, %v1947, %v1951
  %v1956 = vand.u32 2147483647, %v1809
  %vm1957 = vcmp.eq.f32.partialorder %v1956, 8.507059e+37
  %v1958 = vand.u32 %v1809, 2147483648
  %v1959 = vor.u32 1.1754944e-38, %v1958
  %v1960 = vsel %vm1957, %v1959, %v1955
  %v1961 = vmul.f32 1.0, %v1960
  %v1962 = vrcp.pop %v1810
  %v1963 = vmul.f32 %v1810, %v1962
  %v1964 = vsub.f32 1.0, %v1963
  %v1965 = vmul.f32 %v1962, %v1964
  %v1966 = vadd.f32 %v1962, %v1965
  %vm1967 = vweird.f32 %v1810
  %vm1968 = vweird.f32 %v1962
  %vm1969 = vmor %vm1967, %vm1968
  %v1970 = vsel %vm1969, %v1962, %v1966
  %v1971 = vand.u32 2147483647, %v1810
  %vm1972 = vcmp.eq.f32.partialorder %v1971, 8.507059e+37
  %v1973 = vand.u32 %v1810, 2147483648
  %v1974 = vor.u32 1.1754944e-38, %v1973
  %v1975 = vsel %vm1972, %v1974, %v1970
  %v1976 = vmul.f32 1.0, %v1975
  %v1977 = vrcp.pop %v1811
  %v1978 = vmul.f32 %v1811, %v1977
  %v1979 = vsub.f32 1.0, %v1978
  %v1980 = vmul.f32 %v1977, %v1979
  %v1981 = vadd.f32 %v1977, %v1980
  %vm1982 = vweird.f32 %v1811
  %vm1983 = vweird.f32 %v1977
  %vm1984 = vmor %vm1982, %vm1983
  %v1985 = vsel %vm1984, %v1977, %v1981
  %v1986 = vand.u32 2147483647, %v1811
  %vm1987 = vcmp.eq.f32.partialorder %v1986, 8.507059e+37
  %v1988 = vand.u32 %v1811, 2147483648
  %v1989 = vor.u32 1.1754944e-38, %v1988
  %v1990 = vsel %vm1987, %v1989, %v1985
  %v1991 = vmul.f32 1.0, %v1990
  %v1992 = vtanh.pop %v1760
  %v1993 = vtanh.pop %v1761
  %v1994 = vtanh.pop %v1762
  %v1995 = vtanh.pop %v1763
  %v1996 = vmul.f32 %v1886, %v1650
  %v1997 = vmul.f32 %v1901, %v1651
  %v1998 = vmul.f32 %v1916, %v1652
  %v1999 = vmul.f32 %v1931, %v1653
  %v2000 = vmul.f32 %v1826, %v1992
  %v2001 = vmul.f32 %v1841, %v1993
  %v2002 = vmul.f32 %v1856, %v1994
  %v2003 = vmul.f32 %v1871, %v1995
  %v2004 = vadd.f32 %v1996, %v2000
  %v2005 = vadd.f32 %v1997, %v2001
  %v2006 = vadd.f32 %v1998, %v2002
  %v2007 = vadd.f32 %v1999, %v2003
  %v2008 = vtanh.pop %v2004
  %v2009 = vtanh.pop %v2005
  %v2010 = vtanh.pop %v2006
  %v2011 = vtanh.pop %v2007
  %v2012 = vmul.f32 %v1946, %v2008
  %v2013 = vmul.f32 %v1961, %v2009
  %v2014 = vmul.f32 %v1976, %v2010
  %v2015 = vmul.f32 %v1991, %v2011
  %s2016 = scalar_lea.vmem [#allocation3], 64
  %2017 = vst [vmem:[%s2016] sm:$0xff] %v2012
  %2018 = vst [vmem:[%s2016 + $0x8] sm:$0xff] %v2013
  %2019 = vst [vmem:[%s2016 + $0x10] sm:$0xff] %v2014
  %2020 = vst [vmem:[%s2016 + $0x18] sm:$0xff] %v2015
  %v2021 = vld [vmem:[%s502] sm:$0xff]
  %v2022 = vld [vmem:[%s502 + $0x8] sm:$0xff]
  %v2023 = vld [vmem:[%s502 + $0x10] sm:$0xff]
  %v2024 = vld [vmem:[%s502 + $0x18] sm:$0xff]
  %v2025 = vld [vmem:[%s502 + $0x20] sm:$0xff]
  %v2026 = vld [vmem:[%s502 + $0x28] sm:$0xff]
  %v2027 = vld [vmem:[%s502 + $0x30] sm:$0xff]
  %v2028 = vld [vmem:[%s502 + $0x38] sm:$0xff]
  %v2029 = vld [vmem:[%s502 + $0x40] sm:$0xff]
  %v2030 = vld [vmem:[%s502 + $0x48] sm:$0xff]
  %v2031 = vld [vmem:[%s502 + $0x50] sm:$0xff]
  %v2032 = vld [vmem:[%s502 + $0x58] sm:$0xff]
  %v2033 = vld [vmem:[%s502 + $0x60] sm:$0xff]
  %v2034 = vld [vmem:[%s502 + $0x68] sm:$0xff]
  %v2035 = vld [vmem:[%s502 + $0x70] sm:$0xff]
  %v2036 = vld [vmem:[%s502 + $0x78] sm:$0xff]
  %2037 = vmatpush.msra.mxu0 0.0
  %2038 = vmatpush.msra.mxu0 0.0
  %2039 = vmatpush.msra.mxu0 0.0
  %2040 = vmatpush.msra.mxu0 0.0
  %2041 = vmatpush.msra.mxu0 0.0
  %2042 = vmatpush.msra.mxu0 0.0
  %2043 = vmatpush.msra.mxu0 0.0
  %2044 = vmatpush.msra.mxu0 0.0
  %2045 = vmatpush.msra.mxu0 0.0
  %2046 = vmatpush.msra.mxu0 0.0
  %2047 = vmatpush.msra.mxu0 0.0
  %2048 = vmatpush.msra.mxu0 0.0
  %2049 = vmatpush.msra.mxu0 %v2015
  %2050 = vmatpush.msra.mxu0 %v2014
  %2051 = vmatpush.msra.mxu0 %v2013
  %2052 = vmatpush.msra.mxu0 %v2012
  %2053 = vmatmul.f32.gmra.mxu0 %v929
  %v2054 = vpop.f32.mrf.mxu0
  %v2055 = vadd.f32 0.0, %v2054
  %2056 = vmatmul.f32.gmra.mxu0 %v932
  %v2057 = vpop.f32.mrf.mxu0
  %v2058 = vadd.f32 0.0, %v2057
  %2059 = vmatmul.f32.gmra.mxu0 %v935
  %v2060 = vpop.f32.mrf.mxu0
  %v2061 = vadd.f32 0.0, %v2060
  %2062 = vmatmul.f32.gmra.mxu0 %v938
  %v2063 = vpop.f32.mrf.mxu0
  %v2064 = vadd.f32 0.0, %v2063
  %2065 = vmatmul.f32.gmra.mxu0 %v941
  %v2066 = vpop.f32.mrf.mxu0
  %v2067 = vadd.f32 0.0, %v2066
  %2068 = vmatmul.f32.gmra.mxu0 %v944
  %v2069 = vpop.f32.mrf.mxu0
  %v2070 = vadd.f32 0.0, %v2069
  %2071 = vmatmul.f32.gmra.mxu0 %v947
  %v2072 = vpop.f32.mrf.mxu0
  %v2073 = vadd.f32 0.0, %v2072
  %2074 = vmatmul.f32.gmra.mxu0 %v950
  %v2075 = vpop.f32.mrf.mxu0
  %v2076 = vadd.f32 0.0, %v2075
  %2077 = vmatmul.f32.gmra.mxu0 %v953
  %v2078 = vpop.f32.mrf.mxu0
  %v2079 = vadd.f32 0.0, %v2078
  %2080 = vmatmul.f32.gmra.mxu0 %v956
  %v2081 = vpop.f32.mrf.mxu0
  %v2082 = vadd.f32 0.0, %v2081
  %2083 = vmatmul.f32.gmra.mxu0 %v959
  %v2084 = vpop.f32.mrf.mxu0
  %v2085 = vadd.f32 0.0, %v2084
  %2086 = vmatmul.f32.gmra.mxu0 %v962
  %v2087 = vpop.f32.mrf.mxu0
  %v2088 = vadd.f32 0.0, %v2087
  %2089 = vmatmul.f32.gmra.mxu0 %v965
  %v2090 = vpop.f32.mrf.mxu0
  %v2091 = vadd.f32 0.0, %v2090
  %2092 = vmatmul.f32.gmra.mxu0 %v968
  %v2093 = vpop.f32.mrf.mxu0
  %v2094 = vadd.f32 0.0, %v2093
  %2095 = vmatmul.f32.gmra.mxu0 %v971
  %v2096 = vpop.f32.mrf.mxu0
  %v2097 = vadd.f32 0.0, %v2096
  %2098 = vmatmul.f32.gmra.mxu0 %v974
  %v2099 = vpop.f32.mrf.mxu0
  %v2100 = vadd.f32 0.0, %v2099
  %2101 = vdwg.mxu0
  %v2102 = vadd.f32 %v2021, %v2055
  %v2103 = vadd.f32 %v2022, %v2058
  %v2104 = vadd.f32 %v2023, %v2061
  %v2105 = vadd.f32 %v2024, %v2064
  %v2106 = vadd.f32 %v2025, %v2067
  %v2107 = vadd.f32 %v2026, %v2070
  %v2108 = vadd.f32 %v2027, %v2073
  %v2109 = vadd.f32 %v2028, %v2076
  %v2110 = vadd.f32 %v2029, %v2079
  %v2111 = vadd.f32 %v2030, %v2082
  %v2112 = vadd.f32 %v2031, %v2085
  %v2113 = vadd.f32 %v2032, %v2088
  %v2114 = vadd.f32 %v2033, %v2091
  %v2115 = vadd.f32 %v2034, %v2094
  %v2116 = vadd.f32 %v2035, %v2097
  %v2117 = vadd.f32 %v2036, %v2100
  %v2118 = vxor.u32 %v2102, 2147483648
  %v2119 = vxor.u32 %v2103, 2147483648
  %v2120 = vxor.u32 %v2104, 2147483648
  %v2121 = vxor.u32 %v2105, 2147483648
  %v2122 = vxor.u32 %v2106, 2147483648
  %v2123 = vxor.u32 %v2107, 2147483648
  %v2124 = vxor.u32 %v2108, 2147483648
  %v2125 = vxor.u32 %v2109, 2147483648
  %v2126 = vxor.u32 %v2110, 2147483648
  %v2127 = vxor.u32 %v2111, 2147483648
  %v2128 = vxor.u32 %v2112, 2147483648
  %v2129 = vxor.u32 %v2113, 2147483648
  %v2130 = vmul.f32 %v2118, 1.442695
  %v2131 = vpow.pop %v2130
  %v2132 = vmul.f32 %v2119, 1.442695
  %v2133 = vpow.pop %v2132
  %v2134 = vmul.f32 %v2120, 1.442695
  %v2135 = vpow.pop %v2134
  %v2136 = vmul.f32 %v2121, 1.442695
  %v2137 = vpow.pop %v2136
  %v2138 = vmul.f32 %v2122, 1.442695
  %v2139 = vpow.pop %v2138
  %v2140 = vmul.f32 %v2123, 1.442695
  %v2141 = vpow.pop %v2140
  %v2142 = vmul.f32 %v2124, 1.442695
  %v2143 = vpow.pop %v2142
  %v2144 = vmul.f32 %v2125, 1.442695
  %v2145 = vpow.pop %v2144
  %v2146 = vmul.f32 %v2126, 1.442695
  %v2147 = vpow.pop %v2146
  %v2148 = vmul.f32 %v2127, 1.442695
  %v2149 = vpow.pop %v2148
  %v2150 = vmul.f32 %v2128, 1.442695
  %v2151 = vpow.pop %v2150
  %v2152 = vmul.f32 %v2129, 1.442695
  %v2153 = vpow.pop %v2152
  %v2154 = vadd.f32 %v2131, 1.0
  %v2155 = vadd.f32 %v2133, 1.0
  %v2156 = vadd.f32 %v2135, 1.0
  %v2157 = vadd.f32 %v2137, 1.0
  %v2158 = vadd.f32 %v2139, 1.0
  %v2159 = vadd.f32 %v2141, 1.0
  %v2160 = vadd.f32 %v2143, 1.0
  %v2161 = vadd.f32 %v2145, 1.0
  %v2162 = vadd.f32 %v2147, 1.0
  %v2163 = vadd.f32 %v2149, 1.0
  %v2164 = vadd.f32 %v2151, 1.0
  %v2165 = vadd.f32 %v2153, 1.0
  %v2166 = vrcp.pop %v2154
  %v2167 = vmul.f32 %v2154, %v2166
  %v2168 = vsub.f32 1.0, %v2167
  %v2169 = vmul.f32 %v2166, %v2168
  %v2170 = vadd.f32 %v2166, %v2169
  %vm2171 = vweird.f32 %v2154
  %vm2172 = vweird.f32 %v2166
  %vm2173 = vmor %vm2171, %vm2172
  %v2174 = vsel %vm2173, %v2166, %v2170
  %v2175 = vand.u32 2147483647, %v2154
  %vm2176 = vcmp.eq.f32.partialorder %v2175, 8.507059e+37
  %v2177 = vand.u32 %v2154, 2147483648
  %v2178 = vor.u32 1.1754944e-38, %v2177
  %v2179 = vsel %vm2176, %v2178, %v2174
  %v2180 = vmul.f32 1.0, %v2179
  %v2181 = vrcp.pop %v2155
  %v2182 = vmul.f32 %v2155, %v2181
  %v2183 = vsub.f32 1.0, %v2182
  %v2184 = vmul.f32 %v2181, %v2183
  %v2185 = vadd.f32 %v2181, %v2184
  %vm2186 = vweird.f32 %v2155
  %vm2187 = vweird.f32 %v2181
  %vm2188 = vmor %vm2186, %vm2187
  %v2189 = vsel %vm2188, %v2181, %v2185
  %v2190 = vand.u32 2147483647, %v2155
  %vm2191 = vcmp.eq.f32.partialorder %v2190, 8.507059e+37
  %v2192 = vand.u32 %v2155, 2147483648
  %v2193 = vor.u32 1.1754944e-38, %v2192
  %v2194 = vsel %vm2191, %v2193, %v2189
  %v2195 = vmul.f32 1.0, %v2194
  %v2196 = vrcp.pop %v2156
  %v2197 = vmul.f32 %v2156, %v2196
  %v2198 = vsub.f32 1.0, %v2197
  %v2199 = vmul.f32 %v2196, %v2198
  %v2200 = vadd.f32 %v2196, %v2199
  %vm2201 = vweird.f32 %v2156
  %vm2202 = vweird.f32 %v2196
  %vm2203 = vmor %vm2201, %vm2202
  %v2204 = vsel %vm2203, %v2196, %v2200
  %v2205 = vand.u32 2147483647, %v2156
  %vm2206 = vcmp.eq.f32.partialorder %v2205, 8.507059e+37
  %v2207 = vand.u32 %v2156, 2147483648
  %v2208 = vor.u32 1.1754944e-38, %v2207
  %v2209 = vsel %vm2206, %v2208, %v2204
  %v2210 = vmul.f32 1.0, %v2209
  %v2211 = vrcp.pop %v2157
  %v2212 = vmul.f32 %v2157, %v2211
  %v2213 = vsub.f32 1.0, %v2212
  %v2214 = vmul.f32 %v2211, %v2213
  %v2215 = vadd.f32 %v2211, %v2214
  %vm2216 = vweird.f32 %v2157
  %vm2217 = vweird.f32 %v2211
  %vm2218 = vmor %vm2216, %vm2217
  %v2219 = vsel %vm2218, %v2211, %v2215
  %v2220 = vand.u32 2147483647, %v2157
  %vm2221 = vcmp.eq.f32.partialorder %v2220, 8.507059e+37
  %v2222 = vand.u32 %v2157, 2147483648
  %v2223 = vor.u32 1.1754944e-38, %v2222
  %v2224 = vsel %vm2221, %v2223, %v2219
  %v2225 = vmul.f32 1.0, %v2224
  %v2226 = vrcp.pop %v2158
  %v2227 = vmul.f32 %v2158, %v2226
  %v2228 = vsub.f32 1.0, %v2227
  %v2229 = vmul.f32 %v2226, %v2228
  %v2230 = vadd.f32 %v2226, %v2229
  %vm2231 = vweird.f32 %v2158
  %vm2232 = vweird.f32 %v2226
  %vm2233 = vmor %vm2231, %vm2232
  %v2234 = vsel %vm2233, %v2226, %v2230
  %v2235 = vand.u32 2147483647, %v2158
  %vm2236 = vcmp.eq.f32.partialorder %v2235, 8.507059e+37
  %v2237 = vand.u32 %v2158, 2147483648
  %v2238 = vor.u32 1.1754944e-38, %v2237
  %v2239 = vsel %vm2236, %v2238, %v2234
  %v2240 = vmul.f32 1.0, %v2239
  %v2241 = vrcp.pop %v2159
  %v2242 = vmul.f32 %v2159, %v2241
  %v2243 = vsub.f32 1.0, %v2242
  %v2244 = vmul.f32 %v2241, %v2243
  %v2245 = vadd.f32 %v2241, %v2244
  %vm2246 = vweird.f32 %v2159
  %vm2247 = vweird.f32 %v2241
  %vm2248 = vmor %vm2246, %vm2247
  %v2249 = vsel %vm2248, %v2241, %v2245
  %v2250 = vand.u32 2147483647, %v2159
  %vm2251 = vcmp.eq.f32.partialorder %v2250, 8.507059e+37
  %v2252 = vand.u32 %v2159, 2147483648
  %v2253 = vor.u32 1.1754944e-38, %v2252
  %v2254 = vsel %vm2251, %v2253, %v2249
  %v2255 = vmul.f32 1.0, %v2254
  %v2256 = vrcp.pop %v2160
  %v2257 = vmul.f32 %v2160, %v2256
  %v2258 = vsub.f32 1.0, %v2257
  %v2259 = vmul.f32 %v2256, %v2258
  %v2260 = vadd.f32 %v2256, %v2259
  %vm2261 = vweird.f32 %v2160
  %vm2262 = vweird.f32 %v2256
  %vm2263 = vmor %vm2261, %vm2262
  %v2264 = vsel %vm2263, %v2256, %v2260
  %v2265 = vand.u32 2147483647, %v2160
  %vm2266 = vcmp.eq.f32.partialorder %v2265, 8.507059e+37
  %v2267 = vand.u32 %v2160, 2147483648
  %v2268 = vor.u32 1.1754944e-38, %v2267
  %v2269 = vsel %vm2266, %v2268, %v2264
  %v2270 = vmul.f32 1.0, %v2269
  %v2271 = vrcp.pop %v2161
  %v2272 = vmul.f32 %v2161, %v2271
  %v2273 = vsub.f32 1.0, %v2272
  %v2274 = vmul.f32 %v2271, %v2273
  %v2275 = vadd.f32 %v2271, %v2274
  %vm2276 = vweird.f32 %v2161
  %vm2277 = vweird.f32 %v2271
  %vm2278 = vmor %vm2276, %vm2277
  %v2279 = vsel %vm2278, %v2271, %v2275
  %v2280 = vand.u32 2147483647, %v2161
  %vm2281 = vcmp.eq.f32.partialorder %v2280, 8.507059e+37
  %v2282 = vand.u32 %v2161, 2147483648
  %v2283 = vor.u32 1.1754944e-38, %v2282
  %v2284 = vsel %vm2281, %v2283, %v2279
  %v2285 = vmul.f32 1.0, %v2284
  %v2286 = vrcp.pop %v2162
  %v2287 = vmul.f32 %v2162, %v2286
  %v2288 = vsub.f32 1.0, %v2287
  %v2289 = vmul.f32 %v2286, %v2288
  %v2290 = vadd.f32 %v2286, %v2289
  %vm2291 = vweird.f32 %v2162
  %vm2292 = vweird.f32 %v2286
  %vm2293 = vmor %vm2291, %vm2292
  %v2294 = vsel %vm2293, %v2286, %v2290
  %v2295 = vand.u32 2147483647, %v2162
  %vm2296 = vcmp.eq.f32.partialorder %v2295, 8.507059e+37
  %v2297 = vand.u32 %v2162, 2147483648
  %v2298 = vor.u32 1.1754944e-38, %v2297
  %v2299 = vsel %vm2296, %v2298, %v2294
  %v2300 = vmul.f32 1.0, %v2299
  %v2301 = vrcp.pop %v2163
  %v2302 = vmul.f32 %v2163, %v2301
  %v2303 = vsub.f32 1.0, %v2302
  %v2304 = vmul.f32 %v2301, %v2303
  %v2305 = vadd.f32 %v2301, %v2304
  %vm2306 = vweird.f32 %v2163
  %vm2307 = vweird.f32 %v2301
  %vm2308 = vmor %vm2306, %vm2307
  %v2309 = vsel %vm2308, %v2301, %v2305
  %v2310 = vand.u32 2147483647, %v2163
  %vm2311 = vcmp.eq.f32.partialorder %v2310, 8.507059e+37
  %v2312 = vand.u32 %v2163, 2147483648
  %v2313 = vor.u32 1.1754944e-38, %v2312
  %v2314 = vsel %vm2311, %v2313, %v2309
  %v2315 = vmul.f32 1.0, %v2314
  %v2316 = vrcp.pop %v2164
  %v2317 = vmul.f32 %v2164, %v2316
  %v2318 = vsub.f32 1.0, %v2317
  %v2319 = vmul.f32 %v2316, %v2318
  %v2320 = vadd.f32 %v2316, %v2319
  %vm2321 = vweird.f32 %v2164
  %vm2322 = vweird.f32 %v2316
  %vm2323 = vmor %vm2321, %vm2322
  %v2324 = vsel %vm2323, %v2316, %v2320
  %v2325 = vand.u32 2147483647, %v2164
  %vm2326 = vcmp.eq.f32.partialorder %v2325, 8.507059e+37
  %v2327 = vand.u32 %v2164, 2147483648
  %v2328 = vor.u32 1.1754944e-38, %v2327
  %v2329 = vsel %vm2326, %v2328, %v2324
  %v2330 = vmul.f32 1.0, %v2329
  %v2331 = vrcp.pop %v2165
  %v2332 = vmul.f32 %v2165, %v2331
  %v2333 = vsub.f32 1.0, %v2332
  %v2334 = vmul.f32 %v2331, %v2333
  %v2335 = vadd.f32 %v2331, %v2334
  %vm2336 = vweird.f32 %v2165
  %vm2337 = vweird.f32 %v2331
  %vm2338 = vmor %vm2336, %vm2337
  %v2339 = vsel %vm2338, %v2331, %v2335
  %v2340 = vand.u32 2147483647, %v2165
  %vm2341 = vcmp.eq.f32.partialorder %v2340, 8.507059e+37
  %v2342 = vand.u32 %v2165, 2147483648
  %v2343 = vor.u32 1.1754944e-38, %v2342
  %v2344 = vsel %vm2341, %v2343, %v2339
  %v2345 = vmul.f32 1.0, %v2344
  %v2346 = vtanh.pop %v2114
  %v2347 = vtanh.pop %v2115
  %v2348 = vtanh.pop %v2116
  %v2349 = vtanh.pop %v2117
  %v2350 = vmul.f32 %v2240, %v2004
  %v2351 = vmul.f32 %v2255, %v2005
  %v2352 = vmul.f32 %v2270, %v2006
  %v2353 = vmul.f32 %v2285, %v2007
  %v2354 = vmul.f32 %v2180, %v2346
  %v2355 = vmul.f32 %v2195, %v2347
  %v2356 = vmul.f32 %v2210, %v2348
  %v2357 = vmul.f32 %v2225, %v2349
  %v2358 = vadd.f32 %v2350, %v2354
  %v2359 = vadd.f32 %v2351, %v2355
  %v2360 = vadd.f32 %v2352, %v2356
  %v2361 = vadd.f32 %v2353, %v2357
  %v2362 = vtanh.pop %v2358
  %v2363 = vtanh.pop %v2359
  %v2364 = vtanh.pop %v2360
  %v2365 = vtanh.pop %v2361
  %v2366 = vmul.f32 %v2300, %v2362
  %v2367 = vmul.f32 %v2315, %v2363
  %v2368 = vmul.f32 %v2330, %v2364
  %v2369 = vmul.f32 %v2345, %v2365
  %s2370 = scalar_lea.vmem [#allocation3], 96
  %2371 = vst [vmem:[%s2370] sm:$0xff] %v2366
  %2372 = vst [vmem:[%s2370 + $0x8] sm:$0xff] %v2367
  %2373 = vst [vmem:[%s2370 + $0x10] sm:$0xff] %v2368
  %2374 = vst [vmem:[%s2370 + $0x18] sm:$0xff] %v2369
  %v2375 = vld [vmem:[%s600] sm:$0xff]
  %v2376 = vld [vmem:[%s600 + $0x8] sm:$0xff]
  %v2377 = vld [vmem:[%s600 + $0x10] sm:$0xff]
  %v2378 = vld [vmem:[%s600 + $0x18] sm:$0xff]
  %v2379 = vld [vmem:[%s600 + $0x20] sm:$0xff]
  %v2380 = vld [vmem:[%s600 + $0x28] sm:$0xff]
  %v2381 = vld [vmem:[%s600 + $0x30] sm:$0xff]
  %v2382 = vld [vmem:[%s600 + $0x38] sm:$0xff]
  %v2383 = vld [vmem:[%s600 + $0x40] sm:$0xff]
  %v2384 = vld [vmem:[%s600 + $0x48] sm:$0xff]
  %v2385 = vld [vmem:[%s600 + $0x50] sm:$0xff]
  %v2386 = vld [vmem:[%s600 + $0x58] sm:$0xff]
  %v2387 = vld [vmem:[%s600 + $0x60] sm:$0xff]
  %v2388 = vld [vmem:[%s600 + $0x68] sm:$0xff]
  %v2389 = vld [vmem:[%s600 + $0x70] sm:$0xff]
  %v2390 = vld [vmem:[%s600 + $0x78] sm:$0xff]
  %2391 = vmatpush.msra.mxu0 0.0
  %2392 = vmatpush.msra.mxu0 0.0
  %2393 = vmatpush.msra.mxu0 0.0
  %2394 = vmatpush.msra.mxu0 0.0
  %2395 = vmatpush.msra.mxu0 0.0
  %2396 = vmatpush.msra.mxu0 0.0
  %2397 = vmatpush.msra.mxu0 0.0
  %2398 = vmatpush.msra.mxu0 0.0
  %2399 = vmatpush.msra.mxu0 0.0
  %2400 = vmatpush.msra.mxu0 0.0
  %2401 = vmatpush.msra.mxu0 0.0
  %2402 = vmatpush.msra.mxu0 0.0
  %2403 = vmatpush.msra.mxu0 %v2369
  %2404 = vmatpush.msra.mxu0 %v2368
  %2405 = vmatpush.msra.mxu0 %v2367
  %2406 = vmatpush.msra.mxu0 %v2366
  %2407 = vmatmul.f32.gmra.mxu0 %v929
  %v2408 = vpop.f32.mrf.mxu0
  %v2409 = vadd.f32 0.0, %v2408
  %2410 = vmatmul.f32.gmra.mxu0 %v932
  %v2411 = vpop.f32.mrf.mxu0
  %v2412 = vadd.f32 0.0, %v2411
  %2413 = vmatmul.f32.gmra.mxu0 %v935
  %v2414 = vpop.f32.mrf.mxu0
  %v2415 = vadd.f32 0.0, %v2414
  %2416 = vmatmul.f32.gmra.mxu0 %v938
  %v2417 = vpop.f32.mrf.mxu0
  %v2418 = vadd.f32 0.0, %v2417
  %2419 = vmatmul.f32.gmra.mxu0 %v941
  %v2420 = vpop.f32.mrf.mxu0
  %v2421 = vadd.f32 0.0, %v2420
  %2422 = vmatmul.f32.gmra.mxu0 %v944
  %v2423 = vpop.f32.mrf.mxu0
  %v2424 = vadd.f32 0.0, %v2423
  %2425 = vmatmul.f32.gmra.mxu0 %v947
  %v2426 = vpop.f32.mrf.mxu0
  %v2427 = vadd.f32 0.0, %v2426
  %2428 = vmatmul.f32.gmra.mxu0 %v950
  %v2429 = vpop.f32.mrf.mxu0
  %v2430 = vadd.f32 0.0, %v2429
  %2431 = vmatmul.f32.gmra.mxu0 %v953
  %v2432 = vpop.f32.mrf.mxu0
  %v2433 = vadd.f32 0.0, %v2432
  %2434 = vmatmul.f32.gmra.mxu0 %v956
  %v2435 = vpop.f32.mrf.mxu0
  %v2436 = vadd.f32 0.0, %v2435
  %2437 = vmatmul.f32.gmra.mxu0 %v959
  %v2438 = vpop.f32.mrf.mxu0
  %v2439 = vadd.f32 0.0, %v2438
  %2440 = vmatmul.f32.gmra.mxu0 %v962
  %v2441 = vpop.f32.mrf.mxu0
  %v2442 = vadd.f32 0.0, %v2441
  %2443 = vmatmul.f32.gmra.mxu0 %v965
  %v2444 = vpop.f32.mrf.mxu0
  %v2445 = vadd.f32 0.0, %v2444
  %2446 = vmatmul.f32.gmra.mxu0 %v968
  %v2447 = vpop.f32.mrf.mxu0
  %v2448 = vadd.f32 0.0, %v2447
  %2449 = vmatmul.f32.gmra.mxu0 %v971
  %v2450 = vpop.f32.mrf.mxu0
  %v2451 = vadd.f32 0.0, %v2450
  %2452 = vmatmul.f32.gmra.mxu0 %v974
  %v2453 = vpop.f32.mrf.mxu0
  %v2454 = vadd.f32 0.0, %v2453
  %2455 = vdwg.mxu0
  %v2456 = vadd.f32 %v2375, %v2409
  %v2457 = vadd.f32 %v2376, %v2412
  %v2458 = vadd.f32 %v2377, %v2415
  %v2459 = vadd.f32 %v2378, %v2418
  %v2460 = vadd.f32 %v2379, %v2421
  %v2461 = vadd.f32 %v2380, %v2424
  %v2462 = vadd.f32 %v2381, %v2427
  %v2463 = vadd.f32 %v2382, %v2430
  %v2464 = vadd.f32 %v2383, %v2433
  %v2465 = vadd.f32 %v2384, %v2436
  %v2466 = vadd.f32 %v2385, %v2439
  %v2467 = vadd.f32 %v2386, %v2442
  %v2468 = vadd.f32 %v2387, %v2445
  %v2469 = vadd.f32 %v2388, %v2448
  %v2470 = vadd.f32 %v2389, %v2451
  %v2471 = vadd.f32 %v2390, %v2454
  %v2472 = vxor.u32 %v2456, 2147483648
  %v2473 = vxor.u32 %v2457, 2147483648
  %v2474 = vxor.u32 %v2458, 2147483648
  %v2475 = vxor.u32 %v2459, 2147483648
  %v2476 = vxor.u32 %v2460, 2147483648
  %v2477 = vxor.u32 %v2461, 2147483648
  %v2478 = vxor.u32 %v2462, 2147483648
  %v2479 = vxor.u32 %v2463, 2147483648
  %v2480 = vxor.u32 %v2464, 2147483648
  %v2481 = vxor.u32 %v2465, 2147483648
  %v2482 = vxor.u32 %v2466, 2147483648
  %v2483 = vxor.u32 %v2467, 2147483648
  %v2484 = vmul.f32 %v2472, 1.442695
  %v2485 = vpow.pop %v2484
  %v2486 = vmul.f32 %v2473, 1.442695
  %v2487 = vpow.pop %v2486
  %v2488 = vmul.f32 %v2474, 1.442695
  %v2489 = vpow.pop %v2488
  %v2490 = vmul.f32 %v2475, 1.442695
  %v2491 = vpow.pop %v2490
  %v2492 = vmul.f32 %v2476, 1.442695
  %v2493 = vpow.pop %v2492
  %v2494 = vmul.f32 %v2477, 1.442695
  %v2495 = vpow.pop %v2494
  %v2496 = vmul.f32 %v2478, 1.442695
  %v2497 = vpow.pop %v2496
  %v2498 = vmul.f32 %v2479, 1.442695
  %v2499 = vpow.pop %v2498
  %v2500 = vmul.f32 %v2480, 1.442695
  %v2501 = vpow.pop %v2500
  %v2502 = vmul.f32 %v2481, 1.442695
  %v2503 = vpow.pop %v2502
  %v2504 = vmul.f32 %v2482, 1.442695
  %v2505 = vpow.pop %v2504
  %v2506 = vmul.f32 %v2483, 1.442695
  %v2507 = vpow.pop %v2506
  %v2508 = vadd.f32 %v2485, 1.0
  %v2509 = vadd.f32 %v2487, 1.0
  %v2510 = vadd.f32 %v2489, 1.0
  %v2511 = vadd.f32 %v2491, 1.0
  %v2512 = vadd.f32 %v2493, 1.0
  %v2513 = vadd.f32 %v2495, 1.0
  %v2514 = vadd.f32 %v2497, 1.0
  %v2515 = vadd.f32 %v2499, 1.0
  %v2516 = vadd.f32 %v2501, 1.0
  %v2517 = vadd.f32 %v2503, 1.0
  %v2518 = vadd.f32 %v2505, 1.0
  %v2519 = vadd.f32 %v2507, 1.0
  %v2520 = vrcp.pop %v2508
  %v2521 = vmul.f32 %v2508, %v2520
  %v2522 = vsub.f32 1.0, %v2521
  %v2523 = vmul.f32 %v2520, %v2522
  %v2524 = vadd.f32 %v2520, %v2523
  %vm2525 = vweird.f32 %v2508
  %vm2526 = vweird.f32 %v2520
  %vm2527 = vmor %vm2525, %vm2526
  %v2528 = vsel %vm2527, %v2520, %v2524
  %v2529 = vand.u32 2147483647, %v2508
  %vm2530 = vcmp.eq.f32.partialorder %v2529, 8.507059e+37
  %v2531 = vand.u32 %v2508, 2147483648
  %v2532 = vor.u32 1.1754944e-38, %v2531
  %v2533 = vsel %vm2530, %v2532, %v2528
  %v2534 = vmul.f32 1.0, %v2533
  %v2535 = vrcp.pop %v2509
  %v2536 = vmul.f32 %v2509, %v2535
  %v2537 = vsub.f32 1.0, %v2536
  %v2538 = vmul.f32 %v2535, %v2537
  %v2539 = vadd.f32 %v2535, %v2538
  %vm2540 = vweird.f32 %v2509
  %vm2541 = vweird.f32 %v2535
  %vm2542 = vmor %vm2540, %vm2541
  %v2543 = vsel %vm2542, %v2535, %v2539
  %v2544 = vand.u32 2147483647, %v2509
  %vm2545 = vcmp.eq.f32.partialorder %v2544, 8.507059e+37
  %v2546 = vand.u32 %v2509, 2147483648
  %v2547 = vor.u32 1.1754944e-38, %v2546
  %v2548 = vsel %vm2545, %v2547, %v2543
  %v2549 = vmul.f32 1.0, %v2548
  %v2550 = vrcp.pop %v2510
  %v2551 = vmul.f32 %v2510, %v2550
  %v2552 = vsub.f32 1.0, %v2551
  %v2553 = vmul.f32 %v2550, %v2552
  %v2554 = vadd.f32 %v2550, %v2553
  %vm2555 = vweird.f32 %v2510
  %vm2556 = vweird.f32 %v2550
  %vm2557 = vmor %vm2555, %vm2556
  %v2558 = vsel %vm2557, %v2550, %v2554
  %v2559 = vand.u32 2147483647, %v2510
  %vm2560 = vcmp.eq.f32.partialorder %v2559, 8.507059e+37
  %v2561 = vand.u32 %v2510, 2147483648
  %v2562 = vor.u32 1.1754944e-38, %v2561
  %v2563 = vsel %vm2560, %v2562, %v2558
  %v2564 = vmul.f32 1.0, %v2563
  %v2565 = vrcp.pop %v2511
  %v2566 = vmul.f32 %v2511, %v2565
  %v2567 = vsub.f32 1.0, %v2566
  %v2568 = vmul.f32 %v2565, %v2567
  %v2569 = vadd.f32 %v2565, %v2568
  %vm2570 = vweird.f32 %v2511
  %vm2571 = vweird.f32 %v2565
  %vm2572 = vmor %vm2570, %vm2571
  %v2573 = vsel %vm2572, %v2565, %v2569
  %v2574 = vand.u32 2147483647, %v2511
  %vm2575 = vcmp.eq.f32.partialorder %v2574, 8.507059e+37
  %v2576 = vand.u32 %v2511, 2147483648
  %v2577 = vor.u32 1.1754944e-38, %v2576
  %v2578 = vsel %vm2575, %v2577, %v2573
  %v2579 = vmul.f32 1.0, %v2578
  %v2580 = vrcp.pop %v2512
  %v2581 = vmul.f32 %v2512, %v2580
  %v2582 = vsub.f32 1.0, %v2581
  %v2583 = vmul.f32 %v2580, %v2582
  %v2584 = vadd.f32 %v2580, %v2583
  %vm2585 = vweird.f32 %v2512
  %vm2586 = vweird.f32 %v2580
  %vm2587 = vmor %vm2585, %vm2586
  %v2588 = vsel %vm2587, %v2580, %v2584
  %v2589 = vand.u32 2147483647, %v2512
  %vm2590 = vcmp.eq.f32.partialorder %v2589, 8.507059e+37
  %v2591 = vand.u32 %v2512, 2147483648
  %v2592 = vor.u32 1.1754944e-38, %v2591
  %v2593 = vsel %vm2590, %v2592, %v2588
  %v2594 = vmul.f32 1.0, %v2593
  %v2595 = vrcp.pop %v2513
  %v2596 = vmul.f32 %v2513, %v2595
  %v2597 = vsub.f32 1.0, %v2596
  %v2598 = vmul.f32 %v2595, %v2597
  %v2599 = vadd.f32 %v2595, %v2598
  %vm2600 = vweird.f32 %v2513
  %vm2601 = vweird.f32 %v2595
  %vm2602 = vmor %vm2600, %vm2601
  %v2603 = vsel %vm2602, %v2595, %v2599
  %v2604 = vand.u32 2147483647, %v2513
  %vm2605 = vcmp.eq.f32.partialorder %v2604, 8.507059e+37
  %v2606 = vand.u32 %v2513, 2147483648
  %v2607 = vor.u32 1.1754944e-38, %v2606
  %v2608 = vsel %vm2605, %v2607, %v2603
  %v2609 = vmul.f32 1.0, %v2608
  %v2610 = vrcp.pop %v2514
  %v2611 = vmul.f32 %v2514, %v2610
  %v2612 = vsub.f32 1.0, %v2611
  %v2613 = vmul.f32 %v2610, %v2612
  %v2614 = vadd.f32 %v2610, %v2613
  %vm2615 = vweird.f32 %v2514
  %vm2616 = vweird.f32 %v2610
  %vm2617 = vmor %vm2615, %vm2616
  %v2618 = vsel %vm2617, %v2610, %v2614
  %v2619 = vand.u32 2147483647, %v2514
  %vm2620 = vcmp.eq.f32.partialorder %v2619, 8.507059e+37
  %v2621 = vand.u32 %v2514, 2147483648
  %v2622 = vor.u32 1.1754944e-38, %v2621
  %v2623 = vsel %vm2620, %v2622, %v2618
  %v2624 = vmul.f32 1.0, %v2623
  %v2625 = vrcp.pop %v2515
  %v2626 = vmul.f32 %v2515, %v2625
  %v2627 = vsub.f32 1.0, %v2626
  %v2628 = vmul.f32 %v2625, %v2627
  %v2629 = vadd.f32 %v2625, %v2628
  %vm2630 = vweird.f32 %v2515
  %vm2631 = vweird.f32 %v2625
  %vm2632 = vmor %vm2630, %vm2631
  %v2633 = vsel %vm2632, %v2625, %v2629
  %v2634 = vand.u32 2147483647, %v2515
  %vm2635 = vcmp.eq.f32.partialorder %v2634, 8.507059e+37
  %v2636 = vand.u32 %v2515, 2147483648
  %v2637 = vor.u32 1.1754944e-38, %v2636
  %v2638 = vsel %vm2635, %v2637, %v2633
  %v2639 = vmul.f32 1.0, %v2638
  %v2640 = vrcp.pop %v2516
  %v2641 = vmul.f32 %v2516, %v2640
  %v2642 = vsub.f32 1.0, %v2641
  %v2643 = vmul.f32 %v2640, %v2642
  %v2644 = vadd.f32 %v2640, %v2643
  %vm2645 = vweird.f32 %v2516
  %vm2646 = vweird.f32 %v2640
  %vm2647 = vmor %vm2645, %vm2646
  %v2648 = vsel %vm2647, %v2640, %v2644
  %v2649 = vand.u32 2147483647, %v2516
  %vm2650 = vcmp.eq.f32.partialorder %v2649, 8.507059e+37
  %v2651 = vand.u32 %v2516, 2147483648
  %v2652 = vor.u32 1.1754944e-38, %v2651
  %v2653 = vsel %vm2650, %v2652, %v2648
  %v2654 = vmul.f32 1.0, %v2653
  %v2655 = vrcp.pop %v2517
  %v2656 = vmul.f32 %v2517, %v2655
  %v2657 = vsub.f32 1.0, %v2656
  %v2658 = vmul.f32 %v2655, %v2657
  %v2659 = vadd.f32 %v2655, %v2658
  %vm2660 = vweird.f32 %v2517
  %vm2661 = vweird.f32 %v2655
  %vm2662 = vmor %vm2660, %vm2661
  %v2663 = vsel %vm2662, %v2655, %v2659
  %v2664 = vand.u32 2147483647, %v2517
  %vm2665 = vcmp.eq.f32.partialorder %v2664, 8.507059e+37
  %v2666 = vand.u32 %v2517, 2147483648
  %v2667 = vor.u32 1.1754944e-38, %v2666
  %v2668 = vsel %vm2665, %v2667, %v2663
  %v2669 = vmul.f32 1.0, %v2668
  %v2670 = vrcp.pop %v2518
  %v2671 = vmul.f32 %v2518, %v2670
  %v2672 = vsub.f32 1.0, %v2671
  %v2673 = vmul.f32 %v2670, %v2672
  %v2674 = vadd.f32 %v2670, %v2673
  %vm2675 = vweird.f32 %v2518
  %vm2676 = vweird.f32 %v2670
  %vm2677 = vmor %vm2675, %vm2676
  %v2678 = vsel %vm2677, %v2670, %v2674
  %v2679 = vand.u32 2147483647, %v2518
  %vm2680 = vcmp.eq.f32.partialorder %v2679, 8.507059e+37
  %v2681 = vand.u32 %v2518, 2147483648
  %v2682 = vor.u32 1.1754944e-38, %v2681
  %v2683 = vsel %vm2680, %v2682, %v2678
  %v2684 = vmul.f32 1.0, %v2683
  %v2685 = vrcp.pop %v2519
  %v2686 = vmul.f32 %v2519, %v2685
  %v2687 = vsub.f32 1.0, %v2686
  %v2688 = vmul.f32 %v2685, %v2687
  %v2689 = vadd.f32 %v2685, %v2688
  %vm2690 = vweird.f32 %v2519
  %vm2691 = vweird.f32 %v2685
  %vm2692 = vmor %vm2690, %vm2691
  %v2693 = vsel %vm2692, %v2685, %v2689
  %v2694 = vand.u32 2147483647, %v2519
  %vm2695 = vcmp.eq.f32.partialorder %v2694, 8.507059e+37
  %v2696 = vand.u32 %v2519, 2147483648
  %v2697 = vor.u32 1.1754944e-38, %v2696
  %v2698 = vsel %vm2695, %v2697, %v2693
  %v2699 = vmul.f32 1.0, %v2698
  %v2700 = vtanh.pop %v2468
  %v2701 = vtanh.pop %v2469
  %v2702 = vtanh.pop %v2470
  %v2703 = vtanh.pop %v2471
  %v2704 = vmul.f32 %v2594, %v2358
  %v2705 = vmul.f32 %v2609, %v2359
  %v2706 = vmul.f32 %v2624, %v2360
  %v2707 = vmul.f32 %v2639, %v2361
  %v2708 = vmul.f32 %v2534, %v2700
  %v2709 = vmul.f32 %v2549, %v2701
  %v2710 = vmul.f32 %v2564, %v2702
  %v2711 = vmul.f32 %v2579, %v2703
  %v2712 = vadd.f32 %v2704, %v2708
  %v2713 = vadd.f32 %v2705, %v2709
  %v2714 = vadd.f32 %v2706, %v2710
  %v2715 = vadd.f32 %v2707, %v2711
  %v2716 = vtanh.pop %v2712
  %v2717 = vtanh.pop %v2713
  %v2718 = vtanh.pop %v2714
  %v2719 = vtanh.pop %v2715
  %v2720 = vmul.f32 %v2654, %v2716
  %v2721 = vmul.f32 %v2669, %v2717
  %v2722 = vmul.f32 %v2684, %v2718
  %v2723 = vmul.f32 %v2699, %v2719
  %s2724 = scalar_lea.vmem [#allocation3], 128
  %2725 = vst [vmem:[%s2724] sm:$0xff] %v2720
  %2726 = vst [vmem:[%s2724 + $0x8] sm:$0xff] %v2721
  %2727 = vst [vmem:[%s2724 + $0x10] sm:$0xff] %v2722
  %2728 = vst [vmem:[%s2724 + $0x18] sm:$0xff] %v2723
  %v2729 = vld [vmem:[%s698] sm:$0xff]
  %v2730 = vld [vmem:[%s698 + $0x8] sm:$0xff]
  %v2731 = vld [vmem:[%s698 + $0x10] sm:$0xff]
  %v2732 = vld [vmem:[%s698 + $0x18] sm:$0xff]
  %v2733 = vld [vmem:[%s698 + $0x20] sm:$0xff]
  %v2734 = vld [vmem:[%s698 + $0x28] sm:$0xff]
  %v2735 = vld [vmem:[%s698 + $0x30] sm:$0xff]
  %v2736 = vld [vmem:[%s698 + $0x38] sm:$0xff]
  %v2737 = vld [vmem:[%s698 + $0x40] sm:$0xff]
  %v2738 = vld [vmem:[%s698 + $0x48] sm:$0xff]
  %v2739 = vld [vmem:[%s698 + $0x50] sm:$0xff]
  %v2740 = vld [vmem:[%s698 + $0x58] sm:$0xff]
  %v2741 = vld [vmem:[%s698 + $0x60] sm:$0xff]
  %v2742 = vld [vmem:[%s698 + $0x68] sm:$0xff]
  %v2743 = vld [vmem:[%s698 + $0x70] sm:$0xff]
  %v2744 = vld [vmem:[%s698 + $0x78] sm:$0xff]
  %2745 = vmatpush.msra.mxu0 0.0
  %2746 = vmatpush.msra.mxu0 0.0
  %2747 = vmatpush.msra.mxu0 0.0
  %2748 = vmatpush.msra.mxu0 0.0
  %2749 = vmatpush.msra.mxu0 0.0
  %2750 = vmatpush.msra.mxu0 0.0
  %2751 = vmatpush.msra.mxu0 0.0
  %2752 = vmatpush.msra.mxu0 0.0
  %2753 = vmatpush.msra.mxu0 0.0
  %2754 = vmatpush.msra.mxu0 0.0
  %2755 = vmatpush.msra.mxu0 0.0
  %2756 = vmatpush.msra.mxu0 0.0
  %2757 = vmatpush.msra.mxu0 %v2723
  %2758 = vmatpush.msra.mxu0 %v2722
  %2759 = vmatpush.msra.mxu0 %v2721
  %2760 = vmatpush.msra.mxu0 %v2720
  %2761 = vmatmul.f32.gmra.mxu0 %v929
  %v2762 = vpop.f32.mrf.mxu0
  %v2763 = vadd.f32 0.0, %v2762
  %2764 = vmatmul.f32.gmra.mxu0 %v932
  %v2765 = vpop.f32.mrf.mxu0
  %v2766 = vadd.f32 0.0, %v2765
  %2767 = vmatmul.f32.gmra.mxu0 %v935
  %v2768 = vpop.f32.mrf.mxu0
  %v2769 = vadd.f32 0.0, %v2768
  %2770 = vmatmul.f32.gmra.mxu0 %v938
  %v2771 = vpop.f32.mrf.mxu0
  %v2772 = vadd.f32 0.0, %v2771
  %2773 = vmatmul.f32.gmra.mxu0 %v941
  %v2774 = vpop.f32.mrf.mxu0
  %v2775 = vadd.f32 0.0, %v2774
  %2776 = vmatmul.f32.gmra.mxu0 %v944
  %v2777 = vpop.f32.mrf.mxu0
  %v2778 = vadd.f32 0.0, %v2777
  %2779 = vmatmul.f32.gmra.mxu0 %v947
  %v2780 = vpop.f32.mrf.mxu0
  %v2781 = vadd.f32 0.0, %v2780
  %2782 = vmatmul.f32.gmra.mxu0 %v950
  %v2783 = vpop.f32.mrf.mxu0
  %v2784 = vadd.f32 0.0, %v2783
  %2785 = vmatmul.f32.gmra.mxu0 %v953
  %v2786 = vpop.f32.mrf.mxu0
  %v2787 = vadd.f32 0.0, %v2786
  %2788 = vmatmul.f32.gmra.mxu0 %v956
  %v2789 = vpop.f32.mrf.mxu0
  %v2790 = vadd.f32 0.0, %v2789
  %2791 = vmatmul.f32.gmra.mxu0 %v959
  %v2792 = vpop.f32.mrf.mxu0
  %v2793 = vadd.f32 0.0, %v2792
  %2794 = vmatmul.f32.gmra.mxu0 %v962
  %v2795 = vpop.f32.mrf.mxu0
  %v2796 = vadd.f32 0.0, %v2795
  %2797 = vmatmul.f32.gmra.mxu0 %v965
  %v2798 = vpop.f32.mrf.mxu0
  %v2799 = vadd.f32 0.0, %v2798
  %2800 = vmatmul.f32.gmra.mxu0 %v968
  %v2801 = vpop.f32.mrf.mxu0
  %v2802 = vadd.f32 0.0, %v2801
  %2803 = vmatmul.f32.gmra.mxu0 %v971
  %v2804 = vpop.f32.mrf.mxu0
  %v2805 = vadd.f32 0.0, %v2804
  %2806 = vmatmul.f32.gmra.mxu0 %v974
  %v2807 = vpop.f32.mrf.mxu0
  %v2808 = vadd.f32 0.0, %v2807
  %2809 = vdwg.mxu0
  %v2810 = vadd.f32 %v2729, %v2763
  %v2811 = vadd.f32 %v2730, %v2766
  %v2812 = vadd.f32 %v2731, %v2769
  %v2813 = vadd.f32 %v2732, %v2772
  %v2814 = vadd.f32 %v2733, %v2775
  %v2815 = vadd.f32 %v2734, %v2778
  %v2816 = vadd.f32 %v2735, %v2781
  %v2817 = vadd.f32 %v2736, %v2784
  %v2818 = vadd.f32 %v2737, %v2787
  %v2819 = vadd.f32 %v2738, %v2790
  %v2820 = vadd.f32 %v2739, %v2793
  %v2821 = vadd.f32 %v2740, %v2796
  %v2822 = vadd.f32 %v2741, %v2799
  %v2823 = vadd.f32 %v2742, %v2802
  %v2824 = vadd.f32 %v2743, %v2805
  %v2825 = vadd.f32 %v2744, %v2808
  %v2826 = vxor.u32 %v2810, 2147483648
  %v2827 = vxor.u32 %v2811, 2147483648
  %v2828 = vxor.u32 %v2812, 2147483648
  %v2829 = vxor.u32 %v2813, 2147483648
  %v2830 = vxor.u32 %v2814, 2147483648
  %v2831 = vxor.u32 %v2815, 2147483648
  %v2832 = vxor.u32 %v2816, 2147483648
  %v2833 = vxor.u32 %v2817, 2147483648
  %v2834 = vxor.u32 %v2818, 2147483648
  %v2835 = vxor.u32 %v2819, 2147483648
  %v2836 = vxor.u32 %v2820, 2147483648
  %v2837 = vxor.u32 %v2821, 2147483648
  %v2838 = vmul.f32 %v2826, 1.442695
  %v2839 = vpow.pop %v2838
  %v2840 = vmul.f32 %v2827, 1.442695
  %v2841 = vpow.pop %v2840
  %v2842 = vmul.f32 %v2828, 1.442695
  %v2843 = vpow.pop %v2842
  %v2844 = vmul.f32 %v2829, 1.442695
  %v2845 = vpow.pop %v2844
  %v2846 = vmul.f32 %v2830, 1.442695
  %v2847 = vpow.pop %v2846
  %v2848 = vmul.f32 %v2831, 1.442695
  %v2849 = vpow.pop %v2848
  %v2850 = vmul.f32 %v2832, 1.442695
  %v2851 = vpow.pop %v2850
  %v2852 = vmul.f32 %v2833, 1.442695
  %v2853 = vpow.pop %v2852
  %v2854 = vmul.f32 %v2834, 1.442695
  %v2855 = vpow.pop %v2854
  %v2856 = vmul.f32 %v2835, 1.442695
  %v2857 = vpow.pop %v2856
  %v2858 = vmul.f32 %v2836, 1.442695
  %v2859 = vpow.pop %v2858
  %v2860 = vmul.f32 %v2837, 1.442695
  %v2861 = vpow.pop %v2860
  %v2862 = vadd.f32 %v2839, 1.0
  %v2863 = vadd.f32 %v2841, 1.0
  %v2864 = vadd.f32 %v2843, 1.0
  %v2865 = vadd.f32 %v2845, 1.0
  %v2866 = vadd.f32 %v2847, 1.0
  %v2867 = vadd.f32 %v2849, 1.0
  %v2868 = vadd.f32 %v2851, 1.0
  %v2869 = vadd.f32 %v2853, 1.0
  %v2870 = vadd.f32 %v2855, 1.0
  %v2871 = vadd.f32 %v2857, 1.0
  %v2872 = vadd.f32 %v2859, 1.0
  %v2873 = vadd.f32 %v2861, 1.0
  %v2874 = vrcp.pop %v2862
  %v2875 = vmul.f32 %v2862, %v2874
  %v2876 = vsub.f32 1.0, %v2875
  %v2877 = vmul.f32 %v2874, %v2876
  %v2878 = vadd.f32 %v2874, %v2877
  %vm2879 = vweird.f32 %v2862
  %vm2880 = vweird.f32 %v2874
  %vm2881 = vmor %vm2879, %vm2880
  %v2882 = vsel %vm2881, %v2874, %v2878
  %v2883 = vand.u32 2147483647, %v2862
  %vm2884 = vcmp.eq.f32.partialorder %v2883, 8.507059e+37
  %v2885 = vand.u32 %v2862, 2147483648
  %v2886 = vor.u32 1.1754944e-38, %v2885
  %v2887 = vsel %vm2884, %v2886, %v2882
  %v2888 = vmul.f32 1.0, %v2887
  %v2889 = vrcp.pop %v2863
  %v2890 = vmul.f32 %v2863, %v2889
  %v2891 = vsub.f32 1.0, %v2890
  %v2892 = vmul.f32 %v2889, %v2891
  %v2893 = vadd.f32 %v2889, %v2892
  %vm2894 = vweird.f32 %v2863
  %vm2895 = vweird.f32 %v2889
  %vm2896 = vmor %vm2894, %vm2895
  %v2897 = vsel %vm2896, %v2889, %v2893
  %v2898 = vand.u32 2147483647, %v2863
  %vm2899 = vcmp.eq.f32.partialorder %v2898, 8.507059e+37
  %v2900 = vand.u32 %v2863, 2147483648
  %v2901 = vor.u32 1.1754944e-38, %v2900
  %v2902 = vsel %vm2899, %v2901, %v2897
  %v2903 = vmul.f32 1.0, %v2902
  %v2904 = vrcp.pop %v2864
  %v2905 = vmul.f32 %v2864, %v2904
  %v2906 = vsub.f32 1.0, %v2905
  %v2907 = vmul.f32 %v2904, %v2906
  %v2908 = vadd.f32 %v2904, %v2907
  %vm2909 = vweird.f32 %v2864
  %vm2910 = vweird.f32 %v2904
  %vm2911 = vmor %vm2909, %vm2910
  %v2912 = vsel %vm2911, %v2904, %v2908
  %v2913 = vand.u32 2147483647, %v2864
  %vm2914 = vcmp.eq.f32.partialorder %v2913, 8.507059e+37
  %v2915 = vand.u32 %v2864, 2147483648
  %v2916 = vor.u32 1.1754944e-38, %v2915
  %v2917 = vsel %vm2914, %v2916, %v2912
  %v2918 = vmul.f32 1.0, %v2917
  %v2919 = vrcp.pop %v2865
  %v2920 = vmul.f32 %v2865, %v2919
  %v2921 = vsub.f32 1.0, %v2920
  %v2922 = vmul.f32 %v2919, %v2921
  %v2923 = vadd.f32 %v2919, %v2922
  %vm2924 = vweird.f32 %v2865
  %vm2925 = vweird.f32 %v2919
  %vm2926 = vmor %vm2924, %vm2925
  %v2927 = vsel %vm2926, %v2919, %v2923
  %v2928 = vand.u32 2147483647, %v2865
  %vm2929 = vcmp.eq.f32.partialorder %v2928, 8.507059e+37
  %v2930 = vand.u32 %v2865, 2147483648
  %v2931 = vor.u32 1.1754944e-38, %v2930
  %v2932 = vsel %vm2929, %v2931, %v2927
  %v2933 = vmul.f32 1.0, %v2932
  %v2934 = vrcp.pop %v2866
  %v2935 = vmul.f32 %v2866, %v2934
  %v2936 = vsub.f32 1.0, %v2935
  %v2937 = vmul.f32 %v2934, %v2936
  %v2938 = vadd.f32 %v2934, %v2937
  %vm2939 = vweird.f32 %v2866
  %vm2940 = vweird.f32 %v2934
  %vm2941 = vmor %vm2939, %vm2940
  %v2942 = vsel %vm2941, %v2934, %v2938
  %v2943 = vand.u32 2147483647, %v2866
  %vm2944 = vcmp.eq.f32.partialorder %v2943, 8.507059e+37
  %v2945 = vand.u32 %v2866, 2147483648
  %v2946 = vor.u32 1.1754944e-38, %v2945
  %v2947 = vsel %vm2944, %v2946, %v2942
  %v2948 = vmul.f32 1.0, %v2947
  %v2949 = vrcp.pop %v2867
  %v2950 = vmul.f32 %v2867, %v2949
  %v2951 = vsub.f32 1.0, %v2950
  %v2952 = vmul.f32 %v2949, %v2951
  %v2953 = vadd.f32 %v2949, %v2952
  %vm2954 = vweird.f32 %v2867
  %vm2955 = vweird.f32 %v2949
  %vm2956 = vmor %vm2954, %vm2955
  %v2957 = vsel %vm2956, %v2949, %v2953
  %v2958 = vand.u32 2147483647, %v2867
  %vm2959 = vcmp.eq.f32.partialorder %v2958, 8.507059e+37
  %v2960 = vand.u32 %v2867, 2147483648
  %v2961 = vor.u32 1.1754944e-38, %v2960
  %v2962 = vsel %vm2959, %v2961, %v2957
  %v2963 = vmul.f32 1.0, %v2962
  %v2964 = vrcp.pop %v2868
  %v2965 = vmul.f32 %v2868, %v2964
  %v2966 = vsub.f32 1.0, %v2965
  %v2967 = vmul.f32 %v2964, %v2966
  %v2968 = vadd.f32 %v2964, %v2967
  %vm2969 = vweird.f32 %v2868
  %vm2970 = vweird.f32 %v2964
  %vm2971 = vmor %vm2969, %vm2970
  %v2972 = vsel %vm2971, %v2964, %v2968
  %v2973 = vand.u32 2147483647, %v2868
  %vm2974 = vcmp.eq.f32.partialorder %v2973, 8.507059e+37
  %v2975 = vand.u32 %v2868, 2147483648
  %v2976 = vor.u32 1.1754944e-38, %v2975
  %v2977 = vsel %vm2974, %v2976, %v2972
  %v2978 = vmul.f32 1.0, %v2977
  %v2979 = vrcp.pop %v2869
  %v2980 = vmul.f32 %v2869, %v2979
  %v2981 = vsub.f32 1.0, %v2980
  %v2982 = vmul.f32 %v2979, %v2981
  %v2983 = vadd.f32 %v2979, %v2982
  %vm2984 = vweird.f32 %v2869
  %vm2985 = vweird.f32 %v2979
  %vm2986 = vmor %vm2984, %vm2985
  %v2987 = vsel %vm2986, %v2979, %v2983
  %v2988 = vand.u32 2147483647, %v2869
  %vm2989 = vcmp.eq.f32.partialorder %v2988, 8.507059e+37
  %v2990 = vand.u32 %v2869, 2147483648
  %v2991 = vor.u32 1.1754944e-38, %v2990
  %v2992 = vsel %vm2989, %v2991, %v2987
  %v2993 = vmul.f32 1.0, %v2992
  %v2994 = vrcp.pop %v2870
  %v2995 = vmul.f32 %v2870, %v2994
  %v2996 = vsub.f32 1.0, %v2995
  %v2997 = vmul.f32 %v2994, %v2996
  %v2998 = vadd.f32 %v2994, %v2997
  %vm2999 = vweird.f32 %v2870
  %vm3000 = vweird.f32 %v2994
  %vm3001 = vmor %vm2999, %vm3000
  %v3002 = vsel %vm3001, %v2994, %v2998
  %v3003 = vand.u32 2147483647, %v2870
  %vm3004 = vcmp.eq.f32.partialorder %v3003, 8.507059e+37
  %v3005 = vand.u32 %v2870, 2147483648
  %v3006 = vor.u32 1.1754944e-38, %v3005
  %v3007 = vsel %vm3004, %v3006, %v3002
  %v3008 = vmul.f32 1.0, %v3007
  %v3009 = vrcp.pop %v2871
  %v3010 = vmul.f32 %v2871, %v3009
  %v3011 = vsub.f32 1.0, %v3010
  %v3012 = vmul.f32 %v3009, %v3011
  %v3013 = vadd.f32 %v3009, %v3012
  %vm3014 = vweird.f32 %v2871
  %vm3015 = vweird.f32 %v3009
  %vm3016 = vmor %vm3014, %vm3015
  %v3017 = vsel %vm3016, %v3009, %v3013
  %v3018 = vand.u32 2147483647, %v2871
  %vm3019 = vcmp.eq.f32.partialorder %v3018, 8.507059e+37
  %v3020 = vand.u32 %v2871, 2147483648
  %v3021 = vor.u32 1.1754944e-38, %v3020
  %v3022 = vsel %vm3019, %v3021, %v3017
  %v3023 = vmul.f32 1.0, %v3022
  %v3024 = vrcp.pop %v2872
  %v3025 = vmul.f32 %v2872, %v3024
  %v3026 = vsub.f32 1.0, %v3025
  %v3027 = vmul.f32 %v3024, %v3026
  %v3028 = vadd.f32 %v3024, %v3027
  %vm3029 = vweird.f32 %v2872
  %vm3030 = vweird.f32 %v3024
  %vm3031 = vmor %vm3029, %vm3030
  %v3032 = vsel %vm3031, %v3024, %v3028
  %v3033 = vand.u32 2147483647, %v2872
  %vm3034 = vcmp.eq.f32.partialorder %v3033, 8.507059e+37
  %v3035 = vand.u32 %v2872, 2147483648
  %v3036 = vor.u32 1.1754944e-38, %v3035
  %v3037 = vsel %vm3034, %v3036, %v3032
  %v3038 = vmul.f32 1.0, %v3037
  %v3039 = vrcp.pop %v2873
  %v3040 = vmul.f32 %v2873, %v3039
  %v3041 = vsub.f32 1.0, %v3040
  %v3042 = vmul.f32 %v3039, %v3041
  %v3043 = vadd.f32 %v3039, %v3042
  %vm3044 = vweird.f32 %v2873
  %vm3045 = vweird.f32 %v3039
  %vm3046 = vmor %vm3044, %vm3045
  %v3047 = vsel %vm3046, %v3039, %v3043
  %v3048 = vand.u32 2147483647, %v2873
  %vm3049 = vcmp.eq.f32.partialorder %v3048, 8.507059e+37
  %v3050 = vand.u32 %v2873, 2147483648
  %v3051 = vor.u32 1.1754944e-38, %v3050
  %v3052 = vsel %vm3049, %v3051, %v3047
  %v3053 = vmul.f32 1.0, %v3052
  %v3054 = vtanh.pop %v2822
  %v3055 = vtanh.pop %v2823
  %v3056 = vtanh.pop %v2824
  %v3057 = vtanh.pop %v2825
  %v3058 = vmul.f32 %v2948, %v2712
  %v3059 = vmul.f32 %v2963, %v2713
  %v3060 = vmul.f32 %v2978, %v2714
  %v3061 = vmul.f32 %v2993, %v2715
  %v3062 = vmul.f32 %v2888, %v3054
  %v3063 = vmul.f32 %v2903, %v3055
  %v3064 = vmul.f32 %v2918, %v3056
  %v3065 = vmul.f32 %v2933, %v3057
  %v3066 = vadd.f32 %v3058, %v3062
  %v3067 = vadd.f32 %v3059, %v3063
  %v3068 = vadd.f32 %v3060, %v3064
  %v3069 = vadd.f32 %v3061, %v3065
  %v3070 = vtanh.pop %v3066
  %v3071 = vtanh.pop %v3067
  %v3072 = vtanh.pop %v3068
  %v3073 = vtanh.pop %v3069
  %v3074 = vmul.f32 %v3008, %v3070
  %v3075 = vmul.f32 %v3023, %v3071
  %v3076 = vmul.f32 %v3038, %v3072
  %v3077 = vmul.f32 %v3053, %v3073
  %s3078 = scalar_lea.vmem [#allocation3], 160
  %3079 = vst [vmem:[%s3078] sm:$0xff] %v3074
  %3080 = vst [vmem:[%s3078 + $0x8] sm:$0xff] %v3075
  %3081 = vst [vmem:[%s3078 + $0x10] sm:$0xff] %v3076
  %3082 = vst [vmem:[%s3078 + $0x18] sm:$0xff] %v3077
  %v3083 = vld [vmem:[%s796] sm:$0xff]
  %v3084 = vld [vmem:[%s796 + $0x8] sm:$0xff]
  %v3085 = vld [vmem:[%s796 + $0x10] sm:$0xff]
  %v3086 = vld [vmem:[%s796 + $0x18] sm:$0xff]
  %v3087 = vld [vmem:[%s796 + $0x20] sm:$0xff]
  %v3088 = vld [vmem:[%s796 + $0x28] sm:$0xff]
  %v3089 = vld [vmem:[%s796 + $0x30] sm:$0xff]
  %v3090 = vld [vmem:[%s796 + $0x38] sm:$0xff]
  %v3091 = vld [vmem:[%s796 + $0x40] sm:$0xff]
  %v3092 = vld [vmem:[%s796 + $0x48] sm:$0xff]
  %v3093 = vld [vmem:[%s796 + $0x50] sm:$0xff]
  %v3094 = vld [vmem:[%s796 + $0x58] sm:$0xff]
  %v3095 = vld [vmem:[%s796 + $0x60] sm:$0xff]
  %v3096 = vld [vmem:[%s796 + $0x68] sm:$0xff]
  %v3097 = vld [vmem:[%s796 + $0x70] sm:$0xff]
  %v3098 = vld [vmem:[%s796 + $0x78] sm:$0xff]
  %3099 = vmatpush.msra.mxu0 0.0
  %3100 = vmatpush.msra.mxu0 0.0
  %3101 = vmatpush.msra.mxu0 0.0
  %3102 = vmatpush.msra.mxu0 0.0
  %3103 = vmatpush.msra.mxu0 0.0
  %3104 = vmatpush.msra.mxu0 0.0
  %3105 = vmatpush.msra.mxu0 0.0
  %3106 = vmatpush.msra.mxu0 0.0
  %3107 = vmatpush.msra.mxu0 0.0
  %3108 = vmatpush.msra.mxu0 0.0
  %3109 = vmatpush.msra.mxu0 0.0
  %3110 = vmatpush.msra.mxu0 0.0
  %3111 = vmatpush.msra.mxu0 %v3077
  %3112 = vmatpush.msra.mxu0 %v3076
  %3113 = vmatpush.msra.mxu0 %v3075
  %3114 = vmatpush.msra.mxu0 %v3074
  %3115 = vmatmul.f32.gmra.mxu0 %v929
  %v3116 = vpop.f32.mrf.mxu0
  %v3117 = vadd.f32 0.0, %v3116
  %3118 = vmatmul.f32.gmra.mxu0 %v932
  %v3119 = vpop.f32.mrf.mxu0
  %v3120 = vadd.f32 0.0, %v3119
  %3121 = vmatmul.f32.gmra.mxu0 %v935
  %v3122 = vpop.f32.mrf.mxu0
  %v3123 = vadd.f32 0.0, %v3122
  %3124 = vmatmul.f32.gmra.mxu0 %v938
  %v3125 = vpop.f32.mrf.mxu0
  %v3126 = vadd.f32 0.0, %v3125
  %3127 = vmatmul.f32.gmra.mxu0 %v941
  %v3128 = vpop.f32.mrf.mxu0
  %v3129 = vadd.f32 0.0, %v3128
  %3130 = vmatmul.f32.gmra.mxu0 %v944
  %v3131 = vpop.f32.mrf.mxu0
  %v3132 = vadd.f32 0.0, %v3131
  %3133 = vmatmul.f32.gmra.mxu0 %v947
  %v3134 = vpop.f32.mrf.mxu0
  %v3135 = vadd.f32 0.0, %v3134
  %3136 = vmatmul.f32.gmra.mxu0 %v950
  %v3137 = vpop.f32.mrf.mxu0
  %v3138 = vadd.f32 0.0, %v3137
  %3139 = vmatmul.f32.gmra.mxu0 %v953
  %v3140 = vpop.f32.mrf.mxu0
  %v3141 = vadd.f32 0.0, %v3140
  %3142 = vmatmul.f32.gmra.mxu0 %v956
  %v3143 = vpop.f32.mrf.mxu0
  %v3144 = vadd.f32 0.0, %v3143
  %3145 = vmatmul.f32.gmra.mxu0 %v959
  %v3146 = vpop.f32.mrf.mxu0
  %v3147 = vadd.f32 0.0, %v3146
  %3148 = vmatmul.f32.gmra.mxu0 %v962
  %v3149 = vpop.f32.mrf.mxu0
  %v3150 = vadd.f32 0.0, %v3149
  %3151 = vmatmul.f32.gmra.mxu0 %v965
  %v3152 = vpop.f32.mrf.mxu0
  %v3153 = vadd.f32 0.0, %v3152
  %3154 = vmatmul.f32.gmra.mxu0 %v968
  %v3155 = vpop.f32.mrf.mxu0
  %v3156 = vadd.f32 0.0, %v3155
  %3157 = vmatmul.f32.gmra.mxu0 %v971
  %v3158 = vpop.f32.mrf.mxu0
  %v3159 = vadd.f32 0.0, %v3158
  %3160 = vmatmul.f32.gmra.mxu0 %v974
  %v3161 = vpop.f32.mrf.mxu0
  %v3162 = vadd.f32 0.0, %v3161
  %3163 = vdwg.mxu0
  %v3164 = vadd.f32 %v3083, %v3117
  %v3165 = vadd.f32 %v3084, %v3120
  %v3166 = vadd.f32 %v3085, %v3123
  %v3167 = vadd.f32 %v3086, %v3126
  %v3168 = vadd.f32 %v3087, %v3129
  %v3169 = vadd.f32 %v3088, %v3132
  %v3170 = vadd.f32 %v3089, %v3135
  %v3171 = vadd.f32 %v3090, %v3138
  %v3172 = vadd.f32 %v3091, %v3141
  %v3173 = vadd.f32 %v3092, %v3144
  %v3174 = vadd.f32 %v3093, %v3147
  %v3175 = vadd.f32 %v3094, %v3150
  %v3176 = vadd.f32 %v3095, %v3153
  %v3177 = vadd.f32 %v3096, %v3156
  %v3178 = vadd.f32 %v3097, %v3159
  %v3179 = vadd.f32 %v3098, %v3162
  %v3180 = vxor.u32 %v3164, 2147483648
  %v3181 = vxor.u32 %v3165, 2147483648
  %v3182 = vxor.u32 %v3166, 2147483648
  %v3183 = vxor.u32 %v3167, 2147483648
  %v3184 = vxor.u32 %v3168, 2147483648
  %v3185 = vxor.u32 %v3169, 2147483648
  %v3186 = vxor.u32 %v3170, 2147483648
  %v3187 = vxor.u32 %v3171, 2147483648
  %v3188 = vxor.u32 %v3172, 2147483648
  %v3189 = vxor.u32 %v3173, 2147483648
  %v3190 = vxor.u32 %v3174, 2147483648
  %v3191 = vxor.u32 %v3175, 2147483648
  %v3192 = vmul.f32 %v3180, 1.442695
  %v3193 = vpow.pop %v3192
  %v3194 = vmul.f32 %v3181, 1.442695
  %v3195 = vpow.pop %v3194
  %v3196 = vmul.f32 %v3182, 1.442695
  %v3197 = vpow.pop %v3196
  %v3198 = vmul.f32 %v3183, 1.442695
  %v3199 = vpow.pop %v3198
  %v3200 = vmul.f32 %v3184, 1.442695
  %v3201 = vpow.pop %v3200
  %v3202 = vmul.f32 %v3185, 1.442695
  %v3203 = vpow.pop %v3202
  %v3204 = vmul.f32 %v3186, 1.442695
  %v3205 = vpow.pop %v3204
  %v3206 = vmul.f32 %v3187, 1.442695
  %v3207 = vpow.pop %v3206
  %v3208 = vmul.f32 %v3188, 1.442695
  %v3209 = vpow.pop %v3208
  %v3210 = vmul.f32 %v3189, 1.442695
  %v3211 = vpow.pop %v3210
  %v3212 = vmul.f32 %v3190, 1.442695
  %v3213 = vpow.pop %v3212
  %v3214 = vmul.f32 %v3191, 1.442695
  %v3215 = vpow.pop %v3214
  %v3216 = vadd.f32 %v3193, 1.0
  %v3217 = vadd.f32 %v3195, 1.0
  %v3218 = vadd.f32 %v3197, 1.0
  %v3219 = vadd.f32 %v3199, 1.0
  %v3220 = vadd.f32 %v3201, 1.0
  %v3221 = vadd.f32 %v3203, 1.0
  %v3222 = vadd.f32 %v3205, 1.0
  %v3223 = vadd.f32 %v3207, 1.0
  %v3224 = vadd.f32 %v3209, 1.0
  %v3225 = vadd.f32 %v3211, 1.0
  %v3226 = vadd.f32 %v3213, 1.0
  %v3227 = vadd.f32 %v3215, 1.0
  %v3228 = vrcp.pop %v3216
  %v3229 = vmul.f32 %v3216, %v3228
  %v3230 = vsub.f32 1.0, %v3229
  %v3231 = vmul.f32 %v3228, %v3230
  %v3232 = vadd.f32 %v3228, %v3231
  %vm3233 = vweird.f32 %v3216
  %vm3234 = vweird.f32 %v3228
  %vm3235 = vmor %vm3233, %vm3234
  %v3236 = vsel %vm3235, %v3228, %v3232
  %v3237 = vand.u32 2147483647, %v3216
  %vm3238 = vcmp.eq.f32.partialorder %v3237, 8.507059e+37
  %v3239 = vand.u32 %v3216, 2147483648
  %v3240 = vor.u32 1.1754944e-38, %v3239
  %v3241 = vsel %vm3238, %v3240, %v3236
  %v3242 = vmul.f32 1.0, %v3241
  %v3243 = vrcp.pop %v3217
  %v3244 = vmul.f32 %v3217, %v3243
  %v3245 = vsub.f32 1.0, %v3244
  %v3246 = vmul.f32 %v3243, %v3245
  %v3247 = vadd.f32 %v3243, %v3246
  %vm3248 = vweird.f32 %v3217
  %vm3249 = vweird.f32 %v3243
  %vm3250 = vmor %vm3248, %vm3249
  %v3251 = vsel %vm3250, %v3243, %v3247
  %v3252 = vand.u32 2147483647, %v3217
  %vm3253 = vcmp.eq.f32.partialorder %v3252, 8.507059e+37
  %v3254 = vand.u32 %v3217, 2147483648
  %v3255 = vor.u32 1.1754944e-38, %v3254
  %v3256 = vsel %vm3253, %v3255, %v3251
  %v3257 = vmul.f32 1.0, %v3256
  %v3258 = vrcp.pop %v3218
  %v3259 = vmul.f32 %v3218, %v3258
  %v3260 = vsub.f32 1.0, %v3259
  %v3261 = vmul.f32 %v3258, %v3260
  %v3262 = vadd.f32 %v3258, %v3261
  %vm3263 = vweird.f32 %v3218
  %vm3264 = vweird.f32 %v3258
  %vm3265 = vmor %vm3263, %vm3264
  %v3266 = vsel %vm3265, %v3258, %v3262
  %v3267 = vand.u32 2147483647, %v3218
  %vm3268 = vcmp.eq.f32.partialorder %v3267, 8.507059e+37
  %v3269 = vand.u32 %v3218, 2147483648
  %v3270 = vor.u32 1.1754944e-38, %v3269
  %v3271 = vsel %vm3268, %v3270, %v3266
  %v3272 = vmul.f32 1.0, %v3271
  %v3273 = vrcp.pop %v3219
  %v3274 = vmul.f32 %v3219, %v3273
  %v3275 = vsub.f32 1.0, %v3274
  %v3276 = vmul.f32 %v3273, %v3275
  %v3277 = vadd.f32 %v3273, %v3276
  %vm3278 = vweird.f32 %v3219
  %vm3279 = vweird.f32 %v3273
  %vm3280 = vmor %vm3278, %vm3279
  %v3281 = vsel %vm3280, %v3273, %v3277
  %v3282 = vand.u32 2147483647, %v3219
  %vm3283 = vcmp.eq.f32.partialorder %v3282, 8.507059e+37
  %v3284 = vand.u32 %v3219, 2147483648
  %v3285 = vor.u32 1.1754944e-38, %v3284
  %v3286 = vsel %vm3283, %v3285, %v3281
  %v3287 = vmul.f32 1.0, %v3286
  %v3288 = vrcp.pop %v3220
  %v3289 = vmul.f32 %v3220, %v3288
  %v3290 = vsub.f32 1.0, %v3289
  %v3291 = vmul.f32 %v3288, %v3290
  %v3292 = vadd.f32 %v3288, %v3291
  %vm3293 = vweird.f32 %v3220
  %vm3294 = vweird.f32 %v3288
  %vm3295 = vmor %vm3293, %vm3294
  %v3296 = vsel %vm3295, %v3288, %v3292
  %v3297 = vand.u32 2147483647, %v3220
  %vm3298 = vcmp.eq.f32.partialorder %v3297, 8.507059e+37
  %v3299 = vand.u32 %v3220, 2147483648
  %v3300 = vor.u32 1.1754944e-38, %v3299
  %v3301 = vsel %vm3298, %v3300, %v3296
  %v3302 = vmul.f32 1.0, %v3301
  %v3303 = vrcp.pop %v3221
  %v3304 = vmul.f32 %v3221, %v3303
  %v3305 = vsub.f32 1.0, %v3304
  %v3306 = vmul.f32 %v3303, %v3305
  %v3307 = vadd.f32 %v3303, %v3306
  %vm3308 = vweird.f32 %v3221
  %vm3309 = vweird.f32 %v3303
  %vm3310 = vmor %vm3308, %vm3309
  %v3311 = vsel %vm3310, %v3303, %v3307
  %v3312 = vand.u32 2147483647, %v3221
  %vm3313 = vcmp.eq.f32.partialorder %v3312, 8.507059e+37
  %v3314 = vand.u32 %v3221, 2147483648
  %v3315 = vor.u32 1.1754944e-38, %v3314
  %v3316 = vsel %vm3313, %v3315, %v3311
  %v3317 = vmul.f32 1.0, %v3316
  %v3318 = vrcp.pop %v3222
  %v3319 = vmul.f32 %v3222, %v3318
  %v3320 = vsub.f32 1.0, %v3319
  %v3321 = vmul.f32 %v3318, %v3320
  %v3322 = vadd.f32 %v3318, %v3321
  %vm3323 = vweird.f32 %v3222
  %vm3324 = vweird.f32 %v3318
  %vm3325 = vmor %vm3323, %vm3324
  %v3326 = vsel %vm3325, %v3318, %v3322
  %v3327 = vand.u32 2147483647, %v3222
  %vm3328 = vcmp.eq.f32.partialorder %v3327, 8.507059e+37
  %v3329 = vand.u32 %v3222, 2147483648
  %v3330 = vor.u32 1.1754944e-38, %v3329
  %v3331 = vsel %vm3328, %v3330, %v3326
  %v3332 = vmul.f32 1.0, %v3331
  %v3333 = vrcp.pop %v3223
  %v3334 = vmul.f32 %v3223, %v3333
  %v3335 = vsub.f32 1.0, %v3334
  %v3336 = vmul.f32 %v3333, %v3335
  %v3337 = vadd.f32 %v3333, %v3336
  %vm3338 = vweird.f32 %v3223
  %vm3339 = vweird.f32 %v3333
  %vm3340 = vmor %vm3338, %vm3339
  %v3341 = vsel %vm3340, %v3333, %v3337
  %v3342 = vand.u32 2147483647, %v3223
  %vm3343 = vcmp.eq.f32.partialorder %v3342, 8.507059e+37
  %v3344 = vand.u32 %v3223, 2147483648
  %v3345 = vor.u32 1.1754944e-38, %v3344
  %v3346 = vsel %vm3343, %v3345, %v3341
  %v3347 = vmul.f32 1.0, %v3346
  %v3348 = vrcp.pop %v3224
  %v3349 = vmul.f32 %v3224, %v3348
  %v3350 = vsub.f32 1.0, %v3349
  %v3351 = vmul.f32 %v3348, %v3350
  %v3352 = vadd.f32 %v3348, %v3351
  %vm3353 = vweird.f32 %v3224
  %vm3354 = vweird.f32 %v3348
  %vm3355 = vmor %vm3353, %vm3354
  %v3356 = vsel %vm3355, %v3348, %v3352
  %v3357 = vand.u32 2147483647, %v3224
  %vm3358 = vcmp.eq.f32.partialorder %v3357, 8.507059e+37
  %v3359 = vand.u32 %v3224, 2147483648
  %v3360 = vor.u32 1.1754944e-38, %v3359
  %v3361 = vsel %vm3358, %v3360, %v3356
  %v3362 = vmul.f32 1.0, %v3361
  %v3363 = vrcp.pop %v3225
  %v3364 = vmul.f32 %v3225, %v3363
  %v3365 = vsub.f32 1.0, %v3364
  %v3366 = vmul.f32 %v3363, %v3365
  %v3367 = vadd.f32 %v3363, %v3366
  %vm3368 = vweird.f32 %v3225
  %vm3369 = vweird.f32 %v3363
  %vm3370 = vmor %vm3368, %vm3369
  %v3371 = vsel %vm3370, %v3363, %v3367
  %v3372 = vand.u32 2147483647, %v3225
  %vm3373 = vcmp.eq.f32.partialorder %v3372, 8.507059e+37
  %v3374 = vand.u32 %v3225, 2147483648
  %v3375 = vor.u32 1.1754944e-38, %v3374
  %v3376 = vsel %vm3373, %v3375, %v3371
  %v3377 = vmul.f32 1.0, %v3376
  %v3378 = vrcp.pop %v3226
  %v3379 = vmul.f32 %v3226, %v3378
  %v3380 = vsub.f32 1.0, %v3379
  %v3381 = vmul.f32 %v3378, %v3380
  %v3382 = vadd.f32 %v3378, %v3381
  %vm3383 = vweird.f32 %v3226
  %vm3384 = vweird.f32 %v3378
  %vm3385 = vmor %vm3383, %vm3384
  %v3386 = vsel %vm3385, %v3378, %v3382
  %v3387 = vand.u32 2147483647, %v3226
  %vm3388 = vcmp.eq.f32.partialorder %v3387, 8.507059e+37
  %v3389 = vand.u32 %v3226, 2147483648
  %v3390 = vor.u32 1.1754944e-38, %v3389
  %v3391 = vsel %vm3388, %v3390, %v3386
  %v3392 = vmul.f32 1.0, %v3391
  %v3393 = vrcp.pop %v3227
  %v3394 = vmul.f32 %v3227, %v3393
  %v3395 = vsub.f32 1.0, %v3394
  %v3396 = vmul.f32 %v3393, %v3395
  %v3397 = vadd.f32 %v3393, %v3396
  %vm3398 = vweird.f32 %v3227
  %vm3399 = vweird.f32 %v3393
  %vm3400 = vmor %vm3398, %vm3399
  %v3401 = vsel %vm3400, %v3393, %v3397
  %v3402 = vand.u32 2147483647, %v3227
  %vm3403 = vcmp.eq.f32.partialorder %v3402, 8.507059e+37
  %v3404 = vand.u32 %v3227, 2147483648
  %v3405 = vor.u32 1.1754944e-38, %v3404
  %v3406 = vsel %vm3403, %v3405, %v3401
  %v3407 = vmul.f32 1.0, %v3406
  %v3408 = vtanh.pop %v3176
  %v3409 = vtanh.pop %v3177
  %v3410 = vtanh.pop %v3178
  %v3411 = vtanh.pop %v3179
  %v3412 = vmul.f32 %v3302, %v3066
  %v3413 = vmul.f32 %v3317, %v3067
  %v3414 = vmul.f32 %v3332, %v3068
  %v3415 = vmul.f32 %v3347, %v3069
  %v3416 = vmul.f32 %v3242, %v3408
  %v3417 = vmul.f32 %v3257, %v3409
  %v3418 = vmul.f32 %v3272, %v3410
  %v3419 = vmul.f32 %v3287, %v3411
  %v3420 = vadd.f32 %v3412, %v3416
  %v3421 = vadd.f32 %v3413, %v3417
  %v3422 = vadd.f32 %v3414, %v3418
  %v3423 = vadd.f32 %v3415, %v3419
  %v3424 = vtanh.pop %v3420
  %v3425 = vtanh.pop %v3421
  %v3426 = vtanh.pop %v3422
  %v3427 = vtanh.pop %v3423
  %v3428 = vmul.f32 %v3362, %v3424
  %v3429 = vmul.f32 %v3377, %v3425
  %v3430 = vmul.f32 %v3392, %v3426
  %v3431 = vmul.f32 %v3407, %v3427
  %s3432 = scalar_lea.vmem [#allocation3], 192
  %3433 = vst [vmem:[%s3432] sm:$0xff] %v3428
  %3434 = vst [vmem:[%s3432 + $0x8] sm:$0xff] %v3429
  %3435 = vst [vmem:[%s3432 + $0x10] sm:$0xff] %v3430
  %3436 = vst [vmem:[%s3432 + $0x18] sm:$0xff] %v3431
  %v3437 = vld [vmem:[%s894] sm:$0xff]
  %v3438 = vld [vmem:[%s894 + $0x8] sm:$0xff]
  %v3439 = vld [vmem:[%s894 + $0x10] sm:$0xff]
  %v3440 = vld [vmem:[%s894 + $0x18] sm:$0xff]
  %v3441 = vld [vmem:[%s894 + $0x20] sm:$0xff]
  %v3442 = vld [vmem:[%s894 + $0x28] sm:$0xff]
  %v3443 = vld [vmem:[%s894 + $0x30] sm:$0xff]
  %v3444 = vld [vmem:[%s894 + $0x38] sm:$0xff]
  %v3445 = vld [vmem:[%s894 + $0x40] sm:$0xff]
  %v3446 = vld [vmem:[%s894 + $0x48] sm:$0xff]
  %v3447 = vld [vmem:[%s894 + $0x50] sm:$0xff]
  %v3448 = vld [vmem:[%s894 + $0x58] sm:$0xff]
  %v3449 = vld [vmem:[%s894 + $0x60] sm:$0xff]
  %v3450 = vld [vmem:[%s894 + $0x68] sm:$0xff]
  %v3451 = vld [vmem:[%s894 + $0x70] sm:$0xff]
  %v3452 = vld [vmem:[%s894 + $0x78] sm:$0xff]
  %3453 = vmatpush.msra.mxu0 0.0
  %3454 = vmatpush.msra.mxu0 0.0
  %3455 = vmatpush.msra.mxu0 0.0
  %3456 = vmatpush.msra.mxu0 0.0
  %3457 = vmatpush.msra.mxu0 0.0
  %3458 = vmatpush.msra.mxu0 0.0
  %3459 = vmatpush.msra.mxu0 0.0
  %3460 = vmatpush.msra.mxu0 0.0
  %3461 = vmatpush.msra.mxu0 0.0
  %3462 = vmatpush.msra.mxu0 0.0
  %3463 = vmatpush.msra.mxu0 0.0
  %3464 = vmatpush.msra.mxu0 0.0
  %3465 = vmatpush.msra.mxu0 %v3431
  %3466 = vmatpush.msra.mxu0 %v3430
  %3467 = vmatpush.msra.mxu0 %v3429
  %3468 = vmatpush.msra.mxu0 %v3428
  %3469 = vmatmul.f32.gmra.mxu0 %v929
  %v3470 = vpop.f32.mrf.mxu0
  %v3471 = vadd.f32 0.0, %v3470
  %3472 = vmatmul.f32.gmra.mxu0 %v932
  %v3473 = vpop.f32.mrf.mxu0
  %v3474 = vadd.f32 0.0, %v3473
  %3475 = vmatmul.f32.gmra.mxu0 %v935
  %v3476 = vpop.f32.mrf.mxu0
  %v3477 = vadd.f32 0.0, %v3476
  %3478 = vmatmul.f32.gmra.mxu0 %v938
  %v3479 = vpop.f32.mrf.mxu0
  %v3480 = vadd.f32 0.0, %v3479
  %3481 = vmatmul.f32.gmra.mxu0 %v941
  %v3482 = vpop.f32.mrf.mxu0
  %v3483 = vadd.f32 0.0, %v3482
  %3484 = vmatmul.f32.gmra.mxu0 %v944
  %v3485 = vpop.f32.mrf.mxu0
  %v3486 = vadd.f32 0.0, %v3485
  %3487 = vmatmul.f32.gmra.mxu0 %v947
  %v3488 = vpop.f32.mrf.mxu0
  %v3489 = vadd.f32 0.0, %v3488
  %3490 = vmatmul.f32.gmra.mxu0 %v950
  %v3491 = vpop.f32.mrf.mxu0
  %v3492 = vadd.f32 0.0, %v3491
  %3493 = vmatmul.f32.gmra.mxu0 %v953
  %v3494 = vpop.f32.mrf.mxu0
  %v3495 = vadd.f32 0.0, %v3494
  %3496 = vmatmul.f32.gmra.mxu0 %v956
  %v3497 = vpop.f32.mrf.mxu0
  %v3498 = vadd.f32 0.0, %v3497
  %3499 = vmatmul.f32.gmra.mxu0 %v959
  %v3500 = vpop.f32.mrf.mxu0
  %v3501 = vadd.f32 0.0, %v3500
  %3502 = vmatmul.f32.gmra.mxu0 %v962
  %v3503 = vpop.f32.mrf.mxu0
  %v3504 = vadd.f32 0.0, %v3503
  %3505 = vmatmul.f32.gmra.mxu0 %v965
  %v3506 = vpop.f32.mrf.mxu0
  %v3507 = vadd.f32 0.0, %v3506
  %3508 = vmatmul.f32.gmra.mxu0 %v968
  %v3509 = vpop.f32.mrf.mxu0
  %v3510 = vadd.f32 0.0, %v3509
  %3511 = vmatmul.f32.gmra.mxu0 %v971
  %v3512 = vpop.f32.mrf.mxu0
  %v3513 = vadd.f32 0.0, %v3512
  %3514 = vmatmul.f32.gmra.mxu0 %v974
  %v3515 = vpop.f32.mrf.mxu0
  %v3516 = vadd.f32 0.0, %v3515
  %3517 = vdwg.mxu0
  %v3518 = vadd.f32 %v3437, %v3471
  %v3519 = vadd.f32 %v3438, %v3474
  %v3520 = vadd.f32 %v3439, %v3477
  %v3521 = vadd.f32 %v3440, %v3480
  %v3522 = vadd.f32 %v3441, %v3483
  %v3523 = vadd.f32 %v3442, %v3486
  %v3524 = vadd.f32 %v3443, %v3489
  %v3525 = vadd.f32 %v3444, %v3492
  %v3526 = vadd.f32 %v3445, %v3495
  %v3527 = vadd.f32 %v3446, %v3498
  %v3528 = vadd.f32 %v3447, %v3501
  %v3529 = vadd.f32 %v3448, %v3504
  %v3530 = vadd.f32 %v3449, %v3507
  %v3531 = vadd.f32 %v3450, %v3510
  %v3532 = vadd.f32 %v3451, %v3513
  %v3533 = vadd.f32 %v3452, %v3516
  %v3534 = vxor.u32 %v3518, 2147483648
  %v3535 = vxor.u32 %v3519, 2147483648
  %v3536 = vxor.u32 %v3520, 2147483648
  %v3537 = vxor.u32 %v3521, 2147483648
  %v3538 = vxor.u32 %v3522, 2147483648
  %v3539 = vxor.u32 %v3523, 2147483648
  %v3540 = vxor.u32 %v3524, 2147483648
  %v3541 = vxor.u32 %v3525, 2147483648
  %v3542 = vxor.u32 %v3526, 2147483648
  %v3543 = vxor.u32 %v3527, 2147483648
  %v3544 = vxor.u32 %v3528, 2147483648
  %v3545 = vxor.u32 %v3529, 2147483648
  %v3546 = vmul.f32 %v3534, 1.442695
  %v3547 = vpow.pop %v3546
  %v3548 = vmul.f32 %v3535, 1.442695
  %v3549 = vpow.pop %v3548
  %v3550 = vmul.f32 %v3536, 1.442695
  %v3551 = vpow.pop %v3550
  %v3552 = vmul.f32 %v3537, 1.442695
  %v3553 = vpow.pop %v3552
  %v3554 = vmul.f32 %v3538, 1.442695
  %v3555 = vpow.pop %v3554
  %v3556 = vmul.f32 %v3539, 1.442695
  %v3557 = vpow.pop %v3556
  %v3558 = vmul.f32 %v3540, 1.442695
  %v3559 = vpow.pop %v3558
  %v3560 = vmul.f32 %v3541, 1.442695
  %v3561 = vpow.pop %v3560
  %v3562 = vmul.f32 %v3542, 1.442695
  %v3563 = vpow.pop %v3562
  %v3564 = vmul.f32 %v3543, 1.442695
  %v3565 = vpow.pop %v3564
  %v3566 = vmul.f32 %v3544, 1.442695
  %v3567 = vpow.pop %v3566
  %v3568 = vmul.f32 %v3545, 1.442695
  %v3569 = vpow.pop %v3568
  %v3570 = vadd.f32 %v3547, 1.0
  %v3571 = vadd.f32 %v3549, 1.0
  %v3572 = vadd.f32 %v3551, 1.0
  %v3573 = vadd.f32 %v3553, 1.0
  %v3574 = vadd.f32 %v3555, 1.0
  %v3575 = vadd.f32 %v3557, 1.0
  %v3576 = vadd.f32 %v3559, 1.0
  %v3577 = vadd.f32 %v3561, 1.0
  %v3578 = vadd.f32 %v3563, 1.0
  %v3579 = vadd.f32 %v3565, 1.0
  %v3580 = vadd.f32 %v3567, 1.0
  %v3581 = vadd.f32 %v3569, 1.0
  %v3582 = vrcp.pop %v3570
  %v3583 = vmul.f32 %v3570, %v3582
  %v3584 = vsub.f32 1.0, %v3583
  %v3585 = vmul.f32 %v3582, %v3584
  %v3586 = vadd.f32 %v3582, %v3585
  %vm3587 = vweird.f32 %v3570
  %vm3588 = vweird.f32 %v3582
  %vm3589 = vmor %vm3587, %vm3588
  %v3590 = vsel %vm3589, %v3582, %v3586
  %v3591 = vand.u32 2147483647, %v3570
  %vm3592 = vcmp.eq.f32.partialorder %v3591, 8.507059e+37
  %v3593 = vand.u32 %v3570, 2147483648
  %v3594 = vor.u32 1.1754944e-38, %v3593
  %v3595 = vsel %vm3592, %v3594, %v3590
  %v3596 = vmul.f32 1.0, %v3595
  %v3597 = vrcp.pop %v3571
  %v3598 = vmul.f32 %v3571, %v3597
  %v3599 = vsub.f32 1.0, %v3598
  %v3600 = vmul.f32 %v3597, %v3599
  %v3601 = vadd.f32 %v3597, %v3600
  %vm3602 = vweird.f32 %v3571
  %vm3603 = vweird.f32 %v3597
  %vm3604 = vmor %vm3602, %vm3603
  %v3605 = vsel %vm3604, %v3597, %v3601
  %v3606 = vand.u32 2147483647, %v3571
  %vm3607 = vcmp.eq.f32.partialorder %v3606, 8.507059e+37
  %v3608 = vand.u32 %v3571, 2147483648
  %v3609 = vor.u32 1.1754944e-38, %v3608
  %v3610 = vsel %vm3607, %v3609, %v3605
  %v3611 = vmul.f32 1.0, %v3610
  %v3612 = vrcp.pop %v3572
  %v3613 = vmul.f32 %v3572, %v3612
  %v3614 = vsub.f32 1.0, %v3613
  %v3615 = vmul.f32 %v3612, %v3614
  %v3616 = vadd.f32 %v3612, %v3615
  %vm3617 = vweird.f32 %v3572
  %vm3618 = vweird.f32 %v3612
  %vm3619 = vmor %vm3617, %vm3618
  %v3620 = vsel %vm3619, %v3612, %v3616
  %v3621 = vand.u32 2147483647, %v3572
  %vm3622 = vcmp.eq.f32.partialorder %v3621, 8.507059e+37
  %v3623 = vand.u32 %v3572, 2147483648
  %v3624 = vor.u32 1.1754944e-38, %v3623
  %v3625 = vsel %vm3622, %v3624, %v3620
  %v3626 = vmul.f32 1.0, %v3625
  %v3627 = vrcp.pop %v3573
  %v3628 = vmul.f32 %v3573, %v3627
  %v3629 = vsub.f32 1.0, %v3628
  %v3630 = vmul.f32 %v3627, %v3629
  %v3631 = vadd.f32 %v3627, %v3630
  %vm3632 = vweird.f32 %v3573
  %vm3633 = vweird.f32 %v3627
  %vm3634 = vmor %vm3632, %vm3633
  %v3635 = vsel %vm3634, %v3627, %v3631
  %v3636 = vand.u32 2147483647, %v3573
  %vm3637 = vcmp.eq.f32.partialorder %v3636, 8.507059e+37
  %v3638 = vand.u32 %v3573, 2147483648
  %v3639 = vor.u32 1.1754944e-38, %v3638
  %v3640 = vsel %vm3637, %v3639, %v3635
  %v3641 = vmul.f32 1.0, %v3640
  %v3642 = vrcp.pop %v3574
  %v3643 = vmul.f32 %v3574, %v3642
  %v3644 = vsub.f32 1.0, %v3643
  %v3645 = vmul.f32 %v3642, %v3644
  %v3646 = vadd.f32 %v3642, %v3645
  %vm3647 = vweird.f32 %v3574
  %vm3648 = vweird.f32 %v3642
  %vm3649 = vmor %vm3647, %vm3648
  %v3650 = vsel %vm3649, %v3642, %v3646
  %v3651 = vand.u32 2147483647, %v3574
  %vm3652 = vcmp.eq.f32.partialorder %v3651, 8.507059e+37
  %v3653 = vand.u32 %v3574, 2147483648
  %v3654 = vor.u32 1.1754944e-38, %v3653
  %v3655 = vsel %vm3652, %v3654, %v3650
  %v3656 = vmul.f32 1.0, %v3655
  %v3657 = vrcp.pop %v3575
  %v3658 = vmul.f32 %v3575, %v3657
  %v3659 = vsub.f32 1.0, %v3658
  %v3660 = vmul.f32 %v3657, %v3659
  %v3661 = vadd.f32 %v3657, %v3660
  %vm3662 = vweird.f32 %v3575
  %vm3663 = vweird.f32 %v3657
  %vm3664 = vmor %vm3662, %vm3663
  %v3665 = vsel %vm3664, %v3657, %v3661
  %v3666 = vand.u32 2147483647, %v3575
  %vm3667 = vcmp.eq.f32.partialorder %v3666, 8.507059e+37
  %v3668 = vand.u32 %v3575, 2147483648
  %v3669 = vor.u32 1.1754944e-38, %v3668
  %v3670 = vsel %vm3667, %v3669, %v3665
  %v3671 = vmul.f32 1.0, %v3670
  %v3672 = vrcp.pop %v3576
  %v3673 = vmul.f32 %v3576, %v3672
  %v3674 = vsub.f32 1.0, %v3673
  %v3675 = vmul.f32 %v3672, %v3674
  %v3676 = vadd.f32 %v3672, %v3675
  %vm3677 = vweird.f32 %v3576
  %vm3678 = vweird.f32 %v3672
  %vm3679 = vmor %vm3677, %vm3678
  %v3680 = vsel %vm3679, %v3672, %v3676
  %v3681 = vand.u32 2147483647, %v3576
  %vm3682 = vcmp.eq.f32.partialorder %v3681, 8.507059e+37
  %v3683 = vand.u32 %v3576, 2147483648
  %v3684 = vor.u32 1.1754944e-38, %v3683
  %v3685 = vsel %vm3682, %v3684, %v3680
  %v3686 = vmul.f32 1.0, %v3685
  %v3687 = vrcp.pop %v3577
  %v3688 = vmul.f32 %v3577, %v3687
  %v3689 = vsub.f32 1.0, %v3688
  %v3690 = vmul.f32 %v3687, %v3689
  %v3691 = vadd.f32 %v3687, %v3690
  %vm3692 = vweird.f32 %v3577
  %vm3693 = vweird.f32 %v3687
  %vm3694 = vmor %vm3692, %vm3693
  %v3695 = vsel %vm3694, %v3687, %v3691
  %v3696 = vand.u32 2147483647, %v3577
  %vm3697 = vcmp.eq.f32.partialorder %v3696, 8.507059e+37
  %v3698 = vand.u32 %v3577, 2147483648
  %v3699 = vor.u32 1.1754944e-38, %v3698
  %v3700 = vsel %vm3697, %v3699, %v3695
  %v3701 = vmul.f32 1.0, %v3700
  %v3702 = vrcp.pop %v3578
  %v3703 = vmul.f32 %v3578, %v3702
  %v3704 = vsub.f32 1.0, %v3703
  %v3705 = vmul.f32 %v3702, %v3704
  %v3706 = vadd.f32 %v3702, %v3705
  %vm3707 = vweird.f32 %v3578
  %vm3708 = vweird.f32 %v3702
  %vm3709 = vmor %vm3707, %vm3708
  %v3710 = vsel %vm3709, %v3702, %v3706
  %v3711 = vand.u32 2147483647, %v3578
  %vm3712 = vcmp.eq.f32.partialorder %v3711, 8.507059e+37
  %v3713 = vand.u32 %v3578, 2147483648
  %v3714 = vor.u32 1.1754944e-38, %v3713
  %v3715 = vsel %vm3712, %v3714, %v3710
  %v3716 = vmul.f32 1.0, %v3715
  %v3717 = vrcp.pop %v3579
  %v3718 = vmul.f32 %v3579, %v3717
  %v3719 = vsub.f32 1.0, %v3718
  %v3720 = vmul.f32 %v3717, %v3719
  %v3721 = vadd.f32 %v3717, %v3720
  %vm3722 = vweird.f32 %v3579
  %vm3723 = vweird.f32 %v3717
  %vm3724 = vmor %vm3722, %vm3723
  %v3725 = vsel %vm3724, %v3717, %v3721
  %v3726 = vand.u32 2147483647, %v3579
  %vm3727 = vcmp.eq.f32.partialorder %v3726, 8.507059e+37
  %v3728 = vand.u32 %v3579, 2147483648
  %v3729 = vor.u32 1.1754944e-38, %v3728
  %v3730 = vsel %vm3727, %v3729, %v3725
  %v3731 = vmul.f32 1.0, %v3730
  %v3732 = vrcp.pop %v3580
  %v3733 = vmul.f32 %v3580, %v3732
  %v3734 = vsub.f32 1.0, %v3733
  %v3735 = vmul.f32 %v3732, %v3734
  %v3736 = vadd.f32 %v3732, %v3735
  %vm3737 = vweird.f32 %v3580
  %vm3738 = vweird.f32 %v3732
  %vm3739 = vmor %vm3737, %vm3738
  %v3740 = vsel %vm3739, %v3732, %v3736
  %v3741 = vand.u32 2147483647, %v3580
  %vm3742 = vcmp.eq.f32.partialorder %v3741, 8.507059e+37
  %v3743 = vand.u32 %v3580, 2147483648
  %v3744 = vor.u32 1.1754944e-38, %v3743
  %v3745 = vsel %vm3742, %v3744, %v3740
  %v3746 = vmul.f32 1.0, %v3745
  %v3747 = vrcp.pop %v3581
  %v3748 = vmul.f32 %v3581, %v3747
  %v3749 = vsub.f32 1.0, %v3748
  %v3750 = vmul.f32 %v3747, %v3749
  %v3751 = vadd.f32 %v3747, %v3750
  %vm3752 = vweird.f32 %v3581
  %vm3753 = vweird.f32 %v3747
  %vm3754 = vmor %vm3752, %vm3753
  %v3755 = vsel %vm3754, %v3747, %v3751
  %v3756 = vand.u32 2147483647, %v3581
  %vm3757 = vcmp.eq.f32.partialorder %v3756, 8.507059e+37
  %v3758 = vand.u32 %v3581, 2147483648
  %v3759 = vor.u32 1.1754944e-38, %v3758
  %v3760 = vsel %vm3757, %v3759, %v3755
  %v3761 = vmul.f32 1.0, %v3760
  %v3762 = vtanh.pop %v3530
  %v3763 = vtanh.pop %v3531
  %v3764 = vtanh.pop %v3532
  %v3765 = vtanh.pop %v3533
  %v3766 = vmul.f32 %v3656, %v3420
  %v3767 = vmul.f32 %v3671, %v3421
  %v3768 = vmul.f32 %v3686, %v3422
  %v3769 = vmul.f32 %v3701, %v3423
  %v3770 = vmul.f32 %v3596, %v3762
  %v3771 = vmul.f32 %v3611, %v3763
  %v3772 = vmul.f32 %v3626, %v3764
  %v3773 = vmul.f32 %v3641, %v3765
  %v3774 = vadd.f32 %v3766, %v3770
  %v3775 = vadd.f32 %v3767, %v3771
  %v3776 = vadd.f32 %v3768, %v3772
  %v3777 = vadd.f32 %v3769, %v3773
  %v3778 = vtanh.pop %v3774
  %v3779 = vtanh.pop %v3775
  %v3780 = vtanh.pop %v3776
  %v3781 = vtanh.pop %v3777
  %v3782 = vmul.f32 %v3716, %v3778
  %v3783 = vmul.f32 %v3731, %v3779
  %v3784 = vmul.f32 %v3746, %v3780
  %v3785 = vmul.f32 %v3761, %v3781
  %s3786 = scalar_lea.vmem [#allocation3], 224
  %3787 = vst [vmem:[%s3786] sm:$0xff] %v3782
  %3788 = vst [vmem:[%s3786 + $0x8] sm:$0xff] %v3783
  %3789 = vst [vmem:[%s3786 + $0x10] sm:$0xff] %v3784
  %3790 = vst [vmem:[%s3786 + $0x18] sm:$0xff] %v3785
  %v3791 = vld [vmem:[#allocation3] sm:$0xff]
  %v3792 = vld [vmem:[#allocation3 + $0x8] sm:$0xff]
  %v3793 = vld [vmem:[#allocation3 + $0x10] sm:$0xff]
  %v3794 = vld [vmem:[#allocation3 + $0x18] sm:$0xff]
  %v3796 = vsel %vm927, %v60, 0
  %v3799 = vsel %vm927, %v61, 0
  %3801 = vmatpush.msra.mxu0 0.0
  %3802 = vmatpush.msra.mxu0 0.0
  %3803 = vmatpush.msra.mxu0 0.0
  %3804 = vmatpush.msra.mxu0 0.0
  %3805 = vmatpush.msra.mxu0 0.0
  %3806 = vmatpush.msra.mxu0 0.0
  %3807 = vmatpush.msra.mxu0 0.0
  %3808 = vmatpush.msra.mxu0 0.0
  %3809 = vmatpush.msra.mxu0 0.0
  %3810 = vmatpush.msra.mxu0 0.0
  %3811 = vmatpush.msra.mxu0 0.0
  %3812 = vmatpush.msra.mxu0 0.0
  %3813 = vmatpush.msra.mxu0 %v3794
  %3814 = vmatpush.msra.mxu0 %v3793
  %3815 = vmatpush.msra.mxu0 %v3792
  %3816 = vmatpush.msra.mxu0 %v3791
  %3817 = vmatmul.f32.gmra.mxu0 %v3796
  %v3818 = vpop.f32.mrf.mxu0
  %v3819 = vadd.f32 0.0, %v3818
  %3820 = vmatmul.f32.gmra.mxu0 %v3799
  %v3821 = vpop.f32.mrf.mxu0
  %v3822 = vadd.f32 0.0, %v3821
  %3823 = vdwg.mxu0
  %3824 = vst [vmem:[%s8] sm:$0xff] %v3819
  %3825 = vst [vmem:[%s8 + $0x8] sm:$0x7f] %v3822
  %vm3826 = vcmask 1046528
  %v3827 = vsel %vm3826, %v3822, -inf
  %v3828 = vmax.f32 %v3819, %v3827
  %v3829 = vrot.slane %v3828, 4
  %v3830 = vmax.f32 %v3828, %v3829
  %v3831 = vrot.slane %v3830, 2
  %v3832 = vmax.f32 %v3830, %v3831
  %v3833 = vrot.slane %v3832, 1
  %v3834 = vmax.f32 %v3832, %v3833
  %v3835 = vsub.f32 %v3819, %v3834
  %v3836 = vsub.f32 %v3822, %v3834
  %v3837 = vmul.f32 %v3835, 1.442695
  %v3838 = vpow.pop %v3837
  %v3839 = vmul.f32 %v3836, 1.442695
  %v3840 = vpow.pop %v3839
  %v3841 = vsel %vm3826, %v3840, 0.0
  %v3842 = vadd.f32 %v3838, %v3841
  %v3843 = vrot.slane %v3842, 4
  %v3844 = vadd.f32 %v3842, %v3843
  %v3845 = vrot.slane %v3844, 2
  %v3846 = vadd.f32 %v3844, %v3845
  %v3847 = vrot.slane %v3846, 1
  %v3848 = vadd.f32 %v3846, %v3847
  %v3849 = vrcp.pop %v3848
  %v3850 = vmul.f32 %v3838, %v3849
  %v3851 = vmul.f32 %v3840, %v3849
  %vm3852 = vcmask 121856
  %v3854 = vsel %vm3852, %v62, 0
  %v3857 = vsel %vm3852, %v63, 0
  %v3860 = vsel %vm3852, %v64, 0
  %v3863 = vsel %vm3852, %v65, 0
  %v3866 = vsel %vm3852, %v66, 0
  %v3869 = vsel %vm3852, %v67, 0
  %v3872 = vsel %vm3852, %v68, 0
  %v3875 = vsel %vm3852, %v69, 0
  %v3878 = vsel %vm3852, %v70, 0
  %v3881 = vsel %vm3852, %v71, 0
  %v3884 = vsel %vm3852, %v72, 0
  %v3887 = vsel %vm3852, %v73, 0
  %v3890 = vsel %vm3826, %v3851, 0
  %3892 = vmatpush.msra.mxu0 0.0
  %3893 = vmatpush.msra.mxu0 0.0
  %3894 = vmatpush.msra.mxu0 0.0
  %3895 = vmatpush.msra.mxu0 0.0
  %3896 = vmatpush.msra.mxu0 0.0
  %3897 = vmatpush.msra.mxu0 0.0
  %3898 = vmatpush.msra.mxu0 0.0
  %3899 = vmatpush.msra.mxu0 0.0
  %3900 = vmatpush.msra.mxu0 0.0
  %3901 = vmatpush.msra.mxu0 0.0
  %3902 = vmatpush.msra.mxu0 0.0
  %3903 = vmatpush.msra.mxu0 0.0
  %3904 = vmatpush.msra.mxu0 0.0
  %3905 = vmatpush.msra.mxu0 0.0
  %3906 = vmatpush.msra.mxu0 %v3890
  %3907 = vmatpush.msra.mxu0 %v3850
  %3908 = vmatmul.f32.gmra.mxu0 %v3854
  %v3909 = vpop.f32.mrf.mxu0
  %v3910 = vadd.f32 0.0, %v3909
  %3911 = vmatmul.f32.gmra.mxu0 %v3857
  %v3912 = vpop.f32.mrf.mxu0
  %v3913 = vadd.f32 0.0, %v3912
  %3914 = vmatmul.f32.gmra.mxu0 %v3860
  %v3915 = vpop.f32.mrf.mxu0
  %v3916 = vadd.f32 0.0, %v3915
  %3917 = vmatmul.f32.gmra.mxu0 %v3863
  %v3918 = vpop.f32.mrf.mxu0
  %v3919 = vadd.f32 0.0, %v3918
  %3920 = vmatmul.f32.gmra.mxu0 %v3866
  %v3921 = vpop.f32.mrf.mxu0
  %v3922 = vadd.f32 0.0, %v3921
  %3923 = vmatmul.f32.gmra.mxu0 %v3869
  %v3924 = vpop.f32.mrf.mxu0
  %v3925 = vadd.f32 0.0, %v3924
  %3926 = vmatmul.f32.gmra.mxu0 %v3872
  %v3927 = vpop.f32.mrf.mxu0
  %v3928 = vadd.f32 0.0, %v3927
  %3929 = vmatmul.f32.gmra.mxu0 %v3875
  %v3930 = vpop.f32.mrf.mxu0
  %v3931 = vadd.f32 0.0, %v3930
  %3932 = vmatmul.f32.gmra.mxu0 %v3878
  %v3933 = vpop.f32.mrf.mxu0
  %v3934 = vadd.f32 0.0, %v3933
  %3935 = vmatmul.f32.gmra.mxu0 %v3881
  %v3936 = vpop.f32.mrf.mxu0
  %v3937 = vadd.f32 0.0, %v3936
  %3938 = vmatmul.f32.gmra.mxu0 %v3884
  %v3939 = vpop.f32.mrf.mxu0
  %v3940 = vadd.f32 0.0, %v3939
  %3941 = vmatmul.f32.gmra.mxu0 %v3887
  %v3942 = vpop.f32.mrf.mxu0
  %v3943 = vadd.f32 0.0, %v3942
  %3944 = vdwg.mxu0
  %v3945 = vld [vmem:[%s0] sm:$0xff]
  %v3946 = vld [vmem:[%s0 + $0x8] sm:$0xff]
  %v3947 = vld [vmem:[%s0 + $0x10] sm:$0xff]
  %v3948 = vld [vmem:[%s0 + $0x18] sm:$0xff]
  %v3949 = vld [vmem:[%s0 + $0x20] sm:$0xff]
  %v3950 = vld [vmem:[%s0 + $0x28] sm:$0xff]
  %v3951 = vld [vmem:[%s0 + $0x30] sm:$0xff]
  %v3952 = vld [vmem:[%s0 + $0x38] sm:$0xff]
  %v3953 = vld [vmem:[%s0 + $0x40] sm:$0xff]
  %v3954 = vld [vmem:[%s0 + $0x48] sm:$0xff]
  %v3955 = vld [vmem:[%s0 + $0x50] sm:$0xff]
  %v3956 = vld [vmem:[%s0 + $0x58] sm:$0x3]
  %v3957 = vmul.f32 %v3910, %v3945
  %v3958 = vmul.f32 %v3913, %v3946
  %v3959 = vmul.f32 %v3916, %v3947
  %v3960 = vmul.f32 %v3919, %v3948
  %v3961 = vmul.f32 %v3922, %v3949
  %v3962 = vmul.f32 %v3925, %v3950
  %v3963 = vmul.f32 %v3928, %v3951
  %v3964 = vmul.f32 %v3931, %v3952
  %v3965 = vmul.f32 %v3934, %v3953
  %v3966 = vmul.f32 %v3937, %v3954
  %v3967 = vmul.f32 %v3940, %v3955
  %v3968 = vmul.f32 %v3943, %v3956
  %v3970 = vsel %vm91, %v74, 0
  %v3973 = vsel %vm91, %v75, 0
  %v3976 = vsel %vm91, %v76, 0
  %v3979 = vsel %vm91, %v77, 0
  %v3982 = vsel %vm140, %v3968, 0
  %3984 = vmatpush.msra.mxu0 0.0
  %3985 = vmatpush.msra.mxu0 0.0
  %3986 = vmatpush.msra.mxu0 0.0
  %3987 = vmatpush.msra.mxu0 0.0
  %3988 = vmatpush.msra.mxu0 %v3982
  %3989 = vmatpush.msra.mxu0 %v3967
  %3990 = vmatpush.msra.mxu0 %v3966
  %3991 = vmatpush.msra.mxu0 %v3965
  %3992 = vmatpush.msra.mxu0 %v3964
  %3993 = vmatpush.msra.mxu0 %v3963
  %3994 = vmatpush.msra.mxu0 %v3962
  %3995 = vmatpush.msra.mxu0 %v3961
  %3996 = vmatpush.msra.mxu0 %v3960
  %3997 = vmatpush.msra.mxu0 %v3959
  %3998 = vmatpush.msra.mxu0 %v3958
  %3999 = vmatpush.msra.mxu0 %v3957
  %4000 = vmatmul.f32.gmra.mxu0 %v3970
  %v4001 = vpop.f32.mrf.mxu0
  %v4002 = vadd.f32 0.0, %v4001
  %4003 = vmatmul.f32.gmra.mxu0 %v3973
  %v4004 = vpop.f32.mrf.mxu0
  %v4005 = vadd.f32 0.0, %v4004
  %4006 = vmatmul.f32.gmra.mxu0 %v3976
  %v4007 = vpop.f32.mrf.mxu0
  %v4008 = vadd.f32 0.0, %v4007
  %4009 = vmatmul.f32.gmra.mxu0 %v3979
  %v4010 = vpop.f32.mrf.mxu0
  %v4011 = vadd.f32 0.0, %v4010
  %4012 = vdwg.mxu0
  %v4013 = vmax.f32 %v4002, 0.0
  %v4014 = vmax.f32 %v4005, 0.0
  %v4015 = vmax.f32 %v4008, 0.0
  %v4016 = vmax.f32 %v4011, 0.0
  %v4018 = vsel %vm927, %v78, 0
  %4020 = vmatpush.msra.mxu0 0.0
  %4021 = vmatpush.msra.mxu0 0.0
  %4022 = vmatpush.msra.mxu0 0.0
  %4023 = vmatpush.msra.mxu0 0.0
  %4024 = vmatpush.msra.mxu0 0.0
  %4025 = vmatpush.msra.mxu0 0.0
  %4026 = vmatpush.msra.mxu0 0.0
  %4027 = vmatpush.msra.mxu0 0.0
  %4028 = vmatpush.msra.mxu0 0.0
  %4029 = vmatpush.msra.mxu0 0.0
  %4030 = vmatpush.msra.mxu0 0.0
  %4031 = vmatpush.msra.mxu0 0.0
  %4032 = vmatpush.msra.mxu0 %v4016
  %4033 = vmatpush.msra.mxu0 %v4015
  %4034 = vmatpush.msra.mxu0 %v4014
  %4035 = vmatpush.msra.mxu0 %v4013
  %4036 = vmatmul.f32.gmra.mxu0 %v4018
  %v4037 = vpop.f32.mrf.mxu0
  %v4038 = vadd.f32 0.0, %v4037
  %4039 = vdwg.mxu0
  %4040 = vst [vmem:[%s7] sm:$0xf] %v4038
  %v4041 = vld [vmem:[%s1662] sm:$0xff]
  %v4042 = vld [vmem:[%s1662 + $0x8] sm:$0xff]
  %v4043 = vld [vmem:[%s1662 + $0x10] sm:$0xff]
  %v4044 = vld [vmem:[%s1662 + $0x18] sm:$0xff]
  %4045 = vmatpush.msra.mxu0 0.0
  %4046 = vmatpush.msra.mxu0 0.0
  %4047 = vmatpush.msra.mxu0 0.0
  %4048 = vmatpush.msra.mxu0 0.0
  %4049 = vmatpush.msra.mxu0 0.0
  %4050 = vmatpush.msra.mxu0 0.0
  %4051 = vmatpush.msra.mxu0 0.0
  %4052 = vmatpush.msra.mxu0 0.0
  %4053 = vmatpush.msra.mxu0 0.0
  %4054 = vmatpush.msra.mxu0 0.0
  %4055 = vmatpush.msra.mxu0 0.0
  %4056 = vmatpush.msra.mxu0 0.0
  %4057 = vmatpush.msra.mxu0 %v4044
  %4058 = vmatpush.msra.mxu0 %v4043
  %4059 = vmatpush.msra.mxu0 %v4042
  %4060 = vmatpush.msra.mxu0 %v4041
  %4061 = vmatmul.f32.gmra.mxu0 %v3796
  %v4062 = vpop.f32.mrf.mxu0
  %v4063 = vadd.f32 0.0, %v4062
  %4064 = vmatmul.f32.gmra.mxu0 %v3799
  %v4065 = vpop.f32.mrf.mxu0
  %v4066 = vadd.f32 0.0, %v4065
  %4067 = vdwg.mxu0
  %s4068 = scalar_lea.vmem %s8, 16
  %4069 = vst [vmem:[%s4068] sm:$0xff] %v4063
  %4070 = vst [vmem:[%s4068 + $0x8] sm:$0x7f] %v4066
  %v4071 = vsel %vm3826, %v4066, -inf
  %v4072 = vmax.f32 %v4063, %v4071
  %v4073 = vrot.slane %v4072, 4
  %v4074 = vmax.f32 %v4072, %v4073
  %v4075 = vrot.slane %v4074, 2
  %v4076 = vmax.f32 %v4074, %v4075
  %v4077 = vrot.slane %v4076, 1
  %v4078 = vmax.f32 %v4076, %v4077
  %v4079 = vsub.f32 %v4063, %v4078
  %v4080 = vsub.f32 %v4066, %v4078
  %v4081 = vmul.f32 %v4079, 1.442695
  %v4082 = vpow.pop %v4081
  %v4083 = vmul.f32 %v4080, 1.442695
  %v4084 = vpow.pop %v4083
  %v4085 = vsel %vm3826, %v4084, 0.0
  %v4086 = vadd.f32 %v4082, %v4085
  %v4087 = vrot.slane %v4086, 4
  %v4088 = vadd.f32 %v4086, %v4087
  %v4089 = vrot.slane %v4088, 2
  %v4090 = vadd.f32 %v4088, %v4089
  %v4091 = vrot.slane %v4090, 1
  %v4092 = vadd.f32 %v4090, %v4091
  %v4093 = vrcp.pop %v4092
  %v4094 = vmul.f32 %v4082, %v4093
  %v4095 = vmul.f32 %v4084, %v4093
  %v4097 = vsel %vm3826, %v4095, 0
  %4099 = vmatpush.msra.mxu0 0.0
  %4100 = vmatpush.msra.mxu0 0.0
  %4101 = vmatpush.msra.mxu0 0.0
  %4102 = vmatpush.msra.mxu0 0.0
  %4103 = vmatpush.msra.mxu0 0.0
  %4104 = vmatpush.msra.mxu0 0.0
  %4105 = vmatpush.msra.mxu0 0.0
  %4106 = vmatpush.msra.mxu0 0.0
  %4107 = vmatpush.msra.mxu0 0.0
  %4108 = vmatpush.msra.mxu0 0.0
  %4109 = vmatpush.msra.mxu0 0.0
  %4110 = vmatpush.msra.mxu0 0.0
  %4111 = vmatpush.msra.mxu0 0.0
  %4112 = vmatpush.msra.mxu0 0.0
  %4113 = vmatpush.msra.mxu0 %v4097
  %4114 = vmatpush.msra.mxu0 %v4094
  %4115 = vmatmul.f32.gmra.mxu0 %v3854
  %v4116 = vpop.f32.mrf.mxu0
  %v4117 = vadd.f32 0.0, %v4116
  %4118 = vmatmul.f32.gmra.mxu0 %v3857
  %v4119 = vpop.f32.mrf.mxu0
  %v4120 = vadd.f32 0.0, %v4119
  %4121 = vmatmul.f32.gmra.mxu0 %v3860
  %v4122 = vpop.f32.mrf.mxu0
  %v4123 = vadd.f32 0.0, %v4122
  %4124 = vmatmul.f32.gmra.mxu0 %v3863
  %v4125 = vpop.f32.mrf.mxu0
  %v4126 = vadd.f32 0.0, %v4125
  %4127 = vmatmul.f32.gmra.mxu0 %v3866
  %v4128 = vpop.f32.mrf.mxu0
  %v4129 = vadd.f32 0.0, %v4128
  %4130 = vmatmul.f32.gmra.mxu0 %v3869
  %v4131 = vpop.f32.mrf.mxu0
  %v4132 = vadd.f32 0.0, %v4131
  %4133 = vmatmul.f32.gmra.mxu0 %v3872
  %v4134 = vpop.f32.mrf.mxu0
  %v4135 = vadd.f32 0.0, %v4134
  %4136 = vmatmul.f32.gmra.mxu0 %v3875
  %v4137 = vpop.f32.mrf.mxu0
  %v4138 = vadd.f32 0.0, %v4137
  %4139 = vmatmul.f32.gmra.mxu0 %v3878
  %v4140 = vpop.f32.mrf.mxu0
  %v4141 = vadd.f32 0.0, %v4140
  %4142 = vmatmul.f32.gmra.mxu0 %v3881
  %v4143 = vpop.f32.mrf.mxu0
  %v4144 = vadd.f32 0.0, %v4143
  %4145 = vmatmul.f32.gmra.mxu0 %v3884
  %v4146 = vpop.f32.mrf.mxu0
  %v4147 = vadd.f32 0.0, %v4146
  %4148 = vmatmul.f32.gmra.mxu0 %v3887
  %v4149 = vpop.f32.mrf.mxu0
  %v4150 = vadd.f32 0.0, %v4149
  %4151 = vdwg.mxu0
  %v4152 = vld [vmem:[%s225] sm:$0xff]
  %v4153 = vld [vmem:[%s225 + $0x8] sm:$0xff]
  %v4154 = vld [vmem:[%s225 + $0x10] sm:$0xff]
  %v4155 = vld [vmem:[%s225 + $0x18] sm:$0xff]
  %v4156 = vld [vmem:[%s225 + $0x20] sm:$0xff]
  %v4157 = vld [vmem:[%s225 + $0x28] sm:$0xff]
  %v4158 = vld [vmem:[%s225 + $0x30] sm:$0xff]
  %v4159 = vld [vmem:[%s225 + $0x38] sm:$0xff]
  %v4160 = vld [vmem:[%s225 + $0x40] sm:$0xff]
  %v4161 = vld [vmem:[%s225 + $0x48] sm:$0xff]
  %v4162 = vld [vmem:[%s225 + $0x50] sm:$0xff]
  %v4163 = vld [vmem:[%s225 + $0x58] sm:$0x3]
  %v4164 = vmul.f32 %v4117, %v4152
  %v4165 = vmul.f32 %v4120, %v4153
  %v4166 = vmul.f32 %v4123, %v4154
  %v4167 = vmul.f32 %v4126, %v4155
  %v4168 = vmul.f32 %v4129, %v4156
  %v4169 = vmul.f32 %v4132, %v4157
  %v4170 = vmul.f32 %v4135, %v4158
  %v4171 = vmul.f32 %v4138, %v4159
  %v4172 = vmul.f32 %v4141, %v4160
  %v4173 = vmul.f32 %v4144, %v4161
  %v4174 = vmul.f32 %v4147, %v4162
  %v4175 = vmul.f32 %v4150, %v4163
  %v4177 = vsel %vm140, %v4175, 0
  %4179 = vmatpush.msra.mxu0 0.0
  %4180 = vmatpush.msra.mxu0 0.0
  %4181 = vmatpush.msra.mxu0 0.0
  %4182 = vmatpush.msra.mxu0 0.0
  %4183 = vmatpush.msra.mxu0 %v4177
  %4184 = vmatpush.msra.mxu0 %v4174
  %4185 = vmatpush.msra.mxu0 %v4173
  %4186 = vmatpush.msra.mxu0 %v4172
  %4187 = vmatpush.msra.mxu0 %v4171
  %4188 = vmatpush.msra.mxu0 %v4170
  %4189 = vmatpush.msra.mxu0 %v4169
  %4190 = vmatpush.msra.mxu0 %v4168
  %4191 = vmatpush.msra.mxu0 %v4167
  %4192 = vmatpush.msra.mxu0 %v4166
  %4193 = vmatpush.msra.mxu0 %v4165
  %4194 = vmatpush.msra.mxu0 %v4164
  %4195 = vmatmul.f32.gmra.mxu0 %v3970
  %v4196 = vpop.f32.mrf.mxu0
  %v4197 = vadd.f32 0.0, %v4196
  %4198 = vmatmul.f32.gmra.mxu0 %v3973
  %v4199 = vpop.f32.mrf.mxu0
  %v4200 = vadd.f32 0.0, %v4199
  %4201 = vmatmul.f32.gmra.mxu0 %v3976
  %v4202 = vpop.f32.mrf.mxu0
  %v4203 = vadd.f32 0.0, %v4202
  %4204 = vmatmul.f32.gmra.mxu0 %v3979
  %v4205 = vpop.f32.mrf.mxu0
  %v4206 = vadd.f32 0.0, %v4205
  %4207 = vdwg.mxu0
  %v4208 = vmax.f32 %v4197, 0.0
  %v4209 = vmax.f32 %v4200, 0.0
  %v4210 = vmax.f32 %v4203, 0.0
  %v4211 = vmax.f32 %v4206, 0.0
  %4212 = vmatpush.msra.mxu0 0.0
  %4213 = vmatpush.msra.mxu0 0.0
  %4214 = vmatpush.msra.mxu0 0.0
  %4215 = vmatpush.msra.mxu0 0.0
  %4216 = vmatpush.msra.mxu0 0.0
  %4217 = vmatpush.msra.mxu0 0.0
  %4218 = vmatpush.msra.mxu0 0.0
  %4219 = vmatpush.msra.mxu0 0.0
  %4220 = vmatpush.msra.mxu0 0.0
  %4221 = vmatpush.msra.mxu0 0.0
  %4222 = vmatpush.msra.mxu0 0.0
  %4223 = vmatpush.msra.mxu0 0.0
  %4224 = vmatpush.msra.mxu0 %v4211
  %4225 = vmatpush.msra.mxu0 %v4210
  %4226 = vmatpush.msra.mxu0 %v4209
  %4227 = vmatpush.msra.mxu0 %v4208
  %4228 = vmatmul.f32.gmra.mxu0 %v4018
  %v4229 = vpop.f32.mrf.mxu0
  %v4230 = vadd.f32 0.0, %v4229
  %4231 = vdwg.mxu0
  %s4232 = scalar_lea.vmem %s7, 4
  %4233 = vst [vmem:[%s4232] sm:$0xf] %v4230
  %v4234 = vld [vmem:[%s2016] sm:$0xff]
  %v4235 = vld [vmem:[%s2016 + $0x8] sm:$0xff]
  %v4236 = vld [vmem:[%s2016 + $0x10] sm:$0xff]
  %v4237 = vld [vmem:[%s2016 + $0x18] sm:$0xff]
  %4238 = vmatpush.msra.mxu0 0.0
  %4239 = vmatpush.msra.mxu0 0.0
  %4240 = vmatpush.msra.mxu0 0.0
  %4241 = vmatpush.msra.mxu0 0.0
  %4242 = vmatpush.msra.mxu0 0.0
  %4243 = vmatpush.msra.mxu0 0.0
  %4244 = vmatpush.msra.mxu0 0.0
  %4245 = vmatpush.msra.mxu0 0.0
  %4246 = vmatpush.msra.mxu0 0.0
  %4247 = vmatpush.msra.mxu0 0.0
  %4248 = vmatpush.msra.mxu0 0.0
  %4249 = vmatpush.msra.mxu0 0.0
  %4250 = vmatpush.msra.mxu0 %v4237
  %4251 = vmatpush.msra.mxu0 %v4236
  %4252 = vmatpush.msra.mxu0 %v4235
  %4253 = vmatpush.msra.mxu0 %v4234
  %4254 = vmatmul.f32.gmra.mxu0 %v3796
  %v4255 = vpop.f32.mrf.mxu0
  %v4256 = vadd.f32 0.0, %v4255
  %4257 = vmatmul.f32.gmra.mxu0 %v3799
  %v4258 = vpop.f32.mrf.mxu0
  %v4259 = vadd.f32 0.0, %v4258
  %4260 = vdwg.mxu0
  %s4261 = scalar_lea.vmem %s8, 32
  %4262 = vst [vmem:[%s4261] sm:$0xff] %v4256
  %4263 = vst [vmem:[%s4261 + $0x8] sm:$0x7f] %v4259
  %v4264 = vsel %vm3826, %v4259, -inf
  %v4265 = vmax.f32 %v4256, %v4264
  %v4266 = vrot.slane %v4265, 4
  %v4267 = vmax.f32 %v4265, %v4266
  %v4268 = vrot.slane %v4267, 2
  %v4269 = vmax.f32 %v4267, %v4268
  %v4270 = vrot.slane %v4269, 1
  %v4271 = vmax.f32 %v4269, %v4270
  %v4272 = vsub.f32 %v4256, %v4271
  %v4273 = vsub.f32 %v4259, %v4271
  %v4274 = vmul.f32 %v4272, 1.442695
  %v4275 = vpow.pop %v4274
  %v4276 = vmul.f32 %v4273, 1.442695
  %v4277 = vpow.pop %v4276
  %v4278 = vsel %vm3826, %v4277, 0.0
  %v4279 = vadd.f32 %v4275, %v4278
  %v4280 = vrot.slane %v4279, 4
  %v4281 = vadd.f32 %v4279, %v4280
  %v4282 = vrot.slane %v4281, 2
  %v4283 = vadd.f32 %v4281, %v4282
  %v4284 = vrot.slane %v4283, 1
  %v4285 = vadd.f32 %v4283, %v4284
  %v4286 = vrcp.pop %v4285
  %v4287 = vmul.f32 %v4275, %v4286
  %v4288 = vmul.f32 %v4277, %v4286
  %v4290 = vsel %vm3826, %v4288, 0
  %4292 = vmatpush.msra.mxu0 0.0
  %4293 = vmatpush.msra.mxu0 0.0
  %4294 = vmatpush.msra.mxu0 0.0
  %4295 = vmatpush.msra.mxu0 0.0
  %4296 = vmatpush.msra.mxu0 0.0
  %4297 = vmatpush.msra.mxu0 0.0
  %4298 = vmatpush.msra.mxu0 0.0
  %4299 = vmatpush.msra.mxu0 0.0
  %4300 = vmatpush.msra.mxu0 0.0
  %4301 = vmatpush.msra.mxu0 0.0
  %4302 = vmatpush.msra.mxu0 0.0
  %4303 = vmatpush.msra.mxu0 0.0
  %4304 = vmatpush.msra.mxu0 0.0
  %4305 = vmatpush.msra.mxu0 0.0
  %4306 = vmatpush.msra.mxu0 %v4290
  %4307 = vmatpush.msra.mxu0 %v4287
  %4308 = vmatmul.f32.gmra.mxu0 %v3854
  %v4309 = vpop.f32.mrf.mxu0
  %v4310 = vadd.f32 0.0, %v4309
  %4311 = vmatmul.f32.gmra.mxu0 %v3857
  %v4312 = vpop.f32.mrf.mxu0
  %v4313 = vadd.f32 0.0, %v4312
  %4314 = vmatmul.f32.gmra.mxu0 %v3860
  %v4315 = vpop.f32.mrf.mxu0
  %v4316 = vadd.f32 0.0, %v4315
  %4317 = vmatmul.f32.gmra.mxu0 %v3863
  %v4318 = vpop.f32.mrf.mxu0
  %v4319 = vadd.f32 0.0, %v4318
  %4320 = vmatmul.f32.gmra.mxu0 %v3866
  %v4321 = vpop.f32.mrf.mxu0
  %v4322 = vadd.f32 0.0, %v4321
  %4323 = vmatmul.f32.gmra.mxu0 %v3869
  %v4324 = vpop.f32.mrf.mxu0
  %v4325 = vadd.f32 0.0, %v4324
  %4326 = vmatmul.f32.gmra.mxu0 %v3872
  %v4327 = vpop.f32.mrf.mxu0
  %v4328 = vadd.f32 0.0, %v4327
  %4329 = vmatmul.f32.gmra.mxu0 %v3875
  %v4330 = vpop.f32.mrf.mxu0
  %v4331 = vadd.f32 0.0, %v4330
  %4332 = vmatmul.f32.gmra.mxu0 %v3878
  %v4333 = vpop.f32.mrf.mxu0
  %v4334 = vadd.f32 0.0, %v4333
  %4335 = vmatmul.f32.gmra.mxu0 %v3881
  %v4336 = vpop.f32.mrf.mxu0
  %v4337 = vadd.f32 0.0, %v4336
  %4338 = vmatmul.f32.gmra.mxu0 %v3884
  %v4339 = vpop.f32.mrf.mxu0
  %v4340 = vadd.f32 0.0, %v4339
  %4341 = vmatmul.f32.gmra.mxu0 %v3887
  %v4342 = vpop.f32.mrf.mxu0
  %v4343 = vadd.f32 0.0, %v4342
  %4344 = vdwg.mxu0
  %v4345 = vld [vmem:[%s323] sm:$0xff]
  %v4346 = vld [vmem:[%s323 + $0x8] sm:$0xff]
  %v4347 = vld [vmem:[%s323 + $0x10] sm:$0xff]
  %v4348 = vld [vmem:[%s323 + $0x18] sm:$0xff]
  %v4349 = vld [vmem:[%s323 + $0x20] sm:$0xff]
  %v4350 = vld [vmem:[%s323 + $0x28] sm:$0xff]
  %v4351 = vld [vmem:[%s323 + $0x30] sm:$0xff]
  %v4352 = vld [vmem:[%s323 + $0x38] sm:$0xff]
  %v4353 = vld [vmem:[%s323 + $0x40] sm:$0xff]
  %v4354 = vld [vmem:[%s323 + $0x48] sm:$0xff]
  %v4355 = vld [vmem:[%s323 + $0x50] sm:$0xff]
  %v4356 = vld [vmem:[%s323 + $0x58] sm:$0x3]
  %v4357 = vmul.f32 %v4310, %v4345
  %v4358 = vmul.f32 %v4313, %v4346
  %v4359 = vmul.f32 %v4316, %v4347
  %v4360 = vmul.f32 %v4319, %v4348
  %v4361 = vmul.f32 %v4322, %v4349
  %v4362 = vmul.f32 %v4325, %v4350
  %v4363 = vmul.f32 %v4328, %v4351
  %v4364 = vmul.f32 %v4331, %v4352
  %v4365 = vmul.f32 %v4334, %v4353
  %v4366 = vmul.f32 %v4337, %v4354
  %v4367 = vmul.f32 %v4340, %v4355
  %v4368 = vmul.f32 %v4343, %v4356
  %v4370 = vsel %vm140, %v4368, 0
  %4372 = vmatpush.msra.mxu0 0.0
  %4373 = vmatpush.msra.mxu0 0.0
  %4374 = vmatpush.msra.mxu0 0.0
  %4375 = vmatpush.msra.mxu0 0.0
  %4376 = vmatpush.msra.mxu0 %v4370
  %4377 = vmatpush.msra.mxu0 %v4367
  %4378 = vmatpush.msra.mxu0 %v4366
  %4379 = vmatpush.msra.mxu0 %v4365
  %4380 = vmatpush.msra.mxu0 %v4364
  %4381 = vmatpush.msra.mxu0 %v4363
  %4382 = vmatpush.msra.mxu0 %v4362
  %4383 = vmatpush.msra.mxu0 %v4361
  %4384 = vmatpush.msra.mxu0 %v4360
  %4385 = vmatpush.msra.mxu0 %v4359
  %4386 = vmatpush.msra.mxu0 %v4358
  %4387 = vmatpush.msra.mxu0 %v4357
  %4388 = vmatmul.f32.gmra.mxu0 %v3970
  %v4389 = vpop.f32.mrf.mxu0
  %v4390 = vadd.f32 0.0, %v4389
  %4391 = vmatmul.f32.gmra.mxu0 %v3973
  %v4392 = vpop.f32.mrf.mxu0
  %v4393 = vadd.f32 0.0, %v4392
  %4394 = vmatmul.f32.gmra.mxu0 %v3976
  %v4395 = vpop.f32.mrf.mxu0
  %v4396 = vadd.f32 0.0, %v4395
  %4397 = vmatmul.f32.gmra.mxu0 %v3979
  %v4398 = vpop.f32.mrf.mxu0
  %v4399 = vadd.f32 0.0, %v4398
  %4400 = vdwg.mxu0
  %v4401 = vmax.f32 %v4390, 0.0
  %v4402 = vmax.f32 %v4393, 0.0
  %v4403 = vmax.f32 %v4396, 0.0
  %v4404 = vmax.f32 %v4399, 0.0
  %4405 = vmatpush.msra.mxu0 0.0
  %4406 = vmatpush.msra.mxu0 0.0
  %4407 = vmatpush.msra.mxu0 0.0
  %4408 = vmatpush.msra.mxu0 0.0
  %4409 = vmatpush.msra.mxu0 0.0
  %4410 = vmatpush.msra.mxu0 0.0
  %4411 = vmatpush.msra.mxu0 0.0
  %4412 = vmatpush.msra.mxu0 0.0
  %4413 = vmatpush.msra.mxu0 0.0
  %4414 = vmatpush.msra.mxu0 0.0
  %4415 = vmatpush.msra.mxu0 0.0
  %4416 = vmatpush.msra.mxu0 0.0
  %4417 = vmatpush.msra.mxu0 %v4404
  %4418 = vmatpush.msra.mxu0 %v4403
  %4419 = vmatpush.msra.mxu0 %v4402
  %4420 = vmatpush.msra.mxu0 %v4401
  %4421 = vmatmul.f32.gmra.mxu0 %v4018
  %v4422 = vpop.f32.mrf.mxu0
  %v4423 = vadd.f32 0.0, %v4422
  %4424 = vdwg.mxu0
  %s4425 = scalar_lea.vmem %s7, 8
  %4426 = vst [vmem:[%s4425] sm:$0xf] %v4423
  %v4427 = vld [vmem:[%s2370] sm:$0xff]
  %v4428 = vld [vmem:[%s2370 + $0x8] sm:$0xff]
  %v4429 = vld [vmem:[%s2370 + $0x10] sm:$0xff]
  %v4430 = vld [vmem:[%s2370 + $0x18] sm:$0xff]
  %4431 = vmatpush.msra.mxu0 0.0
  %4432 = vmatpush.msra.mxu0 0.0
  %4433 = vmatpush.msra.mxu0 0.0
  %4434 = vmatpush.msra.mxu0 0.0
  %4435 = vmatpush.msra.mxu0 0.0
  %4436 = vmatpush.msra.mxu0 0.0
  %4437 = vmatpush.msra.mxu0 0.0
  %4438 = vmatpush.msra.mxu0 0.0
  %4439 = vmatpush.msra.mxu0 0.0
  %4440 = vmatpush.msra.mxu0 0.0
  %4441 = vmatpush.msra.mxu0 0.0
  %4442 = vmatpush.msra.mxu0 0.0
  %4443 = vmatpush.msra.mxu0 %v4430
  %4444 = vmatpush.msra.mxu0 %v4429
  %4445 = vmatpush.msra.mxu0 %v4428
  %4446 = vmatpush.msra.mxu0 %v4427
  %4447 = vmatmul.f32.gmra.mxu0 %v3796
  %v4448 = vpop.f32.mrf.mxu0
  %v4449 = vadd.f32 0.0, %v4448
  %4450 = vmatmul.f32.gmra.mxu0 %v3799
  %v4451 = vpop.f32.mrf.mxu0
  %v4452 = vadd.f32 0.0, %v4451
  %4453 = vdwg.mxu0
  %s4454 = scalar_lea.vmem %s8, 48
  %4455 = vst [vmem:[%s4454] sm:$0xff] %v4449
  %4456 = vst [vmem:[%s4454 + $0x8] sm:$0x7f] %v4452
  %v4457 = vsel %vm3826, %v4452, -inf
  %v4458 = vmax.f32 %v4449, %v4457
  %v4459 = vrot.slane %v4458, 4
  %v4460 = vmax.f32 %v4458, %v4459
  %v4461 = vrot.slane %v4460, 2
  %v4462 = vmax.f32 %v4460, %v4461
  %v4463 = vrot.slane %v4462, 1
  %v4464 = vmax.f32 %v4462, %v4463
  %v4465 = vsub.f32 %v4449, %v4464
  %v4466 = vsub.f32 %v4452, %v4464
  %v4467 = vmul.f32 %v4465, 1.442695
  %v4468 = vpow.pop %v4467
  %v4469 = vmul.f32 %v4466, 1.442695
  %v4470 = vpow.pop %v4469
  %v4471 = vsel %vm3826, %v4470, 0.0
  %v4472 = vadd.f32 %v4468, %v4471
  %v4473 = vrot.slane %v4472, 4
  %v4474 = vadd.f32 %v4472, %v4473
  %v4475 = vrot.slane %v4474, 2
  %v4476 = vadd.f32 %v4474, %v4475
  %v4477 = vrot.slane %v4476, 1
  %v4478 = vadd.f32 %v4476, %v4477
  %v4479 = vrcp.pop %v4478
  %v4480 = vmul.f32 %v4468, %v4479
  %v4481 = vmul.f32 %v4470, %v4479
  %v4483 = vsel %vm3826, %v4481, 0
  %4485 = vmatpush.msra.mxu0 0.0
  %4486 = vmatpush.msra.mxu0 0.0
  %4487 = vmatpush.msra.mxu0 0.0
  %4488 = vmatpush.msra.mxu0 0.0
  %4489 = vmatpush.msra.mxu0 0.0
  %4490 = vmatpush.msra.mxu0 0.0
  %4491 = vmatpush.msra.mxu0 0.0
  %4492 = vmatpush.msra.mxu0 0.0
  %4493 = vmatpush.msra.mxu0 0.0
  %4494 = vmatpush.msra.mxu0 0.0
  %4495 = vmatpush.msra.mxu0 0.0
  %4496 = vmatpush.msra.mxu0 0.0
  %4497 = vmatpush.msra.mxu0 0.0
  %4498 = vmatpush.msra.mxu0 0.0
  %4499 = vmatpush.msra.mxu0 %v4483
  %4500 = vmatpush.msra.mxu0 %v4480
  %4501 = vmatmul.f32.gmra.mxu0 %v3854
  %v4502 = vpop.f32.mrf.mxu0
  %v4503 = vadd.f32 0.0, %v4502
  %4504 = vmatmul.f32.gmra.mxu0 %v3857
  %v4505 = vpop.f32.mrf.mxu0
  %v4506 = vadd.f32 0.0, %v4505
  %4507 = vmatmul.f32.gmra.mxu0 %v3860
  %v4508 = vpop.f32.mrf.mxu0
  %v4509 = vadd.f32 0.0, %v4508
  %4510 = vmatmul.f32.gmra.mxu0 %v3863
  %v4511 = vpop.f32.mrf.mxu0
  %v4512 = vadd.f32 0.0, %v4511
  %4513 = vmatmul.f32.gmra.mxu0 %v3866
  %v4514 = vpop.f32.mrf.mxu0
  %v4515 = vadd.f32 0.0, %v4514
  %4516 = vmatmul.f32.gmra.mxu0 %v3869
  %v4517 = vpop.f32.mrf.mxu0
  %v4518 = vadd.f32 0.0, %v4517
  %4519 = vmatmul.f32.gmra.mxu0 %v3872
  %v4520 = vpop.f32.mrf.mxu0
  %v4521 = vadd.f32 0.0, %v4520
  %4522 = vmatmul.f32.gmra.mxu0 %v3875
  %v4523 = vpop.f32.mrf.mxu0
  %v4524 = vadd.f32 0.0, %v4523
  %4525 = vmatmul.f32.gmra.mxu0 %v3878
  %v4526 = vpop.f32.mrf.mxu0
  %v4527 = vadd.f32 0.0, %v4526
  %4528 = vmatmul.f32.gmra.mxu0 %v3881
  %v4529 = vpop.f32.mrf.mxu0
  %v4530 = vadd.f32 0.0, %v4529
  %4531 = vmatmul.f32.gmra.mxu0 %v3884
  %v4532 = vpop.f32.mrf.mxu0
  %v4533 = vadd.f32 0.0, %v4532
  %4534 = vmatmul.f32.gmra.mxu0 %v3887
  %v4535 = vpop.f32.mrf.mxu0
  %v4536 = vadd.f32 0.0, %v4535
  %4537 = vdwg.mxu0
  %v4538 = vld [vmem:[%s421] sm:$0xff]
  %v4539 = vld [vmem:[%s421 + $0x8] sm:$0xff]
  %v4540 = vld [vmem:[%s421 + $0x10] sm:$0xff]
  %v4541 = vld [vmem:[%s421 + $0x18] sm:$0xff]
  %v4542 = vld [vmem:[%s421 + $0x20] sm:$0xff]
  %v4543 = vld [vmem:[%s421 + $0x28] sm:$0xff]
  %v4544 = vld [vmem:[%s421 + $0x30] sm:$0xff]
  %v4545 = vld [vmem:[%s421 + $0x38] sm:$0xff]
  %v4546 = vld [vmem:[%s421 + $0x40] sm:$0xff]
  %v4547 = vld [vmem:[%s421 + $0x48] sm:$0xff]
  %v4548 = vld [vmem:[%s421 + $0x50] sm:$0xff]
  %v4549 = vld [vmem:[%s421 + $0x58] sm:$0x3]
  %v4550 = vmul.f32 %v4503, %v4538
  %v4551 = vmul.f32 %v4506, %v4539
  %v4552 = vmul.f32 %v4509, %v4540
  %v4553 = vmul.f32 %v4512, %v4541
  %v4554 = vmul.f32 %v4515, %v4542
  %v4555 = vmul.f32 %v4518, %v4543
  %v4556 = vmul.f32 %v4521, %v4544
  %v4557 = vmul.f32 %v4524, %v4545
  %v4558 = vmul.f32 %v4527, %v4546
  %v4559 = vmul.f32 %v4530, %v4547
  %v4560 = vmul.f32 %v4533, %v4548
  %v4561 = vmul.f32 %v4536, %v4549
  %v4563 = vsel %vm140, %v4561, 0
  %4565 = vmatpush.msra.mxu0 0.0
  %4566 = vmatpush.msra.mxu0 0.0
  %4567 = vmatpush.msra.mxu0 0.0
  %4568 = vmatpush.msra.mxu0 0.0
  %4569 = vmatpush.msra.mxu0 %v4563
  %4570 = vmatpush.msra.mxu0 %v4560
  %4571 = vmatpush.msra.mxu0 %v4559
  %4572 = vmatpush.msra.mxu0 %v4558
  %4573 = vmatpush.msra.mxu0 %v4557
  %4574 = vmatpush.msra.mxu0 %v4556
  %4575 = vmatpush.msra.mxu0 %v4555
  %4576 = vmatpush.msra.mxu0 %v4554
  %4577 = vmatpush.msra.mxu0 %v4553
  %4578 = vmatpush.msra.mxu0 %v4552
  %4579 = vmatpush.msra.mxu0 %v4551
  %4580 = vmatpush.msra.mxu0 %v4550
  %4581 = vmatmul.f32.gmra.mxu0 %v3970
  %v4582 = vpop.f32.mrf.mxu0
  %v4583 = vadd.f32 0.0, %v4582
  %4584 = vmatmul.f32.gmra.mxu0 %v3973
  %v4585 = vpop.f32.mrf.mxu0
  %v4586 = vadd.f32 0.0, %v4585
  %4587 = vmatmul.f32.gmra.mxu0 %v3976
  %v4588 = vpop.f32.mrf.mxu0
  %v4589 = vadd.f32 0.0, %v4588
  %4590 = vmatmul.f32.gmra.mxu0 %v3979
  %v4591 = vpop.f32.mrf.mxu0
  %v4592 = vadd.f32 0.0, %v4591
  %4593 = vdwg.mxu0
  %v4594 = vmax.f32 %v4583, 0.0
  %v4595 = vmax.f32 %v4586, 0.0
  %v4596 = vmax.f32 %v4589, 0.0
  %v4597 = vmax.f32 %v4592, 0.0
  %4598 = vmatpush.msra.mxu0 0.0
  %4599 = vmatpush.msra.mxu0 0.0
  %4600 = vmatpush.msra.mxu0 0.0
  %4601 = vmatpush.msra.mxu0 0.0
  %4602 = vmatpush.msra.mxu0 0.0
  %4603 = vmatpush.msra.mxu0 0.0
  %4604 = vmatpush.msra.mxu0 0.0
  %4605 = vmatpush.msra.mxu0 0.0
  %4606 = vmatpush.msra.mxu0 0.0
  %4607 = vmatpush.msra.mxu0 0.0
  %4608 = vmatpush.msra.mxu0 0.0
  %4609 = vmatpush.msra.mxu0 0.0
  %4610 = vmatpush.msra.mxu0 %v4597
  %4611 = vmatpush.msra.mxu0 %v4596
  %4612 = vmatpush.msra.mxu0 %v4595
  %4613 = vmatpush.msra.mxu0 %v4594
  %4614 = vmatmul.f32.gmra.mxu0 %v4018
  %v4615 = vpop.f32.mrf.mxu0
  %v4616 = vadd.f32 0.0, %v4615
  %4617 = vdwg.mxu0
  %s4618 = scalar_lea.vmem %s7, 12
  %4619 = vst [vmem:[%s4618] sm:$0xf] %v4616
  %v4620 = vld [vmem:[%s2724] sm:$0xff]
  %v4621 = vld [vmem:[%s2724 + $0x8] sm:$0xff]
  %v4622 = vld [vmem:[%s2724 + $0x10] sm:$0xff]
  %v4623 = vld [vmem:[%s2724 + $0x18] sm:$0xff]
  %4624 = vmatpush.msra.mxu0 0.0
  %4625 = vmatpush.msra.mxu0 0.0
  %4626 = vmatpush.msra.mxu0 0.0
  %4627 = vmatpush.msra.mxu0 0.0
  %4628 = vmatpush.msra.mxu0 0.0
  %4629 = vmatpush.msra.mxu0 0.0
  %4630 = vmatpush.msra.mxu0 0.0
  %4631 = vmatpush.msra.mxu0 0.0
  %4632 = vmatpush.msra.mxu0 0.0
  %4633 = vmatpush.msra.mxu0 0.0
  %4634 = vmatpush.msra.mxu0 0.0
  %4635 = vmatpush.msra.mxu0 0.0
  %4636 = vmatpush.msra.mxu0 %v4623
  %4637 = vmatpush.msra.mxu0 %v4622
  %4638 = vmatpush.msra.mxu0 %v4621
  %4639 = vmatpush.msra.mxu0 %v4620
  %4640 = vmatmul.f32.gmra.mxu0 %v3796
  %v4641 = vpop.f32.mrf.mxu0
  %v4642 = vadd.f32 0.0, %v4641
  %4643 = vmatmul.f32.gmra.mxu0 %v3799
  %v4644 = vpop.f32.mrf.mxu0
  %v4645 = vadd.f32 0.0, %v4644
  %4646 = vdwg.mxu0
  %s4647 = scalar_lea.vmem %s8, 64
  %4648 = vst [vmem:[%s4647] sm:$0xff] %v4642
  %4649 = vst [vmem:[%s4647 + $0x8] sm:$0x7f] %v4645
  %v4650 = vsel %vm3826, %v4645, -inf
  %v4651 = vmax.f32 %v4642, %v4650
  %v4652 = vrot.slane %v4651, 4
  %v4653 = vmax.f32 %v4651, %v4652
  %v4654 = vrot.slane %v4653, 2
  %v4655 = vmax.f32 %v4653, %v4654
  %v4656 = vrot.slane %v4655, 1
  %v4657 = vmax.f32 %v4655, %v4656
  %v4658 = vsub.f32 %v4642, %v4657
  %v4659 = vsub.f32 %v4645, %v4657
  %v4660 = vmul.f32 %v4658, 1.442695
  %v4661 = vpow.pop %v4660
  %v4662 = vmul.f32 %v4659, 1.442695
  %v4663 = vpow.pop %v4662
  %v4664 = vsel %vm3826, %v4663, 0.0
  %v4665 = vadd.f32 %v4661, %v4664
  %v4666 = vrot.slane %v4665, 4
  %v4667 = vadd.f32 %v4665, %v4666
  %v4668 = vrot.slane %v4667, 2
  %v4669 = vadd.f32 %v4667, %v4668
  %v4670 = vrot.slane %v4669, 1
  %v4671 = vadd.f32 %v4669, %v4670
  %v4672 = vrcp.pop %v4671
  %v4673 = vmul.f32 %v4661, %v4672
  %v4674 = vmul.f32 %v4663, %v4672
  %v4676 = vsel %vm3826, %v4674, 0
  %4678 = vmatpush.msra.mxu0 0.0
  %4679 = vmatpush.msra.mxu0 0.0
  %4680 = vmatpush.msra.mxu0 0.0
  %4681 = vmatpush.msra.mxu0 0.0
  %4682 = vmatpush.msra.mxu0 0.0
  %4683 = vmatpush.msra.mxu0 0.0
  %4684 = vmatpush.msra.mxu0 0.0
  %4685 = vmatpush.msra.mxu0 0.0
  %4686 = vmatpush.msra.mxu0 0.0
  %4687 = vmatpush.msra.mxu0 0.0
  %4688 = vmatpush.msra.mxu0 0.0
  %4689 = vmatpush.msra.mxu0 0.0
  %4690 = vmatpush.msra.mxu0 0.0
  %4691 = vmatpush.msra.mxu0 0.0
  %4692 = vmatpush.msra.mxu0 %v4676
  %4693 = vmatpush.msra.mxu0 %v4673
  %4694 = vmatmul.f32.gmra.mxu0 %v3854
  %v4695 = vpop.f32.mrf.mxu0
  %v4696 = vadd.f32 0.0, %v4695
  %4697 = vmatmul.f32.gmra.mxu0 %v3857
  %v4698 = vpop.f32.mrf.mxu0
  %v4699 = vadd.f32 0.0, %v4698
  %4700 = vmatmul.f32.gmra.mxu0 %v3860
  %v4701 = vpop.f32.mrf.mxu0
  %v4702 = vadd.f32 0.0, %v4701
  %4703 = vmatmul.f32.gmra.mxu0 %v3863
  %v4704 = vpop.f32.mrf.mxu0
  %v4705 = vadd.f32 0.0, %v4704
  %4706 = vmatmul.f32.gmra.mxu0 %v3866
  %v4707 = vpop.f32.mrf.mxu0
  %v4708 = vadd.f32 0.0, %v4707
  %4709 = vmatmul.f32.gmra.mxu0 %v3869
  %v4710 = vpop.f32.mrf.mxu0
  %v4711 = vadd.f32 0.0, %v4710
  %4712 = vmatmul.f32.gmra.mxu0 %v3872
  %v4713 = vpop.f32.mrf.mxu0
  %v4714 = vadd.f32 0.0, %v4713
  %4715 = vmatmul.f32.gmra.mxu0 %v3875
  %v4716 = vpop.f32.mrf.mxu0
  %v4717 = vadd.f32 0.0, %v4716
  %4718 = vmatmul.f32.gmra.mxu0 %v3878
  %v4719 = vpop.f32.mrf.mxu0
  %v4720 = vadd.f32 0.0, %v4719
  %4721 = vmatmul.f32.gmra.mxu0 %v3881
  %v4722 = vpop.f32.mrf.mxu0
  %v4723 = vadd.f32 0.0, %v4722
  %4724 = vmatmul.f32.gmra.mxu0 %v3884
  %v4725 = vpop.f32.mrf.mxu0
  %v4726 = vadd.f32 0.0, %v4725
  %4727 = vmatmul.f32.gmra.mxu0 %v3887
  %v4728 = vpop.f32.mrf.mxu0
  %v4729 = vadd.f32 0.0, %v4728
  %4730 = vdwg.mxu0
  %v4731 = vld [vmem:[%s519] sm:$0xff]
  %v4732 = vld [vmem:[%s519 + $0x8] sm:$0xff]
  %v4733 = vld [vmem:[%s519 + $0x10] sm:$0xff]
  %v4734 = vld [vmem:[%s519 + $0x18] sm:$0xff]
  %v4735 = vld [vmem:[%s519 + $0x20] sm:$0xff]
  %v4736 = vld [vmem:[%s519 + $0x28] sm:$0xff]
  %v4737 = vld [vmem:[%s519 + $0x30] sm:$0xff]
  %v4738 = vld [vmem:[%s519 + $0x38] sm:$0xff]
  %v4739 = vld [vmem:[%s519 + $0x40] sm:$0xff]
  %v4740 = vld [vmem:[%s519 + $0x48] sm:$0xff]
  %v4741 = vld [vmem:[%s519 + $0x50] sm:$0xff]
  %v4742 = vld [vmem:[%s519 + $0x58] sm:$0x3]
  %v4743 = vmul.f32 %v4696, %v4731
  %v4744 = vmul.f32 %v4699, %v4732
  %v4745 = vmul.f32 %v4702, %v4733
  %v4746 = vmul.f32 %v4705, %v4734
  %v4747 = vmul.f32 %v4708, %v4735
  %v4748 = vmul.f32 %v4711, %v4736
  %v4749 = vmul.f32 %v4714, %v4737
  %v4750 = vmul.f32 %v4717, %v4738
  %v4751 = vmul.f32 %v4720, %v4739
  %v4752 = vmul.f32 %v4723, %v4740
  %v4753 = vmul.f32 %v4726, %v4741
  %v4754 = vmul.f32 %v4729, %v4742
  %v4756 = vsel %vm140, %v4754, 0
  %4758 = vmatpush.msra.mxu0 0.0
  %4759 = vmatpush.msra.mxu0 0.0
  %4760 = vmatpush.msra.mxu0 0.0
  %4761 = vmatpush.msra.mxu0 0.0
  %4762 = vmatpush.msra.mxu0 %v4756
  %4763 = vmatpush.msra.mxu0 %v4753
  %4764 = vmatpush.msra.mxu0 %v4752
  %4765 = vmatpush.msra.mxu0 %v4751
  %4766 = vmatpush.msra.mxu0 %v4750
  %4767 = vmatpush.msra.mxu0 %v4749
  %4768 = vmatpush.msra.mxu0 %v4748
  %4769 = vmatpush.msra.mxu0 %v4747
  %4770 = vmatpush.msra.mxu0 %v4746
  %4771 = vmatpush.msra.mxu0 %v4745
  %4772 = vmatpush.msra.mxu0 %v4744
  %4773 = vmatpush.msra.mxu0 %v4743
  %4774 = vmatmul.f32.gmra.mxu0 %v3970
  %v4775 = vpop.f32.mrf.mxu0
  %v4776 = vadd.f32 0.0, %v4775
  %4777 = vmatmul.f32.gmra.mxu0 %v3973
  %v4778 = vpop.f32.mrf.mxu0
  %v4779 = vadd.f32 0.0, %v4778
  %4780 = vmatmul.f32.gmra.mxu0 %v3976
  %v4781 = vpop.f32.mrf.mxu0
  %v4782 = vadd.f32 0.0, %v4781
  %4783 = vmatmul.f32.gmra.mxu0 %v3979
  %v4784 = vpop.f32.mrf.mxu0
  %v4785 = vadd.f32 0.0, %v4784
  %4786 = vdwg.mxu0
  %v4787 = vmax.f32 %v4776, 0.0
  %v4788 = vmax.f32 %v4779, 0.0
  %v4789 = vmax.f32 %v4782, 0.0
  %v4790 = vmax.f32 %v4785, 0.0
  %4791 = vmatpush.msra.mxu0 0.0
  %4792 = vmatpush.msra.mxu0 0.0
  %4793 = vmatpush.msra.mxu0 0.0
  %4794 = vmatpush.msra.mxu0 0.0
  %4795 = vmatpush.msra.mxu0 0.0
  %4796 = vmatpush.msra.mxu0 0.0
  %4797 = vmatpush.msra.mxu0 0.0
  %4798 = vmatpush.msra.mxu0 0.0
  %4799 = vmatpush.msra.mxu0 0.0
  %4800 = vmatpush.msra.mxu0 0.0
  %4801 = vmatpush.msra.mxu0 0.0
  %4802 = vmatpush.msra.mxu0 0.0
  %4803 = vmatpush.msra.mxu0 %v4790
  %4804 = vmatpush.msra.mxu0 %v4789
  %4805 = vmatpush.msra.mxu0 %v4788
  %4806 = vmatpush.msra.mxu0 %v4787
  %4807 = vmatmul.f32.gmra.mxu0 %v4018
  %v4808 = vpop.f32.mrf.mxu0
  %v4809 = vadd.f32 0.0, %v4808
  %4810 = vdwg.mxu0
  %s4811 = scalar_lea.vmem %s7, 16
  %4812 = vst [vmem:[%s4811] sm:$0xf] %v4809
  %v4813 = vld [vmem:[%s3078] sm:$0xff]
  %v4814 = vld [vmem:[%s3078 + $0x8] sm:$0xff]
  %v4815 = vld [vmem:[%s3078 + $0x10] sm:$0xff]
  %v4816 = vld [vmem:[%s3078 + $0x18] sm:$0xff]
  %4817 = vmatpush.msra.mxu0 0.0
  %4818 = vmatpush.msra.mxu0 0.0
  %4819 = vmatpush.msra.mxu0 0.0
  %4820 = vmatpush.msra.mxu0 0.0
  %4821 = vmatpush.msra.mxu0 0.0
  %4822 = vmatpush.msra.mxu0 0.0
  %4823 = vmatpush.msra.mxu0 0.0
  %4824 = vmatpush.msra.mxu0 0.0
  %4825 = vmatpush.msra.mxu0 0.0
  %4826 = vmatpush.msra.mxu0 0.0
  %4827 = vmatpush.msra.mxu0 0.0
  %4828 = vmatpush.msra.mxu0 0.0
  %4829 = vmatpush.msra.mxu0 %v4816
  %4830 = vmatpush.msra.mxu0 %v4815
  %4831 = vmatpush.msra.mxu0 %v4814
  %4832 = vmatpush.msra.mxu0 %v4813
  %4833 = vmatmul.f32.gmra.mxu0 %v3796
  %v4834 = vpop.f32.mrf.mxu0
  %v4835 = vadd.f32 0.0, %v4834
  %4836 = vmatmul.f32.gmra.mxu0 %v3799
  %v4837 = vpop.f32.mrf.mxu0
  %v4838 = vadd.f32 0.0, %v4837
  %4839 = vdwg.mxu0
  %s4840 = scalar_lea.vmem %s8, 80
  %4841 = vst [vmem:[%s4840] sm:$0xff] %v4835
  %4842 = vst [vmem:[%s4840 + $0x8] sm:$0x7f] %v4838
  %v4843 = vsel %vm3826, %v4838, -inf
  %v4844 = vmax.f32 %v4835, %v4843
  %v4845 = vrot.slane %v4844, 4
  %v4846 = vmax.f32 %v4844, %v4845
  %v4847 = vrot.slane %v4846, 2
  %v4848 = vmax.f32 %v4846, %v4847
  %v4849 = vrot.slane %v4848, 1
  %v4850 = vmax.f32 %v4848, %v4849
  %v4851 = vsub.f32 %v4835, %v4850
  %v4852 = vsub.f32 %v4838, %v4850
  %v4853 = vmul.f32 %v4851, 1.442695
  %v4854 = vpow.pop %v4853
  %v4855 = vmul.f32 %v4852, 1.442695
  %v4856 = vpow.pop %v4855
  %v4857 = vsel %vm3826, %v4856, 0.0
  %v4858 = vadd.f32 %v4854, %v4857
  %v4859 = vrot.slane %v4858, 4
  %v4860 = vadd.f32 %v4858, %v4859
  %v4861 = vrot.slane %v4860, 2
  %v4862 = vadd.f32 %v4860, %v4861
  %v4863 = vrot.slane %v4862, 1
  %v4864 = vadd.f32 %v4862, %v4863
  %v4865 = vrcp.pop %v4864
  %v4866 = vmul.f32 %v4854, %v4865
  %v4867 = vmul.f32 %v4856, %v4865
  %v4869 = vsel %vm3826, %v4867, 0
  %4871 = vmatpush.msra.mxu0 0.0
  %4872 = vmatpush.msra.mxu0 0.0
  %4873 = vmatpush.msra.mxu0 0.0
  %4874 = vmatpush.msra.mxu0 0.0
  %4875 = vmatpush.msra.mxu0 0.0
  %4876 = vmatpush.msra.mxu0 0.0
  %4877 = vmatpush.msra.mxu0 0.0
  %4878 = vmatpush.msra.mxu0 0.0
  %4879 = vmatpush.msra.mxu0 0.0
  %4880 = vmatpush.msra.mxu0 0.0
  %4881 = vmatpush.msra.mxu0 0.0
  %4882 = vmatpush.msra.mxu0 0.0
  %4883 = vmatpush.msra.mxu0 0.0
  %4884 = vmatpush.msra.mxu0 0.0
  %4885 = vmatpush.msra.mxu0 %v4869
  %4886 = vmatpush.msra.mxu0 %v4866
  %4887 = vmatmul.f32.gmra.mxu0 %v3854
  %v4888 = vpop.f32.mrf.mxu0
  %v4889 = vadd.f32 0.0, %v4888
  %4890 = vmatmul.f32.gmra.mxu0 %v3857
  %v4891 = vpop.f32.mrf.mxu0
  %v4892 = vadd.f32 0.0, %v4891
  %4893 = vmatmul.f32.gmra.mxu0 %v3860
  %v4894 = vpop.f32.mrf.mxu0
  %v4895 = vadd.f32 0.0, %v4894
  %4896 = vmatmul.f32.gmra.mxu0 %v3863
  %v4897 = vpop.f32.mrf.mxu0
  %v4898 = vadd.f32 0.0, %v4897
  %4899 = vmatmul.f32.gmra.mxu0 %v3866
  %v4900 = vpop.f32.mrf.mxu0
  %v4901 = vadd.f32 0.0, %v4900
  %4902 = vmatmul.f32.gmra.mxu0 %v3869
  %v4903 = vpop.f32.mrf.mxu0
  %v4904 = vadd.f32 0.0, %v4903
  %4905 = vmatmul.f32.gmra.mxu0 %v3872
  %v4906 = vpop.f32.mrf.mxu0
  %v4907 = vadd.f32 0.0, %v4906
  %4908 = vmatmul.f32.gmra.mxu0 %v3875
  %v4909 = vpop.f32.mrf.mxu0
  %v4910 = vadd.f32 0.0, %v4909
  %4911 = vmatmul.f32.gmra.mxu0 %v3878
  %v4912 = vpop.f32.mrf.mxu0
  %v4913 = vadd.f32 0.0, %v4912
  %4914 = vmatmul.f32.gmra.mxu0 %v3881
  %v4915 = vpop.f32.mrf.mxu0
  %v4916 = vadd.f32 0.0, %v4915
  %4917 = vmatmul.f32.gmra.mxu0 %v3884
  %v4918 = vpop.f32.mrf.mxu0
  %v4919 = vadd.f32 0.0, %v4918
  %4920 = vmatmul.f32.gmra.mxu0 %v3887
  %v4921 = vpop.f32.mrf.mxu0
  %v4922 = vadd.f32 0.0, %v4921
  %4923 = vdwg.mxu0
  %v4924 = vld [vmem:[%s617] sm:$0xff]
  %v4925 = vld [vmem:[%s617 + $0x8] sm:$0xff]
  %v4926 = vld [vmem:[%s617 + $0x10] sm:$0xff]
  %v4927 = vld [vmem:[%s617 + $0x18] sm:$0xff]
  %v4928 = vld [vmem:[%s617 + $0x20] sm:$0xff]
  %v4929 = vld [vmem:[%s617 + $0x28] sm:$0xff]
  %v4930 = vld [vmem:[%s617 + $0x30] sm:$0xff]
  %v4931 = vld [vmem:[%s617 + $0x38] sm:$0xff]
  %v4932 = vld [vmem:[%s617 + $0x40] sm:$0xff]
  %v4933 = vld [vmem:[%s617 + $0x48] sm:$0xff]
  %v4934 = vld [vmem:[%s617 + $0x50] sm:$0xff]
  %v4935 = vld [vmem:[%s617 + $0x58] sm:$0x3]
  %v4936 = vmul.f32 %v4889, %v4924
  %v4937 = vmul.f32 %v4892, %v4925
  %v4938 = vmul.f32 %v4895, %v4926
  %v4939 = vmul.f32 %v4898, %v4927
  %v4940 = vmul.f32 %v4901, %v4928
  %v4941 = vmul.f32 %v4904, %v4929
  %v4942 = vmul.f32 %v4907, %v4930
  %v4943 = vmul.f32 %v4910, %v4931
  %v4944 = vmul.f32 %v4913, %v4932
  %v4945 = vmul.f32 %v4916, %v4933
  %v4946 = vmul.f32 %v4919, %v4934
  %v4947 = vmul.f32 %v4922, %v4935
  %v4949 = vsel %vm140, %v4947, 0
  %4951 = vmatpush.msra.mxu0 0.0
  %4952 = vmatpush.msra.mxu0 0.0
  %4953 = vmatpush.msra.mxu0 0.0
  %4954 = vmatpush.msra.mxu0 0.0
  %4955 = vmatpush.msra.mxu0 %v4949
  %4956 = vmatpush.msra.mxu0 %v4946
  %4957 = vmatpush.msra.mxu0 %v4945
  %4958 = vmatpush.msra.mxu0 %v4944
  %4959 = vmatpush.msra.mxu0 %v4943
  %4960 = vmatpush.msra.mxu0 %v4942
  %4961 = vmatpush.msra.mxu0 %v4941
  %4962 = vmatpush.msra.mxu0 %v4940
  %4963 = vmatpush.msra.mxu0 %v4939
  %4964 = vmatpush.msra.mxu0 %v4938
  %4965 = vmatpush.msra.mxu0 %v4937
  %4966 = vmatpush.msra.mxu0 %v4936
  %4967 = vmatmul.f32.gmra.mxu0 %v3970
  %v4968 = vpop.f32.mrf.mxu0
  %v4969 = vadd.f32 0.0, %v4968
  %4970 = vmatmul.f32.gmra.mxu0 %v3973
  %v4971 = vpop.f32.mrf.mxu0
  %v4972 = vadd.f32 0.0, %v4971
  %4973 = vmatmul.f32.gmra.mxu0 %v3976
  %v4974 = vpop.f32.mrf.mxu0
  %v4975 = vadd.f32 0.0, %v4974
  %4976 = vmatmul.f32.gmra.mxu0 %v3979
  %v4977 = vpop.f32.mrf.mxu0
  %v4978 = vadd.f32 0.0, %v4977
  %4979 = vdwg.mxu0
  %v4980 = vmax.f32 %v4969, 0.0
  %v4981 = vmax.f32 %v4972, 0.0
  %v4982 = vmax.f32 %v4975, 0.0
  %v4983 = vmax.f32 %v4978, 0.0
  %4984 = vmatpush.msra.mxu0 0.0
  %4985 = vmatpush.msra.mxu0 0.0
  %4986 = vmatpush.msra.mxu0 0.0
  %4987 = vmatpush.msra.mxu0 0.0
  %4988 = vmatpush.msra.mxu0 0.0
  %4989 = vmatpush.msra.mxu0 0.0
  %4990 = vmatpush.msra.mxu0 0.0
  %4991 = vmatpush.msra.mxu0 0.0
  %4992 = vmatpush.msra.mxu0 0.0
  %4993 = vmatpush.msra.mxu0 0.0
  %4994 = vmatpush.msra.mxu0 0.0
  %4995 = vmatpush.msra.mxu0 0.0
  %4996 = vmatpush.msra.mxu0 %v4983
  %4997 = vmatpush.msra.mxu0 %v4982
  %4998 = vmatpush.msra.mxu0 %v4981
  %4999 = vmatpush.msra.mxu0 %v4980
  %5000 = vmatmul.f32.gmra.mxu0 %v4018
  %v5001 = vpop.f32.mrf.mxu0
  %v5002 = vadd.f32 0.0, %v5001
  %5003 = vdwg.mxu0
  %s5004 = scalar_lea.vmem %s7, 20
  %5005 = vst [vmem:[%s5004] sm:$0xf] %v5002
  %v5006 = vld [vmem:[%s3432] sm:$0xff]
  %v5007 = vld [vmem:[%s3432 + $0x8] sm:$0xff]
  %v5008 = vld [vmem:[%s3432 + $0x10] sm:$0xff]
  %v5009 = vld [vmem:[%s3432 + $0x18] sm:$0xff]
  %5010 = vmatpush.msra.mxu0 0.0
  %5011 = vmatpush.msra.mxu0 0.0
  %5012 = vmatpush.msra.mxu0 0.0
  %5013 = vmatpush.msra.mxu0 0.0
  %5014 = vmatpush.msra.mxu0 0.0
  %5015 = vmatpush.msra.mxu0 0.0
  %5016 = vmatpush.msra.mxu0 0.0
  %5017 = vmatpush.msra.mxu0 0.0
  %5018 = vmatpush.msra.mxu0 0.0
  %5019 = vmatpush.msra.mxu0 0.0
  %5020 = vmatpush.msra.mxu0 0.0
  %5021 = vmatpush.msra.mxu0 0.0
  %5022 = vmatpush.msra.mxu0 %v5009
  %5023 = vmatpush.msra.mxu0 %v5008
  %5024 = vmatpush.msra.mxu0 %v5007
  %5025 = vmatpush.msra.mxu0 %v5006
  %5026 = vmatmul.f32.gmra.mxu0 %v3796
  %v5027 = vpop.f32.mrf.mxu0
  %v5028 = vadd.f32 0.0, %v5027
  %5029 = vmatmul.f32.gmra.mxu0 %v3799
  %v5030 = vpop.f32.mrf.mxu0
  %v5031 = vadd.f32 0.0, %v5030
  %5032 = vdwg.mxu0
  %s5033 = scalar_lea.vmem %s8, 96
  %5034 = vst [vmem:[%s5033] sm:$0xff] %v5028
  %5035 = vst [vmem:[%s5033 + $0x8] sm:$0x7f] %v5031
  %v5036 = vsel %vm3826, %v5031, -inf
  %v5037 = vmax.f32 %v5028, %v5036
  %v5038 = vrot.slane %v5037, 4
  %v5039 = vmax.f32 %v5037, %v5038
  %v5040 = vrot.slane %v5039, 2
  %v5041 = vmax.f32 %v5039, %v5040
  %v5042 = vrot.slane %v5041, 1
  %v5043 = vmax.f32 %v5041, %v5042
  %v5044 = vsub.f32 %v5028, %v5043
  %v5045 = vsub.f32 %v5031, %v5043
  %v5046 = vmul.f32 %v5044, 1.442695
  %v5047 = vpow.pop %v5046
  %v5048 = vmul.f32 %v5045, 1.442695
  %v5049 = vpow.pop %v5048
  %v5050 = vsel %vm3826, %v5049, 0.0
  %v5051 = vadd.f32 %v5047, %v5050
  %v5052 = vrot.slane %v5051, 4
  %v5053 = vadd.f32 %v5051, %v5052
  %v5054 = vrot.slane %v5053, 2
  %v5055 = vadd.f32 %v5053, %v5054
  %v5056 = vrot.slane %v5055, 1
  %v5057 = vadd.f32 %v5055, %v5056
  %v5058 = vrcp.pop %v5057
  %v5059 = vmul.f32 %v5047, %v5058
  %v5060 = vmul.f32 %v5049, %v5058
  %v5062 = vsel %vm3826, %v5060, 0
  %5064 = vmatpush.msra.mxu0 0.0
  %5065 = vmatpush.msra.mxu0 0.0
  %5066 = vmatpush.msra.mxu0 0.0
  %5067 = vmatpush.msra.mxu0 0.0
  %5068 = vmatpush.msra.mxu0 0.0
  %5069 = vmatpush.msra.mxu0 0.0
  %5070 = vmatpush.msra.mxu0 0.0
  %5071 = vmatpush.msra.mxu0 0.0
  %5072 = vmatpush.msra.mxu0 0.0
  %5073 = vmatpush.msra.mxu0 0.0
  %5074 = vmatpush.msra.mxu0 0.0
  %5075 = vmatpush.msra.mxu0 0.0
  %5076 = vmatpush.msra.mxu0 0.0
  %5077 = vmatpush.msra.mxu0 0.0
  %5078 = vmatpush.msra.mxu0 %v5062
  %5079 = vmatpush.msra.mxu0 %v5059
  %5080 = vmatmul.f32.gmra.mxu0 %v3854
  %v5081 = vpop.f32.mrf.mxu0
  %v5082 = vadd.f32 0.0, %v5081
  %5083 = vmatmul.f32.gmra.mxu0 %v3857
  %v5084 = vpop.f32.mrf.mxu0
  %v5085 = vadd.f32 0.0, %v5084
  %5086 = vmatmul.f32.gmra.mxu0 %v3860
  %v5087 = vpop.f32.mrf.mxu0
  %v5088 = vadd.f32 0.0, %v5087
  %5089 = vmatmul.f32.gmra.mxu0 %v3863
  %v5090 = vpop.f32.mrf.mxu0
  %v5091 = vadd.f32 0.0, %v5090
  %5092 = vmatmul.f32.gmra.mxu0 %v3866
  %v5093 = vpop.f32.mrf.mxu0
  %v5094 = vadd.f32 0.0, %v5093
  %5095 = vmatmul.f32.gmra.mxu0 %v3869
  %v5096 = vpop.f32.mrf.mxu0
  %v5097 = vadd.f32 0.0, %v5096
  %5098 = vmatmul.f32.gmra.mxu0 %v3872
  %v5099 = vpop.f32.mrf.mxu0
  %v5100 = vadd.f32 0.0, %v5099
  %5101 = vmatmul.f32.gmra.mxu0 %v3875
  %v5102 = vpop.f32.mrf.mxu0
  %v5103 = vadd.f32 0.0, %v5102
  %5104 = vmatmul.f32.gmra.mxu0 %v3878
  %v5105 = vpop.f32.mrf.mxu0
  %v5106 = vadd.f32 0.0, %v5105
  %5107 = vmatmul.f32.gmra.mxu0 %v3881
  %v5108 = vpop.f32.mrf.mxu0
  %v5109 = vadd.f32 0.0, %v5108
  %5110 = vmatmul.f32.gmra.mxu0 %v3884
  %v5111 = vpop.f32.mrf.mxu0
  %v5112 = vadd.f32 0.0, %v5111
  %5113 = vmatmul.f32.gmra.mxu0 %v3887
  %v5114 = vpop.f32.mrf.mxu0
  %v5115 = vadd.f32 0.0, %v5114
  %5116 = vdwg.mxu0
  %v5117 = vld [vmem:[%s715] sm:$0xff]
  %v5118 = vld [vmem:[%s715 + $0x8] sm:$0xff]
  %v5119 = vld [vmem:[%s715 + $0x10] sm:$0xff]
  %v5120 = vld [vmem:[%s715 + $0x18] sm:$0xff]
  %v5121 = vld [vmem:[%s715 + $0x20] sm:$0xff]
  %v5122 = vld [vmem:[%s715 + $0x28] sm:$0xff]
  %v5123 = vld [vmem:[%s715 + $0x30] sm:$0xff]
  %v5124 = vld [vmem:[%s715 + $0x38] sm:$0xff]
  %v5125 = vld [vmem:[%s715 + $0x40] sm:$0xff]
  %v5126 = vld [vmem:[%s715 + $0x48] sm:$0xff]
  %v5127 = vld [vmem:[%s715 + $0x50] sm:$0xff]
  %v5128 = vld [vmem:[%s715 + $0x58] sm:$0x3]
  %v5129 = vmul.f32 %v5082, %v5117
  %v5130 = vmul.f32 %v5085, %v5118
  %v5131 = vmul.f32 %v5088, %v5119
  %v5132 = vmul.f32 %v5091, %v5120
  %v5133 = vmul.f32 %v5094, %v5121
  %v5134 = vmul.f32 %v5097, %v5122
  %v5135 = vmul.f32 %v5100, %v5123
  %v5136 = vmul.f32 %v5103, %v5124
  %v5137 = vmul.f32 %v5106, %v5125
  %v5138 = vmul.f32 %v5109, %v5126
  %v5139 = vmul.f32 %v5112, %v5127
  %v5140 = vmul.f32 %v5115, %v5128
  %v5142 = vsel %vm140, %v5140, 0
  %5144 = vmatpush.msra.mxu0 0.0
  %5145 = vmatpush.msra.mxu0 0.0
  %5146 = vmatpush.msra.mxu0 0.0
  %5147 = vmatpush.msra.mxu0 0.0
  %5148 = vmatpush.msra.mxu0 %v5142
  %5149 = vmatpush.msra.mxu0 %v5139
  %5150 = vmatpush.msra.mxu0 %v5138
  %5151 = vmatpush.msra.mxu0 %v5137
  %5152 = vmatpush.msra.mxu0 %v5136
  %5153 = vmatpush.msra.mxu0 %v5135
  %5154 = vmatpush.msra.mxu0 %v5134
  %5155 = vmatpush.msra.mxu0 %v5133
  %5156 = vmatpush.msra.mxu0 %v5132
  %5157 = vmatpush.msra.mxu0 %v5131
  %5158 = vmatpush.msra.mxu0 %v5130
  %5159 = vmatpush.msra.mxu0 %v5129
  %5160 = vmatmul.f32.gmra.mxu0 %v3970
  %v5161 = vpop.f32.mrf.mxu0
  %v5162 = vadd.f32 0.0, %v5161
  %5163 = vmatmul.f32.gmra.mxu0 %v3973
  %v5164 = vpop.f32.mrf.mxu0
  %v5165 = vadd.f32 0.0, %v5164
  %5166 = vmatmul.f32.gmra.mxu0 %v3976
  %v5167 = vpop.f32.mrf.mxu0
  %v5168 = vadd.f32 0.0, %v5167
  %5169 = vmatmul.f32.gmra.mxu0 %v3979
  %v5170 = vpop.f32.mrf.mxu0
  %v5171 = vadd.f32 0.0, %v5170
  %5172 = vdwg.mxu0
  %v5173 = vmax.f32 %v5162, 0.0
  %v5174 = vmax.f32 %v5165, 0.0
  %v5175 = vmax.f32 %v5168, 0.0
  %v5176 = vmax.f32 %v5171, 0.0
  %5177 = vmatpush.msra.mxu0 0.0
  %5178 = vmatpush.msra.mxu0 0.0
  %5179 = vmatpush.msra.mxu0 0.0
  %5180 = vmatpush.msra.mxu0 0.0
  %5181 = vmatpush.msra.mxu0 0.0
  %5182 = vmatpush.msra.mxu0 0.0
  %5183 = vmatpush.msra.mxu0 0.0
  %5184 = vmatpush.msra.mxu0 0.0
  %5185 = vmatpush.msra.mxu0 0.0
  %5186 = vmatpush.msra.mxu0 0.0
  %5187 = vmatpush.msra.mxu0 0.0
  %5188 = vmatpush.msra.mxu0 0.0
  %5189 = vmatpush.msra.mxu0 %v5176
  %5190 = vmatpush.msra.mxu0 %v5175
  %5191 = vmatpush.msra.mxu0 %v5174
  %5192 = vmatpush.msra.mxu0 %v5173
  %5193 = vmatmul.f32.gmra.mxu0 %v4018
  %v5194 = vpop.f32.mrf.mxu0
  %v5195 = vadd.f32 0.0, %v5194
  %5196 = vdwg.mxu0
  %s5197 = scalar_lea.vmem %s7, 24
  %5198 = vst [vmem:[%s5197] sm:$0xf] %v5195
  %v5199 = vld [vmem:[%s3786] sm:$0xff]
  %v5200 = vld [vmem:[%s3786 + $0x8] sm:$0xff]
  %v5201 = vld [vmem:[%s3786 + $0x10] sm:$0xff]
  %v5202 = vld [vmem:[%s3786 + $0x18] sm:$0xff]
  %5203 = vmatpush.msra.mxu0 0.0
  %5204 = vmatpush.msra.mxu0 0.0
  %5205 = vmatpush.msra.mxu0 0.0
  %5206 = vmatpush.msra.mxu0 0.0
  %5207 = vmatpush.msra.mxu0 0.0
  %5208 = vmatpush.msra.mxu0 0.0
  %5209 = vmatpush.msra.mxu0 0.0
  %5210 = vmatpush.msra.mxu0 0.0
  %5211 = vmatpush.msra.mxu0 0.0
  %5212 = vmatpush.msra.mxu0 0.0
  %5213 = vmatpush.msra.mxu0 0.0
  %5214 = vmatpush.msra.mxu0 0.0
  %5215 = vmatpush.msra.mxu0 %v5202
  %5216 = vmatpush.msra.mxu0 %v5201
  %5217 = vmatpush.msra.mxu0 %v5200
  %5218 = vmatpush.msra.mxu0 %v5199
  %5219 = vmatmul.f32.gmra.mxu0 %v3796
  %v5220 = vpop.f32.mrf.mxu0
  %v5221 = vadd.f32 0.0, %v5220
  %5222 = vmatmul.f32.gmra.mxu0 %v3799
  %v5223 = vpop.f32.mrf.mxu0
  %v5224 = vadd.f32 0.0, %v5223
  %5225 = vdwg.mxu0
  %s5226 = scalar_lea.vmem %s8, 112
  %5227 = vst [vmem:[%s5226] sm:$0xff] %v5221
  %5228 = vst [vmem:[%s5226 + $0x8] sm:$0x7f] %v5224
  %v5229 = vsel %vm3826, %v5224, -inf
  %v5230 = vmax.f32 %v5221, %v5229
  %v5231 = vrot.slane %v5230, 4
  %v5232 = vmax.f32 %v5230, %v5231
  %v5233 = vrot.slane %v5232, 2
  %v5234 = vmax.f32 %v5232, %v5233
  %v5235 = vrot.slane %v5234, 1
  %v5236 = vmax.f32 %v5234, %v5235
  %v5237 = vsub.f32 %v5221, %v5236
  %v5238 = vsub.f32 %v5224, %v5236
  %v5239 = vmul.f32 %v5237, 1.442695
  %v5240 = vpow.pop %v5239
  %v5241 = vmul.f32 %v5238, 1.442695
  %v5242 = vpow.pop %v5241
  %v5243 = vsel %vm3826, %v5242, 0.0
  %v5244 = vadd.f32 %v5240, %v5243
  %v5245 = vrot.slane %v5244, 4
  %v5246 = vadd.f32 %v5244, %v5245
  %v5247 = vrot.slane %v5246, 2
  %v5248 = vadd.f32 %v5246, %v5247
  %v5249 = vrot.slane %v5248, 1
  %v5250 = vadd.f32 %v5248, %v5249
  %v5251 = vrcp.pop %v5250
  %v5252 = vmul.f32 %v5240, %v5251
  %v5253 = vmul.f32 %v5242, %v5251
  %v5255 = vsel %vm3826, %v5253, 0
  %5257 = vmatpush.msra.mxu0 0.0
  %5258 = vmatpush.msra.mxu0 0.0
  %5259 = vmatpush.msra.mxu0 0.0
  %5260 = vmatpush.msra.mxu0 0.0
  %5261 = vmatpush.msra.mxu0 0.0
  %5262 = vmatpush.msra.mxu0 0.0
  %5263 = vmatpush.msra.mxu0 0.0
  %5264 = vmatpush.msra.mxu0 0.0
  %5265 = vmatpush.msra.mxu0 0.0
  %5266 = vmatpush.msra.mxu0 0.0
  %5267 = vmatpush.msra.mxu0 0.0
  %5268 = vmatpush.msra.mxu0 0.0
  %5269 = vmatpush.msra.mxu0 0.0
  %5270 = vmatpush.msra.mxu0 0.0
  %5271 = vmatpush.msra.mxu0 %v5255
  %5272 = vmatpush.msra.mxu0 %v5252
  %5273 = vmatmul.f32.gmra.mxu0 %v3854
  %v5274 = vpop.f32.mrf.mxu0
  %v5275 = vadd.f32 0.0, %v5274
  %5276 = vmatmul.f32.gmra.mxu0 %v3857
  %v5277 = vpop.f32.mrf.mxu0
  %v5278 = vadd.f32 0.0, %v5277
  %5279 = vmatmul.f32.gmra.mxu0 %v3860
  %v5280 = vpop.f32.mrf.mxu0
  %v5281 = vadd.f32 0.0, %v5280
  %5282 = vmatmul.f32.gmra.mxu0 %v3863
  %v5283 = vpop.f32.mrf.mxu0
  %v5284 = vadd.f32 0.0, %v5283
  %5285 = vmatmul.f32.gmra.mxu0 %v3866
  %v5286 = vpop.f32.mrf.mxu0
  %v5287 = vadd.f32 0.0, %v5286
  %5288 = vmatmul.f32.gmra.mxu0 %v3869
  %v5289 = vpop.f32.mrf.mxu0
  %v5290 = vadd.f32 0.0, %v5289
  %5291 = vmatmul.f32.gmra.mxu0 %v3872
  %v5292 = vpop.f32.mrf.mxu0
  %v5293 = vadd.f32 0.0, %v5292
  %5294 = vmatmul.f32.gmra.mxu0 %v3875
  %v5295 = vpop.f32.mrf.mxu0
  %v5296 = vadd.f32 0.0, %v5295
  %5297 = vmatmul.f32.gmra.mxu0 %v3878
  %v5298 = vpop.f32.mrf.mxu0
  %v5299 = vadd.f32 0.0, %v5298
  %5300 = vmatmul.f32.gmra.mxu0 %v3881
  %v5301 = vpop.f32.mrf.mxu0
  %v5302 = vadd.f32 0.0, %v5301
  %5303 = vmatmul.f32.gmra.mxu0 %v3884
  %v5304 = vpop.f32.mrf.mxu0
  %v5305 = vadd.f32 0.0, %v5304
  %5306 = vmatmul.f32.gmra.mxu0 %v3887
  %v5307 = vpop.f32.mrf.mxu0
  %v5308 = vadd.f32 0.0, %v5307
  %5309 = vdwg.mxu0
  %v5310 = vld [vmem:[%s813] sm:$0xff]
  %v5311 = vld [vmem:[%s813 + $0x8] sm:$0xff]
  %v5312 = vld [vmem:[%s813 + $0x10] sm:$0xff]
  %v5313 = vld [vmem:[%s813 + $0x18] sm:$0xff]
  %v5314 = vld [vmem:[%s813 + $0x20] sm:$0xff]
  %v5315 = vld [vmem:[%s813 + $0x28] sm:$0xff]
  %v5316 = vld [vmem:[%s813 + $0x30] sm:$0xff]
  %v5317 = vld [vmem:[%s813 + $0x38] sm:$0xff]
  %v5318 = vld [vmem:[%s813 + $0x40] sm:$0xff]
  %v5319 = vld [vmem:[%s813 + $0x48] sm:$0xff]
  %v5320 = vld [vmem:[%s813 + $0x50] sm:$0xff]
  %v5321 = vld [vmem:[%s813 + $0x58] sm:$0x3]
  %v5322 = vmul.f32 %v5275, %v5310
  %v5323 = vmul.f32 %v5278, %v5311
  %v5324 = vmul.f32 %v5281, %v5312
  %v5325 = vmul.f32 %v5284, %v5313
  %v5326 = vmul.f32 %v5287, %v5314
  %v5327 = vmul.f32 %v5290, %v5315
  %v5328 = vmul.f32 %v5293, %v5316
  %v5329 = vmul.f32 %v5296, %v5317
  %v5330 = vmul.f32 %v5299, %v5318
  %v5331 = vmul.f32 %v5302, %v5319
  %v5332 = vmul.f32 %v5305, %v5320
  %v5333 = vmul.f32 %v5308, %v5321
  %v5335 = vsel %vm140, %v5333, 0
  %5337 = vmatpush.msra.mxu0 0.0
  %5338 = vmatpush.msra.mxu0 0.0
  %5339 = vmatpush.msra.mxu0 0.0
  %5340 = vmatpush.msra.mxu0 0.0
  %5341 = vmatpush.msra.mxu0 %v5335
  %5342 = vmatpush.msra.mxu0 %v5332
  %5343 = vmatpush.msra.mxu0 %v5331
  %5344 = vmatpush.msra.mxu0 %v5330
  %5345 = vmatpush.msra.mxu0 %v5329
  %5346 = vmatpush.msra.mxu0 %v5328
  %5347 = vmatpush.msra.mxu0 %v5327
  %5348 = vmatpush.msra.mxu0 %v5326
  %5349 = vmatpush.msra.mxu0 %v5325
  %5350 = vmatpush.msra.mxu0 %v5324
  %5351 = vmatpush.msra.mxu0 %v5323
  %5352 = vmatpush.msra.mxu0 %v5322
  %5353 = vmatmul.f32.gmra.mxu0 %v3970
  %v5354 = vpop.f32.mrf.mxu0
  %v5355 = vadd.f32 0.0, %v5354
  %5356 = vmatmul.f32.gmra.mxu0 %v3973
  %v5357 = vpop.f32.mrf.mxu0
  %v5358 = vadd.f32 0.0, %v5357
  %5359 = vmatmul.f32.gmra.mxu0 %v3976
  %v5360 = vpop.f32.mrf.mxu0
  %v5361 = vadd.f32 0.0, %v5360
  %5362 = vmatmul.f32.gmra.mxu0 %v3979
  %v5363 = vpop.f32.mrf.mxu0
  %v5364 = vadd.f32 0.0, %v5363
  %5365 = vdwg.mxu0
  %v5366 = vmax.f32 %v5355, 0.0
  %v5367 = vmax.f32 %v5358, 0.0
  %v5368 = vmax.f32 %v5361, 0.0
  %v5369 = vmax.f32 %v5364, 0.0
  %5370 = vmatpush.msra.mxu0 0.0
  %5371 = vmatpush.msra.mxu0 0.0
  %5372 = vmatpush.msra.mxu0 0.0
  %5373 = vmatpush.msra.mxu0 0.0
  %5374 = vmatpush.msra.mxu0 0.0
  %5375 = vmatpush.msra.mxu0 0.0
  %5376 = vmatpush.msra.mxu0 0.0
  %5377 = vmatpush.msra.mxu0 0.0
  %5378 = vmatpush.msra.mxu0 0.0
  %5379 = vmatpush.msra.mxu0 0.0
  %5380 = vmatpush.msra.mxu0 0.0
  %5381 = vmatpush.msra.mxu0 0.0
  %5382 = vmatpush.msra.mxu0 %v5369
  %5383 = vmatpush.msra.mxu0 %v5368
  %5384 = vmatpush.msra.mxu0 %v5367
  %5385 = vmatpush.msra.mxu0 %v5366
  %5386 = vmatmul.f32.gmra.mxu0 %v4018
  %v5387 = vpop.f32.mrf.mxu0
  %v5388 = vadd.f32 0.0, %v5387
  %5389 = vdwg.mxu0
  %s5390 = scalar_lea.vmem %s7, 28
  %5391 = vst [vmem:[%s5390] sm:$0xf] %v5388
  // Predicated region
  $region30: #{opnet_lstm_mlp.1} parent=0 // pred_check
    _
  $region31: #{opnet_lstm_mlp.1} parent=0 // pred_check_branch
    %5393 = sbr.rel (0) target = $region33
  $region32: #{opnet_lstm_mlp.1} parent=0 // pred_region
    _
  $region33: #{opnet_lstm_mlp.1} parent=0 // pred_fallthru
    _
  // Predicated region
  $region34: #{opnet_lstm_mlp.1} parent=0 // pred_check
    _
  $region35: #{opnet_lstm_mlp.1} parent=0 // pred_check_branch
    %5395 = sbr.rel (0) target = $region37
  $region36: #{opnet_lstm_mlp.1} parent=0 // pred_region
    _
  $region37: #{opnet_lstm_mlp.1} parent=0 // pred_fallthru
    _
  // Predicated region
  $region38: #{opnet_lstm_mlp.1} parent=0 // pred_check
    _
  $region39: #{opnet_lstm_mlp.1} parent=0 // pred_check_branch
    %5397 = sbr.rel (0) target = $region41
  $region40: #{opnet_lstm_mlp.1} parent=0 // pred_region
    _
  $region41: #{opnet_lstm_mlp.1} parent=0 // pred_fallthru
    _
  // Predicated region
  $region42: #{opnet_lstm_mlp.1} parent=0 // pred_check
    _
  $region43: #{opnet_lstm_mlp.1} parent=0 // pred_check_branch
    %5399 = sbr.rel (0) target = $region45
  $region44: #{opnet_lstm_mlp.1} parent=0 // pred_region
    _
  $region45: #{opnet_lstm_mlp.1} parent=0 // pred_fallthru
    _

</llo_original>
